<compile_context>
chip_gen: v6e
topology: v6e:2x2x1
jax: 0.10.0
libtpu: 0.0.40
codegen_flags: <defaults>
</compile_context>

<pallas_src>
import functools
import math

import jax
import jax.numpy as jnp
from jax.experimental import pallas as pl
from jax.experimental.pallas import tpu as pltpu

_NEG = -1e30  # large finite negative for causal masking (no inf-inf NaNs)


def _layernorm(h, gamma, beta, eps=1e-5):
    mu = jnp.mean(h, axis=-1, keepdims=True)
    var = jnp.mean((h - mu) ** 2, axis=-1, keepdims=True)
    return (h - mu) * jax.lax.rsqrt(var + eps) * gamma + beta


def _gelu_tanh(x):
    # PyTorch nn.GELU(approximate='tanh')
    c = math.sqrt(2.0 / math.pi)
    return 0.5 * x * (1.0 + jnp.tanh(c * (x + 0.044715 * x * x * x)))


# --------------------------------------------------------------------------
# Kernel 1: LN1 + K/V projection, head-major (B, n_head, T, hd) bf16 output
# --------------------------------------------------------------------------
def kv_kernel(n_head, x_ref, ln1_g_ref, ln1_b_ref, w_kv_ref, b_kv_ref,
              k_ref, v_ref):
    x = x_ref[0]                               # (tt, C) f32
    C = x.shape[-1]
    hd = C // n_head

    h = _layernorm(x, ln1_g_ref[...], ln1_b_ref[...])
    kv = jnp.dot(h.astype(jnp.bfloat16), w_kv_ref[...],
                 preferred_element_type=jnp.float32) + b_kv_ref[...]   # (tt, 2C)

    # Head-major writes: the lane extraction happens once per tile here,
    # not per kv step inside the attention inner loop.
    for hh in range(n_head):
        k_ref[0, hh] = kv[:, hh * hd:(hh + 1) * hd].astype(jnp.bfloat16)
        v_ref[0, hh] = kv[:, C + hh * hd:C + (hh + 1) * hd].astype(jnp.bfloat16)


# --------------------------------------------------------------------------
# Kernel 2: q-proj (ki==0) + streamed flash causal attention + out-proj
#           + residual (finalized at ki == qi)
# --------------------------------------------------------------------------
def attn_kernel(n_head, tq, tk,
                x_ref, ln1_g_ref, ln1_b_ref, wq_ref, bq_ref,
                k_ref, v_ref, wp_ref, bp_ref,
                o_ref,
                q_sc, m_sc, l_sc, acc_sc, att_sc):
    qi = pl.program_id(1)
    ki = pl.program_id(2)
    C = x_ref.shape[-1]
    hd = C // n_head

    @pl.when(ki == 0)
    def _init():
        # LN1 + q projection on the local (tq, C) tile; 1/sqrt(hd) is already
        # folded into wq/bq by the wrapper.
        h = _layernorm(x_ref[0], ln1_g_ref[...], ln1_b_ref[...])
        q = jnp.dot(h.astype(jnp.bfloat16), wq_ref[...],
                    preferred_element_type=jnp.float32) + bq_ref[...]
        for hh in range(n_head):
            q_sc[hh] = q[:, hh * hd:(hh + 1) * hd].astype(jnp.bfloat16)
        m_sc[...] = jnp.full_like(m_sc, _NEG)
        l_sc[...] = jnp.zeros_like(l_sc)
        acc_sc[...] = jnp.zeros_like(acc_sc)

    def _flash_block(diag):
        if diag:
            # Mask only on the diagonal block; iota/compare hoisted out of the
            # per-head loop.
            row = jax.lax.broadcasted_iota(jnp.int32, (tq, tk), 0)
            col = jax.lax.broadcasted_iota(jnp.int32, (tq, tk), 1)
            keep = col <= row
        for hh in range(n_head):
            s = jax.lax.dot_general(
                q_sc[hh], k_ref[0, hh], (((1,), (1,)), ((), ())),
                preferred_element_type=jnp.float32)              # (tq, tk) f32
            if diag:
                s = jnp.where(keep, s, _NEG)
            m_prev = m_sc[hh]
            m_new = jnp.maximum(m_prev, jnp.max(s, axis=-1, keepdims=True))
            alpha = jnp.exp(m_prev - m_new)
            p = jnp.exp(s - m_new)
            l_sc[hh] = alpha * l_sc[hh] + jnp.sum(p, axis=-1, keepdims=True)
            acc_sc[hh] = alpha * acc_sc[hh] + jax.lax.dot_general(
                p.astype(jnp.bfloat16), v_ref[0, hh], (((1,), (0,)), ((), ())),
                preferred_element_type=jnp.float32)
            m_sc[hh] = m_new

    @pl.when(ki < qi)
    def _off_diagonal():                 # mask-free path
        _flash_block(diag=False)

    @pl.when(ki == qi)
    def _diagonal_and_finalize():        # last causal block for this query tile
        _flash_block(diag=True)
        for hh in range(n_head):
            inv_l = pl.reciprocal(l_sc[hh], approx=True)
            att_sc[:, hh * hd:(hh + 1) * hd] = acc_sc[hh] * inv_l
        att = jnp.dot(att_sc[...].astype(jnp.bfloat16), wp_ref[...],
                      preferred_element_type=jnp.float32) + bp_ref[...]
        o_ref[0] = (x_ref[0] + att).astype(o_ref.dtype)
    # Blocks with ki > qi: nothing to do (their DMA is elided by clamping the
    # kv index_map); the output VMEM block keeps the value written at ki == qi.


# --------------------------------------------------------------------------
# Kernel 3: LN2 + MLP (GELU tanh) + residual
# --------------------------------------------------------------------------
def mlp_kernel(x_ref, ln2_g_ref, ln2_b_ref, w_fc_ref, b_fc_ref,
               w_mp_ref, b_mp_ref, o_ref):
    x = x_ref[0]                               # (tt, C) f32
    h = _layernorm(x, ln2_g_ref[...], ln2_b_ref[...])
    h = jnp.dot(h.astype(jnp.bfloat16), w_fc_ref[...],
                preferred_element_type=jnp.float32) + b_fc_ref[...]
    h = _gelu_tanh(h)
    h = jnp.dot(h.astype(jnp.bfloat16), w_mp_ref[...],
                preferred_element_type=jnp.float32) + b_mp_ref[...]
    o_ref[0] = (x + h).astype(o_ref.dtype)


# --------------------------------------------------------------------------
# Wrapper
# --------------------------------------------------------------------------
def _vmem_budget_bytes():
    cap = 64 << 20                      # conservative v7x per-core default
    try:
        info = pltpu.get_tpu_info()
        cap = int(getattr(info, "vmem_capacity_bytes", cap))
    except Exception:
        pass
    return int(0.8 * cap)


def gpt2_block(x, params, n_head, tq=None):
    B, T, C = x.shape
    assert C % n_head == 0
    hd = C // n_head
    if tq is None:
        tq = min(256, T)                # production tile; sweep {256, 512}
    # TODO(synk): pad the sequence when T is not a multiple of the tile size.
    assert T % tq == 0 and tq % 8 == 0
    tk = tq   # invariant: tk == tq keeps every processed row >=1 unmasked col

    bf16, f32 = jnp.bfloat16, jnp.float32
    scale = 1.0 / math.sqrt(hd)

    # Split QKV weights; fold 1/sqrt(hd) into the q projection.
    w_attn, b_attn = params['w_attn'], params['b_attn']
    w_q = (w_attn[:, :C] * scale).astype(bf16)
    b_q = (b_attn[:, :C] * scale).astype(f32)
    w_kv = w_attn[:, C:].astype(bf16)
    b_kv = b_attn[:, C:].astype(f32)
    w_ap = params['w_attn_proj'].astype(bf16)
    w_fc = params['w_fc'].astype(bf16)
    w_mp = params['w_mlp_proj'].astype(bf16)

    vmem_spec = pl.BlockSpec(memory_space=pltpu.MemorySpace.VMEM)
    budget = _vmem_budget_bytes()
    nq, nk = T // tq, T // tk

    # ---- kernel 1: LN1 + K/V projection (head-major) ----------------------
    est1 = (2 * tq * C * 4 + 2 * 2 * tq * C * 2
            + 2 * C * C * 2 + 6 * C * 4 + 6 * tq * C * 4)
    assert est1 <= budget, f"kv_kernel VMEM estimate {est1} > budget {budget}"
    cost1 = pl.CostEstimate(
        flops=int(4 * B * T * C * C + 10 * B * T * C),
        transcendentals=int(B * T),
        bytes_accessed=int(B * T * C * 4 + 2 * C * C * 2 + 2 * B * T * C * 2))

    k, v = pl.pallas_call(
        functools.partial(kv_kernel, n_head),
        out_shape=(jax.ShapeDtypeStruct((B, n_head, T, hd), bf16),
                   jax.ShapeDtypeStruct((B, n_head, T, hd), bf16)),
        grid=(B, nq),
        in_specs=[pl.BlockSpec((1, tq, C), lambda b, i: (b, i, 0)),
                  vmem_spec, vmem_spec, vmem_spec, vmem_spec],
        out_specs=(pl.BlockSpec((1, n_head, tq, hd), lambda b, i: (b, 0, i, 0)),
                   pl.BlockSpec((1, n_head, tq, hd), lambda b, i: (b, 0, i, 0))),
        compiler_params=pltpu.CompilerParams(
            dimension_semantics=("parallel", "parallel"),
            vmem_limit_bytes=budget),
        cost_estimate=cost1,
    )(x, params['ln1_g'], params['ln1_b'], w_kv, b_kv)

    # ---- kernel 2: q-proj + streamed flash attention + out-proj + residual -
    est2 = (4 * tq * C * 4                       # x in + x1 out (double-buf)
            + 2 * 2 * tk * C * 2                 # k, v tiles (double-buf)
            + 2 * C * C * 2 + 8 * C * 4          # wq, wp, biases, ln params
            + tq * C * 2 + tq * C * 4            # q_sc, acc_sc
            + 2 * n_head * tq * 128 * 4          # m_sc, l_sc (lane-padded)
            + tq * C * 4                         # att_sc
            + 8 * tq * tk * 4 + 2 * tq * C * 4)  # s/p/q intermediates
    assert est2 <= budget, f"attn_kernel VMEM estimate {est2} > budget {budget}"
    cost2 = pl.CostEstimate(
        flops=int(4 * B * T * C * C + 2 * B * T * T * C),
        transcendentals=int(B * n_head * T * T),
        bytes_accessed=int(2 * B * T * C * 4 + 2 * B * T * C * 2
                           + 2 * C * C * 2))

    # kv index clamped to min(ki, qi): skipped blocks (ki > qi) revisit the
    # previous block index, so no extra DMA is issued for them.
    kv_spec = pl.BlockSpec((1, n_head, tk, hd),
                           lambda b, i, j: (b, 0, jnp.minimum(i, j), 0))

    x1 = pl.pallas_call(
        functools.partial(attn_kernel, n_head, tq, tk),
        out_shape=jax.ShapeDtypeStruct((B, T, C), x.dtype),
        grid=(B, nq, nk),
        in_specs=[pl.BlockSpec((1, tq, C), lambda b, i, j: (b, i, 0)),  # x
                  vmem_spec, vmem_spec,                                 # ln1 g,b
                  vmem_spec, vmem_spec,                                 # w_q, b_q
                  kv_spec, kv_spec,                                     # k, v
                  vmem_spec, vmem_spec],                                # w_ap, b_ap
        out_specs=pl.BlockSpec((1, tq, C), lambda b, i, j: (b, i, 0)),
        scratch_shapes=[pltpu.VMEM((n_head, tq, hd), bf16),   # q_sc
                        pltpu.VMEM((n_head, tq, 1), f32),     # m_sc
                        pltpu.VMEM((n_head, tq, 1), f32),     # l_sc
                        pltpu.VMEM((n_head, tq, hd), f32),    # acc_sc
                        pltpu.VMEM((tq, C), f32)],            # att_sc
        compiler_params=pltpu.CompilerParams(
            dimension_semantics=("parallel", "parallel", "arbitrary"),
            vmem_limit_bytes=budget),
        cost_estimate=cost2,
    )(x, params['ln1_g'], params['ln1_b'], w_q, b_q, k, v,
      w_ap, params['b_attn_proj'])

    # ---- kernel 3: LN2 + MLP + residual ------------------------------------
    # TODO(synk): tile w_fc / w_mlp_proj along the 4C axis when the MLP weights
    # plus the (tq, 4C) f32 intermediates exceed the per-core VMEM budget
    # (v7x with very large C).
    est3 = (4 * tq * C * 4 + 2 * 4 * C * C * 2 + 12 * C * 4
            + 4 * tq * 4 * C * 4)
    assert est3 <= budget, f"mlp_kernel VMEM estimate {est3} > budget {budget}"
    cost3 = pl.CostEstimate(
        flops=int(16 * B * T * C * C),
        transcendentals=int(4 * B * T * C),
        bytes_accessed=int(2 * B * T * C * 4 + 8 * C * C * 2))

    out = pl.pallas_call(
        mlp_kernel,
        out_shape=jax.ShapeDtypeStruct((B, T, C), x.dtype),
        grid=(B, nq),
        in_specs=[pl.BlockSpec((1, tq, C), lambda b, i: (b, i, 0)),
                  vmem_spec, vmem_spec, vmem_spec, vmem_spec,
                  vmem_spec, vmem_spec],
        out_specs=pl.BlockSpec((1, tq, C), lambda b, i: (b, i, 0)),
        input_output_aliases={0: 0},   # x1 is a jit-internal temp -> in-place
        compiler_params=pltpu.CompilerParams(
            dimension_semantics=("parallel", "parallel"),
            vmem_limit_bytes=budget),
        cost_estimate=cost3,
    )(x1, params['ln2_g'], params['ln2_b'], w_fc, params['b_fc'],
      w_mp, params['b_mlp_proj'])
    return out


# --------------------------------------------------------------------------
# Pure-JAX f32 reference mirroring the PyTorch module exactly
# --------------------------------------------------------------------------
def reference_block(x, params, n_head):
    B, T, C = x.shape
    hd = C // n_head

    h = _layernorm(x, params['ln1_g'], params['ln1_b'])
    qkv = h @ params['w_attn'] + params['b_attn']
    q, k, v = jnp.split(qkv, 3, axis=-1)
    q = q.reshape(B, T, n_head, hd).transpose(0, 2, 1, 3)
    k = k.reshape(B, T, n_head, hd).transpose(0, 2, 1, 3)
    v = v.reshape(B, T, n_head, hd).transpose(0, 2, 1, 3)
    wei = (q @ k.transpose(0, 1, 3, 2)) / math.sqrt(hd)
    mask = jnp.tril(jnp.ones((T, T), bool))
    wei = jnp.where(mask[None, None], wei, -jnp.inf)
    wei = jax.nn.softmax(wei, axis=-1)
    att = (wei @ v).transpose(0, 2, 1, 3).reshape(B, T, C)
    att = att @ params['w_attn_proj'] + params['b_attn_proj']
    x = x + att

    h2 = _layernorm(x, params['ln2_g'], params['ln2_b'])
    h2 = h2 @ params['w_fc'] + params['b_fc']
    h2 = _gelu_tanh(h2)
    h2 = h2 @ params['w_mlp_proj'] + params['b_mlp_proj']
    return x + h2


def init_params(key, n_embd):
    ks = jax.random.split(key, 8)
    s = 0.02
    return {
        'ln1_g': jnp.ones((1, n_embd), jnp.float32),
        'ln1_b': jnp.zeros((1, n_embd), jnp.float32),
        'w_attn': s * jax.random.normal(ks[0], (n_embd, 3 * n_embd), jnp.float32),
        'b_attn': s * jax.random.normal(ks[1], (1, 3 * n_embd), jnp.float32),
        'w_attn_proj': s * jax.random.normal(ks[2], (n_embd, n_embd), jnp.float32),
        'b_attn_proj': s * jax.random.normal(ks[3], (1, n_embd), jnp.float32),
        'ln2_g': jnp.ones((1, n_embd), jnp.float32),
        'ln2_b': jnp.zeros((1, n_embd), jnp.float32),
        'w_fc': s * jax.random.normal(ks[4], (n_embd, 4 * n_embd), jnp.float32),
        'b_fc': s * jax.random.normal(ks[5], (1, 4 * n_embd), jnp.float32),
        'w_mlp_proj': s * jax.random.normal(ks[6], (4 * n_embd, n_embd), jnp.float32),
        'b_mlp_proj': s * jax.random.normal(ks[7], (1, n_embd), jnp.float32),
    }


if __name__ == "__main__":
    # B, T from the original script; C a multiple of 128 (lane-dense output).
    B, T, n_embd, n_head = 4, 32, 128, 4

    key = jax.random.PRNGKey(0)
    kx, kp = jax.random.split(key)
    x = jax.random.normal(kx, (B, T, n_embd), jnp.float32)
    params = init_params(kp, n_embd)

    ref = reference_block(x, params, n_head)

    # tq=T: single-tile path; tq=8: multi-tile path (exercises streamed kv
    # blocks, block skipping, diagonal-only masking, online-softmax carry).
    for tq in (T, 8):
        fn = jax.jit(functools.partial(gpt2_block, n_head=n_head, tq=tq))
        out = jax.block_until_ready(fn(x, params))
        assert out.shape == (B, T, n_embd)
        # bf16 matmul operands / f32 accumulation vs full-f32 reference
        assert jnp.allclose(out, ref, atol=1e-2, rtol=1e-2), f"mismatch tq={tq}"

    print("KERNEL_OK")
</pallas_src>

<mosaic_0001>
module attributes {stable_mosaic.version = 11 : i64} {
  func.func @kv_kernel(%arg0: i32, %arg1: i32, %arg2: memref<1x32x128xf32, #tpu.memory_space<vmem>>, %arg3: memref<1x128xf32, #tpu.memory_space<vmem>>, %arg4: memref<1x128xf32, #tpu.memory_space<vmem>>, %arg5: memref<128x256xbf16, #tpu.memory_space<vmem>>, %arg6: memref<1x256xf32, #tpu.memory_space<vmem>>, %arg7: memref<1x4x32x32xbf16, #tpu.memory_space<vmem>>, %arg8: memref<1x4x32x32xbf16, #tpu.memory_space<vmem>>) attributes {dimension_semantics = [#tpu.dimension_semantics<parallel>, #tpu.dimension_semantics<parallel>], iteration_bounds = array<i64: 4, 1>, scalar_prefetch = 0 : i64, scratch_operands = 0 : i64, tpu.core_type = #tpu.core_type<tc>, window_params = [{transform_indices = @transform_0, window_bounds = array<i64: 1, 32, 128>}, {pipeline_mode = #tpu.pipeline_mode<synchronous>, transform_indices = @transform_1, window_bounds = array<i64: 1, 128>}, {pipeline_mode = #tpu.pipeline_mode<synchronous>, transform_indices = @transform_2, window_bounds = array<i64: 1, 128>}, {pipeline_mode = #tpu.pipeline_mode<synchronous>, transform_indices = @transform_3, window_bounds = array<i64: 128, 256>}, {pipeline_mode = #tpu.pipeline_mode<synchronous>, transform_indices = @transform_4, window_bounds = array<i64: 1, 256>}, {transform_indices = @transform_5, window_bounds = array<i64: 1, 4, 32, 32>}, {transform_indices = @transform_6, window_bounds = array<i64: 1, 4, 32, 32>}]} {
    %c0 = arith.constant 0 : index
    %c0_0 = arith.constant 0 : index
    %c0_1 = arith.constant 0 : index
    %0 = vector.load %arg2[%c0, %c0_0, %c0_1] : memref<1x32x128xf32, #tpu.memory_space<vmem>>, vector<1x32x128xf32>
    %1 = vector.shape_cast %0 : vector<1x32x128xf32> to vector<32x128xf32>
    %c0_2 = arith.constant 0 : index
    %c0_3 = arith.constant 0 : index
    %2 = vector.load %arg3[%c0_2, %c0_3] : memref<1x128xf32, #tpu.memory_space<vmem>>, vector<1x128xf32>
    %c0_4 = arith.constant 0 : index
    %c0_5 = arith.constant 0 : index
    %3 = vector.load %arg4[%c0_4, %c0_5] : memref<1x128xf32, #tpu.memory_space<vmem>>, vector<1x128xf32>
    %cst = arith.constant dense<0.000000e+00> : vector<32xf32>
    %4 = vector.multi_reduction <add>, %1, %cst [1] : vector<32x128xf32> to vector<32xf32>
    %5 = vector.shape_cast %4 : vector<32xf32> to vector<32x1xf32>
    %cst_6 = arith.constant 1.280000e+02 : f32
    %6 = vector.broadcast %cst_6 : f32 to vector<32x1xf32>
    %7 = arith.divf %5, %6 : vector<32x1xf32>
    %8 = vector.broadcast %7 : vector<32x1xf32> to vector<32x128xf32>
    %9 = arith.subf %1, %8 : vector<32x128xf32>
    %10 = arith.mulf %9, %9 : vector<32x128xf32>
    %cst_7 = arith.constant dense<0.000000e+00> : vector<32xf32>
    %11 = vector.multi_reduction <add>, %10, %cst_7 [1] : vector<32x128xf32> to vector<32xf32>
    %12 = vector.shape_cast %11 : vector<32xf32> to vector<32x1xf32>
    %cst_8 = arith.constant 1.280000e+02 : f32
    %13 = vector.broadcast %cst_8 : f32 to vector<32x1xf32>
    %14 = arith.divf %12, %13 : vector<32x1xf32>
    %15 = vector.broadcast %7 : vector<32x1xf32> to vector<32x128xf32>
    %16 = arith.subf %1, %15 : vector<32x128xf32>
    %cst_9 = arith.constant 9.99999974E-6 : f32
    %17 = vector.broadcast %cst_9 : f32 to vector<32x1xf32>
    %18 = arith.addf %14, %17 : vector<32x1xf32>
    %19 = math.rsqrt %18 : vector<32x1xf32>
    %20 = vector.broadcast %19 : vector<32x1xf32> to vector<32x128xf32>
    %21 = arith.mulf %16, %20 : vector<32x128xf32>
    %22 = vector.broadcast %2 : vector<1x128xf32> to vector<32x128xf32>
    %23 = arith.mulf %21, %22 : vector<32x128xf32>
    %24 = vector.broadcast %3 : vector<1x128xf32> to vector<32x128xf32>
    %25 = arith.addf %23, %24 : vector<32x128xf32>
    %26 = arith.truncf %25 : vector<32x128xf32> to vector<32x128xbf16>
    %c0_10 = arith.constant 0 : index
    %c0_11 = arith.constant 0 : index
    %27 = vector.load %arg5[%c0_10, %c0_11] : memref<128x256xbf16, #tpu.memory_space<vmem>>, vector<128x256xbf16>
    %cst_12 = arith.constant dense<0.000000e+00> : vector<32x256xf32>
    %28 = tpu.matmul %26, %27, %cst_12 {dimension_numbers = #tpu.dot_dimension_numbers<[1], [0], [0], [1], [0, 0, 1, 1], [], []>} : vector<32x128xbf16>, vector<128x256xbf16>, vector<32x256xf32> -> vector<32x256xf32>
    %c0_13 = arith.constant 0 : index
    %c0_14 = arith.constant 0 : index
    %29 = vector.load %arg6[%c0_13, %c0_14] : memref<1x256xf32, #tpu.memory_space<vmem>>, vector<1x256xf32>
    %30 = vector.broadcast %29 : vector<1x256xf32> to vector<32x256xf32>
    %31 = arith.addf %28, %30 : vector<32x256xf32>
    %32 = vector.extract_strided_slice %31 {offsets = [0, 0], sizes = [32, 32], strides = [1, 1]} : vector<32x256xf32> to vector<32x32xf32>
    %33 = arith.truncf %32 : vector<32x32xf32> to vector<32x32xbf16>
    %c0_15 = arith.constant 0 : index
    %c0_16 = arith.constant 0 : index
    %c0_17 = arith.constant 0 : index
    %c0_18 = arith.constant 0 : index
    %34 = vector.load %arg7[%c0_15, %c0_16, %c0_17, %c0_18] : memref<1x4x32x32xbf16, #tpu.memory_space<vmem>>, vector<1x1x32x32xbf16>
    %35 = vector.shape_cast %34 : vector<1x1x32x32xbf16> to vector<32x32xbf16>
    %36 = vector.shape_cast %33 : vector<32x32xbf16> to vector<1x1x32x32xbf16>
    tpu.vector_store %arg7[%c0_15, %c0_16, %c0_17, %c0_18], %36 {strides = array<i32>} : memref<1x4x32x32xbf16, #tpu.memory_space<vmem>>, vector<1x1x32x32xbf16>,
    %37 = vector.extract_strided_slice %31 {offsets = [0, 128], sizes = [32, 32], strides = [1, 1]} : vector<32x256xf32> to vector<32x32xf32>
    %38 = arith.truncf %37 : vector<32x32xf32> to vector<32x32xbf16>
    %c0_19 = arith.constant 0 : index
    %c0_20 = arith.constant 0 : index
    %c0_21 = arith.constant 0 : index
    %c0_22 = arith.constant 0 : index
    %39 = vector.load %arg8[%c0_19, %c0_20, %c0_21, %c0_22] : memref<1x4x32x32xbf16, #tpu.memory_space<vmem>>, vector<1x1x32x32xbf16>
    %40 = vector.shape_cast %39 : vector<1x1x32x32xbf16> to vector<32x32xbf16>
    %41 = vector.shape_cast %38 : vector<32x32xbf16> to vector<1x1x32x32xbf16>
    tpu.vector_store %arg8[%c0_19, %c0_20, %c0_21, %c0_22], %41 {strides = array<i32>} : memref<1x4x32x32xbf16, #tpu.memory_space<vmem>>, vector<1x1x32x32xbf16>,
    %42 = vector.extract_strided_slice %31 {offsets = [0, 32], sizes = [32, 32], strides = [1, 1]} : vector<32x256xf32> to vector<32x32xf32>
    %43 = arith.truncf %42 : vector<32x32xf32> to vector<32x32xbf16>
    %c0_23 = arith.constant 0 : index
    %c1 = arith.constant 1 : index
    %c0_24 = arith.constant 0 : index
    %c0_25 = arith.constant 0 : index
    %44 = vector.load %arg7[%c0_23, %c1, %c0_24, %c0_25] : memref<1x4x32x32xbf16, #tpu.memory_space<vmem>>, vector<1x1x32x32xbf16>
    %45 = vector.shape_cast %44 : vector<1x1x32x32xbf16> to vector<32x32xbf16>
    %46 = vector.shape_cast %43 : vector<32x32xbf16> to vector<1x1x32x32xbf16>
    tpu.vector_store %arg7[%c0_23, %c1, %c0_24, %c0_25], %46 {strides = array<i32>} : memref<1x4x32x32xbf16, #tpu.memory_space<vmem>>, vector<1x1x32x32xbf16>,
    %47 = vector.extract_strided_slice %31 {offsets = [0, 160], sizes = [32, 32], strides = [1, 1]} : vector<32x256xf32> to vector<32x32xf32>
    %48 = arith.truncf %47 : vector<32x32xf32> to vector<32x32xbf16>
    %c0_26 = arith.constant 0 : index
    %c1_27 = arith.constant 1 : index
    %c0_28 = arith.constant 0 : index
    %c0_29 = arith.constant 0 : index
    %49 = vector.load %arg8[%c0_26, %c1_27, %c0_28, %c0_29] : memref<1x4x32x32xbf16, #tpu.memory_space<vmem>>, vector<1x1x32x32xbf16>
    %50 = vector.shape_cast %49 : vector<1x1x32x32xbf16> to vector<32x32xbf16>
    %51 = vector.shape_cast %48 : vector<32x32xbf16> to vector<1x1x32x32xbf16>
    tpu.vector_store %arg8[%c0_26, %c1_27, %c0_28, %c0_29], %51 {strides = array<i32>} : memref<1x4x32x32xbf16, #tpu.memory_space<vmem>>, vector<1x1x32x32xbf16>,
    %52 = vector.extract_strided_slice %31 {offsets = [0, 64], sizes = [32, 32], strides = [1, 1]} : vector<32x256xf32> to vector<32x32xf32>
    %53 = arith.truncf %52 : vector<32x32xf32> to vector<32x32xbf16>
    %c0_30 = arith.constant 0 : index
    %c2 = arith.constant 2 : index
    %c0_31 = arith.constant 0 : index
    %c0_32 = arith.constant 0 : index
    %54 = vector.load %arg7[%c0_30, %c2, %c0_31, %c0_32] : memref<1x4x32x32xbf16, #tpu.memory_space<vmem>>, vector<1x1x32x32xbf16>
    %55 = vector.shape_cast %54 : vector<1x1x32x32xbf16> to vector<32x32xbf16>
    %56 = vector.shape_cast %53 : vector<32x32xbf16> to vector<1x1x32x32xbf16>
    tpu.vector_store %arg7[%c0_30, %c2, %c0_31, %c0_32], %56 {strides = array<i32>} : memref<1x4x32x32xbf16, #tpu.memory_space<vmem>>, vector<1x1x32x32xbf16>,
    %57 = vector.extract_strided_slice %31 {offsets = [0, 192], sizes = [32, 32], strides = [1, 1]} : vector<32x256xf32> to vector<32x32xf32>
    %58 = arith.truncf %57 : vector<32x32xf32> to vector<32x32xbf16>
    %c0_33 = arith.constant 0 : index
    %c2_34 = arith.constant 2 : index
    %c0_35 = arith.constant 0 : index
    %c0_36 = arith.constant 0 : index
    %59 = vector.load %arg8[%c0_33, %c2_34, %c0_35, %c0_36] : memref<1x4x32x32xbf16, #tpu.memory_space<vmem>>, vector<1x1x32x32xbf16>
    %60 = vector.shape_cast %59 : vector<1x1x32x32xbf16> to vector<32x32xbf16>
    %61 = vector.shape_cast %58 : vector<32x32xbf16> to vector<1x1x32x32xbf16>
    tpu.vector_store %arg8[%c0_33, %c2_34, %c0_35, %c0_36], %61 {strides = array<i32>} : memref<1x4x32x32xbf16, #tpu.memory_space<vmem>>, vector<1x1x32x32xbf16>,
    %62 = vector.extract_strided_slice %31 {offsets = [0, 96], sizes = [32, 32], strides = [1, 1]} : vector<32x256xf32> to vector<32x32xf32>
    %63 = arith.truncf %62 : vector<32x32xf32> to vector<32x32xbf16>
    %c0_37 = arith.constant 0 : index
    %c3 = arith.constant 3 : index
    %c0_38 = arith.constant 0 : index
    %c0_39 = arith.constant 0 : index
    %64 = vector.load %arg7[%c0_37, %c3, %c0_38, %c0_39] : memref<1x4x32x32xbf16, #tpu.memory_space<vmem>>, vector<1x1x32x32xbf16>
    %65 = vector.shape_cast %64 : vector<1x1x32x32xbf16> to vector<32x32xbf16>
    %66 = vector.shape_cast %63 : vector<32x32xbf16> to vector<1x1x32x32xbf16>
    tpu.vector_store %arg7[%c0_37, %c3, %c0_38, %c0_39], %66 {strides = array<i32>} : memref<1x4x32x32xbf16, #tpu.memory_space<vmem>>, vector<1x1x32x32xbf16>,
    %67 = vector.extract_strided_slice %31 {offsets = [0, 224], sizes = [32, 32], strides = [1, 1]} : vector<32x256xf32> to vector<32x32xf32>
    %68 = arith.truncf %67 : vector<32x32xf32> to vector<32x32xbf16>
    %c0_40 = arith.constant 0 : index
    %c3_41 = arith.constant 3 : index
    %c0_42 = arith.constant 0 : index
    %c0_43 = arith.constant 0 : index
    %69 = vector.load %arg8[%c0_40, %c3_41, %c0_42, %c0_43] : memref<1x4x32x32xbf16, #tpu.memory_space<vmem>>, vector<1x1x32x32xbf16>
    %70 = vector.shape_cast %69 : vector<1x1x32x32xbf16> to vector<32x32xbf16>
    %71 = vector.shape_cast %68 : vector<32x32xbf16> to vector<1x1x32x32xbf16>
    tpu.vector_store %arg8[%c0_40, %c3_41, %c0_42, %c0_43], %71 {strides = array<i32>} : memref<1x4x32x32xbf16, #tpu.memory_space<vmem>>, vector<1x1x32x32xbf16>,
    return
  }
  func.func @transform_0(%arg0: i32, %arg1: i32) -> (i32, i32, i32) {
    %c0_i32 = arith.constant 0 : i32
    %c0_i32_0 = arith.constant 0 : i32
    return %arg0, %arg1, %c0_i32 : i32, i32, i32
  }
  func.func @transform_1(%arg0: i32, %arg1: i32) -> (i32, i32) {
    %c0_i32 = arith.constant 0 : i32
    %c0_i32_0 = arith.constant 0 : i32
    %c0_i32_1 = arith.constant 0 : i32
    return %c0_i32, %c0_i32_0 : i32, i32
  }
  func.func @transform_2(%arg0: i32, %arg1: i32) -> (i32, i32) {
    %c0_i32 = arith.constant 0 : i32
    %c0_i32_0 = arith.constant 0 : i32
    %c0_i32_1 = arith.constant 0 : i32
    return %c0_i32, %c0_i32_0 : i32, i32
  }
  func.func @transform_3(%arg0: i32, %arg1: i32) -> (i32, i32) {
    %c0_i32 = arith.constant 0 : i32
    %c0_i32_0 = arith.constant 0 : i32
    %c0_i32_1 = arith.constant 0 : i32
    return %c0_i32, %c0_i32_0 : i32, i32
  }
  func.func @transform_4(%arg0: i32, %arg1: i32) -> (i32, i32) {
    %c0_i32 = arith.constant 0 : i32
    %c0_i32_0 = arith.constant 0 : i32
    %c0_i32_1 = arith.constant 0 : i32
    return %c0_i32, %c0_i32_0 : i32, i32
  }
  func.func @transform_5(%arg0: i32, %arg1: i32) -> (i32, i32, i32, i32) {
    %c0_i32 = arith.constant 0 : i32
    %c0_i32_0 = arith.constant 0 : i32
    %c0_i32_1 = arith.constant 0 : i32
    return %arg0, %c0_i32, %arg1, %c0_i32_0 : i32, i32, i32, i32
  }
  func.func @transform_6(%arg0: i32, %arg1: i32) -> (i32, i32, i32, i32) {
    %c0_i32 = arith.constant 0 : i32
    %c0_i32_0 = arith.constant 0 : i32
    %c0_i32_1 = arith.constant 0 : i32
    return %arg0, %c0_i32, %arg1, %c0_i32_0 : i32, i32, i32, i32
  }
}

module attributes {stable_mosaic.version = 11 : i64} {
  func.func @mlp_kernel(%arg0: i32, %arg1: i32, %arg2: memref<1x32x128xf32, #tpu.memory_space<vmem>>, %arg3: memref<1x128xf32, #tpu.memory_space<vmem>>, %arg4: memref<1x128xf32, #tpu.memory_space<vmem>>, %arg5: memref<128x512xbf16, #tpu.memory_space<vmem>>, %arg6: memref<1x512xf32, #tpu.memory_space<vmem>>, %arg7: memref<512x128xbf16, #tpu.memory_space<vmem>>, %arg8: memref<1x128xf32, #tpu.memory_space<vmem>>, %arg9: memref<1x32x128xf32, #tpu.memory_space<vmem>>) attributes {dimension_semantics = [#tpu.dimension_semantics<parallel>, #tpu.dimension_semantics<parallel>], iteration_bounds = array<i64: 4, 1>, scalar_prefetch = 0 : i64, scratch_operands = 0 : i64, tpu.core_type = #tpu.core_type<tc>, window_params = [{transform_indices = @transform_0, window_bounds = array<i64: 1, 32, 128>}, {pipeline_mode = #tpu.pipeline_mode<synchronous>, transform_indices = @transform_1, window_bounds = array<i64: 1, 128>}, {pipeline_mode = #tpu.pipeline_mode<synchronous>, transform_indices = @transform_2, window_bounds = array<i64: 1, 128>}, {pipeline_mode = #tpu.pipeline_mode<synchronous>, transform_indices = @transform_3, window_bounds = array<i64: 128, 512>}, {pipeline_mode = #tpu.pipeline_mode<synchronous>, transform_indices = @transform_4, window_bounds = array<i64: 1, 512>}, {pipeline_mode = #tpu.pipeline_mode<synchronous>, transform_indices = @transform_5, window_bounds = array<i64: 512, 128>}, {pipeline_mode = #tpu.pipeline_mode<synchronous>, transform_indices = @transform_6, window_bounds = array<i64: 1, 128>}, {transform_indices = @transform_7, window_bounds = array<i64: 1, 32, 128>}]} {
    %c0 = arith.constant 0 : index
    %c0_0 = arith.constant 0 : index
    %c0_1 = arith.constant 0 : index
    %0 = vector.load %arg2[%c0, %c0_0, %c0_1] : memref<1x32x128xf32, #tpu.memory_space<vmem>>, vector<1x32x128xf32>
    %1 = vector.shape_cast %0 : vector<1x32x128xf32> to vector<32x128xf32>
    %c0_2 = arith.constant 0 : index
    %c0_3 = arith.constant 0 : index
    %2 = vector.load %arg3[%c0_2, %c0_3] : memref<1x128xf32, #tpu.memory_space<vmem>>, vector<1x128xf32>
    %c0_4 = arith.constant 0 : index
    %c0_5 = arith.constant 0 : index
    %3 = vector.load %arg4[%c0_4, %c0_5] : memref<1x128xf32, #tpu.memory_space<vmem>>, vector<1x128xf32>
    %cst = arith.constant dense<0.000000e+00> : vector<32xf32>
    %4 = vector.multi_reduction <add>, %1, %cst [1] : vector<32x128xf32> to vector<32xf32>
    %5 = vector.shape_cast %4 : vector<32xf32> to vector<32x1xf32>
    %cst_6 = arith.constant 1.280000e+02 : f32
    %6 = vector.broadcast %cst_6 : f32 to vector<32x1xf32>
    %7 = arith.divf %5, %6 : vector<32x1xf32>
    %8 = vector.broadcast %7 : vector<32x1xf32> to vector<32x128xf32>
    %9 = arith.subf %1, %8 : vector<32x128xf32>
    %10 = arith.mulf %9, %9 : vector<32x128xf32>
    %cst_7 = arith.constant dense<0.000000e+00> : vector<32xf32>
    %11 = vector.multi_reduction <add>, %10, %cst_7 [1] : vector<32x128xf32> to vector<32xf32>
    %12 = vector.shape_cast %11 : vector<32xf32> to vector<32x1xf32>
    %cst_8 = arith.constant 1.280000e+02 : f32
    %13 = vector.broadcast %cst_8 : f32 to vector<32x1xf32>
    %14 = arith.divf %12, %13 : vector<32x1xf32>
    %15 = vector.broadcast %7 : vector<32x1xf32> to vector<32x128xf32>
    %16 = arith.subf %1, %15 : vector<32x128xf32>
    %cst_9 = arith.constant 9.99999974E-6 : f32
    %17 = vector.broadcast %cst_9 : f32 to vector<32x1xf32>
    %18 = arith.addf %14, %17 : vector<32x1xf32>
    %19 = math.rsqrt %18 : vector<32x1xf32>
    %20 = vector.broadcast %19 : vector<32x1xf32> to vector<32x128xf32>
    %21 = arith.mulf %16, %20 : vector<32x128xf32>
    %22 = vector.broadcast %2 : vector<1x128xf32> to vector<32x128xf32>
    %23 = arith.mulf %21, %22 : vector<32x128xf32>
    %24 = vector.broadcast %3 : vector<1x128xf32> to vector<32x128xf32>
    %25 = arith.addf %23, %24 : vector<32x128xf32>
    %26 = arith.truncf %25 : vector<32x128xf32> to vector<32x128xbf16>
    %c0_10 = arith.constant 0 : index
    %c0_11 = arith.constant 0 : index
    %27 = vector.load %arg5[%c0_10, %c0_11] : memref<128x512xbf16, #tpu.memory_space<vmem>>, vector<128x512xbf16>
    %cst_12 = arith.constant dense<0.000000e+00> : vector<32x512xf32>
    %28 = tpu.matmul %26, %27, %cst_12 {dimension_numbers = #tpu.dot_dimension_numbers<[1], [0], [0], [1], [0, 0, 1, 1], [], []>} : vector<32x128xbf16>, vector<128x512xbf16>, vector<32x512xf32> -> vector<32x512xf32>
    %c0_13 = arith.constant 0 : index
    %c0_14 = arith.constant 0 : index
    %29 = vector.load %arg6[%c0_13, %c0_14] : memref<1x512xf32, #tpu.memory_space<vmem>>, vector<1x512xf32>
    %30 = vector.broadcast %29 : vector<1x512xf32> to vector<32x512xf32>
    %31 = arith.addf %28, %30 : vector<32x512xf32>
    %cst_15 = arith.constant 5.000000e-01 : f32
    %32 = vector.broadcast %cst_15 : f32 to vector<32x512xf32>
    %33 = arith.mulf %32, %31 : vector<32x512xf32>
    %cst_16 = arith.constant 4.471500e-02 : f32
    %34 = vector.broadcast %cst_16 : f32 to vector<32x512xf32>
    %35 = arith.mulf %34, %31 : vector<32x512xf32>
    %36 = arith.mulf %35, %31 : vector<32x512xf32>
    %37 = arith.mulf %36, %31 : vector<32x512xf32>
    %38 = arith.addf %31, %37 : vector<32x512xf32>
    %cst_17 = arith.constant 0.797884583 : f32
    %39 = vector.broadcast %cst_17 : f32 to vector<32x512xf32>
    %40 = arith.mulf %39, %38 : vector<32x512xf32>
    %41 = math.tanh %40 : vector<32x512xf32>
    %cst_18 = arith.constant 1.000000e+00 : f32
    %42 = vector.broadcast %cst_18 : f32 to vector<32x512xf32>
    %43 = arith.addf %42, %41 : vector<32x512xf32>
    %44 = arith.mulf %33, %43 : vector<32x512xf32>
    %45 = arith.truncf %44 : vector<32x512xf32> to vector<32x512xbf16>
    %c0_19 = arith.constant 0 : index
    %c0_20 = arith.constant 0 : index
    %46 = vector.load %arg7[%c0_19, %c0_20] : memref<512x128xbf16, #tpu.memory_space<vmem>>, vector<512x128xbf16>
    %cst_21 = arith.constant dense<0.000000e+00> : vector<32x128xf32>
    %47 = tpu.matmul %45, %46, %cst_21 {dimension_numbers = #tpu.dot_dimension_numbers<[1], [0], [0], [1], [0, 0, 1, 1], [], []>} : vector<32x512xbf16>, vector<512x128xbf16>, vector<32x128xf32> -> vector<32x128xf32>
    %c0_22 = arith.constant 0 : index
    %c0_23 = arith.constant 0 : index
    %48 = vector.load %arg8[%c0_22, %c0_23] : memref<1x128xf32, #tpu.memory_space<vmem>>, vector<1x128xf32>
    %49 = vector.broadcast %48 : vector<1x128xf32> to vector<32x128xf32>
    %50 = arith.addf %47, %49 : vector<32x128xf32>
    %51 = arith.addf %1, %50 : vector<32x128xf32>
    %c0_24 = arith.constant 0 : index
    %c0_25 = arith.constant 0 : index
    %c0_26 = arith.constant 0 : index
    %52 = vector.load %arg9[%c0_24, %c0_25, %c0_26] : memref<1x32x128xf32, #tpu.memory_space<vmem>>, vector<1x32x128xf32>
    %53 = vector.shape_cast %52 : vector<1x32x128xf32> to vector<32x128xf32>
    %54 = vector.shape_cast %51 : vector<32x128xf32> to vector<1x32x128xf32>
    tpu.vector_store %arg9[%c0_24, %c0_25, %c0_26], %54 {strides = array<i32>} : memref<1x32x128xf32, #tpu.memory_space<vmem>>, vector<1x32x128xf32>,
    return
  }
  func.func @transform_0(%arg0: i32, %arg1: i32) -> (i32, i32, i32) {
    %c0_i32 = arith.constant 0 : i32
    %c0_i32_0 = arith.constant 0 : i32
    return %arg0, %arg1, %c0_i32 : i32, i32, i32
  }
  func.func @transform_1(%arg0: i32, %arg1: i32) -> (i32, i32) {
    %c0_i32 = arith.constant 0 : i32
    %c0_i32_0 = arith.constant 0 : i32
    %c0_i32_1 = arith.constant 0 : i32
    return %c0_i32, %c0_i32_0 : i32, i32
  }
  func.func @transform_2(%arg0: i32, %arg1: i32) -> (i32, i32) {
    %c0_i32 = arith.constant 0 : i32
    %c0_i32_0 = arith.constant 0 : i32
    %c0_i32_1 = arith.constant 0 : i32
    return %c0_i32, %c0_i32_0 : i32, i32
  }
  func.func @transform_3(%arg0: i32, %arg1: i32) -> (i32, i32) {
    %c0_i32 = arith.constant 0 : i32
    %c0_i32_0 = arith.constant 0 : i32
    %c0_i32_1 = arith.constant 0 : i32
    return %c0_i32, %c0_i32_0 : i32, i32
  }
  func.func @transform_4(%arg0: i32, %arg1: i32) -> (i32, i32) {
    %c0_i32 = arith.constant 0 : i32
    %c0_i32_0 = arith.constant 0 : i32
    %c0_i32_1 = arith.constant 0 : i32
    return %c0_i32, %c0_i32_0 : i32, i32
  }
  func.func @transform_5(%arg0: i32, %arg1: i32) -> (i32, i32) {
    %c0_i32 = arith.constant 0 : i32
    %c0_i32_0 = arith.constant 0 : i32
    %c0_i32_1 = arith.constant 0 : i32
    return %c0_i32, %c0_i32_0 : i32, i32
  }
  func.func @transform_6(%arg0: i32, %arg1: i32) -> (i32, i32) {
    %c0_i32 = arith.constant 0 : i32
    %c0_i32_0 = arith.constant 0 : i32
    %c0_i32_1 = arith.constant 0 : i32
    return %c0_i32, %c0_i32_0 : i32, i32
  }
  func.func @transform_7(%arg0: i32, %arg1: i32) -> (i32, i32, i32) {
    %c0_i32 = arith.constant 0 : i32
    %c0_i32_0 = arith.constant 0 : i32
    return %arg0, %arg1, %c0_i32 : i32, i32, i32
  }
}

module attributes {stable_mosaic.version = 11 : i64} {
  func.func @attn_kernel(%arg0: i32, %arg1: i32, %arg2: i32, %arg3: memref<1x32x128xf32, #tpu.memory_space<vmem>>, %arg4: memref<1x128xf32, #tpu.memory_space<vmem>>, %arg5: memref<1x128xf32, #tpu.memory_space<vmem>>, %arg6: memref<128x128xbf16, #tpu.memory_space<vmem>>, %arg7: memref<1x128xf32, #tpu.memory_space<vmem>>, %arg8: memref<1x4x32x32xbf16, #tpu.memory_space<vmem>>, %arg9: memref<1x4x32x32xbf16, #tpu.memory_space<vmem>>, %arg10: memref<128x128xbf16, #tpu.memory_space<vmem>>, %arg11: memref<1x128xf32, #tpu.memory_space<vmem>>, %arg12: memref<1x32x128xf32, #tpu.memory_space<vmem>>, %arg13: memref<4x32x32xbf16, #tpu.memory_space<vmem>>, %arg14: memref<4x32x1xf32, #tpu.memory_space<vmem>>, %arg15: memref<4x32x1xf32, #tpu.memory_space<vmem>>, %arg16: memref<4x32x32xf32, #tpu.memory_space<vmem>>, %arg17: memref<32x128xf32, #tpu.memory_space<vmem>>) attributes {dimension_semantics = [#tpu.dimension_semantics<parallel>, #tpu.dimension_semantics<parallel>, #tpu.dimension_semantics<arbitrary>], iteration_bounds = array<i64: 4, 1, 1>, scalar_prefetch = 0 : i64, scratch_operands = 5 : i64, tpu.core_type = #tpu.core_type<tc>, window_params = [{transform_indices = @transform_0, window_bounds = array<i64: 1, 32, 128>}, {pipeline_mode = #tpu.pipeline_mode<synchronous>, transform_indices = @transform_1, window_bounds = array<i64: 1, 128>}, {pipeline_mode = #tpu.pipeline_mode<synchronous>, transform_indices = @transform_2, window_bounds = array<i64: 1, 128>}, {pipeline_mode = #tpu.pipeline_mode<synchronous>, transform_indices = @transform_3, window_bounds = array<i64: 128, 128>}, {pipeline_mode = #tpu.pipeline_mode<synchronous>, transform_indices = @transform_4, window_bounds = array<i64: 1, 128>}, {transform_indices = @transform_5, window_bounds = array<i64: 1, 4, 32, 32>}, {transform_indices = @transform_6, window_bounds = array<i64: 1, 4, 32, 32>}, {pipeline_mode = #tpu.pipeline_mode<synchronous>, transform_indices = @transform_7, window_bounds = array<i64: 128, 128>}, {pipeline_mode = #tpu.pipeline_mode<synchronous>, transform_indices = @transform_8, window_bounds = array<i64: 1, 128>}, {transform_indices = @transform_9, window_bounds = array<i64: 1, 32, 128>}]} {
    %c0_i32 = arith.constant 0 : i32
    %0 = arith.cmpi eq, %arg2, %c0_i32 : i32
    %1 = arith.extui %0 : i1 to i32
    %c0_i32_0 = arith.constant 0 : i32
    %2 = arith.cmpi ne, %1, %c0_i32_0 : i32
    scf.if %2 {
      %c0 = arith.constant 0 : index
      %c0_3 = arith.constant 0 : index
      %c0_4 = arith.constant 0 : index
      %9 = vector.load %arg3[%c0, %c0_3, %c0_4] : memref<1x32x128xf32, #tpu.memory_space<vmem>>, vector<1x32x128xf32>
      %10 = vector.shape_cast %9 : vector<1x32x128xf32> to vector<32x128xf32>
      %c0_5 = arith.constant 0 : index
      %c0_6 = arith.constant 0 : index
      %11 = vector.load %arg4[%c0_5, %c0_6] : memref<1x128xf32, #tpu.memory_space<vmem>>, vector<1x128xf32>
      %c0_7 = arith.constant 0 : index
      %c0_8 = arith.constant 0 : index
      %12 = vector.load %arg5[%c0_7, %c0_8] : memref<1x128xf32, #tpu.memory_space<vmem>>, vector<1x128xf32>
      %cst = arith.constant dense<0.000000e+00> : vector<32xf32>
      %13 = vector.multi_reduction <add>, %10, %cst [1] : vector<32x128xf32> to vector<32xf32>
      %14 = vector.shape_cast %13 : vector<32xf32> to vector<32x1xf32>
      %cst_9 = arith.constant 1.280000e+02 : f32
      %15 = vector.broadcast %cst_9 : f32 to vector<32x1xf32>
      %16 = arith.divf %14, %15 : vector<32x1xf32>
      %17 = vector.broadcast %16 : vector<32x1xf32> to vector<32x128xf32>
      %18 = arith.subf %10, %17 : vector<32x128xf32>
      %19 = arith.mulf %18, %18 : vector<32x128xf32>
      %cst_10 = arith.constant dense<0.000000e+00> : vector<32xf32>
      %20 = vector.multi_reduction <add>, %19, %cst_10 [1] : vector<32x128xf32> to vector<32xf32>
      %21 = vector.shape_cast %20 : vector<32xf32> to vector<32x1xf32>
      %cst_11 = arith.constant 1.280000e+02 : f32
      %22 = vector.broadcast %cst_11 : f32 to vector<32x1xf32>
      %23 = arith.divf %21, %22 : vector<32x1xf32>
      %24 = vector.broadcast %16 : vector<32x1xf32> to vector<32x128xf32>
      %25 = arith.subf %10, %24 : vector<32x128xf32>
      %cst_12 = arith.constant 9.99999974E-6 : f32
      %26 = vector.broadcast %cst_12 : f32 to vector<32x1xf32>
      %27 = arith.addf %23, %26 : vector<32x1xf32>
      %28 = math.rsqrt %27 : vector<32x1xf32>
      %29 = vector.broadcast %28 : vector<32x1xf32> to vector<32x128xf32>
      %30 = arith.mulf %25, %29 : vector<32x128xf32>
      %31 = vector.broadcast %11 : vector<1x128xf32> to vector<32x128xf32>
      %32 = arith.mulf %30, %31 : vector<32x128xf32>
      %33 = vector.broadcast %12 : vector<1x128xf32> to vector<32x128xf32>
      %34 = arith.addf %32, %33 : vector<32x128xf32>
      %35 = arith.truncf %34 : vector<32x128xf32> to vector<32x128xbf16>
      %c0_13 = arith.constant 0 : index
      %c0_14 = arith.constant 0 : index
      %36 = vector.load %arg6[%c0_13, %c0_14] : memref<128x128xbf16, #tpu.memory_space<vmem>>, vector<128x128xbf16>
      %cst_15 = arith.constant dense<0.000000e+00> : vector<32x128xf32>
      %37 = tpu.matmul %35, %36, %cst_15 {dimension_numbers = #tpu.dot_dimension_numbers<[1], [0], [0], [1], [0, 0, 1, 1], [], []>} : vector<32x128xbf16>, vector<128x128xbf16>, vector<32x128xf32> -> vector<32x128xf32>
      %c0_16 = arith.constant 0 : index
      %c0_17 = arith.constant 0 : index
      %38 = vector.load %arg7[%c0_16, %c0_17] : memref<1x128xf32, #tpu.memory_space<vmem>>, vector<1x128xf32>
      %39 = vector.broadcast %38 : vector<1x128xf32> to vector<32x128xf32>
      %40 = arith.addf %37, %39 : vector<32x128xf32>
      %41 = vector.extract_strided_slice %40 {offsets = [0, 0], sizes = [32, 32], strides = [1, 1]} : vector<32x128xf32> to vector<32x32xf32>
      %42 = arith.truncf %41 : vector<32x32xf32> to vector<32x32xbf16>
      %c0_18 = arith.constant 0 : index
      %c0_19 = arith.constant 0 : index
      %c0_20 = arith.constant 0 : index
      %43 = vector.load %arg13[%c0_18, %c0_19, %c0_20] : memref<4x32x32xbf16, #tpu.memory_space<vmem>>, vector<1x32x32xbf16>
      %44 = vector.shape_cast %43 : vector<1x32x32xbf16> to vector<32x32xbf16>
      %45 = vector.shape_cast %42 : vector<32x32xbf16> to vector<1x32x32xbf16>
      tpu.vector_store %arg13[%c0_18, %c0_19, %c0_20], %45 {strides = array<i32>} : memref<4x32x32xbf16, #tpu.memory_space<vmem>>, vector<1x32x32xbf16>,
      %46 = vector.extract_strided_slice %40 {offsets = [0, 32], sizes = [32, 32], strides = [1, 1]} : vector<32x128xf32> to vector<32x32xf32>
      %47 = arith.truncf %46 : vector<32x32xf32> to vector<32x32xbf16>
      %c1 = arith.constant 1 : index
      %c0_21 = arith.constant 0 : index
      %c0_22 = arith.constant 0 : index
      %48 = vector.load %arg13[%c1, %c0_21, %c0_22] : memref<4x32x32xbf16, #tpu.memory_space<vmem>>, vector<1x32x32xbf16>
      %49 = vector.shape_cast %48 : vector<1x32x32xbf16> to vector<32x32xbf16>
      %50 = vector.shape_cast %47 : vector<32x32xbf16> to vector<1x32x32xbf16>
      tpu.vector_store %arg13[%c1, %c0_21, %c0_22], %50 {strides = array<i32>} : memref<4x32x32xbf16, #tpu.memory_space<vmem>>, vector<1x32x32xbf16>,
      %51 = vector.extract_strided_slice %40 {offsets = [0, 64], sizes = [32, 32], strides = [1, 1]} : vector<32x128xf32> to vector<32x32xf32>
      %52 = arith.truncf %51 : vector<32x32xf32> to vector<32x32xbf16>
      %c2 = arith.constant 2 : index
      %c0_23 = arith.constant 0 : index
      %c0_24 = arith.constant 0 : index
      %53 = vector.load %arg13[%c2, %c0_23, %c0_24] : memref<4x32x32xbf16, #tpu.memory_space<vmem>>, vector<1x32x32xbf16>
      %54 = vector.shape_cast %53 : vector<1x32x32xbf16> to vector<32x32xbf16>
      %55 = vector.shape_cast %52 : vector<32x32xbf16> to vector<1x32x32xbf16>
      tpu.vector_store %arg13[%c2, %c0_23, %c0_24], %55 {strides = array<i32>} : memref<4x32x32xbf16, #tpu.memory_space<vmem>>, vector<1x32x32xbf16>,
      %56 = vector.extract_strided_slice %40 {offsets = [0, 96], sizes = [32, 32], strides = [1, 1]} : vector<32x128xf32> to vector<32x32xf32>
      %57 = arith.truncf %56 : vector<32x32xf32> to vector<32x32xbf16>
      %c3 = arith.constant 3 : index
      %c0_25 = arith.constant 0 : index
      %c0_26 = arith.constant 0 : index
      %58 = vector.load %arg13[%c3, %c0_25, %c0_26] : memref<4x32x32xbf16, #tpu.memory_space<vmem>>, vector<1x32x32xbf16>
      %59 = vector.shape_cast %58 : vector<1x32x32xbf16> to vector<32x32xbf16>
      %60 = vector.shape_cast %57 : vector<32x32xbf16> to vector<1x32x32xbf16>
      tpu.vector_store %arg13[%c3, %c0_25, %c0_26], %60 {strides = array<i32>} : memref<4x32x32xbf16, #tpu.memory_space<vmem>>, vector<1x32x32xbf16>,
      %cst_27 = arith.constant -1.000000e+30 : f32
      %61 = vector.broadcast %cst_27 : f32 to vector<4x32x1xf32>
      %c0_28 = arith.constant 0 : index
      %c0_29 = arith.constant 0 : index
      %c0_30 = arith.constant 0 : index
      %62 = vector.load %arg14[%c0_28, %c0_29, %c0_30] : memref<4x32x1xf32, #tpu.memory_space<vmem>>, vector<4x32x1xf32>
      tpu.vector_store %arg14[%c0_28, %c0_29, %c0_30], %61 {strides = array<i32>} : memref<4x32x1xf32, #tpu.memory_space<vmem>>, vector<4x32x1xf32>,
      %cst_31 = arith.constant 0.000000e+00 : f32
      %63 = vector.broadcast %cst_31 : f32 to vector<4x32x1xf32>
      %c0_32 = arith.constant 0 : index
      %c0_33 = arith.constant 0 : index
      %c0_34 = arith.constant 0 : index
      %64 = vector.load %arg15[%c0_32, %c0_33, %c0_34] : memref<4x32x1xf32, #tpu.memory_space<vmem>>, vector<4x32x1xf32>
      tpu.vector_store %arg15[%c0_32, %c0_33, %c0_34], %63 {strides = array<i32>} : memref<4x32x1xf32, #tpu.memory_space<vmem>>, vector<4x32x1xf32>,
      %cst_35 = arith.constant 0.000000e+00 : f32
      %65 = vector.broadcast %cst_35 : f32 to vector<4x32x32xf32>
      %c0_36 = arith.constant 0 : index
      %c0_37 = arith.constant 0 : index
      %c0_38 = arith.constant 0 : index
      %66 = vector.load %arg16[%c0_36, %c0_37, %c0_38] : memref<4x32x32xf32, #tpu.memory_space<vmem>>, vector<4x32x32xf32>
      tpu.vector_store %arg16[%c0_36, %c0_37, %c0_38], %65 {strides = array<i32>} : memref<4x32x32xf32, #tpu.memory_space<vmem>>, vector<4x32x32xf32>,
    } else {
    }
    %3 = arith.cmpi slt, %arg2, %arg1 : i32
    %4 = arith.extui %3 : i1 to i32
    %c0_i32_1 = arith.constant 0 : i32
    %5 = arith.cmpi ne, %4, %c0_i32_1 : i32
    scf.if %5 {
      %c0 = arith.constant 0 : index
      %c0_3 = arith.constant 0 : index
      %c0_4 = arith.constant 0 : index
      %9 = vector.load %arg13[%c0, %c0_3, %c0_4] : memref<4x32x32xbf16, #tpu.memory_space<vmem>>, vector<1x32x32xbf16>
      %10 = vector.shape_cast %9 : vector<1x32x32xbf16> to vector<32x32xbf16>
      %c0_5 = arith.constant 0 : index
      %c0_6 = arith.constant 0 : index
      %c0_7 = arith.constant 0 : index
      %c0_8 = arith.constant 0 : index
      %11 = vector.load %arg8[%c0_5, %c0_6, %c0_7, %c0_8] : memref<1x4x32x32xbf16, #tpu.memory_space<vmem>>, vector<1x1x32x32xbf16>
      %12 = vector.shape_cast %11 : vector<1x1x32x32xbf16> to vector<32x32xbf16>
      %cst = arith.constant dense<0.000000e+00> : vector<32x32xf32>
      %13 = tpu.matmul %10, %12, %cst {dimension_numbers = #tpu.dot_dimension_numbers<[1], [1], [0], [0], [0, 0, 1, 0], [], []>} : vector<32x32xbf16>, vector<32x32xbf16>, vector<32x32xf32> -> vector<32x32xf32>
      %c0_9 = arith.constant 0 : index
      %c0_10 = arith.constant 0 : index
      %c0_11 = arith.constant 0 : index
      %14 = vector.load %arg14[%c0_9, %c0_10, %c0_11] : memref<4x32x1xf32, #tpu.memory_space<vmem>>, vector<1x32x1xf32>
      %15 = vector.shape_cast %14 : vector<1x32x1xf32> to vector<32x1xf32>
      %cst_12 = arith.constant dense<0xFF800000> : vector<32xf32>
      %16 = vector.multi_reduction <maximumf>, %13, %cst_12 [1] : vector<32x32xf32> to vector<32xf32>
      %17 = vector.shape_cast %16 : vector<32xf32> to vector<32x1xf32>
      %18 = arith.maximumf %15, %17 : vector<32x1xf32>
      %19 = arith.subf %15, %18 : vector<32x1xf32>
      %20 = math.exp %19 : vector<32x1xf32>
      %21 = vector.broadcast %18 : vector<32x1xf32> to vector<32x32xf32>
      %22 = arith.subf %13, %21 : vector<32x32xf32>
      %23 = math.exp %22 : vector<32x32xf32>
      %c0_13 = arith.constant 0 : index
      %c0_14 = arith.constant 0 : index
      %c0_15 = arith.constant 0 : index
      %24 = vector.load %arg15[%c0_13, %c0_14, %c0_15] : memref<4x32x1xf32, #tpu.memory_space<vmem>>, vector<1x32x1xf32>
      %25 = vector.shape_cast %24 : vector<1x32x1xf32> to vector<32x1xf32>
      %26 = arith.mulf %20, %25 : vector<32x1xf32>
      %cst_16 = arith.constant dense<0.000000e+00> : vector<32xf32>
      %27 = vector.multi_reduction <add>, %23, %cst_16 [1] : vector<32x32xf32> to vector<32xf32>
      %28 = vector.shape_cast %27 : vector<32xf32> to vector<32x1xf32>
      %29 = arith.addf %26, %28 : vector<32x1xf32>
      %c0_17 = arith.constant 0 : index
      %c0_18 = arith.constant 0 : index
      %c0_19 = arith.constant 0 : index
      %30 = vector.load %arg15[%c0_17, %c0_18, %c0_19] : memref<4x32x1xf32, #tpu.memory_space<vmem>>, vector<1x32x1xf32>
      %31 = vector.shape_cast %30 : vector<1x32x1xf32> to vector<32x1xf32>
      %32 = vector.shape_cast %29 : vector<32x1xf32> to vector<1x32x1xf32>
      tpu.vector_store %arg15[%c0_17, %c0_18, %c0_19], %32 {strides = array<i32>} : memref<4x32x1xf32, #tpu.memory_space<vmem>>, vector<1x32x1xf32>,
      %c0_20 = arith.constant 0 : index
      %c0_21 = arith.constant 0 : index
      %c0_22 = arith.constant 0 : index
      %33 = vector.load %arg16[%c0_20, %c0_21, %c0_22] : memref<4x32x32xf32, #tpu.memory_space<vmem>>, vector<1x32x32xf32>
      %34 = vector.shape_cast %33 : vector<1x32x32xf32> to vector<32x32xf32>
      %35 = vector.broadcast %20 : vector<32x1xf32> to vector<32x32xf32>
      %36 = arith.mulf %35, %34 : vector<32x32xf32>
      %37 = arith.truncf %23 : vector<32x32xf32> to vector<32x32xbf16>
      %c0_23 = arith.constant 0 : index
      %c0_24 = arith.constant 0 : index
      %c0_25 = arith.constant 0 : index
      %c0_26 = arith.constant 0 : index
      %38 = vector.load %arg9[%c0_23, %c0_24, %c0_25, %c0_26] : memref<1x4x32x32xbf16, #tpu.memory_space<vmem>>, vector<1x1x32x32xbf16>
      %39 = vector.shape_cast %38 : vector<1x1x32x32xbf16> to vector<32x32xbf16>
      %cst_27 = arith.constant dense<0.000000e+00> : vector<32x32xf32>
      %40 = tpu.matmul %37, %39, %cst_27 {dimension_numbers = #tpu.dot_dimension_numbers<[1], [0], [0], [1], [0, 0, 1, 1], [], []>} : vector<32x32xbf16>, vector<32x32xbf16>, vector<32x32xf32> -> vector<32x32xf32>
      %41 = arith.addf %36, %40 : vector<32x32xf32>
      %c0_28 = arith.constant 0 : index
      %c0_29 = arith.constant 0 : index
      %c0_30 = arith.constant 0 : index
      %42 = vector.load %arg16[%c0_28, %c0_29, %c0_30] : memref<4x32x32xf32, #tpu.memory_space<vmem>>, vector<1x32x32xf32>
      %43 = vector.shape_cast %42 : vector<1x32x32xf32> to vector<32x32xf32>
      %44 = vector.shape_cast %41 : vector<32x32xf32> to vector<1x32x32xf32>
      tpu.vector_store %arg16[%c0_28, %c0_29, %c0_30], %44 {strides = array<i32>} : memref<4x32x32xf32, #tpu.memory_space<vmem>>, vector<1x32x32xf32>,
      %c0_31 = arith.constant 0 : index
      %c0_32 = arith.constant 0 : index
      %c0_33 = arith.constant 0 : index
      %45 = vector.load %arg14[%c0_31, %c0_32, %c0_33] : memref<4x32x1xf32, #tpu.memory_space<vmem>>, vector<1x32x1xf32>
      %46 = vector.shape_cast %45 : vector<1x32x1xf32> to vector<32x1xf32>
      %47 = vector.shape_cast %18 : vector<32x1xf32> to vector<1x32x1xf32>
      tpu.vector_store %arg14[%c0_31, %c0_32, %c0_33], %47 {strides = array<i32>} : memref<4x32x1xf32, #tpu.memory_space<vmem>>, vector<1x32x1xf32>,
      %c1 = arith.constant 1 : index
      %c0_34 = arith.constant 0 : index
      %c0_35 = arith.constant 0 : index
      %48 = vector.load %arg13[%c1, %c0_34, %c0_35] : memref<4x32x32xbf16, #tpu.memory_space<vmem>>, vector<1x32x32xbf16>
      %49 = vector.shape_cast %48 : vector<1x32x32xbf16> to vector<32x32xbf16>
      %c0_36 = arith.constant 0 : index
      %c1_37 = arith.constant 1 : index
      %c0_38 = arith.constant 0 : index
      %c0_39 = arith.constant 0 : index
      %50 = vector.load %arg8[%c0_36, %c1_37, %c0_38, %c0_39] : memref<1x4x32x32xbf16, #tpu.memory_space<vmem>>, vector<1x1x32x32xbf16>
      %51 = vector.shape_cast %50 : vector<1x1x32x32xbf16> to vector<32x32xbf16>
      %cst_40 = arith.constant dense<0.000000e+00> : vector<32x32xf32>
      %52 = tpu.matmul %49, %51, %cst_40 {dimension_numbers = #tpu.dot_dimension_numbers<[1], [1], [0], [0], [0, 0, 1, 0], [], []>} : vector<32x32xbf16>, vector<32x32xbf16>, vector<32x32xf32> -> vector<32x32xf32>
      %c1_41 = arith.constant 1 : index
      %c0_42 = arith.constant 0 : index
      %c0_43 = arith.constant 0 : index
      %53 = vector.load %arg14[%c1_41, %c0_42, %c0_43] : memref<4x32x1xf32, #tpu.memory_space<vmem>>, vector<1x32x1xf32>
      %54 = vector.shape_cast %53 : vector<1x32x1xf32> to vector<32x1xf32>
      %cst_44 = arith.constant dense<0xFF800000> : vector<32xf32>
      %55 = vector.multi_reduction <maximumf>, %52, %cst_44 [1] : vector<32x32xf32> to vector<32xf32>
      %56 = vector.shape_cast %55 : vector<32xf32> to vector<32x1xf32>
      %57 = arith.maximumf %54, %56 : vector<32x1xf32>
      %58 = arith.subf %54, %57 : vector<32x1xf32>
      %59 = math.exp %58 : vector<32x1xf32>
      %60 = vector.broadcast %57 : vector<32x1xf32> to vector<32x32xf32>
      %61 = arith.subf %52, %60 : vector<32x32xf32>
      %62 = math.exp %61 : vector<32x32xf32>
      %c1_45 = arith.constant 1 : index
      %c0_46 = arith.constant 0 : index
      %c0_47 = arith.constant 0 : index
      %63 = vector.load %arg15[%c1_45, %c0_46, %c0_47] : memref<4x32x1xf32, #tpu.memory_space<vmem>>, vector<1x32x1xf32>
      %64 = vector.shape_cast %63 : vector<1x32x1xf32> to vector<32x1xf32>
      %65 = arith.mulf %59, %64 : vector<32x1xf32>
      %cst_48 = arith.constant dense<0.000000e+00> : vector<32xf32>
      %66 = vector.multi_reduction <add>, %62, %cst_48 [1] : vector<32x32xf32> to vector<32xf32>
      %67 = vector.shape_cast %66 : vector<32xf32> to vector<32x1xf32>
      %68 = arith.addf %65, %67 : vector<32x1xf32>
      %c1_49 = arith.constant 1 : index
      %c0_50 = arith.constant 0 : index
      %c0_51 = arith.constant 0 : index
      %69 = vector.load %arg15[%c1_49, %c0_50, %c0_51] : memref<4x32x1xf32, #tpu.memory_space<vmem>>, vector<1x32x1xf32>
      %70 = vector.shape_cast %69 : vector<1x32x1xf32> to vector<32x1xf32>
      %71 = vector.shape_cast %68 : vector<32x1xf32> to vector<1x32x1xf32>
      tpu.vector_store %arg15[%c1_49, %c0_50, %c0_51], %71 {strides = array<i32>} : memref<4x32x1xf32, #tpu.memory_space<vmem>>, vector<1x32x1xf32>,
      %c1_52 = arith.constant 1 : index
      %c0_53 = arith.constant 0 : index
      %c0_54 = arith.constant 0 : index
      %72 = vector.load %arg16[%c1_52, %c0_53, %c0_54] : memref<4x32x32xf32, #tpu.memory_space<vmem>>, vector<1x32x32xf32>
      %73 = vector.shape_cast %72 : vector<1x32x32xf32> to vector<32x32xf32>
      %74 = vector.broadcast %59 : vector<32x1xf32> to vector<32x32xf32>
      %75 = arith.mulf %74, %73 : vector<32x32xf32>
      %76 = arith.truncf %62 : vector<32x32xf32> to vector<32x32xbf16>
      %c0_55 = arith.constant 0 : index
      %c1_56 = arith.constant 1 : index
      %c0_57 = arith.constant 0 : index
      %c0_58 = arith.constant 0 : index
      %77 = vector.load %arg9[%c0_55, %c1_56, %c0_57, %c0_58] : memref<1x4x32x32xbf16, #tpu.memory_space<vmem>>, vector<1x1x32x32xbf16>
      %78 = vector.shape_cast %77 : vector<1x1x32x32xbf16> to vector<32x32xbf16>
      %cst_59 = arith.constant dense<0.000000e+00> : vector<32x32xf32>
      %79 = tpu.matmul %76, %78, %cst_59 {dimension_numbers = #tpu.dot_dimension_numbers<[1], [0], [0], [1], [0, 0, 1, 1], [], []>} : vector<32x32xbf16>, vector<32x32xbf16>, vector<32x32xf32> -> vector<32x32xf32>
      %80 = arith.addf %75, %79 : vector<32x32xf32>
      %c1_60 = arith.constant 1 : index
      %c0_61 = arith.constant 0 : index
      %c0_62 = arith.constant 0 : index
      %81 = vector.load %arg16[%c1_60, %c0_61, %c0_62] : memref<4x32x32xf32, #tpu.memory_space<vmem>>, vector<1x32x32xf32>
      %82 = vector.shape_cast %81 : vector<1x32x32xf32> to vector<32x32xf32>
      %83 = vector.shape_cast %80 : vector<32x32xf32> to vector<1x32x32xf32>
      tpu.vector_store %arg16[%c1_60, %c0_61, %c0_62], %83 {strides = array<i32>} : memref<4x32x32xf32, #tpu.memory_space<vmem>>, vector<1x32x32xf32>,
      %c1_63 = arith.constant 1 : index
      %c0_64 = arith.constant 0 : index
      %c0_65 = arith.constant 0 : index
      %84 = vector.load %arg14[%c1_63, %c0_64, %c0_65] : memref<4x32x1xf32, #tpu.memory_space<vmem>>, vector<1x32x1xf32>
      %85 = vector.shape_cast %84 : vector<1x32x1xf32> to vector<32x1xf32>
      %86 = vector.shape_cast %57 : vector<32x1xf32> to vector<1x32x1xf32>
      tpu.vector_store %arg14[%c1_63, %c0_64, %c0_65], %86 {strides = array<i32>} : memref<4x32x1xf32, #tpu.memory_space<vmem>>, vector<1x32x1xf32>,
      %c2 = arith.constant 2 : index
      %c0_66 = arith.constant 0 : index
      %c0_67 = arith.constant 0 : index
      %87 = vector.load %arg13[%c2, %c0_66, %c0_67] : memref<4x32x32xbf16, #tpu.memory_space<vmem>>, vector<1x32x32xbf16>
      %88 = vector.shape_cast %87 : vector<1x32x32xbf16> to vector<32x32xbf16>
      %c0_68 = arith.constant 0 : index
      %c2_69 = arith.constant 2 : index
      %c0_70 = arith.constant 0 : index
      %c0_71 = arith.constant 0 : index
      %89 = vector.load %arg8[%c0_68, %c2_69, %c0_70, %c0_71] : memref<1x4x32x32xbf16, #tpu.memory_space<vmem>>, vector<1x1x32x32xbf16>
      %90 = vector.shape_cast %89 : vector<1x1x32x32xbf16> to vector<32x32xbf16>
      %cst_72 = arith.constant dense<0.000000e+00> : vector<32x32xf32>
      %91 = tpu.matmul %88, %90, %cst_72 {dimension_numbers = #tpu.dot_dimension_numbers<[1], [1], [0], [0], [0, 0, 1, 0], [], []>} : vector<32x32xbf16>, vector<32x32xbf16>, vector<32x32xf32> -> vector<32x32xf32>
      %c2_73 = arith.constant 2 : index
      %c0_74 = arith.constant 0 : index
      %c0_75 = arith.constant 0 : index
      %92 = vector.load %arg14[%c2_73, %c0_74, %c0_75] : memref<4x32x1xf32, #tpu.memory_space<vmem>>, vector<1x32x1xf32>
      %93 = vector.shape_cast %92 : vector<1x32x1xf32> to vector<32x1xf32>
      %cst_76 = arith.constant dense<0xFF800000> : vector<32xf32>
      %94 = vector.multi_reduction <maximumf>, %91, %cst_76 [1] : vector<32x32xf32> to vector<32xf32>
      %95 = vector.shape_cast %94 : vector<32xf32> to vector<32x1xf32>
      %96 = arith.maximumf %93, %95 : vector<32x1xf32>
      %97 = arith.subf %93, %96 : vector<32x1xf32>
      %98 = math.exp %97 : vector<32x1xf32>
      %99 = vector.broadcast %96 : vector<32x1xf32> to vector<32x32xf32>
      %100 = arith.subf %91, %99 : vector<32x32xf32>
      %101 = math.exp %100 : vector<32x32xf32>
      %c2_77 = arith.constant 2 : index
      %c0_78 = arith.constant 0 : index
      %c0_79 = arith.constant 0 : index
      %102 = vector.load %arg15[%c2_77, %c0_78, %c0_79] : memref<4x32x1xf32, #tpu.memory_space<vmem>>, vector<1x32x1xf32>
      %103 = vector.shape_cast %102 : vector<1x32x1xf32> to vector<32x1xf32>
      %104 = arith.mulf %98, %103 : vector<32x1xf32>
      %cst_80 = arith.constant dense<0.000000e+00> : vector<32xf32>
      %105 = vector.multi_reduction <add>, %101, %cst_80 [1] : vector<32x32xf32> to vector<32xf32>
      %106 = vector.shape_cast %105 : vector<32xf32> to vector<32x1xf32>
      %107 = arith.addf %104, %106 : vector<32x1xf32>
      %c2_81 = arith.constant 2 : index
      %c0_82 = arith.constant 0 : index
      %c0_83 = arith.constant 0 : index
      %108 = vector.load %arg15[%c2_81, %c0_82, %c0_83] : memref<4x32x1xf32, #tpu.memory_space<vmem>>, vector<1x32x1xf32>
      %109 = vector.shape_cast %108 : vector<1x32x1xf32> to vector<32x1xf32>
      %110 = vector.shape_cast %107 : vector<32x1xf32> to vector<1x32x1xf32>
      tpu.vector_store %arg15[%c2_81, %c0_82, %c0_83], %110 {strides = array<i32>} : memref<4x32x1xf32, #tpu.memory_space<vmem>>, vector<1x32x1xf32>,
      %c2_84 = arith.constant 2 : index
      %c0_85 = arith.constant 0 : index
      %c0_86 = arith.constant 0 : index
      %111 = vector.load %arg16[%c2_84, %c0_85, %c0_86] : memref<4x32x32xf32, #tpu.memory_space<vmem>>, vector<1x32x32xf32>
      %112 = vector.shape_cast %111 : vector<1x32x32xf32> to vector<32x32xf32>
      %113 = vector.broadcast %98 : vector<32x1xf32> to vector<32x32xf32>
      %114 = arith.mulf %113, %112 : vector<32x32xf32>
      %115 = arith.truncf %101 : vector<32x32xf32> to vector<32x32xbf16>
      %c0_87 = arith.constant 0 : index
      %c2_88 = arith.constant 2 : index
      %c0_89 = arith.constant 0 : index
      %c0_90 = arith.constant 0 : index
      %116 = vector.load %arg9[%c0_87, %c2_88, %c0_89, %c0_90] : memref<1x4x32x32xbf16, #tpu.memory_space<vmem>>, vector<1x1x32x32xbf16>
      %117 = vector.shape_cast %116 : vector<1x1x32x32xbf16> to vector<32x32xbf16>
      %cst_91 = arith.constant dense<0.000000e+00> : vector<32x32xf32>
      %118 = tpu.matmul %115, %117, %cst_91 {dimension_numbers = #tpu.dot_dimension_numbers<[1], [0], [0], [1], [0, 0, 1, 1], [], []>} : vector<32x32xbf16>, vector<32x32xbf16>, vector<32x32xf32> -> vector<32x32xf32>
      %119 = arith.addf %114, %118 : vector<32x32xf32>
      %c2_92 = arith.constant 2 : index
      %c0_93 = arith.constant 0 : index
      %c0_94 = arith.constant 0 : index
      %120 = vector.load %arg16[%c2_92, %c0_93, %c0_94] : memref<4x32x32xf32, #tpu.memory_space<vmem>>, vector<1x32x32xf32>
      %121 = vector.shape_cast %120 : vector<1x32x32xf32> to vector<32x32xf32>
      %122 = vector.shape_cast %119 : vector<32x32xf32> to vector<1x32x32xf32>
      tpu.vector_store %arg16[%c2_92, %c0_93, %c0_94], %122 {strides = array<i32>} : memref<4x32x32xf32, #tpu.memory_space<vmem>>, vector<1x32x32xf32>,
      %c2_95 = arith.constant 2 : index
      %c0_96 = arith.constant 0 : index
      %c0_97 = arith.constant 0 : index
      %123 = vector.load %arg14[%c2_95, %c0_96, %c0_97] : memref<4x32x1xf32, #tpu.memory_space<vmem>>, vector<1x32x1xf32>
      %124 = vector.shape_cast %123 : vector<1x32x1xf32> to vector<32x1xf32>
      %125 = vector.shape_cast %96 : vector<32x1xf32> to vector<1x32x1xf32>
      tpu.vector_store %arg14[%c2_95, %c0_96, %c0_97], %125 {strides = array<i32>} : memref<4x32x1xf32, #tpu.memory_space<vmem>>, vector<1x32x1xf32>,
      %c3 = arith.constant 3 : index
      %c0_98 = arith.constant 0 : index
      %c0_99 = arith.constant 0 : index
      %126 = vector.load %arg13[%c3, %c0_98, %c0_99] : memref<4x32x32xbf16, #tpu.memory_space<vmem>>, vector<1x32x32xbf16>
      %127 = vector.shape_cast %126 : vector<1x32x32xbf16> to vector<32x32xbf16>
      %c0_100 = arith.constant 0 : index
      %c3_101 = arith.constant 3 : index
      %c0_102 = arith.constant 0 : index
      %c0_103 = arith.constant 0 : index
      %128 = vector.load %arg8[%c0_100, %c3_101, %c0_102, %c0_103] : memref<1x4x32x32xbf16, #tpu.memory_space<vmem>>, vector<1x1x32x32xbf16>
      %129 = vector.shape_cast %128 : vector<1x1x32x32xbf16> to vector<32x32xbf16>
      %cst_104 = arith.constant dense<0.000000e+00> : vector<32x32xf32>
      %130 = tpu.matmul %127, %129, %cst_104 {dimension_numbers = #tpu.dot_dimension_numbers<[1], [1], [0], [0], [0, 0, 1, 0], [], []>} : vector<32x32xbf16>, vector<32x32xbf16>, vector<32x32xf32> -> vector<32x32xf32>
      %c3_105 = arith.constant 3 : index
      %c0_106 = arith.constant 0 : index
      %c0_107 = arith.constant 0 : index
      %131 = vector.load %arg14[%c3_105, %c0_106, %c0_107] : memref<4x32x1xf32, #tpu.memory_space<vmem>>, vector<1x32x1xf32>
      %132 = vector.shape_cast %131 : vector<1x32x1xf32> to vector<32x1xf32>
      %cst_108 = arith.constant dense<0xFF800000> : vector<32xf32>
      %133 = vector.multi_reduction <maximumf>, %130, %cst_108 [1] : vector<32x32xf32> to vector<32xf32>
      %134 = vector.shape_cast %133 : vector<32xf32> to vector<32x1xf32>
      %135 = arith.maximumf %132, %134 : vector<32x1xf32>
      %136 = arith.subf %132, %135 : vector<32x1xf32>
      %137 = math.exp %136 : vector<32x1xf32>
      %138 = vector.broadcast %135 : vector<32x1xf32> to vector<32x32xf32>
      %139 = arith.subf %130, %138 : vector<32x32xf32>
      %140 = math.exp %139 : vector<32x32xf32>
      %c3_109 = arith.constant 3 : index
      %c0_110 = arith.constant 0 : index
      %c0_111 = arith.constant 0 : index
      %141 = vector.load %arg15[%c3_109, %c0_110, %c0_111] : memref<4x32x1xf32, #tpu.memory_space<vmem>>, vector<1x32x1xf32>
      %142 = vector.shape_cast %141 : vector<1x32x1xf32> to vector<32x1xf32>
      %143 = arith.mulf %137, %142 : vector<32x1xf32>
      %cst_112 = arith.constant dense<0.000000e+00> : vector<32xf32>
      %144 = vector.multi_reduction <add>, %140, %cst_112 [1] : vector<32x32xf32> to vector<32xf32>
      %145 = vector.shape_cast %144 : vector<32xf32> to vector<32x1xf32>
      %146 = arith.addf %143, %145 : vector<32x1xf32>
      %c3_113 = arith.constant 3 : index
      %c0_114 = arith.constant 0 : index
      %c0_115 = arith.constant 0 : index
      %147 = vector.load %arg15[%c3_113, %c0_114, %c0_115] : memref<4x32x1xf32, #tpu.memory_space<vmem>>, vector<1x32x1xf32>
      %148 = vector.shape_cast %147 : vector<1x32x1xf32> to vector<32x1xf32>
      %149 = vector.shape_cast %146 : vector<32x1xf32> to vector<1x32x1xf32>
      tpu.vector_store %arg15[%c3_113, %c0_114, %c0_115], %149 {strides = array<i32>} : memref<4x32x1xf32, #tpu.memory_space<vmem>>, vector<1x32x1xf32>,
      %c3_116 = arith.constant 3 : index
      %c0_117 = arith.constant 0 : index
      %c0_118 = arith.constant 0 : index
      %150 = vector.load %arg16[%c3_116, %c0_117, %c0_118] : memref<4x32x32xf32, #tpu.memory_space<vmem>>, vector<1x32x32xf32>
      %151 = vector.shape_cast %150 : vector<1x32x32xf32> to vector<32x32xf32>
      %152 = vector.broadcast %137 : vector<32x1xf32> to vector<32x32xf32>
      %153 = arith.mulf %152, %151 : vector<32x32xf32>
      %154 = arith.truncf %140 : vector<32x32xf32> to vector<32x32xbf16>
      %c0_119 = arith.constant 0 : index
      %c3_120 = arith.constant 3 : index
      %c0_121 = arith.constant 0 : index
      %c0_122 = arith.constant 0 : index
      %155 = vector.load %arg9[%c0_119, %c3_120, %c0_121, %c0_122] : memref<1x4x32x32xbf16, #tpu.memory_space<vmem>>, vector<1x1x32x32xbf16>
      %156 = vector.shape_cast %155 : vector<1x1x32x32xbf16> to vector<32x32xbf16>
      %cst_123 = arith.constant dense<0.000000e+00> : vector<32x32xf32>
      %157 = tpu.matmul %154, %156, %cst_123 {dimension_numbers = #tpu.dot_dimension_numbers<[1], [0], [0], [1], [0, 0, 1, 1], [], []>} : vector<32x32xbf16>, vector<32x32xbf16>, vector<32x32xf32> -> vector<32x32xf32>
      %158 = arith.addf %153, %157 : vector<32x32xf32>
      %c3_124 = arith.constant 3 : index
      %c0_125 = arith.constant 0 : index
      %c0_126 = arith.constant 0 : index
      %159 = vector.load %arg16[%c3_124, %c0_125, %c0_126] : memref<4x32x32xf32, #tpu.memory_space<vmem>>, vector<1x32x32xf32>
      %160 = vector.shape_cast %159 : vector<1x32x32xf32> to vector<32x32xf32>
      %161 = vector.shape_cast %158 : vector<32x32xf32> to vector<1x32x32xf32>
      tpu.vector_store %arg16[%c3_124, %c0_125, %c0_126], %161 {strides = array<i32>} : memref<4x32x32xf32, #tpu.memory_space<vmem>>, vector<1x32x32xf32>,
      %c3_127 = arith.constant 3 : index
      %c0_128 = arith.constant 0 : index
      %c0_129 = arith.constant 0 : index
      %162 = vector.load %arg14[%c3_127, %c0_128, %c0_129] : memref<4x32x1xf32, #tpu.memory_space<vmem>>, vector<1x32x1xf32>
      %163 = vector.shape_cast %162 : vector<1x32x1xf32> to vector<32x1xf32>
      %164 = vector.shape_cast %135 : vector<32x1xf32> to vector<1x32x1xf32>
      tpu.vector_store %arg14[%c3_127, %c0_128, %c0_129], %164 {strides = array<i32>} : memref<4x32x1xf32, #tpu.memory_space<vmem>>, vector<1x32x1xf32>,
    } else {
    }
    %6 = arith.cmpi eq, %arg2, %arg1 : i32
    %7 = arith.extui %6 : i1 to i32
    %c0_i32_2 = arith.constant 0 : i32
    %8 = arith.cmpi ne, %7, %c0_i32_2 : i32
    scf.if %8 {
      %9 = tpu.iota {dimensions = array<i32: 0>} : vector<32x32xi32>
      %10 = tpu.iota {dimensions = array<i32: 1>} : vector<32x32xi32>
      %11 = arith.cmpi sle, %10, %9 : vector<32x32xi32>
      %c0 = arith.constant 0 : index
      %c0_3 = arith.constant 0 : index
      %c0_4 = arith.constant 0 : index
      %12 = vector.load %arg13[%c0, %c0_3, %c0_4] : memref<4x32x32xbf16, #tpu.memory_space<vmem>>, vector<1x32x32xbf16>
      %13 = vector.shape_cast %12 : vector<1x32x32xbf16> to vector<32x32xbf16>
      %c0_5 = arith.constant 0 : index
      %c0_6 = arith.constant 0 : index
      %c0_7 = arith.constant 0 : index
      %c0_8 = arith.constant 0 : index
      %14 = vector.load %arg8[%c0_5, %c0_6, %c0_7, %c0_8] : memref<1x4x32x32xbf16, #tpu.memory_space<vmem>>, vector<1x1x32x32xbf16>
      %15 = vector.shape_cast %14 : vector<1x1x32x32xbf16> to vector<32x32xbf16>
      %cst = arith.constant dense<0.000000e+00> : vector<32x32xf32>
      %16 = tpu.matmul %13, %15, %cst {dimension_numbers = #tpu.dot_dimension_numbers<[1], [1], [0], [0], [0, 0, 1, 0], [], []>} : vector<32x32xbf16>, vector<32x32xbf16>, vector<32x32xf32> -> vector<32x32xf32>
      %cst_9 = arith.constant -1.000000e+30 : f32
      %17 = vector.broadcast %cst_9 : f32 to vector<32x32xf32>
      %18 = arith.select %11, %16, %17 : vector<32x32xi1>, vector<32x32xf32>
      %c0_10 = arith.constant 0 : index
      %c0_11 = arith.constant 0 : index
      %c0_12 = arith.constant 0 : index
      %19 = vector.load %arg14[%c0_10, %c0_11, %c0_12] : memref<4x32x1xf32, #tpu.memory_space<vmem>>, vector<1x32x1xf32>
      %20 = vector.shape_cast %19 : vector<1x32x1xf32> to vector<32x1xf32>
      %cst_13 = arith.constant dense<0xFF800000> : vector<32xf32>
      %21 = vector.multi_reduction <maximumf>, %18, %cst_13 [1] : vector<32x32xf32> to vector<32xf32>
      %22 = vector.shape_cast %21 : vector<32xf32> to vector<32x1xf32>
      %23 = arith.maximumf %20, %22 : vector<32x1xf32>
      %24 = arith.subf %20, %23 : vector<32x1xf32>
      %25 = math.exp %24 : vector<32x1xf32>
      %26 = vector.broadcast %23 : vector<32x1xf32> to vector<32x32xf32>
      %27 = arith.subf %18, %26 : vector<32x32xf32>
      %28 = math.exp %27 : vector<32x32xf32>
      %c0_14 = arith.constant 0 : index
      %c0_15 = arith.constant 0 : index
      %c0_16 = arith.constant 0 : index
      %29 = vector.load %arg15[%c0_14, %c0_15, %c0_16] : memref<4x32x1xf32, #tpu.memory_space<vmem>>, vector<1x32x1xf32>
      %30 = vector.shape_cast %29 : vector<1x32x1xf32> to vector<32x1xf32>
      %31 = arith.mulf %25, %30 : vector<32x1xf32>
      %cst_17 = arith.constant dense<0.000000e+00> : vector<32xf32>
      %32 = vector.multi_reduction <add>, %28, %cst_17 [1] : vector<32x32xf32> to vector<32xf32>
      %33 = vector.shape_cast %32 : vector<32xf32> to vector<32x1xf32>
      %34 = arith.addf %31, %33 : vector<32x1xf32>
      %c0_18 = arith.constant 0 : index
      %c0_19 = arith.constant 0 : index
      %c0_20 = arith.constant 0 : index
      %35 = vector.load %arg15[%c0_18, %c0_19, %c0_20] : memref<4x32x1xf32, #tpu.memory_space<vmem>>, vector<1x32x1xf32>
      %36 = vector.shape_cast %35 : vector<1x32x1xf32> to vector<32x1xf32>
      %37 = vector.shape_cast %34 : vector<32x1xf32> to vector<1x32x1xf32>
      tpu.vector_store %arg15[%c0_18, %c0_19, %c0_20], %37 {strides = array<i32>} : memref<4x32x1xf32, #tpu.memory_space<vmem>>, vector<1x32x1xf32>,
      %c0_21 = arith.constant 0 : index
      %c0_22 = arith.constant 0 : index
      %c0_23 = arith.constant 0 : index
      %38 = vector.load %arg16[%c0_21, %c0_22, %c0_23] : memref<4x32x32xf32, #tpu.memory_space<vmem>>, vector<1x32x32xf32>
      %39 = vector.shape_cast %38 : vector<1x32x32xf32> to vector<32x32xf32>
      %40 = vector.broadcast %25 : vector<32x1xf32> to vector<32x32xf32>
      %41 = arith.mulf %40, %39 : vector<32x32xf32>
      %42 = arith.truncf %28 : vector<32x32xf32> to vector<32x32xbf16>
      %c0_24 = arith.constant 0 : index
      %c0_25 = arith.constant 0 : index
      %c0_26 = arith.constant 0 : index
      %c0_27 = arith.constant 0 : index
      %43 = vector.load %arg9[%c0_24, %c0_25, %c0_26, %c0_27] : memref<1x4x32x32xbf16, #tpu.memory_space<vmem>>, vector<1x1x32x32xbf16>
      %44 = vector.shape_cast %43 : vector<1x1x32x32xbf16> to vector<32x32xbf16>
      %cst_28 = arith.constant dense<0.000000e+00> : vector<32x32xf32>
      %45 = tpu.matmul %42, %44, %cst_28 {dimension_numbers = #tpu.dot_dimension_numbers<[1], [0], [0], [1], [0, 0, 1, 1], [], []>} : vector<32x32xbf16>, vector<32x32xbf16>, vector<32x32xf32> -> vector<32x32xf32>
      %46 = arith.addf %41, %45 : vector<32x32xf32>
      %c0_29 = arith.constant 0 : index
      %c0_30 = arith.constant 0 : index
      %c0_31 = arith.constant 0 : index
      %47 = vector.load %arg16[%c0_29, %c0_30, %c0_31] : memref<4x32x32xf32, #tpu.memory_space<vmem>>, vector<1x32x32xf32>
      %48 = vector.shape_cast %47 : vector<1x32x32xf32> to vector<32x32xf32>
      %49 = vector.shape_cast %46 : vector<32x32xf32> to vector<1x32x32xf32>
      tpu.vector_store %arg16[%c0_29, %c0_30, %c0_31], %49 {strides = array<i32>} : memref<4x32x32xf32, #tpu.memory_space<vmem>>, vector<1x32x32xf32>,
      %c0_32 = arith.constant 0 : index
      %c0_33 = arith.constant 0 : index
      %c0_34 = arith.constant 0 : index
      %50 = vector.load %arg14[%c0_32, %c0_33, %c0_34] : memref<4x32x1xf32, #tpu.memory_space<vmem>>, vector<1x32x1xf32>
      %51 = vector.shape_cast %50 : vector<1x32x1xf32> to vector<32x1xf32>
      %52 = vector.shape_cast %23 : vector<32x1xf32> to vector<1x32x1xf32>
      tpu.vector_store %arg14[%c0_32, %c0_33, %c0_34], %52 {strides = array<i32>} : memref<4x32x1xf32, #tpu.memory_space<vmem>>, vector<1x32x1xf32>,
      %c1 = arith.constant 1 : index
      %c0_35 = arith.constant 0 : index
      %c0_36 = arith.constant 0 : index
      %53 = vector.load %arg13[%c1, %c0_35, %c0_36] : memref<4x32x32xbf16, #tpu.memory_space<vmem>>, vector<1x32x32xbf16>
      %54 = vector.shape_cast %53 : vector<1x32x32xbf16> to vector<32x32xbf16>
      %c0_37 = arith.constant 0 : index
      %c1_38 = arith.constant 1 : index
      %c0_39 = arith.constant 0 : index
      %c0_40 = arith.constant 0 : index
      %55 = vector.load %arg8[%c0_37, %c1_38, %c0_39, %c0_40] : memref<1x4x32x32xbf16, #tpu.memory_space<vmem>>, vector<1x1x32x32xbf16>
      %56 = vector.shape_cast %55 : vector<1x1x32x32xbf16> to vector<32x32xbf16>
      %cst_41 = arith.constant dense<0.000000e+00> : vector<32x32xf32>
      %57 = tpu.matmul %54, %56, %cst_41 {dimension_numbers = #tpu.dot_dimension_numbers<[1], [1], [0], [0], [0, 0, 1, 0], [], []>} : vector<32x32xbf16>, vector<32x32xbf16>, vector<32x32xf32> -> vector<32x32xf32>
      %cst_42 = arith.constant -1.000000e+30 : f32
      %58 = vector.broadcast %cst_42 : f32 to vector<32x32xf32>
      %59 = arith.select %11, %57, %58 : vector<32x32xi1>, vector<32x32xf32>
      %c1_43 = arith.constant 1 : index
      %c0_44 = arith.constant 0 : index
      %c0_45 = arith.constant 0 : index
      %60 = vector.load %arg14[%c1_43, %c0_44, %c0_45] : memref<4x32x1xf32, #tpu.memory_space<vmem>>, vector<1x32x1xf32>
      %61 = vector.shape_cast %60 : vector<1x32x1xf32> to vector<32x1xf32>
      %cst_46 = arith.constant dense<0xFF800000> : vector<32xf32>
      %62 = vector.multi_reduction <maximumf>, %59, %cst_46 [1] : vector<32x32xf32> to vector<32xf32>
      %63 = vector.shape_cast %62 : vector<32xf32> to vector<32x1xf32>
      %64 = arith.maximumf %61, %63 : vector<32x1xf32>
      %65 = arith.subf %61, %64 : vector<32x1xf32>
      %66 = math.exp %65 : vector<32x1xf32>
      %67 = vector.broadcast %64 : vector<32x1xf32> to vector<32x32xf32>
      %68 = arith.subf %59, %67 : vector<32x32xf32>
      %69 = math.exp %68 : vector<32x32xf32>
      %c1_47 = arith.constant 1 : index
      %c0_48 = arith.constant 0 : index
      %c0_49 = arith.constant 0 : index
      %70 = vector.load %arg15[%c1_47, %c0_48, %c0_49] : memref<4x32x1xf32, #tpu.memory_space<vmem>>, vector<1x32x1xf32>
      %71 = vector.shape_cast %70 : vector<1x32x1xf32> to vector<32x1xf32>
      %72 = arith.mulf %66, %71 : vector<32x1xf32>
      %cst_50 = arith.constant dense<0.000000e+00> : vector<32xf32>
      %73 = vector.multi_reduction <add>, %69, %cst_50 [1] : vector<32x32xf32> to vector<32xf32>
      %74 = vector.shape_cast %73 : vector<32xf32> to vector<32x1xf32>
      %75 = arith.addf %72, %74 : vector<32x1xf32>
      %c1_51 = arith.constant 1 : index
      %c0_52 = arith.constant 0 : index
      %c0_53 = arith.constant 0 : index
      %76 = vector.load %arg15[%c1_51, %c0_52, %c0_53] : memref<4x32x1xf32, #tpu.memory_space<vmem>>, vector<1x32x1xf32>
      %77 = vector.shape_cast %76 : vector<1x32x1xf32> to vector<32x1xf32>
      %78 = vector.shape_cast %75 : vector<32x1xf32> to vector<1x32x1xf32>
      tpu.vector_store %arg15[%c1_51, %c0_52, %c0_53], %78 {strides = array<i32>} : memref<4x32x1xf32, #tpu.memory_space<vmem>>, vector<1x32x1xf32>,
      %c1_54 = arith.constant 1 : index
      %c0_55 = arith.constant 0 : index
      %c0_56 = arith.constant 0 : index
      %79 = vector.load %arg16[%c1_54, %c0_55, %c0_56] : memref<4x32x32xf32, #tpu.memory_space<vmem>>, vector<1x32x32xf32>
      %80 = vector.shape_cast %79 : vector<1x32x32xf32> to vector<32x32xf32>
      %81 = vector.broadcast %66 : vector<32x1xf32> to vector<32x32xf32>
      %82 = arith.mulf %81, %80 : vector<32x32xf32>
      %83 = arith.truncf %69 : vector<32x32xf32> to vector<32x32xbf16>
      %c0_57 = arith.constant 0 : index
      %c1_58 = arith.constant 1 : index
      %c0_59 = arith.constant 0 : index
      %c0_60 = arith.constant 0 : index
      %84 = vector.load %arg9[%c0_57, %c1_58, %c0_59, %c0_60] : memref<1x4x32x32xbf16, #tpu.memory_space<vmem>>, vector<1x1x32x32xbf16>
      %85 = vector.shape_cast %84 : vector<1x1x32x32xbf16> to vector<32x32xbf16>
      %cst_61 = arith.constant dense<0.000000e+00> : vector<32x32xf32>
      %86 = tpu.matmul %83, %85, %cst_61 {dimension_numbers = #tpu.dot_dimension_numbers<[1], [0], [0], [1], [0, 0, 1, 1], [], []>} : vector<32x32xbf16>, vector<32x32xbf16>, vector<32x32xf32> -> vector<32x32xf32>
      %87 = arith.addf %82, %86 : vector<32x32xf32>
      %c1_62 = arith.constant 1 : index
      %c0_63 = arith.constant 0 : index
      %c0_64 = arith.constant 0 : index
      %88 = vector.load %arg16[%c1_62, %c0_63, %c0_64] : memref<4x32x32xf32, #tpu.memory_space<vmem>>, vector<1x32x32xf32>
      %89 = vector.shape_cast %88 : vector<1x32x32xf32> to vector<32x32xf32>
      %90 = vector.shape_cast %87 : vector<32x32xf32> to vector<1x32x32xf32>
      tpu.vector_store %arg16[%c1_62, %c0_63, %c0_64], %90 {strides = array<i32>} : memref<4x32x32xf32, #tpu.memory_space<vmem>>, vector<1x32x32xf32>,
      %c1_65 = arith.constant 1 : index
      %c0_66 = arith.constant 0 : index
      %c0_67 = arith.constant 0 : index
      %91 = vector.load %arg14[%c1_65, %c0_66, %c0_67] : memref<4x32x1xf32, #tpu.memory_space<vmem>>, vector<1x32x1xf32>
      %92 = vector.shape_cast %91 : vector<1x32x1xf32> to vector<32x1xf32>
      %93 = vector.shape_cast %64 : vector<32x1xf32> to vector<1x32x1xf32>
      tpu.vector_store %arg14[%c1_65, %c0_66, %c0_67], %93 {strides = array<i32>} : memref<4x32x1xf32, #tpu.memory_space<vmem>>, vector<1x32x1xf32>,
      %c2 = arith.constant 2 : index
      %c0_68 = arith.constant 0 : index
      %c0_69 = arith.constant 0 : index
      %94 = vector.load %arg13[%c2, %c0_68, %c0_69] : memref<4x32x32xbf16, #tpu.memory_space<vmem>>, vector<1x32x32xbf16>
      %95 = vector.shape_cast %94 : vector<1x32x32xbf16> to vector<32x32xbf16>
      %c0_70 = arith.constant 0 : index
      %c2_71 = arith.constant 2 : index
      %c0_72 = arith.constant 0 : index
      %c0_73 = arith.constant 0 : index
      %96 = vector.load %arg8[%c0_70, %c2_71, %c0_72, %c0_73] : memref<1x4x32x32xbf16, #tpu.memory_space<vmem>>, vector<1x1x32x32xbf16>
      %97 = vector.shape_cast %96 : vector<1x1x32x32xbf16> to vector<32x32xbf16>
      %cst_74 = arith.constant dense<0.000000e+00> : vector<32x32xf32>
      %98 = tpu.matmul %95, %97, %cst_74 {dimension_numbers = #tpu.dot_dimension_numbers<[1], [1], [0], [0], [0, 0, 1, 0], [], []>} : vector<32x32xbf16>, vector<32x32xbf16>, vector<32x32xf32> -> vector<32x32xf32>
      %cst_75 = arith.constant -1.000000e+30 : f32
      %99 = vector.broadcast %cst_75 : f32 to vector<32x32xf32>
      %100 = arith.select %11, %98, %99 : vector<32x32xi1>, vector<32x32xf32>
      %c2_76 = arith.constant 2 : index
      %c0_77 = arith.constant 0 : index
      %c0_78 = arith.constant 0 : index
      %101 = vector.load %arg14[%c2_76, %c0_77, %c0_78] : memref<4x32x1xf32, #tpu.memory_space<vmem>>, vector<1x32x1xf32>
      %102 = vector.shape_cast %101 : vector<1x32x1xf32> to vector<32x1xf32>
      %cst_79 = arith.constant dense<0xFF800000> : vector<32xf32>
      %103 = vector.multi_reduction <maximumf>, %100, %cst_79 [1] : vector<32x32xf32> to vector<32xf32>
      %104 = vector.shape_cast %103 : vector<32xf32> to vector<32x1xf32>
      %105 = arith.maximumf %102, %104 : vector<32x1xf32>
      %106 = arith.subf %102, %105 : vector<32x1xf32>
      %107 = math.exp %106 : vector<32x1xf32>
      %108 = vector.broadcast %105 : vector<32x1xf32> to vector<32x32xf32>
      %109 = arith.subf %100, %108 : vector<32x32xf32>
      %110 = math.exp %109 : vector<32x32xf32>
      %c2_80 = arith.constant 2 : index
      %c0_81 = arith.constant 0 : index
      %c0_82 = arith.constant 0 : index
      %111 = vector.load %arg15[%c2_80, %c0_81, %c0_82] : memref<4x32x1xf32, #tpu.memory_space<vmem>>, vector<1x32x1xf32>
      %112 = vector.shape_cast %111 : vector<1x32x1xf32> to vector<32x1xf32>
      %113 = arith.mulf %107, %112 : vector<32x1xf32>
      %cst_83 = arith.constant dense<0.000000e+00> : vector<32xf32>
      %114 = vector.multi_reduction <add>, %110, %cst_83 [1] : vector<32x32xf32> to vector<32xf32>
      %115 = vector.shape_cast %114 : vector<32xf32> to vector<32x1xf32>
      %116 = arith.addf %113, %115 : vector<32x1xf32>
      %c2_84 = arith.constant 2 : index
      %c0_85 = arith.constant 0 : index
      %c0_86 = arith.constant 0 : index
      %117 = vector.load %arg15[%c2_84, %c0_85, %c0_86] : memref<4x32x1xf32, #tpu.memory_space<vmem>>, vector<1x32x1xf32>
      %118 = vector.shape_cast %117 : vector<1x32x1xf32> to vector<32x1xf32>
      %119 = vector.shape_cast %116 : vector<32x1xf32> to vector<1x32x1xf32>
      tpu.vector_store %arg15[%c2_84, %c0_85, %c0_86], %119 {strides = array<i32>} : memref<4x32x1xf32, #tpu.memory_space<vmem>>, vector<1x32x1xf32>,
      %c2_87 = arith.constant 2 : index
      %c0_88 = arith.constant 0 : index
      %c0_89 = arith.constant 0 : index
      %120 = vector.load %arg16[%c2_87, %c0_88, %c0_89] : memref<4x32x32xf32, #tpu.memory_space<vmem>>, vector<1x32x32xf32>
      %121 = vector.shape_cast %120 : vector<1x32x32xf32> to vector<32x32xf32>
      %122 = vector.broadcast %107 : vector<32x1xf32> to vector<32x32xf32>
      %123 = arith.mulf %122, %121 : vector<32x32xf32>
      %124 = arith.truncf %110 : vector<32x32xf32> to vector<32x32xbf16>
      %c0_90 = arith.constant 0 : index
      %c2_91 = arith.constant 2 : index
      %c0_92 = arith.constant 0 : index
      %c0_93 = arith.constant 0 : index
      %125 = vector.load %arg9[%c0_90, %c2_91, %c0_92, %c0_93] : memref<1x4x32x32xbf16, #tpu.memory_space<vmem>>, vector<1x1x32x32xbf16>
      %126 = vector.shape_cast %125 : vector<1x1x32x32xbf16> to vector<32x32xbf16>
      %cst_94 = arith.constant dense<0.000000e+00> : vector<32x32xf32>
      %127 = tpu.matmul %124, %126, %cst_94 {dimension_numbers = #tpu.dot_dimension_numbers<[1], [0], [0], [1], [0, 0, 1, 1], [], []>} : vector<32x32xbf16>, vector<32x32xbf16>, vector<32x32xf32> -> vector<32x32xf32>
      %128 = arith.addf %123, %127 : vector<32x32xf32>
      %c2_95 = arith.constant 2 : index
      %c0_96 = arith.constant 0 : index
      %c0_97 = arith.constant 0 : index
      %129 = vector.load %arg16[%c2_95, %c0_96, %c0_97] : memref<4x32x32xf32, #tpu.memory_space<vmem>>, vector<1x32x32xf32>
      %130 = vector.shape_cast %129 : vector<1x32x32xf32> to vector<32x32xf32>
      %131 = vector.shape_cast %128 : vector<32x32xf32> to vector<1x32x32xf32>
      tpu.vector_store %arg16[%c2_95, %c0_96, %c0_97], %131 {strides = array<i32>} : memref<4x32x32xf32, #tpu.memory_space<vmem>>, vector<1x32x32xf32>,
      %c2_98 = arith.constant 2 : index
      %c0_99 = arith.constant 0 : index
      %c0_100 = arith.constant 0 : index
      %132 = vector.load %arg14[%c2_98, %c0_99, %c0_100] : memref<4x32x1xf32, #tpu.memory_space<vmem>>, vector<1x32x1xf32>
      %133 = vector.shape_cast %132 : vector<1x32x1xf32> to vector<32x1xf32>
      %134 = vector.shape_cast %105 : vector<32x1xf32> to vector<1x32x1xf32>
      tpu.vector_store %arg14[%c2_98, %c0_99, %c0_100], %134 {strides = array<i32>} : memref<4x32x1xf32, #tpu.memory_space<vmem>>, vector<1x32x1xf32>,
      %c3 = arith.constant 3 : index
      %c0_101 = arith.constant 0 : index
      %c0_102 = arith.constant 0 : index
      %135 = vector.load %arg13[%c3, %c0_101, %c0_102] : memref<4x32x32xbf16, #tpu.memory_space<vmem>>, vector<1x32x32xbf16>
      %136 = vector.shape_cast %135 : vector<1x32x32xbf16> to vector<32x32xbf16>
      %c0_103 = arith.constant 0 : index
      %c3_104 = arith.constant 3 : index
      %c0_105 = arith.constant 0 : index
      %c0_106 = arith.constant 0 : index
      %137 = vector.load %arg8[%c0_103, %c3_104, %c0_105, %c0_106] : memref<1x4x32x32xbf16, #tpu.memory_space<vmem>>, vector<1x1x32x32xbf16>
      %138 = vector.shape_cast %137 : vector<1x1x32x32xbf16> to vector<32x32xbf16>
      %cst_107 = arith.constant dense<0.000000e+00> : vector<32x32xf32>
      %139 = tpu.matmul %136, %138, %cst_107 {dimension_numbers = #tpu.dot_dimension_numbers<[1], [1], [0], [0], [0, 0, 1, 0], [], []>} : vector<32x32xbf16>, vector<32x32xbf16>, vector<32x32xf32> -> vector<32x32xf32>
      %cst_108 = arith.constant -1.000000e+30 : f32
      %140 = vector.broadcast %cst_108 : f32 to vector<32x32xf32>
      %141 = arith.select %11, %139, %140 : vector<32x32xi1>, vector<32x32xf32>
      %c3_109 = arith.constant 3 : index
      %c0_110 = arith.constant 0 : index
      %c0_111 = arith.constant 0 : index
      %142 = vector.load %arg14[%c3_109, %c0_110, %c0_111] : memref<4x32x1xf32, #tpu.memory_space<vmem>>, vector<1x32x1xf32>
      %143 = vector.shape_cast %142 : vector<1x32x1xf32> to vector<32x1xf32>
      %cst_112 = arith.constant dense<0xFF800000> : vector<32xf32>
      %144 = vector.multi_reduction <maximumf>, %141, %cst_112 [1] : vector<32x32xf32> to vector<32xf32>
      %145 = vector.shape_cast %144 : vector<32xf32> to vector<32x1xf32>
      %146 = arith.maximumf %143, %145 : vector<32x1xf32>
      %147 = arith.subf %143, %146 : vector<32x1xf32>
      %148 = math.exp %147 : vector<32x1xf32>
      %149 = vector.broadcast %146 : vector<32x1xf32> to vector<32x32xf32>
      %150 = arith.subf %141, %149 : vector<32x32xf32>
      %151 = math.exp %150 : vector<32x32xf32>
      %c3_113 = arith.constant 3 : index
      %c0_114 = arith.constant 0 : index
      %c0_115 = arith.constant 0 : index
      %152 = vector.load %arg15[%c3_113, %c0_114, %c0_115] : memref<4x32x1xf32, #tpu.memory_space<vmem>>, vector<1x32x1xf32>
      %153 = vector.shape_cast %152 : vector<1x32x1xf32> to vector<32x1xf32>
      %154 = arith.mulf %148, %153 : vector<32x1xf32>
      %cst_116 = arith.constant dense<0.000000e+00> : vector<32xf32>
      %155 = vector.multi_reduction <add>, %151, %cst_116 [1] : vector<32x32xf32> to vector<32xf32>
      %156 = vector.shape_cast %155 : vector<32xf32> to vector<32x1xf32>
      %157 = arith.addf %154, %156 : vector<32x1xf32>
      %c3_117 = arith.constant 3 : index
      %c0_118 = arith.constant 0 : index
      %c0_119 = arith.constant 0 : index
      %158 = vector.load %arg15[%c3_117, %c0_118, %c0_119] : memref<4x32x1xf32, #tpu.memory_space<vmem>>, vector<1x32x1xf32>
      %159 = vector.shape_cast %158 : vector<1x32x1xf32> to vector<32x1xf32>
      %160 = vector.shape_cast %157 : vector<32x1xf32> to vector<1x32x1xf32>
      tpu.vector_store %arg15[%c3_117, %c0_118, %c0_119], %160 {strides = array<i32>} : memref<4x32x1xf32, #tpu.memory_space<vmem>>, vector<1x32x1xf32>,
      %c3_120 = arith.constant 3 : index
      %c0_121 = arith.constant 0 : index
      %c0_122 = arith.constant 0 : index
      %161 = vector.load %arg16[%c3_120, %c0_121, %c0_122] : memref<4x32x32xf32, #tpu.memory_space<vmem>>, vector<1x32x32xf32>
      %162 = vector.shape_cast %161 : vector<1x32x32xf32> to vector<32x32xf32>
      %163 = vector.broadcast %148 : vector<32x1xf32> to vector<32x32xf32>
      %164 = arith.mulf %163, %162 : vector<32x32xf32>
      %165 = arith.truncf %151 : vector<32x32xf32> to vector<32x32xbf16>
      %c0_123 = arith.constant 0 : index
      %c3_124 = arith.constant 3 : index
      %c0_125 = arith.constant 0 : index
      %c0_126 = arith.constant 0 : index
      %166 = vector.load %arg9[%c0_123, %c3_124, %c0_125, %c0_126] : memref<1x4x32x32xbf16, #tpu.memory_space<vmem>>, vector<1x1x32x32xbf16>
      %167 = vector.shape_cast %166 : vector<1x1x32x32xbf16> to vector<32x32xbf16>
      %cst_127 = arith.constant dense<0.000000e+00> : vector<32x32xf32>
      %168 = tpu.matmul %165, %167, %cst_127 {dimension_numbers = #tpu.dot_dimension_numbers<[1], [0], [0], [1], [0, 0, 1, 1], [], []>} : vector<32x32xbf16>, vector<32x32xbf16>, vector<32x32xf32> -> vector<32x32xf32>
      %169 = arith.addf %164, %168 : vector<32x32xf32>
      %c3_128 = arith.constant 3 : index
      %c0_129 = arith.constant 0 : index
      %c0_130 = arith.constant 0 : index
      %170 = vector.load %arg16[%c3_128, %c0_129, %c0_130] : memref<4x32x32xf32, #tpu.memory_space<vmem>>, vector<1x32x32xf32>
      %171 = vector.shape_cast %170 : vector<1x32x32xf32> to vector<32x32xf32>
      %172 = vector.shape_cast %169 : vector<32x32xf32> to vector<1x32x32xf32>
      tpu.vector_store %arg16[%c3_128, %c0_129, %c0_130], %172 {strides = array<i32>} : memref<4x32x32xf32, #tpu.memory_space<vmem>>, vector<1x32x32xf32>,
      %c3_131 = arith.constant 3 : index
      %c0_132 = arith.constant 0 : index
      %c0_133 = arith.constant 0 : index
      %173 = vector.load %arg14[%c3_131, %c0_132, %c0_133] : memref<4x32x1xf32, #tpu.memory_space<vmem>>, vector<1x32x1xf32>
      %174 = vector.shape_cast %173 : vector<1x32x1xf32> to vector<32x1xf32>
      %175 = vector.shape_cast %146 : vector<32x1xf32> to vector<1x32x1xf32>
      tpu.vector_store %arg14[%c3_131, %c0_132, %c0_133], %175 {strides = array<i32>} : memref<4x32x1xf32, #tpu.memory_space<vmem>>, vector<1x32x1xf32>,
      %c0_134 = arith.constant 0 : index
      %c0_135 = arith.constant 0 : index
      %c0_136 = arith.constant 0 : index
      %176 = vector.load %arg15[%c0_134, %c0_135, %c0_136] : memref<4x32x1xf32, #tpu.memory_space<vmem>>, vector<1x32x1xf32>
      %177 = vector.shape_cast %176 : vector<1x32x1xf32> to vector<32x1xf32>
      %178 = tpu.reciprocal %177 {approx = true} : vector<32x1xf32> -> vector<32x1xf32>
      %c0_137 = arith.constant 0 : index
      %c0_138 = arith.constant 0 : index
      %c0_139 = arith.constant 0 : index
      %179 = vector.load %arg16[%c0_137, %c0_138, %c0_139] : memref<4x32x32xf32, #tpu.memory_space<vmem>>, vector<1x32x32xf32>
      %180 = vector.shape_cast %179 : vector<1x32x32xf32> to vector<32x32xf32>
      %181 = vector.broadcast %178 : vector<32x1xf32> to vector<32x32xf32>
      %182 = arith.mulf %180, %181 : vector<32x32xf32>
      %c0_140 = arith.constant 0 : index
      %c0_141 = arith.constant 0 : index
      %183 = vector.load %arg17[%c0_140, %c0_141] : memref<32x128xf32, #tpu.memory_space<vmem>>, vector<32x32xf32>
      tpu.vector_store %arg17[%c0_140, %c0_141], %182 {strides = array<i32>} : memref<32x128xf32, #tpu.memory_space<vmem>>, vector<32x32xf32>,
      %c1_142 = arith.constant 1 : index
      %c0_143 = arith.constant 0 : index
      %c0_144 = arith.constant 0 : index
      %184 = vector.load %arg15[%c1_142, %c0_143, %c0_144] : memref<4x32x1xf32, #tpu.memory_space<vmem>>, vector<1x32x1xf32>
      %185 = vector.shape_cast %184 : vector<1x32x1xf32> to vector<32x1xf32>
      %186 = tpu.reciprocal %185 {approx = true} : vector<32x1xf32> -> vector<32x1xf32>
      %c1_145 = arith.constant 1 : index
      %c0_146 = arith.constant 0 : index
      %c0_147 = arith.constant 0 : index
      %187 = vector.load %arg16[%c1_145, %c0_146, %c0_147] : memref<4x32x32xf32, #tpu.memory_space<vmem>>, vector<1x32x32xf32>
      %188 = vector.shape_cast %187 : vector<1x32x32xf32> to vector<32x32xf32>
      %189 = vector.broadcast %186 : vector<32x1xf32> to vector<32x32xf32>
      %190 = arith.mulf %188, %189 : vector<32x32xf32>
      %c0_148 = arith.constant 0 : index
      %c32 = arith.constant 32 : index
      %191 = vector.load %arg17[%c0_148, %c32] : memref<32x128xf32, #tpu.memory_space<vmem>>, vector<32x32xf32>
      tpu.vector_store %arg17[%c0_148, %c32], %190 {strides = array<i32>} : memref<32x128xf32, #tpu.memory_space<vmem>>, vector<32x32xf32>,
      %c2_149 = arith.constant 2 : index
      %c0_150 = arith.constant 0 : index
      %c0_151 = arith.constant 0 : index
      %192 = vector.load %arg15[%c2_149, %c0_150, %c0_151] : memref<4x32x1xf32, #tpu.memory_space<vmem>>, vector<1x32x1xf32>
      %193 = vector.shape_cast %192 : vector<1x32x1xf32> to vector<32x1xf32>
      %194 = tpu.reciprocal %193 {approx = true} : vector<32x1xf32> -> vector<32x1xf32>
      %c2_152 = arith.constant 2 : index
      %c0_153 = arith.constant 0 : index
      %c0_154 = arith.constant 0 : index
      %195 = vector.load %arg16[%c2_152, %c0_153, %c0_154] : memref<4x32x32xf32, #tpu.memory_space<vmem>>, vector<1x32x32xf32>
      %196 = vector.shape_cast %195 : vector<1x32x32xf32> to vector<32x32xf32>
      %197 = vector.broadcast %194 : vector<32x1xf32> to vector<32x32xf32>
      %198 = arith.mulf %196, %197 : vector<32x32xf32>
      %c0_155 = arith.constant 0 : index
      %c64 = arith.constant 64 : index
      %199 = vector.load %arg17[%c0_155, %c64] : memref<32x128xf32, #tpu.memory_space<vmem>>, vector<32x32xf32>
      tpu.vector_store %arg17[%c0_155, %c64], %198 {strides = array<i32>} : memref<32x128xf32, #tpu.memory_space<vmem>>, vector<32x32xf32>,
      %c3_156 = arith.constant 3 : index
      %c0_157 = arith.constant 0 : index
      %c0_158 = arith.constant 0 : index
      %200 = vector.load %arg15[%c3_156, %c0_157, %c0_158] : memref<4x32x1xf32, #tpu.memory_space<vmem>>, vector<1x32x1xf32>
      %201 = vector.shape_cast %200 : vector<1x32x1xf32> to vector<32x1xf32>
      %202 = tpu.reciprocal %201 {approx = true} : vector<32x1xf32> -> vector<32x1xf32>
      %c3_159 = arith.constant 3 : index
      %c0_160 = arith.constant 0 : index
      %c0_161 = arith.constant 0 : index
      %203 = vector.load %arg16[%c3_159, %c0_160, %c0_161] : memref<4x32x32xf32, #tpu.memory_space<vmem>>, vector<1x32x32xf32>
      %204 = vector.shape_cast %203 : vector<1x32x32xf32> to vector<32x32xf32>
      %205 = vector.broadcast %202 : vector<32x1xf32> to vector<32x32xf32>
      %206 = arith.mulf %204, %205 : vector<32x32xf32>
      %c0_162 = arith.constant 0 : index
      %c96 = arith.constant 96 : index
      %207 = vector.load %arg17[%c0_162, %c96] : memref<32x128xf32, #tpu.memory_space<vmem>>, vector<32x32xf32>
      tpu.vector_store %arg17[%c0_162, %c96], %206 {strides = array<i32>} : memref<32x128xf32, #tpu.memory_space<vmem>>, vector<32x32xf32>,
      %c0_163 = arith.constant 0 : index
      %c0_164 = arith.constant 0 : index
      %208 = vector.load %arg17[%c0_163, %c0_164] : memref<32x128xf32, #tpu.memory_space<vmem>>, vector<32x128xf32>
      %209 = arith.truncf %208 : vector<32x128xf32> to vector<32x128xbf16>
      %c0_165 = arith.constant 0 : index
      %c0_166 = arith.constant 0 : index
      %210 = vector.load %arg10[%c0_165, %c0_166] : memref<128x128xbf16, #tpu.memory_space<vmem>>, vector<128x128xbf16>
      %cst_167 = arith.constant dense<0.000000e+00> : vector<32x128xf32>
      %211 = tpu.matmul %209, %210, %cst_167 {dimension_numbers = #tpu.dot_dimension_numbers<[1], [0], [0], [1], [0, 0, 1, 1], [], []>} : vector<32x128xbf16>, vector<128x128xbf16>, vector<32x128xf32> -> vector<32x128xf32>
      %c0_168 = arith.constant 0 : index
      %c0_169 = arith.constant 0 : index
      %212 = vector.load %arg11[%c0_168, %c0_169] : memref<1x128xf32, #tpu.memory_space<vmem>>, vector<1x128xf32>
      %213 = vector.broadcast %212 : vector<1x128xf32> to vector<32x128xf32>
      %214 = arith.addf %211, %213 : vector<32x128xf32>
      %c0_170 = arith.constant 0 : index
      %c0_171 = arith.constant 0 : index
      %c0_172 = arith.constant 0 : index
      %215 = vector.load %arg3[%c0_170, %c0_171, %c0_172] : memref<1x32x128xf32, #tpu.memory_space<vmem>>, vector<1x32x128xf32>
      %216 = vector.shape_cast %215 : vector<1x32x128xf32> to vector<32x128xf32>
      %217 = arith.addf %216, %214 : vector<32x128xf32>
      %c0_173 = arith.constant 0 : index
      %c0_174 = arith.constant 0 : index
      %c0_175 = arith.constant 0 : index
      %218 = vector.load %arg12[%c0_173, %c0_174, %c0_175] : memref<1x32x128xf32, #tpu.memory_space<vmem>>, vector<1x32x128xf32>
      %219 = vector.shape_cast %218 : vector<1x32x128xf32> to vector<32x128xf32>
      %220 = vector.shape_cast %217 : vector<32x128xf32> to vector<1x32x128xf32>
      tpu.vector_store %arg12[%c0_173, %c0_174, %c0_175], %220 {strides = array<i32>} : memref<1x32x128xf32, #tpu.memory_space<vmem>>, vector<1x32x128xf32>,
    } else {
    }
    return
  }
  func.func @transform_0(%arg0: i32, %arg1: i32, %arg2: i32) -> (i32, i32, i32) {
    %c0_i32 = arith.constant 0 : i32
    %c0_i32_0 = arith.constant 0 : i32
    return %arg0, %arg1, %c0_i32 : i32, i32, i32
  }
  func.func @transform_1(%arg0: i32, %arg1: i32, %arg2: i32) -> (i32, i32) {
    %c0_i32 = arith.constant 0 : i32
    %c0_i32_0 = arith.constant 0 : i32
    %c0_i32_1 = arith.constant 0 : i32
    return %c0_i32, %c0_i32_0 : i32, i32
  }
  func.func @transform_2(%arg0: i32, %arg1: i32, %arg2: i32) -> (i32, i32) {
    %c0_i32 = arith.constant 0 : i32
    %c0_i32_0 = arith.constant 0 : i32
    %c0_i32_1 = arith.constant 0 : i32
    return %c0_i32, %c0_i32_0 : i32, i32
  }
  func.func @transform_3(%arg0: i32, %arg1: i32, %arg2: i32) -> (i32, i32) {
    %c0_i32 = arith.constant 0 : i32
    %c0_i32_0 = arith.constant 0 : i32
    %c0_i32_1 = arith.constant 0 : i32
    return %c0_i32, %c0_i32_0 : i32, i32
  }
  func.func @transform_4(%arg0: i32, %arg1: i32, %arg2: i32) -> (i32, i32) {
    %c0_i32 = arith.constant 0 : i32
    %c0_i32_0 = arith.constant 0 : i32
    %c0_i32_1 = arith.constant 0 : i32
    return %c0_i32, %c0_i32_0 : i32, i32
  }
  func.func @transform_5(%arg0: i32, %arg1: i32, %arg2: i32) -> (i32, i32, i32, i32) {
    %0 = arith.minsi %arg1, %arg2 : i32
    %c0_i32 = arith.constant 0 : i32
    %c0_i32_0 = arith.constant 0 : i32
    %c0_i32_1 = arith.constant 0 : i32
    return %arg0, %c0_i32, %0, %c0_i32_0 : i32, i32, i32, i32
  }
  func.func @transform_6(%arg0: i32, %arg1: i32, %arg2: i32) -> (i32, i32, i32, i32) {
    %0 = arith.minsi %arg1, %arg2 : i32
    %c0_i32 = arith.constant 0 : i32
    %c0_i32_0 = arith.constant 0 : i32
    %c0_i32_1 = arith.constant 0 : i32
    return %arg0, %c0_i32, %0, %c0_i32_0 : i32, i32, i32, i32
  }
  func.func @transform_7(%arg0: i32, %arg1: i32, %arg2: i32) -> (i32, i32) {
    %c0_i32 = arith.constant 0 : i32
    %c0_i32_0 = arith.constant 0 : i32
    %c0_i32_1 = arith.constant 0 : i32
    return %c0_i32, %c0_i32_0 : i32, i32
  }
  func.func @transform_8(%arg0: i32, %arg1: i32, %arg2: i32) -> (i32, i32) {
    %c0_i32 = arith.constant 0 : i32
    %c0_i32_0 = arith.constant 0 : i32
    %c0_i32_1 = arith.constant 0 : i32
    return %c0_i32, %c0_i32_0 : i32, i32
  }
  func.func @transform_9(%arg0: i32, %arg1: i32, %arg2: i32) -> (i32, i32, i32) {
    %c0_i32 = arith.constant 0 : i32
    %c0_i32_0 = arith.constant 0 : i32
    return %arg0, %arg1, %c0_i32 : i32, i32, i32
  }
}

</mosaic_0001>

<llo_original>
// kernel: gpt2_block.3
$region0: #{gpt2_block.3}
  #allocation0 [shape = 'u32[]', space=smem, size = 0x4, offset = 0x4, fixed_abs, tag = 'smem constant byte address 0x4 - core index']
  #allocation1 [shape = 'u32[144,128]{1,0:T(1,128)}', space=vmem, size = 0x12000, scoped, tag = 'internal scratch']
  %s0 = inlined_call_operand.vmem [shape: f32[4,32,128], index: 0, kind: input, shape index: {}]
  %s1 = inlined_call_operand.vmem [shape: f32[1,128], index: 1, kind: input, shape index: {}]
  %s2 = inlined_call_operand.vmem [shape: f32[1,128], index: 2, kind: input, shape index: {}]
  %s3 = inlined_call_operand.vmem [shape: bf16[128,256], index: 3, kind: input, shape index: {}]
  %s4 = inlined_call_operand.vmem [shape: f32[1,256], index: 4, kind: input, shape index: {}]
  %s5 = inlined_call_operand.vmem [shape: bf16[4,4,32,32], index: 5, kind: output, shape index: {0}]
  %s6 = inlined_call_operand.vmem [shape: bf16[4,4,32,32], index: 6, kind: output, shape index: {1}]
  %7 = xla_tuple %s5, %s6
  %s8 = sld [smem:[#allocation0]]
  $region61: #{gpt2_block.3} parent=0
    _
  %s10 = ssub.s32 1, %s8
  %s11 = scalar_select 0, %s10, %s8
  loop: start=0, step=1, limit=6
  $region2: #{gpt2_block.3} parent=0 // loop_pre_header
    _
  $region3: #{gpt2_block.3} parent=0 // loop_header
    %s13 = sphi 0, %s17
    %p14 = scmp.ge.s32.totalorder %s13, 6
    %s20 = sphi 0, %s32
    %s21 = sphi 0, %s28
    %s22 = sphi 0, %s20
    %s23 = sphi 0, %s21
    %s24 = sphi 0, %s22
    %s25 = sphi 0, %s23
    %s37 = sphi 0, %s39
    %s40 = sphi 0, %s37
    %s41 = sphi 0, %s40
    %s57 = sphi 0, %s41
    %s61 = sphi 0, %s61
    %s63 = sphi 0, %s61
    %s64 = sphi 0, %s63
    %s78 = sphi 0, %s64
    %s82 = sphi 0, %s82
    %s84 = sphi 0, %s82
    %s85 = sphi 0, %s84
    %s99 = sphi 0, %s85
    %s103 = sphi 0, %s103
    %s105 = sphi 0, %s103
    %s106 = sphi 0, %s105
    %s120 = sphi 0, %s106
    %s124 = sphi 0, %s124
    %s126 = sphi 0, %s124
    %s127 = sphi 0, %s126
    %s141 = sphi 0, %s127
    %s149 = sphi 0, %s151
    %s152 = sphi 0, %s149
    %s153 = sphi 0, %s152
    %s169 = sphi 0, %s153
    %s177 = sphi 0, %s179
    %s180 = sphi 0, %s177
    %s181 = sphi 0, %s180
    %s197 = sphi 0, %s181
  $region4: #{gpt2_block.3} parent=0 // loop_header_branch
    %16 = sbr.rel (%p14) target = $region8
  $region5: #{gpt2_block.3} parent=0 // loop_body
    %s18 = ssub.s32 %s13, 1
    %s19 = ssub.s32 %s13, 2
    %s26 = sadd.s32 1, %s21
    %p27 = scmp.ge.s32.totalorder %s26, 1
    %s28 = scalar_select %p27, 0, %s26
    %s29 = sadd.s32 1, %s20
    %s30 = scalar_select %p27, %s29, %s20
    %p31 = scmp.ge.s32.totalorder %s30, 4
    %s32 = scalar_select %p31, 0, %s30
    %s33 = ssub.s32 %s20, %s32
    %s34 = ssub.s32 %s21, %s28
    %s35 = sor.u32 %s33, %s34
    %p36 = scmp.eq.s32.totalorder %s35, 0
    %s38 = sadd.s32 %s37, 1
    %s39 = scalar_select %p36, %s37, %s38
    %p42 = pneg %p36
    %p43 = scmp.eq.s32.totalorder %s13, 3
    %p44 = por %p42, %p43
    %p45 = scmp.ne.s32.totalorder %s37, %s40
    %p46 = scmp.eq.s32.totalorder %s13, 0
    %p47 = por %p45, %p46
    %p48 = scmp.ne.s32.totalorder %s37, %s40
    %p49 = scmp.eq.s32.totalorder %s18, 3
    %p50 = por %p48, %p49
    %p51 = scmp.ne.s32.totalorder %s40, %s41
    %p52 = scmp.eq.s32.totalorder %s18, 0
    %p53 = por %p51, %p52
    %p54 = scmp.ne.s32.totalorder %s40, %s41
    %p55 = scmp.eq.s32.totalorder %s19, 3
    %p56 = por %p54, %p55
    %p58 = scmp.ne.s32.totalorder %s41, %s57
    %p59 = scmp.eq.s32.totalorder %s19, 0
    %p60 = por %p58, %p59
    %s62 = sadd.s32 %s61, 1
    %p65 = scmp.eq.s32.totalorder %s13, 3
    %p66 = scmp.ne.s32.totalorder %s61, %s63
    %p67 = scmp.eq.s32.totalorder %s13, 0
    %p68 = por %p66, %p67
    %p69 = scmp.ne.s32.totalorder %s61, %s63
    %p70 = scmp.eq.s32.totalorder %s18, 3
    %p71 = por %p69, %p70
    %p72 = scmp.ne.s32.totalorder %s63, %s64
    %p73 = scmp.eq.s32.totalorder %s18, 0
    %p74 = por %p72, %p73
    %p75 = scmp.ne.s32.totalorder %s63, %s64
    %p76 = scmp.eq.s32.totalorder %s19, 3
    %p77 = por %p75, %p76
    %p79 = scmp.ne.s32.totalorder %s64, %s78
    %p80 = scmp.eq.s32.totalorder %s19, 0
    %p81 = por %p79, %p80
    %s83 = sadd.s32 %s82, 1
    %p86 = scmp.eq.s32.totalorder %s13, 3
    %p87 = scmp.ne.s32.totalorder %s82, %s84
    %p88 = scmp.eq.s32.totalorder %s13, 0
    %p89 = por %p87, %p88
    %p90 = scmp.ne.s32.totalorder %s82, %s84
    %p91 = scmp.eq.s32.totalorder %s18, 3
    %p92 = por %p90, %p91
    %p93 = scmp.ne.s32.totalorder %s84, %s85
    %p94 = scmp.eq.s32.totalorder %s18, 0
    %p95 = por %p93, %p94
    %p96 = scmp.ne.s32.totalorder %s84, %s85
    %p97 = scmp.eq.s32.totalorder %s19, 3
    %p98 = por %p96, %p97
    %p100 = scmp.ne.s32.totalorder %s85, %s99
    %p101 = scmp.eq.s32.totalorder %s19, 0
    %p102 = por %p100, %p101
    %s104 = sadd.s32 %s103, 1
    %p107 = scmp.eq.s32.totalorder %s13, 3
    %p108 = scmp.ne.s32.totalorder %s103, %s105
    %p109 = scmp.eq.s32.totalorder %s13, 0
    %p110 = por %p108, %p109
    %p111 = scmp.ne.s32.totalorder %s103, %s105
    %p112 = scmp.eq.s32.totalorder %s18, 3
    %p113 = por %p111, %p112
    %p114 = scmp.ne.s32.totalorder %s105, %s106
    %p115 = scmp.eq.s32.totalorder %s18, 0
    %p116 = por %p114, %p115
    %p117 = scmp.ne.s32.totalorder %s105, %s106
    %p118 = scmp.eq.s32.totalorder %s19, 3
    %p119 = por %p117, %p118
    %p121 = scmp.ne.s32.totalorder %s106, %s120
    %p122 = scmp.eq.s32.totalorder %s19, 0
    %p123 = por %p121, %p122
    %s125 = sadd.s32 %s124, 1
    %p128 = scmp.eq.s32.totalorder %s13, 3
    %p129 = scmp.ne.s32.totalorder %s124, %s126
    %p130 = scmp.eq.s32.totalorder %s13, 0
    %p131 = por %p129, %p130
    %p132 = scmp.ne.s32.totalorder %s124, %s126
    %p133 = scmp.eq.s32.totalorder %s18, 3
    %p134 = por %p132, %p133
    %p135 = scmp.ne.s32.totalorder %s126, %s127
    %p136 = scmp.eq.s32.totalorder %s18, 0
    %p137 = por %p135, %p136
    %p138 = scmp.ne.s32.totalorder %s126, %s127
    %p139 = scmp.eq.s32.totalorder %s19, 3
    %p140 = por %p138, %p139
    %p142 = scmp.ne.s32.totalorder %s127, %s141
    %p143 = scmp.eq.s32.totalorder %s19, 0
    %p144 = por %p142, %p143
    %s145 = ssub.s32 %s20, %s32
    %s146 = ssub.s32 %s21, %s28
    %s147 = sor.u32 %s145, %s146
    %p148 = scmp.eq.s32.totalorder %s147, 0
    %s150 = sadd.s32 %s149, 1
    %s151 = scalar_select %p148, %s149, %s150
    %p154 = pneg %p148
    %p155 = scmp.eq.s32.totalorder %s13, 3
    %p156 = por %p154, %p155
    %p157 = scmp.ne.s32.totalorder %s149, %s152
    %p158 = scmp.eq.s32.totalorder %s13, 0
    %p159 = por %p157, %p158
    %p160 = scmp.ne.s32.totalorder %s149, %s152
    %p161 = scmp.eq.s32.totalorder %s18, 3
    %p162 = por %p160, %p161
    %p163 = scmp.ne.s32.totalorder %s152, %s153
    %p164 = scmp.eq.s32.totalorder %s18, 0
    %p165 = por %p163, %p164
    %p166 = scmp.ne.s32.totalorder %s152, %s153
    %p167 = scmp.eq.s32.totalorder %s19, 3
    %p168 = por %p166, %p167
    %p170 = scmp.ne.s32.totalorder %s153, %s169
    %p171 = scmp.eq.s32.totalorder %s19, 0
    %p172 = por %p170, %p171
    %s173 = ssub.s32 %s20, %s32
    %s174 = ssub.s32 %s21, %s28
    %s175 = sor.u32 %s173, %s174
    %p176 = scmp.eq.s32.totalorder %s175, 0
    %s178 = sadd.s32 %s177, 1
    %s179 = scalar_select %p176, %s177, %s178
    %p182 = pneg %p176
    %p183 = scmp.eq.s32.totalorder %s13, 3
    %p184 = por %p182, %p183
    %p185 = scmp.ne.s32.totalorder %s177, %s180
    %p186 = scmp.eq.s32.totalorder %s13, 0
    %p187 = por %p185, %p186
    %p188 = scmp.ne.s32.totalorder %s177, %s180
    %p189 = scmp.eq.s32.totalorder %s18, 3
    %p190 = por %p188, %p189
    %p191 = scmp.ne.s32.totalorder %s180, %s181
    %p192 = scmp.eq.s32.totalorder %s18, 0
    %p193 = por %p191, %p192
    %p194 = scmp.ne.s32.totalorder %s180, %s181
    %p195 = scmp.eq.s32.totalorder %s19, 3
    %p196 = por %p194, %p195
    %p198 = scmp.ne.s32.totalorder %s181, %s197
    %p199 = scmp.eq.s32.totalorder %s19, 0
    %p200 = por %p198, %p199
    %p201 = scmp.le.s32.totalorder 1, %s13
    %p202 = scmp.lt.s32.totalorder %s13, 5
    %p203 = pnand %p201, %p202
    %p204 = pneg %p203
    // Predicated region
    $region9: #{gpt2_block.3} parent=5 // pred_check
      _
    $region10: #{gpt2_block.3} parent=5 // pred_check_branch
      %206 = sbr.rel (%p203) target = $region12
    $region11: #{gpt2_block.3} parent=5 // pred_region
      %s207 = ssub.s32 %s13, 1
      // Predicated region
      $region13: #{gpt2_block.3} parent=11 // pred_check
        %p208 = pneg %p74
      $region14: #{gpt2_block.3} parent=11 // pred_check_branch
        %210 = sbr.rel (%p208) target = $region16
      $region15: #{gpt2_block.3} parent=11 // pred_region
        _
      $region16: #{gpt2_block.3} parent=11 // pred_fallthru
        _
      // Predicated region
      $region17: #{gpt2_block.3} parent=11 // pred_check
        %p211 = pneg %p95
      $region18: #{gpt2_block.3} parent=11 // pred_check_branch
        %213 = sbr.rel (%p211) target = $region20
      $region19: #{gpt2_block.3} parent=11 // pred_region
        _
      $region20: #{gpt2_block.3} parent=11 // pred_fallthru
        _
      // Predicated region
      $region21: #{gpt2_block.3} parent=11 // pred_check
        %p214 = pneg %p116
      $region22: #{gpt2_block.3} parent=11 // pred_check_branch
        %216 = sbr.rel (%p214) target = $region24
      $region23: #{gpt2_block.3} parent=11 // pred_region
        _
      $region24: #{gpt2_block.3} parent=11 // pred_fallthru
        _
      // Predicated region
      $region25: #{gpt2_block.3} parent=11 // pred_check
        %p217 = pneg %p137
      $region26: #{gpt2_block.3} parent=11 // pred_check_branch
        %219 = sbr.rel (%p217) target = $region28
      $region27: #{gpt2_block.3} parent=11 // pred_region
        _
      $region28: #{gpt2_block.3} parent=11 // pred_fallthru
        _
    $region12: #{gpt2_block.3} parent=5 // pred_fallthru
      _
    %p220 = scmp.lt.s32.totalorder %s13, 4
    // Predicated region
    $region29: #{gpt2_block.3} parent=5 // pred_check
      %p221 = pneg %p220
    $region30: #{gpt2_block.3} parent=5 // pred_check_branch
      %223 = sbr.rel (%p221) target = $region32
    $region31: #{gpt2_block.3} parent=5 // pred_region
      // Predicated region
      $region33: #{gpt2_block.3} parent=31 // pred_check
        %p224 = pneg %p47
      $region34: #{gpt2_block.3} parent=31 // pred_check_branch
        %226 = sbr.rel (%p224) target = $region36
      $region35: #{gpt2_block.3} parent=31 // pred_region
        %s227 = smul.u32 4, %s21
        %p228 = scmp.lt.s32.totalorder %s20, 3
        %s229 = scalar_select %p228, %s20, 3
        %p230 = scmp.lt.s32.totalorder %s227, 3
        %s231 = scalar_select %p230, %s227, 3
        %s232 = smul.addr %s229, 4
        %s233 = sadd.s32 %s231, %s232
        %s234 = smul.addr %s233, 8
        %s235 = scalar_lea.vmem %s0, %s234
        %s236 = smul.u32 4, %s21
      $region36: #{gpt2_block.3} parent=31 // pred_fallthru
        _
    $region32: #{gpt2_block.3} parent=5 // pred_fallthru
      _
    %p237 = scmp.le.s32.totalorder 1, %s13
    %p238 = scmp.lt.s32.totalorder %s13, 5
    %p239 = pnand %p237, %p238
    %p240 = pneg %p239
    // Predicated region
    $region37: #{gpt2_block.3} parent=5 // pred_check
      _
    $region38: #{gpt2_block.3} parent=5 // pred_check_branch
      %242 = sbr.rel (%p239) target = $region40
    $region39: #{gpt2_block.3} parent=5 // pred_region
      %s243 = ssub.s32 %s13, 1
      %s244 = smul.u32 4, %s23
      %p245 = scmp.lt.s32.totalorder %s22, 3
      %s246 = scalar_select %p245, %s22, 3
      %p247 = scmp.lt.s32.totalorder %s244, 3
      %s248 = scalar_select %p247, %s244, 3
      %s249 = smul.addr %s246, 4
      %s250 = sadd.s32 %s248, %s249
      %s251 = smul.addr %s250, 8
      %s252 = scalar_lea.vmem %s0, %s251
      %p253 = pneg %p53
      %p254 = pneg %p50
      %p255 = pneg %p74
      %p256 = pneg %p71
      %p257 = pneg %p95
      %p258 = pneg %p92
      %p259 = pneg %p116
      %p260 = pneg %p113
      %p261 = pneg %p137
      %p262 = pneg %p134
      %p263 = pneg %p165
      %p264 = pneg %p162
      %s265 = smul.u32 4, %s23
      %p266 = scmp.lt.s32.totalorder %s22, 3
      %s267 = scalar_select %p266, %s22, 3
      %p268 = scmp.lt.s32.totalorder %s265, 3
      %s269 = scalar_select %p268, %s265, 3
      %s270 = smul.addr %s267, 16
      %s271 = sadd.s32 %s269, %s270
      %s272 = smul.addr %s271, 4
      %s273 = scalar_lea.vmem %s5, %s272
      %p274 = pneg %p193
      %p275 = pneg %p190
      %s276 = smul.u32 4, %s23
      %p277 = scmp.lt.s32.totalorder %s22, 3
      %s278 = scalar_select %p277, %s22, 3
      %p279 = scmp.lt.s32.totalorder %s276, 3
      %s280 = scalar_select %p279, %s276, 3
      %s281 = smul.addr %s278, 16
      %s282 = sadd.s32 %s280, %s281
      %s283 = smul.addr %s282, 4
      %s284 = scalar_lea.vmem %s6, %s283
      %s285 = smul.u32 4, %s23
      %p286 = scmp.lt.s32.totalorder %s22, 3
      %s287 = scalar_select %p286, %s22, 3
      %p288 = scmp.lt.s32.totalorder %s285, 3
      %s289 = scalar_select %p288, %s285, 3
      %s290 = smul.addr %s287, 4
      %s291 = sadd.s32 %s289, %s290
      %s292 = smul.addr %s291, 8
      %s293 = scalar_lea.vmem %s0, %s292
      %s294 = smul.u32 4, %s23
      %s295 = smul.u32 4, %s23
      %p296 = scmp.lt.s32.totalorder %s22, 3
      %s297 = scalar_select %p296, %s22, 3
      %p298 = scmp.lt.s32.totalorder %s295, 3
      %s299 = scalar_select %p298, %s295, 3
      %s300 = smul.addr %s297, 16
      %s301 = sadd.s32 %s299, %s300
      %s302 = smul.addr %s301, 4
      %s303 = scalar_lea.vmem %s5, %s302
      %s304 = smul.u32 4, %s23
      %s305 = smul.u32 4, %s23
      %p306 = scmp.lt.s32.totalorder %s22, 3
      %s307 = scalar_select %p306, %s22, 3
      %p308 = scmp.lt.s32.totalorder %s305, 3
      %s309 = scalar_select %p308, %s305, 3
      %s310 = smul.addr %s307, 16
      %s311 = sadd.s32 %s309, %s310
      %s312 = smul.addr %s311, 4
      %s313 = scalar_lea.vmem %s6, %s312
      %s314 = smul.u32 4, %s23
      %v316 = vld [vmem:[%s293] sm:$0xff]
      %v317 = vld [vmem:[%s293 + $0x8] sm:$0xff]
      %v318 = vld [vmem:[%s293 + $0x10] sm:$0xff]
      %v319 = vld [vmem:[%s293 + $0x18] sm:$0xff]
      %v320 = vld [vmem:[%s1] sm:$0x1]
      %v321 = vld [vmem:[%s2] sm:$0x1]
      %322 = vadd.xlane.f32.xlu0 %v316
      %v323 = vpop.xlane.xlu0 %322
      %324 = vadd.xlane.f32.xlu0 %v317
      %v325 = vpop.xlane.xlu0 %324
      %326 = vadd.xlane.f32.xlu0 %v318
      %v327 = vpop.xlane.xlu0 %326
      %328 = vadd.xlane.f32.xlu0 %v319
      %v329 = vpop.xlane.xlu0 %328
      %v330 = vrcp.pop 128.0
      %v331 = vmul.f32 %v323, %v330
      %v332 = vmul.f32 %v325, %v330
      %v333 = vmul.f32 %v327, %v330
      %v334 = vmul.f32 %v329, %v330
      %v335 = vsub.f32 %v316, %v331
      %v336 = vsub.f32 %v317, %v332
      %v337 = vsub.f32 %v318, %v333
      %v338 = vsub.f32 %v319, %v334
      %v339 = vmul.f32 %v335, %v335
      %v340 = vmul.f32 %v336, %v336
      %v341 = vmul.f32 %v337, %v337
      %v342 = vmul.f32 %v338, %v338
      %343 = vadd.xlane.f32.xlu0 %v339
      %v344 = vpop.xlane.xlu0 %343
      %345 = vadd.xlane.f32.xlu0 %v340
      %v346 = vpop.xlane.xlu0 %345
      %347 = vadd.xlane.f32.xlu0 %v341
      %v348 = vpop.xlane.xlu0 %347
      %349 = vadd.xlane.f32.xlu0 %v342
      %v350 = vpop.xlane.xlu0 %349
      %v351 = vmul.f32 %v344, %v330
      %v352 = vmul.f32 %v346, %v330
      %v353 = vmul.f32 %v348, %v330
      %v354 = vmul.f32 %v350, %v330
      %v355 = vadd.f32 %v351, 1e-05
      %v356 = vadd.f32 %v352, 1e-05
      %v357 = vadd.f32 %v353, 1e-05
      %v358 = vadd.f32 %v354, 1e-05
      %v359 = vrsqrt.pop %v355
      %v360 = vrsqrt.pop %v356
      %v361 = vrsqrt.pop %v357
      %v362 = vrsqrt.pop %v358
      %v363 = vmul.f32 %v335, %v359
      %v364 = vmul.f32 %v336, %v360
      %v365 = vmul.f32 %v337, %v361
      %v366 = vmul.f32 %v338, %v362
      %v368 = vlaneseq
      %v369 = vshrl.u32 %v368, 7
      %v370 = vsub.s32 0, %v369
      %v371 = vrot.slane %v320, %v370
      %v373 = vmul.f32 %v363, %v371
      %v374 = vmul.f32 %v364, %v371
      %v375 = vmul.f32 %v365, %v371
      %v376 = vmul.f32 %v366, %v371
      %v378 = vlaneseq
      %v379 = vshrl.u32 %v378, 7
      %v380 = vsub.s32 0, %v379
      %v381 = vrot.slane %v321, %v380
      %v383 = vadd.f32 %v373, %v381
      %v384 = vadd.f32 %v374, %v381
      %v385 = vadd.f32 %v375, %v381
      %v386 = vadd.f32 %v376, %v381
      %v387 = vpack.c.bf16 %v384, %v383
      %v388 = vpack.c.bf16 %v386, %v385
      %v389 = vld [vmem:[%s3] sm:$0xff]
      %v390 = vld [vmem:[%s3 + $0x8] sm:$0xff]
      %v391 = vld [vmem:[%s3 + $0x10] sm:$0xff]
      %v392 = vld [vmem:[%s3 + $0x18] sm:$0xff]
      %v393 = vld [vmem:[%s3 + $0x20] sm:$0xff]
      %v394 = vld [vmem:[%s3 + $0x28] sm:$0xff]
      %v395 = vld [vmem:[%s3 + $0x30] sm:$0xff]
      %v396 = vld [vmem:[%s3 + $0x38] sm:$0xff]
      %v397 = vld [vmem:[%s3 + $0x40] sm:$0xff]
      %v398 = vld [vmem:[%s3 + $0x48] sm:$0xff]
      %v399 = vld [vmem:[%s3 + $0x50] sm:$0xff]
      %v400 = vld [vmem:[%s3 + $0x58] sm:$0xff]
      %v401 = vld [vmem:[%s3 + $0x60] sm:$0xff]
      %v402 = vld [vmem:[%s3 + $0x68] sm:$0xff]
      %v403 = vld [vmem:[%s3 + $0x70] sm:$0xff]
      %v404 = vld [vmem:[%s3 + $0x78] sm:$0xff]
      %v405 = vld [vmem:[%s4] sm:$0x3]
      %v407 = vlaneseq
      %v408 = vshrl.u32 %v407, 7
      %v409 = vsub.s32 0, %v408
      %v410 = vrot.slane %v405, %v409
      %v411 = vlaneseq
      %v412 = vshrl.u32 %v411, 7
      %v413 = vsub.s32 1, %v412
      %v414 = vrot.slane %v405, %v413
      %v433 = vunpack.c.l.b16 %v389
      %v434 = vunpack.c.h.b16 %v389
      %v435 = vunpack.c.l.b16 %v390
      %v436 = vunpack.c.h.b16 %v390
      %v437 = vunpack.c.l.b16 %v391
      %v438 = vunpack.c.h.b16 %v391
      %v439 = vunpack.c.l.b16 %v392
      %v440 = vunpack.c.h.b16 %v392
      %v441 = vunpack.c.l.b16 %v393
      %v442 = vunpack.c.h.b16 %v393
      %v443 = vunpack.c.l.b16 %v394
      %v444 = vunpack.c.h.b16 %v394
      %v445 = vunpack.c.l.b16 %v395
      %v446 = vunpack.c.h.b16 %v395
      %v447 = vunpack.c.l.b16 %v396
      %v448 = vunpack.c.h.b16 %v396
      %v449 = vunpack.c.l.b16 %v397
      %v450 = vunpack.c.h.b16 %v397
      %v451 = vunpack.c.l.b16 %v398
      %v452 = vunpack.c.h.b16 %v398
      %v453 = vunpack.c.l.b16 %v399
      %v454 = vunpack.c.h.b16 %v399
      %v455 = vunpack.c.l.b16 %v400
      %v456 = vunpack.c.h.b16 %v400
      %v457 = vunpack.c.l.b16 %v401
      %v458 = vunpack.c.h.b16 %v401
      %v459 = vunpack.c.l.b16 %v402
      %v460 = vunpack.c.h.b16 %v402
      %v461 = vunpack.c.l.b16 %v403
      %v462 = vunpack.c.h.b16 %v403
      %v463 = vunpack.c.l.b16 %v404
      %v464 = vunpack.c.h.b16 %v404
      %v465 = vpack.c.b16 %v435, %v433
      %v466 = vpack.c.b16 %v436, %v434
      %v467 = vpack.c.b16 %v439, %v437
      %v468 = vpack.c.b16 %v440, %v438
      %v469 = vpack.c.b16 %v443, %v441
      %v470 = vpack.c.b16 %v444, %v442
      %v471 = vpack.c.b16 %v447, %v445
      %v472 = vpack.c.b16 %v448, %v446
      %v473 = vpack.c.b16 %v451, %v449
      %v474 = vpack.c.b16 %v452, %v450
      %v475 = vpack.c.b16 %v455, %v453
      %v476 = vpack.c.b16 %v456, %v454
      %v477 = vpack.c.b16 %v459, %v457
      %v478 = vpack.c.b16 %v460, %v458
      %v479 = vpack.c.b16 %v463, %v461
      %v480 = vpack.c.b16 %v464, %v462
      %497 = vmatprep.subr.bf16.mxu0 %v480
      %498 = vmatpush1.bf16.msra.mxu0 %v479
      %499 = vmatprep.subr.bf16.mxu0 %v478
      %500 = vmatpush1.bf16.msra.mxu0 %v477
      %501 = vmatprep.subr.bf16.mxu0 %v476
      %502 = vmatpush1.bf16.msra.mxu0 %v475
      %503 = vmatprep.subr.bf16.mxu0 %v474
      %504 = vmatpush1.bf16.msra.mxu0 %v473
      %505 = vmatprep.subr.bf16.mxu0 %v472
      %506 = vmatpush1.bf16.msra.mxu0 %v471
      %507 = vmatprep.subr.bf16.mxu0 %v470
      %508 = vmatpush1.bf16.msra.mxu0 %v469
      %509 = vmatprep.subr.bf16.mxu0 %v468
      %510 = vmatpush1.bf16.msra.mxu0 %v467
      %511 = vmatprep.subr.bf16.mxu0 %v466
      %512 = vmatpush1.bf16.msra.mxu0 %v465
      %513 = vmatprep.subr.bf16.mxu0 0
      %514 = vmatpush2.bf16.msra.mxu0 0
      %515 = vmatprep.subr.bf16.mxu0 0
      %516 = vmatpush2.bf16.msra.mxu0 0
      %517 = vmatprep.subr.bf16.mxu0 0
      %518 = vmatpush2.bf16.msra.mxu0 0
      %519 = vmatprep.subr.bf16.mxu0 0
      %520 = vmatpush2.bf16.msra.mxu0 0
      %521 = vmatprep.subr.bf16.mxu0 0
      %522 = vmatpush2.bf16.msra.mxu0 0
      %523 = vmatprep.subr.bf16.mxu0 0
      %524 = vmatpush2.bf16.msra.mxu0 0
      %525 = vmatprep.subr.bf16.mxu0 0
      %526 = vmatpush2.bf16.msra.mxu0 0
      %527 = vmatprep.subr.bf16.mxu0 0
      %528 = vmatpush2.bf16.msra.mxu0 0
      %529 = vmatprep.mubr.bf16.mxu0 0
      %530 = vmatmul.mubr.bf16.gmra.mxu0 %v387
      %v531 = vpop.f32.mrf.mxu0
      %v532 = vadd.f32 %v410, %v531
      %v533 = vpop.f32.mrf.mxu0
      %v534 = vadd.f32 %v414, %v533
      %v535 = vpop.f32.mrf.mxu0
      %v536 = vadd.f32 %v410, %v535
      %v537 = vpop.f32.mrf.mxu0
      %v538 = vadd.f32 %v414, %v537
      %539 = vmatprep.mubr.bf16.mxu0 0
      %540 = vmatmul.mubr.bf16.gmra.mxu0 %v388
      %v541 = vpop.f32.mrf.mxu0
      %v542 = vadd.f32 %v410, %v541
      %v543 = vpop.f32.mrf.mxu0
      %v544 = vadd.f32 %v414, %v543
      %v545 = vpop.f32.mrf.mxu0
      %v546 = vadd.f32 %v410, %v545
      %v547 = vpop.f32.mrf.mxu0
      %v548 = vadd.f32 %v414, %v547
      %549 = vdwg.mxu0
      %v550 = vpack.c.bf16 %v536, %v532
      %v551 = vpack.c.bf16 %v546, %v542
      %v554 = vunpack.c.l.b16 %v550
      %v555 = vunpack.c.h.b16 %v550
      %v556 = vunpack.c.l.b16 %v551
      %v557 = vunpack.c.h.b16 %v551
      %v558 = vpack.c.b16 %v554, %v554
      %v559 = vpack.c.b16 %v555, %v555
      %v560 = vpack.c.b16 %v556, %v556
      %v561 = vpack.c.b16 %v557, %v557
      %vm566 = vcmask 257024
      %567 = vst.msk [vmem:[%s303] sm:$0xf] %vm566, %v558
      %568 = vst.msk [vmem:[%s303 + $0x4] sm:$0xf] %vm566, %v559
      %569 = vst.msk [vmem:[%s303 + $0x8] sm:$0xf] %vm566, %v560
      %570 = vst.msk [vmem:[%s303 + $0xc] sm:$0xf] %vm566, %v561
      %v571 = vpack.c.bf16 %v538, %v534
      %v572 = vpack.c.bf16 %v548, %v544
      %v575 = vunpack.c.l.b16 %v571
      %v576 = vunpack.c.h.b16 %v571
      %v577 = vunpack.c.l.b16 %v572
      %v578 = vunpack.c.h.b16 %v572
      %v579 = vpack.c.b16 %v575, %v575
      %v580 = vpack.c.b16 %v576, %v576
      %v581 = vpack.c.b16 %v577, %v577
      %v582 = vpack.c.b16 %v578, %v578
      %587 = vst.msk [vmem:[%s313] sm:$0xf] %vm566, %v579
      %588 = vst.msk [vmem:[%s313 + $0x4] sm:$0xf] %vm566, %v580
      %589 = vst.msk [vmem:[%s313 + $0x8] sm:$0xf] %vm566, %v581
      %590 = vst.msk [vmem:[%s313 + $0xc] sm:$0xf] %vm566, %v582
      %591 = vrot.lane.b32.xlu0 %v558, 96
      %v592 = vpop.permute.xlu0 %591
      %593 = vrot.lane.b32.xlu0 %v559, 96
      %v594 = vpop.permute.xlu0 %593
      %595 = vrot.lane.b32.xlu0 %v560, 96
      %v596 = vpop.permute.xlu0 %595
      %597 = vrot.lane.b32.xlu0 %v561, 96
      %v598 = vpop.permute.xlu0 %597
      %s603 = scalar_lea.vmem %s303, 16
      %604 = vst.msk [vmem:[%s603] sm:$0xf] %vm566, %v592
      %605 = vst.msk [vmem:[%s603 + $0x4] sm:$0xf] %vm566, %v594
      %606 = vst.msk [vmem:[%s603 + $0x8] sm:$0xf] %vm566, %v596
      %607 = vst.msk [vmem:[%s603 + $0xc] sm:$0xf] %vm566, %v598
      %608 = vrot.lane.b32.xlu0 %v579, 96
      %v609 = vpop.permute.xlu0 %608
      %610 = vrot.lane.b32.xlu0 %v580, 96
      %v611 = vpop.permute.xlu0 %610
      %612 = vrot.lane.b32.xlu0 %v581, 96
      %v613 = vpop.permute.xlu0 %612
      %614 = vrot.lane.b32.xlu0 %v582, 96
      %v615 = vpop.permute.xlu0 %614
      %s620 = scalar_lea.vmem %s313, 16
      %621 = vst.msk [vmem:[%s620] sm:$0xf] %vm566, %v609
      %622 = vst.msk [vmem:[%s620 + $0x4] sm:$0xf] %vm566, %v611
      %623 = vst.msk [vmem:[%s620 + $0x8] sm:$0xf] %vm566, %v613
      %624 = vst.msk [vmem:[%s620 + $0xc] sm:$0xf] %vm566, %v615
      %625 = vrot.lane.b32.xlu0 %v558, 64
      %v626 = vpop.permute.xlu0 %625
      %627 = vrot.lane.b32.xlu0 %v559, 64
      %v628 = vpop.permute.xlu0 %627
      %629 = vrot.lane.b32.xlu0 %v560, 64
      %v630 = vpop.permute.xlu0 %629
      %631 = vrot.lane.b32.xlu0 %v561, 64
      %v632 = vpop.permute.xlu0 %631
      %s637 = scalar_lea.vmem %s303, 32
      %638 = vst.msk [vmem:[%s637] sm:$0xf] %vm566, %v626
      %639 = vst.msk [vmem:[%s637 + $0x4] sm:$0xf] %vm566, %v628
      %640 = vst.msk [vmem:[%s637 + $0x8] sm:$0xf] %vm566, %v630
      %641 = vst.msk [vmem:[%s637 + $0xc] sm:$0xf] %vm566, %v632
      %642 = vrot.lane.b32.xlu0 %v579, 64
      %v643 = vpop.permute.xlu0 %642
      %644 = vrot.lane.b32.xlu0 %v580, 64
      %v645 = vpop.permute.xlu0 %644
      %646 = vrot.lane.b32.xlu0 %v581, 64
      %v647 = vpop.permute.xlu0 %646
      %648 = vrot.lane.b32.xlu0 %v582, 64
      %v649 = vpop.permute.xlu0 %648
      %s654 = scalar_lea.vmem %s313, 32
      %655 = vst.msk [vmem:[%s654] sm:$0xf] %vm566, %v643
      %656 = vst.msk [vmem:[%s654 + $0x4] sm:$0xf] %vm566, %v645
      %657 = vst.msk [vmem:[%s654 + $0x8] sm:$0xf] %vm566, %v647
      %658 = vst.msk [vmem:[%s654 + $0xc] sm:$0xf] %vm566, %v649
      %659 = vrot.lane.b32.xlu0 %v558, 32
      %v660 = vpop.permute.xlu0 %659
      %661 = vrot.lane.b32.xlu0 %v559, 32
      %v662 = vpop.permute.xlu0 %661
      %663 = vrot.lane.b32.xlu0 %v560, 32
      %v664 = vpop.permute.xlu0 %663
      %665 = vrot.lane.b32.xlu0 %v561, 32
      %v666 = vpop.permute.xlu0 %665
      %s671 = scalar_lea.vmem %s303, 48
      %672 = vst.msk [vmem:[%s671] sm:$0xf] %vm566, %v660
      %673 = vst.msk [vmem:[%s671 + $0x4] sm:$0xf] %vm566, %v662
      %674 = vst.msk [vmem:[%s671 + $0x8] sm:$0xf] %vm566, %v664
      %675 = vst.msk [vmem:[%s671 + $0xc] sm:$0xf] %vm566, %v666
      %676 = vrot.lane.b32.xlu0 %v579, 32
      %v677 = vpop.permute.xlu0 %676
      %678 = vrot.lane.b32.xlu0 %v580, 32
      %v679 = vpop.permute.xlu0 %678
      %680 = vrot.lane.b32.xlu0 %v581, 32
      %v681 = vpop.permute.xlu0 %680
      %682 = vrot.lane.b32.xlu0 %v582, 32
      %v683 = vpop.permute.xlu0 %682
      %s688 = scalar_lea.vmem %s313, 48
      %689 = vst.msk [vmem:[%s688] sm:$0xf] %vm566, %v677
      %690 = vst.msk [vmem:[%s688 + $0x4] sm:$0xf] %vm566, %v679
      %691 = vst.msk [vmem:[%s688 + $0x8] sm:$0xf] %vm566, %v681
      %692 = vst.msk [vmem:[%s688 + $0xc] sm:$0xf] %vm566, %v683
      %s693 = smul.u32 4, %s23
      %p694 = scmp.lt.s32.totalorder %s22, 3
      %s695 = scalar_select %p694, %s22, 3
      %p696 = scmp.lt.s32.totalorder %s693, 3
      %s697 = scalar_select %p696, %s693, 3
      %s698 = smul.addr %s695, 16
      %s699 = sadd.s32 %s697, %s698
      %s700 = smul.addr %s699, 4
      %s701 = scalar_lea.vmem %s5, %s700
      %s702 = smul.u32 4, %s23
      %p703 = scmp.lt.s32.totalorder %s22, 3
      %s704 = scalar_select %p703, %s22, 3
      %p705 = scmp.lt.s32.totalorder %s702, 3
      %s706 = scalar_select %p705, %s702, 3
      %s707 = smul.addr %s704, 16
      %s708 = sadd.s32 %s706, %s707
      %s709 = smul.addr %s708, 4
      %s710 = scalar_lea.vmem %s6, %s709
      // Predicated region
      $region41: #{gpt2_block.3} parent=39 // pred_check
        %p711 = pneg %p162
      $region42: #{gpt2_block.3} parent=39 // pred_check_branch
        %713 = sbr.rel (%p711) target = $region44
      $region43: #{gpt2_block.3} parent=39 // pred_region
        %s714 = smul.u32 4, %s23
      $region44: #{gpt2_block.3} parent=39 // pred_fallthru
        _
      // Predicated region
      $region45: #{gpt2_block.3} parent=39 // pred_check
        %p715 = pneg %p190
      $region46: #{gpt2_block.3} parent=39 // pred_check_branch
        %717 = sbr.rel (%p715) target = $region48
      $region47: #{gpt2_block.3} parent=39 // pred_region
        %s718 = smul.u32 4, %s23
      $region48: #{gpt2_block.3} parent=39 // pred_fallthru
        _
    $region40: #{gpt2_block.3} parent=5 // pred_fallthru
      _
    %p719 = scmp.le.s32.totalorder 2, %s13
    // Predicated region
    $region49: #{gpt2_block.3} parent=5 // pred_check
      %p720 = pneg %p719
    $region50: #{gpt2_block.3} parent=5 // pred_check_branch
      %722 = sbr.rel (%p720) target = $region52
    $region51: #{gpt2_block.3} parent=5 // pred_region
      %s723 = ssub.s32 %s13, 2
      // Predicated region
      $region53: #{gpt2_block.3} parent=51 // pred_check
        %p724 = pneg %p168
      $region54: #{gpt2_block.3} parent=51 // pred_check_branch
        %726 = sbr.rel (%p724) target = $region56
      $region55: #{gpt2_block.3} parent=51 // pred_region
        %s727 = smul.u32 4, %s25
        %p728 = scmp.lt.s32.totalorder %s24, 3
        %s729 = scalar_select %p728, %s24, 3
        %p730 = scmp.lt.s32.totalorder %s727, 3
        %s731 = scalar_select %p730, %s727, 3
        %s732 = smul.addr %s729, 16
        %s733 = sadd.s32 %s731, %s732
        %s734 = smul.addr %s733, 4
        %s735 = scalar_lea.vmem %s5, %s734
      $region56: #{gpt2_block.3} parent=51 // pred_fallthru
        _
      // Predicated region
      $region57: #{gpt2_block.3} parent=51 // pred_check
        %p736 = pneg %p196
      $region58: #{gpt2_block.3} parent=51 // pred_check_branch
        %738 = sbr.rel (%p736) target = $region60
      $region59: #{gpt2_block.3} parent=51 // pred_region
        %s739 = smul.u32 4, %s25
        %p740 = scmp.lt.s32.totalorder %s24, 3
        %s741 = scalar_select %p740, %s24, 3
        %p742 = scmp.lt.s32.totalorder %s739, 3
        %s743 = scalar_select %p742, %s739, 3
        %s744 = smul.addr %s741, 16
        %s745 = sadd.s32 %s743, %s744
        %s746 = smul.addr %s745, 4
        %s747 = scalar_lea.vmem %s6, %s746
      $region60: #{gpt2_block.3} parent=51 // pred_fallthru
        _
    $region52: #{gpt2_block.3} parent=5 // pred_fallthru
      _
  $region6: #{gpt2_block.3} parent=0 // loop_footer
    %s17 = sadd.s32 1, %s13
  $region7: #{gpt2_block.3} parent=0 // loop_footer_branch
    %12 = sbr.rel target = $region3
  $region8: #{gpt2_block.3} parent=0 // loop_exit
    _

// kernel: gpt2_block.5
$region0: #{gpt2_block.5}
  #allocation0 [shape = 'u32[]', space=smem, size = 0x4, offset = 0x4, fixed_abs, tag = 'smem constant byte address 0x4 - core index']
  #allocation1 [shape = 'u32[144,128]{1,0:T(1,128)}', space=vmem, size = 0x12000, scoped, tag = 'internal scratch']
  %s0 = inlined_call_operand.hbm [shape: f32[4,32,128], index: 0, kind: input, shape index: {}, may-alias: {0,7}]
  %s1 = inlined_call_operand.vmem [shape: f32[1,128], index: 1, kind: input, shape index: {}]
  %s2 = inlined_call_operand.vmem [shape: f32[1,128], index: 2, kind: input, shape index: {}]
  %s3 = inlined_call_operand.vmem [shape: bf16[128,512], index: 3, kind: input, shape index: {}]
  %s4 = inlined_call_operand.vmem [shape: f32[1,512], index: 4, kind: input, shape index: {}]
  %s5 = inlined_call_operand.vmem [shape: bf16[512,128], index: 5, kind: input, shape index: {}]
  %s6 = inlined_call_operand.vmem [shape: f32[1,128], index: 6, kind: input, shape index: {}]
  %s7 = inlined_call_operand.hbm [shape: f32[4,32,128], index: 7, kind: output, shape index: {}, may-alias: {0,7}]
  %s8 = sld [smem:[#allocation0]]
  $region65: #{gpt2_block.5} parent=0
    _
  %s10 = ssub.s32 1, %s8
  %s11 = scalar_select 0, %s10, %s8
  $region1: #{gpt2_block.5} parent=0
    #allocation2 [shape = 'u8[32768]{0}', space=vmem, size = 0x8000, scoped, tag = 'input window, operand 0']
    #allocation3 [shape = 's32[2]{0}', space=sflag, size = 0x8, scoped, tag = 'scoped memory for gpt2_block.5']
    #allocation4 [shape = 's32[2]{0}', space=sflag, size = 0x8, scoped, tag = 'scoped memory for gpt2_block.5']
    #allocation5 [shape = 'u8[32768]{0}', space=vmem, size = 0x8000, scoped, tag = 'output window, operand 0']
    %12 = vsyncpa [#allocation3], 0
    %s13 = scalar_lea.sflag [#allocation3], 1
    %14 = vsyncpa %s13, 0
    %15 = vsyncpa [#allocation4], 0
    %s16 = scalar_lea.sflag [#allocation4], 1
    %17 = vsyncpa %s16, 0
    loop: start=0, step=1, limit=6
    $region2: #{gpt2_block.5} parent=1 // loop_pre_header
      _
    $region3: #{gpt2_block.5} parent=1 // loop_header
      %s19 = sphi 0, %s23
      %p20 = scmp.ge.s32.totalorder %s19, 6
      %s26 = sphi 0, %s38
      %s27 = sphi 0, %s34
      %s28 = sphi 0, %s26
      %s29 = sphi 0, %s27
      %s30 = sphi 0, %s28
      %s31 = sphi 0, %s29
      %s43 = sphi 0, %s45
      %s46 = sphi 0, %s43
      %s47 = sphi 0, %s46
      %s63 = sphi 0, %s47
      %s67 = sphi 0, %s67
      %s69 = sphi 0, %s67
      %s70 = sphi 0, %s69
      %s84 = sphi 0, %s70
      %s88 = sphi 0, %s88
      %s90 = sphi 0, %s88
      %s91 = sphi 0, %s90
      %s105 = sphi 0, %s91
      %s109 = sphi 0, %s109
      %s111 = sphi 0, %s109
      %s112 = sphi 0, %s111
      %s126 = sphi 0, %s112
      %s130 = sphi 0, %s130
      %s132 = sphi 0, %s130
      %s133 = sphi 0, %s132
      %s147 = sphi 0, %s133
      %s151 = sphi 0, %s151
      %s153 = sphi 0, %s151
      %s154 = sphi 0, %s153
      %s168 = sphi 0, %s154
      %s172 = sphi 0, %s172
      %s174 = sphi 0, %s172
      %s175 = sphi 0, %s174
      %s189 = sphi 0, %s175
      %s197 = sphi 0, %s199
      %s200 = sphi 0, %s197
      %s201 = sphi 0, %s200
      %s217 = sphi 0, %s201
    $region4: #{gpt2_block.5} parent=1 // loop_header_branch
      %22 = sbr.rel (%p20) target = $region8
    $region5: #{gpt2_block.5} parent=1 // loop_body
      %s24 = ssub.s32 %s19, 1
      %s25 = ssub.s32 %s19, 2
      %s32 = sadd.s32 1, %s27
      %p33 = scmp.ge.s32.totalorder %s32, 1
      %s34 = scalar_select %p33, 0, %s32
      %s35 = sadd.s32 1, %s26
      %s36 = scalar_select %p33, %s35, %s26
      %p37 = scmp.ge.s32.totalorder %s36, 4
      %s38 = scalar_select %p37, 0, %s36
      %s39 = ssub.s32 %s26, %s38
      %s40 = ssub.s32 %s27, %s34
      %s41 = sor.u32 %s39, %s40
      %p42 = scmp.eq.s32.totalorder %s41, 0
      %s44 = sadd.s32 %s43, 1
      %s45 = scalar_select %p42, %s43, %s44
      %p48 = pneg %p42
      %p49 = scmp.eq.s32.totalorder %s19, 3
      %p50 = por %p48, %p49
      %p51 = scmp.ne.s32.totalorder %s43, %s46
      %p52 = scmp.eq.s32.totalorder %s19, 0
      %p53 = por %p51, %p52
      %p54 = scmp.ne.s32.totalorder %s43, %s46
      %p55 = scmp.eq.s32.totalorder %s24, 3
      %p56 = por %p54, %p55
      %p57 = scmp.ne.s32.totalorder %s46, %s47
      %p58 = scmp.eq.s32.totalorder %s24, 0
      %p59 = por %p57, %p58
      %p60 = scmp.ne.s32.totalorder %s46, %s47
      %p61 = scmp.eq.s32.totalorder %s25, 3
      %p62 = por %p60, %p61
      %p64 = scmp.ne.s32.totalorder %s47, %s63
      %p65 = scmp.eq.s32.totalorder %s25, 0
      %p66 = por %p64, %p65
      %s68 = sadd.s32 %s67, 1
      %p71 = scmp.eq.s32.totalorder %s19, 3
      %p72 = scmp.ne.s32.totalorder %s67, %s69
      %p73 = scmp.eq.s32.totalorder %s19, 0
      %p74 = por %p72, %p73
      %p75 = scmp.ne.s32.totalorder %s67, %s69
      %p76 = scmp.eq.s32.totalorder %s24, 3
      %p77 = por %p75, %p76
      %p78 = scmp.ne.s32.totalorder %s69, %s70
      %p79 = scmp.eq.s32.totalorder %s24, 0
      %p80 = por %p78, %p79
      %p81 = scmp.ne.s32.totalorder %s69, %s70
      %p82 = scmp.eq.s32.totalorder %s25, 3
      %p83 = por %p81, %p82
      %p85 = scmp.ne.s32.totalorder %s70, %s84
      %p86 = scmp.eq.s32.totalorder %s25, 0
      %p87 = por %p85, %p86
      %s89 = sadd.s32 %s88, 1
      %p92 = scmp.eq.s32.totalorder %s19, 3
      %p93 = scmp.ne.s32.totalorder %s88, %s90
      %p94 = scmp.eq.s32.totalorder %s19, 0
      %p95 = por %p93, %p94
      %p96 = scmp.ne.s32.totalorder %s88, %s90
      %p97 = scmp.eq.s32.totalorder %s24, 3
      %p98 = por %p96, %p97
      %p99 = scmp.ne.s32.totalorder %s90, %s91
      %p100 = scmp.eq.s32.totalorder %s24, 0
      %p101 = por %p99, %p100
      %p102 = scmp.ne.s32.totalorder %s90, %s91
      %p103 = scmp.eq.s32.totalorder %s25, 3
      %p104 = por %p102, %p103
      %p106 = scmp.ne.s32.totalorder %s91, %s105
      %p107 = scmp.eq.s32.totalorder %s25, 0
      %p108 = por %p106, %p107
      %s110 = sadd.s32 %s109, 1
      %p113 = scmp.eq.s32.totalorder %s19, 3
      %p114 = scmp.ne.s32.totalorder %s109, %s111
      %p115 = scmp.eq.s32.totalorder %s19, 0
      %p116 = por %p114, %p115
      %p117 = scmp.ne.s32.totalorder %s109, %s111
      %p118 = scmp.eq.s32.totalorder %s24, 3
      %p119 = por %p117, %p118
      %p120 = scmp.ne.s32.totalorder %s111, %s112
      %p121 = scmp.eq.s32.totalorder %s24, 0
      %p122 = por %p120, %p121
      %p123 = scmp.ne.s32.totalorder %s111, %s112
      %p124 = scmp.eq.s32.totalorder %s25, 3
      %p125 = por %p123, %p124
      %p127 = scmp.ne.s32.totalorder %s112, %s126
      %p128 = scmp.eq.s32.totalorder %s25, 0
      %p129 = por %p127, %p128
      %s131 = sadd.s32 %s130, 1
      %p134 = scmp.eq.s32.totalorder %s19, 3
      %p135 = scmp.ne.s32.totalorder %s130, %s132
      %p136 = scmp.eq.s32.totalorder %s19, 0
      %p137 = por %p135, %p136
      %p138 = scmp.ne.s32.totalorder %s130, %s132
      %p139 = scmp.eq.s32.totalorder %s24, 3
      %p140 = por %p138, %p139
      %p141 = scmp.ne.s32.totalorder %s132, %s133
      %p142 = scmp.eq.s32.totalorder %s24, 0
      %p143 = por %p141, %p142
      %p144 = scmp.ne.s32.totalorder %s132, %s133
      %p145 = scmp.eq.s32.totalorder %s25, 3
      %p146 = por %p144, %p145
      %p148 = scmp.ne.s32.totalorder %s133, %s147
      %p149 = scmp.eq.s32.totalorder %s25, 0
      %p150 = por %p148, %p149
      %s152 = sadd.s32 %s151, 1
      %p155 = scmp.eq.s32.totalorder %s19, 3
      %p156 = scmp.ne.s32.totalorder %s151, %s153
      %p157 = scmp.eq.s32.totalorder %s19, 0
      %p158 = por %p156, %p157
      %p159 = scmp.ne.s32.totalorder %s151, %s153
      %p160 = scmp.eq.s32.totalorder %s24, 3
      %p161 = por %p159, %p160
      %p162 = scmp.ne.s32.totalorder %s153, %s154
      %p163 = scmp.eq.s32.totalorder %s24, 0
      %p164 = por %p162, %p163
      %p165 = scmp.ne.s32.totalorder %s153, %s154
      %p166 = scmp.eq.s32.totalorder %s25, 3
      %p167 = por %p165, %p166
      %p169 = scmp.ne.s32.totalorder %s154, %s168
      %p170 = scmp.eq.s32.totalorder %s25, 0
      %p171 = por %p169, %p170
      %s173 = sadd.s32 %s172, 1
      %p176 = scmp.eq.s32.totalorder %s19, 3
      %p177 = scmp.ne.s32.totalorder %s172, %s174
      %p178 = scmp.eq.s32.totalorder %s19, 0
      %p179 = por %p177, %p178
      %p180 = scmp.ne.s32.totalorder %s172, %s174
      %p181 = scmp.eq.s32.totalorder %s24, 3
      %p182 = por %p180, %p181
      %p183 = scmp.ne.s32.totalorder %s174, %s175
      %p184 = scmp.eq.s32.totalorder %s24, 0
      %p185 = por %p183, %p184
      %p186 = scmp.ne.s32.totalorder %s174, %s175
      %p187 = scmp.eq.s32.totalorder %s25, 3
      %p188 = por %p186, %p187
      %p190 = scmp.ne.s32.totalorder %s175, %s189
      %p191 = scmp.eq.s32.totalorder %s25, 0
      %p192 = por %p190, %p191
      %s193 = ssub.s32 %s26, %s38
      %s194 = ssub.s32 %s27, %s34
      %s195 = sor.u32 %s193, %s194
      %p196 = scmp.eq.s32.totalorder %s195, 0
      %s198 = sadd.s32 %s197, 1
      %s199 = scalar_select %p196, %s197, %s198
      %p202 = pneg %p196
      %p203 = scmp.eq.s32.totalorder %s19, 3
      %p204 = por %p202, %p203
      %p205 = scmp.ne.s32.totalorder %s197, %s200
      %p206 = scmp.eq.s32.totalorder %s19, 0
      %p207 = por %p205, %p206
      %p208 = scmp.ne.s32.totalorder %s197, %s200
      %p209 = scmp.eq.s32.totalorder %s24, 3
      %p210 = por %p208, %p209
      %p211 = scmp.ne.s32.totalorder %s200, %s201
      %p212 = scmp.eq.s32.totalorder %s24, 0
      %p213 = por %p211, %p212
      %p214 = scmp.ne.s32.totalorder %s200, %s201
      %p215 = scmp.eq.s32.totalorder %s25, 3
      %p216 = por %p214, %p215
      %p218 = scmp.ne.s32.totalorder %s201, %s217
      %p219 = scmp.eq.s32.totalorder %s25, 0
      %p220 = por %p218, %p219
      %p221 = scmp.le.s32.totalorder 1, %s19
      %p222 = scmp.lt.s32.totalorder %s19, 5
      %p223 = pnand %p221, %p222
      %p224 = pneg %p223
      // Predicated region
      $region9: #{gpt2_block.5} parent=5 // pred_check
        _
      $region10: #{gpt2_block.5} parent=5 // pred_check_branch
        %226 = sbr.rel (%p223) target = $region12
      $region11: #{gpt2_block.5} parent=5 // pred_region
        %s227 = ssub.s32 %s19, 1
        // Predicated region
        $region13: #{gpt2_block.5} parent=11 // pred_check
          %p228 = pneg %p80
        $region14: #{gpt2_block.5} parent=11 // pred_check_branch
          %230 = sbr.rel (%p228) target = $region16
        $region15: #{gpt2_block.5} parent=11 // pred_region
          _
        $region16: #{gpt2_block.5} parent=11 // pred_fallthru
          _
        // Predicated region
        $region17: #{gpt2_block.5} parent=11 // pred_check
          %p231 = pneg %p101
        $region18: #{gpt2_block.5} parent=11 // pred_check_branch
          %233 = sbr.rel (%p231) target = $region20
        $region19: #{gpt2_block.5} parent=11 // pred_region
          _
        $region20: #{gpt2_block.5} parent=11 // pred_fallthru
          _
        // Predicated region
        $region21: #{gpt2_block.5} parent=11 // pred_check
          %p234 = pneg %p122
        $region22: #{gpt2_block.5} parent=11 // pred_check_branch
          %236 = sbr.rel (%p234) target = $region24
        $region23: #{gpt2_block.5} parent=11 // pred_region
          _
        $region24: #{gpt2_block.5} parent=11 // pred_fallthru
          _
        // Predicated region
        $region25: #{gpt2_block.5} parent=11 // pred_check
          %p237 = pneg %p143
        $region26: #{gpt2_block.5} parent=11 // pred_check_branch
          %239 = sbr.rel (%p237) target = $region28
        $region27: #{gpt2_block.5} parent=11 // pred_region
          _
        $region28: #{gpt2_block.5} parent=11 // pred_fallthru
          _
        // Predicated region
        $region29: #{gpt2_block.5} parent=11 // pred_check
          %p240 = pneg %p164
        $region30: #{gpt2_block.5} parent=11 // pred_check_branch
          %242 = sbr.rel (%p240) target = $region32
        $region31: #{gpt2_block.5} parent=11 // pred_region
          _
        $region32: #{gpt2_block.5} parent=11 // pred_fallthru
          _
        // Predicated region
        $region33: #{gpt2_block.5} parent=11 // pred_check
          %p243 = pneg %p185
        $region34: #{gpt2_block.5} parent=11 // pred_check_branch
          %245 = sbr.rel (%p243) target = $region36
        $region35: #{gpt2_block.5} parent=11 // pred_region
          _
        $region36: #{gpt2_block.5} parent=11 // pred_fallthru
          _
      $region12: #{gpt2_block.5} parent=5 // pred_fallthru
        _
      %p246 = scmp.lt.s32.totalorder %s19, 4
      // Predicated region
      $region37: #{gpt2_block.5} parent=5 // pred_check
        %p247 = pneg %p246
      $region38: #{gpt2_block.5} parent=5 // pred_check_branch
        %249 = sbr.rel (%p247) target = $region40
      $region39: #{gpt2_block.5} parent=5 // pred_region
        // Predicated region
        $region41: #{gpt2_block.5} parent=39 // pred_check
          %p250 = pneg %p53
        $region42: #{gpt2_block.5} parent=39 // pred_check_branch
          %252 = sbr.rel (%p250) target = $region44
        $region43: #{gpt2_block.5} parent=39 // pred_region
          %s253 = sand.u32 %s43, 1
          %s254 = scalar_lea.sflag [#allocation3], %s253
          %s255 = sand.u32 %s43, 1
          %s256 = smul.addr %s255, 32
          %s257 = scalar_lea.vmem [#allocation2], %s256
          %s258 = smul.u32 4, %s27
          %s260 = ssub.s32 512, 512
          %261 = vsyncadd %s254, %s260
          %s262 = smul.addr %s26, 4
          %s263 = sadd.s32 %s258, %s262
          %s264 = smul.addr %s263, 128
          %s265 = scalar_lea.hbm %s0, %s264
          %s266 = sshll.u32 %s257, 4
          %s267 = int_to_ptr.vmem [resolvable:$true] %s266
          %272 = dma.hbm_to_vmem [thread:$0]  %s265, 512, %s267, %s254, 128, 128, 8
        $region44: #{gpt2_block.5} parent=39 // pred_fallthru
          _
      $region40: #{gpt2_block.5} parent=5 // pred_fallthru
        _
      %p273 = scmp.le.s32.totalorder 1, %s19
      %p274 = scmp.lt.s32.totalorder %s19, 5
      %p275 = pnand %p273, %p274
      %p276 = pneg %p275
      // Predicated region
      $region45: #{gpt2_block.5} parent=5 // pred_check
        _
      $region46: #{gpt2_block.5} parent=5 // pred_check_branch
        %278 = sbr.rel (%p275) target = $region48
      $region47: #{gpt2_block.5} parent=5 // pred_region
        %s279 = ssub.s32 %s19, 1
        %s280 = sand.u32 %s46, 1
        %s281 = scalar_lea.sflag [#allocation3], %s280
        %s282 = sand.u32 %s46, 1
        %s283 = smul.addr %s282, 32
        %s284 = scalar_lea.vmem [#allocation2], %s283
        // Predicated region
        $region49: #{gpt2_block.5} parent=47 // pred_check
          %p285 = pneg %p59
        $region50: #{gpt2_block.5} parent=47 // pred_check_branch
          %287 = sbr.rel (%p285) target = $region52
        $region51: #{gpt2_block.5} parent=47 // pred_region
          %288 = dma.done %s281, 512
        $region52: #{gpt2_block.5} parent=47 // pred_fallthru
          _
        %s289 = sand.u32 %s46, 1
        %s290 = scalar_lea.sflag [#allocation3], %s289
        %s291 = sand.u32 %s46, 1
        %s292 = smul.addr %s291, 32
        %s293 = scalar_lea.vmem [#allocation2], %s292
        %p294 = pneg %p59
        %p295 = pneg %p56
        %p296 = pneg %p80
        %p297 = pneg %p77
        %p298 = pneg %p101
        %p299 = pneg %p98
        %p300 = pneg %p122
        %p301 = pneg %p119
        %p302 = pneg %p143
        %p303 = pneg %p140
        %p304 = pneg %p164
        %p305 = pneg %p161
        %p306 = pneg %p185
        %p307 = pneg %p182
        %p308 = pneg %p213
        %p309 = pneg %p210
        %s310 = sand.u32 %s200, 1
        %s311 = scalar_lea.sflag [#allocation4], %s310
        %s312 = sand.u32 %s200, 1
        %s313 = smul.addr %s312, 32
        %s314 = scalar_lea.vmem [#allocation5], %s313
        %s315 = smul.u32 4, %s29
        %s316 = smul.u32 4, %s29
        %v318 = vld [vmem:[%s284] sm:$0xff]
        %v319 = vld [vmem:[%s284 + $0x8] sm:$0xff]
        %v320 = vld [vmem:[%s284 + $0x10] sm:$0xff]
        %v321 = vld [vmem:[%s284 + $0x18] sm:$0xff]
        %v322 = vld [vmem:[%s1] sm:$0x1]
        %v323 = vld [vmem:[%s2] sm:$0x1]
        %324 = vadd.xlane.f32.xlu0 %v318
        %v325 = vpop.xlane.xlu0 %324
        %326 = vadd.xlane.f32.xlu0 %v319
        %v327 = vpop.xlane.xlu0 %326
        %328 = vadd.xlane.f32.xlu0 %v320
        %v329 = vpop.xlane.xlu0 %328
        %330 = vadd.xlane.f32.xlu0 %v321
        %v331 = vpop.xlane.xlu0 %330
        %v332 = vrcp.pop 128.0
        %v333 = vmul.f32 %v325, %v332
        %v334 = vmul.f32 %v327, %v332
        %v335 = vmul.f32 %v329, %v332
        %v336 = vmul.f32 %v331, %v332
        %v337 = vsub.f32 %v318, %v333
        %v338 = vsub.f32 %v319, %v334
        %v339 = vsub.f32 %v320, %v335
        %v340 = vsub.f32 %v321, %v336
        %v341 = vmul.f32 %v337, %v337
        %v342 = vmul.f32 %v338, %v338
        %v343 = vmul.f32 %v339, %v339
        %v344 = vmul.f32 %v340, %v340
        %345 = vadd.xlane.f32.xlu0 %v341
        %v346 = vpop.xlane.xlu0 %345
        %347 = vadd.xlane.f32.xlu0 %v342
        %v348 = vpop.xlane.xlu0 %347
        %349 = vadd.xlane.f32.xlu0 %v343
        %v350 = vpop.xlane.xlu0 %349
        %351 = vadd.xlane.f32.xlu0 %v344
        %v352 = vpop.xlane.xlu0 %351
        %v353 = vmul.f32 %v346, %v332
        %v354 = vmul.f32 %v348, %v332
        %v355 = vmul.f32 %v350, %v332
        %v356 = vmul.f32 %v352, %v332
        %v357 = vadd.f32 %v353, 1e-05
        %v358 = vadd.f32 %v354, 1e-05
        %v359 = vadd.f32 %v355, 1e-05
        %v360 = vadd.f32 %v356, 1e-05
        %v361 = vrsqrt.pop %v357
        %v362 = vrsqrt.pop %v358
        %v363 = vrsqrt.pop %v359
        %v364 = vrsqrt.pop %v360
        %v365 = vmul.f32 %v337, %v361
        %v366 = vmul.f32 %v338, %v362
        %v367 = vmul.f32 %v339, %v363
        %v368 = vmul.f32 %v340, %v364
        %v370 = vlaneseq
        %v371 = vshrl.u32 %v370, 7
        %v372 = vsub.s32 0, %v371
        %v373 = vrot.slane %v322, %v372
        %v375 = vmul.f32 %v365, %v373
        %v376 = vmul.f32 %v366, %v373
        %v377 = vmul.f32 %v367, %v373
        %v378 = vmul.f32 %v368, %v373
        %v380 = vlaneseq
        %v381 = vshrl.u32 %v380, 7
        %v382 = vsub.s32 0, %v381
        %v383 = vrot.slane %v323, %v382
        %v385 = vadd.f32 %v375, %v383
        %v386 = vadd.f32 %v376, %v383
        %v387 = vadd.f32 %v377, %v383
        %v388 = vadd.f32 %v378, %v383
        %v389 = vpack.c.bf16 %v386, %v385
        %v390 = vpack.c.bf16 %v388, %v387
        %v391 = vld [vmem:[%s3] sm:$0xff]
        %v392 = vld [vmem:[%s3 + $0x8] sm:$0xff]
        %v393 = vld [vmem:[%s3 + $0x10] sm:$0xff]
        %v394 = vld [vmem:[%s3 + $0x18] sm:$0xff]
        %v395 = vld [vmem:[%s3 + $0x20] sm:$0xff]
        %v396 = vld [vmem:[%s3 + $0x28] sm:$0xff]
        %v397 = vld [vmem:[%s3 + $0x30] sm:$0xff]
        %v398 = vld [vmem:[%s3 + $0x38] sm:$0xff]
        %v399 = vld [vmem:[%s3 + $0x40] sm:$0xff]
        %v400 = vld [vmem:[%s3 + $0x48] sm:$0xff]
        %v401 = vld [vmem:[%s3 + $0x50] sm:$0xff]
        %v402 = vld [vmem:[%s3 + $0x58] sm:$0xff]
        %v403 = vld [vmem:[%s3 + $0x60] sm:$0xff]
        %v404 = vld [vmem:[%s3 + $0x68] sm:$0xff]
        %v405 = vld [vmem:[%s3 + $0x70] sm:$0xff]
        %v406 = vld [vmem:[%s3 + $0x78] sm:$0xff]
        %v407 = vld [vmem:[%s3 + $0x80] sm:$0xff]
        %v408 = vld [vmem:[%s3 + $0x88] sm:$0xff]
        %v409 = vld [vmem:[%s3 + $0x90] sm:$0xff]
        %v410 = vld [vmem:[%s3 + $0x98] sm:$0xff]
        %v411 = vld [vmem:[%s3 + $0xa0] sm:$0xff]
        %v412 = vld [vmem:[%s3 + $0xa8] sm:$0xff]
        %v413 = vld [vmem:[%s3 + $0xb0] sm:$0xff]
        %v414 = vld [vmem:[%s3 + $0xb8] sm:$0xff]
        %v415 = vld [vmem:[%s3 + $0xc0] sm:$0xff]
        %v416 = vld [vmem:[%s3 + $0xc8] sm:$0xff]
        %v417 = vld [vmem:[%s3 + $0xd0] sm:$0xff]
        %v418 = vld [vmem:[%s3 + $0xd8] sm:$0xff]
        %v419 = vld [vmem:[%s3 + $0xe0] sm:$0xff]
        %v420 = vld [vmem:[%s3 + $0xe8] sm:$0xff]
        %v421 = vld [vmem:[%s3 + $0xf0] sm:$0xff]
        %v422 = vld [vmem:[%s3 + $0xf8] sm:$0xff]
        %v423 = vld [vmem:[%s4] sm:$0xf]
        %v425 = vlaneseq
        %v426 = vshrl.u32 %v425, 7
        %v427 = vsub.s32 0, %v426
        %v428 = vrot.slane %v423, %v427
        %v429 = vlaneseq
        %v430 = vshrl.u32 %v429, 7
        %v431 = vsub.s32 1, %v430
        %v432 = vrot.slane %v423, %v431
        %v433 = vlaneseq
        %v434 = vshrl.u32 %v433, 7
        %v435 = vsub.s32 2, %v434
        %v436 = vrot.slane %v423, %v435
        %v437 = vlaneseq
        %v438 = vshrl.u32 %v437, 7
        %v439 = vsub.s32 3, %v438
        %v440 = vrot.slane %v423, %v439
        %v477 = vunpack.c.l.b16 %v391
        %v478 = vunpack.c.h.b16 %v391
        %v479 = vunpack.c.l.b16 %v392
        %v480 = vunpack.c.h.b16 %v392
        %v481 = vunpack.c.l.b16 %v393
        %v482 = vunpack.c.h.b16 %v393
        %v483 = vunpack.c.l.b16 %v394
        %v484 = vunpack.c.h.b16 %v394
        %v485 = vunpack.c.l.b16 %v395
        %v486 = vunpack.c.h.b16 %v395
        %v487 = vunpack.c.l.b16 %v396
        %v488 = vunpack.c.h.b16 %v396
        %v489 = vunpack.c.l.b16 %v397
        %v490 = vunpack.c.h.b16 %v397
        %v491 = vunpack.c.l.b16 %v398
        %v492 = vunpack.c.h.b16 %v398
        %v493 = vunpack.c.l.b16 %v399
        %v494 = vunpack.c.h.b16 %v399
        %v495 = vunpack.c.l.b16 %v400
        %v496 = vunpack.c.h.b16 %v400
        %v497 = vunpack.c.l.b16 %v401
        %v498 = vunpack.c.h.b16 %v401
        %v499 = vunpack.c.l.b16 %v402
        %v500 = vunpack.c.h.b16 %v402
        %v501 = vunpack.c.l.b16 %v403
        %v502 = vunpack.c.h.b16 %v403
        %v503 = vunpack.c.l.b16 %v404
        %v504 = vunpack.c.h.b16 %v404
        %v505 = vunpack.c.l.b16 %v405
        %v506 = vunpack.c.h.b16 %v405
        %v507 = vunpack.c.l.b16 %v406
        %v508 = vunpack.c.h.b16 %v406
        %v509 = vunpack.c.l.b16 %v407
        %v510 = vunpack.c.h.b16 %v407
        %v511 = vunpack.c.l.b16 %v408
        %v512 = vunpack.c.h.b16 %v408
        %v513 = vunpack.c.l.b16 %v409
        %v514 = vunpack.c.h.b16 %v409
        %v515 = vunpack.c.l.b16 %v410
        %v516 = vunpack.c.h.b16 %v410
        %v517 = vunpack.c.l.b16 %v411
        %v518 = vunpack.c.h.b16 %v411
        %v519 = vunpack.c.l.b16 %v412
        %v520 = vunpack.c.h.b16 %v412
        %v521 = vunpack.c.l.b16 %v413
        %v522 = vunpack.c.h.b16 %v413
        %v523 = vunpack.c.l.b16 %v414
        %v524 = vunpack.c.h.b16 %v414
        %v525 = vunpack.c.l.b16 %v415
        %v526 = vunpack.c.h.b16 %v415
        %v527 = vunpack.c.l.b16 %v416
        %v528 = vunpack.c.h.b16 %v416
        %v529 = vunpack.c.l.b16 %v417
        %v530 = vunpack.c.h.b16 %v417
        %v531 = vunpack.c.l.b16 %v418
        %v532 = vunpack.c.h.b16 %v418
        %v533 = vunpack.c.l.b16 %v419
        %v534 = vunpack.c.h.b16 %v419
        %v535 = vunpack.c.l.b16 %v420
        %v536 = vunpack.c.h.b16 %v420
        %v537 = vunpack.c.l.b16 %v421
        %v538 = vunpack.c.h.b16 %v421
        %v539 = vunpack.c.l.b16 %v422
        %v540 = vunpack.c.h.b16 %v422
        %v541 = vpack.c.b16 %v481, %v477
        %v542 = vpack.c.b16 %v482, %v478
        %v543 = vpack.c.b16 %v483, %v479
        %v544 = vpack.c.b16 %v484, %v480
        %v545 = vpack.c.b16 %v489, %v485
        %v546 = vpack.c.b16 %v490, %v486
        %v547 = vpack.c.b16 %v491, %v487
        %v548 = vpack.c.b16 %v492, %v488
        %v549 = vpack.c.b16 %v497, %v493
        %v550 = vpack.c.b16 %v498, %v494
        %v551 = vpack.c.b16 %v499, %v495
        %v552 = vpack.c.b16 %v500, %v496
        %v553 = vpack.c.b16 %v505, %v501
        %v554 = vpack.c.b16 %v506, %v502
        %v555 = vpack.c.b16 %v507, %v503
        %v556 = vpack.c.b16 %v508, %v504
        %v557 = vpack.c.b16 %v513, %v509
        %v558 = vpack.c.b16 %v514, %v510
        %v559 = vpack.c.b16 %v515, %v511
        %v560 = vpack.c.b16 %v516, %v512
        %v561 = vpack.c.b16 %v521, %v517
        %v562 = vpack.c.b16 %v522, %v518
        %v563 = vpack.c.b16 %v523, %v519
        %v564 = vpack.c.b16 %v524, %v520
        %v565 = vpack.c.b16 %v529, %v525
        %v566 = vpack.c.b16 %v530, %v526
        %v567 = vpack.c.b16 %v531, %v527
        %v568 = vpack.c.b16 %v532, %v528
        %v569 = vpack.c.b16 %v537, %v533
        %v570 = vpack.c.b16 %v538, %v534
        %v571 = vpack.c.b16 %v539, %v535
        %v572 = vpack.c.b16 %v540, %v536
        %605 = vmatprep.subr.bf16.mxu0 %v570
        %606 = vmatpush1.bf16.msra.mxu0 %v569
        %607 = vmatprep.subr.bf16.mxu0 %v566
        %608 = vmatpush1.bf16.msra.mxu0 %v565
        %609 = vmatprep.subr.bf16.mxu0 %v562
        %610 = vmatpush1.bf16.msra.mxu0 %v561
        %611 = vmatprep.subr.bf16.mxu0 %v558
        %612 = vmatpush1.bf16.msra.mxu0 %v557
        %613 = vmatprep.subr.bf16.mxu0 %v554
        %614 = vmatpush1.bf16.msra.mxu0 %v553
        %615 = vmatprep.subr.bf16.mxu0 %v550
        %616 = vmatpush1.bf16.msra.mxu0 %v549
        %617 = vmatprep.subr.bf16.mxu0 %v546
        %618 = vmatpush1.bf16.msra.mxu0 %v545
        %619 = vmatprep.subr.bf16.mxu0 %v542
        %620 = vmatpush1.bf16.msra.mxu0 %v541
        %621 = vmatprep.subr.bf16.mxu0 0
        %622 = vmatpush2.bf16.msra.mxu0 0
        %623 = vmatprep.subr.bf16.mxu0 0
        %624 = vmatpush2.bf16.msra.mxu0 0
        %625 = vmatprep.subr.bf16.mxu0 0
        %626 = vmatpush2.bf16.msra.mxu0 0
        %627 = vmatprep.subr.bf16.mxu0 0
        %628 = vmatpush2.bf16.msra.mxu0 0
        %629 = vmatprep.subr.bf16.mxu0 0
        %630 = vmatpush2.bf16.msra.mxu0 0
        %631 = vmatprep.subr.bf16.mxu0 0
        %632 = vmatpush2.bf16.msra.mxu0 0
        %633 = vmatprep.subr.bf16.mxu0 0
        %634 = vmatpush2.bf16.msra.mxu0 0
        %635 = vmatprep.subr.bf16.mxu0 0
        %636 = vmatpush2.bf16.msra.mxu0 0
        %637 = vmatprep.mubr.bf16.mxu0 0
        %638 = vmatmul.mubr.bf16.gmra.mxu0 %v389
        %v639 = vpop.f32.mrf.mxu0
        %v640 = vadd.f32 %v428, %v639
        %v641 = vpop.f32.mrf.mxu0
        %v642 = vadd.f32 %v432, %v641
        %v643 = vpop.f32.mrf.mxu0
        %v644 = vadd.f32 %v428, %v643
        %v645 = vpop.f32.mrf.mxu0
        %v646 = vadd.f32 %v432, %v645
        %647 = vmatprep.mubr.bf16.mxu0 0
        %648 = vmatmul.mubr.bf16.gmra.mxu0 %v390
        %v649 = vpop.f32.mrf.mxu0
        %v650 = vadd.f32 %v428, %v649
        %v651 = vpop.f32.mrf.mxu0
        %v652 = vadd.f32 %v432, %v651
        %v653 = vpop.f32.mrf.mxu0
        %v654 = vadd.f32 %v428, %v653
        %v655 = vpop.f32.mrf.mxu0
        %v656 = vadd.f32 %v432, %v655
        %657 = vdwg.mxu0
        %658 = vmatprep.subr.bf16.mxu0 %v572
        %659 = vmatpush1.bf16.msra.mxu0 %v571
        %660 = vmatprep.subr.bf16.mxu0 %v568
        %661 = vmatpush1.bf16.msra.mxu0 %v567
        %662 = vmatprep.subr.bf16.mxu0 %v564
        %663 = vmatpush1.bf16.msra.mxu0 %v563
        %664 = vmatprep.subr.bf16.mxu0 %v560
        %665 = vmatpush1.bf16.msra.mxu0 %v559
        %666 = vmatprep.subr.bf16.mxu0 %v556
        %667 = vmatpush1.bf16.msra.mxu0 %v555
        %668 = vmatprep.subr.bf16.mxu0 %v552
        %669 = vmatpush1.bf16.msra.mxu0 %v551
        %670 = vmatprep.subr.bf16.mxu0 %v548
        %671 = vmatpush1.bf16.msra.mxu0 %v547
        %672 = vmatprep.subr.bf16.mxu0 %v544
        %673 = vmatpush1.bf16.msra.mxu0 %v543
        %674 = vmatprep.subr.bf16.mxu0 0
        %675 = vmatpush2.bf16.msra.mxu0 0
        %676 = vmatprep.subr.bf16.mxu0 0
        %677 = vmatpush2.bf16.msra.mxu0 0
        %678 = vmatprep.subr.bf16.mxu0 0
        %679 = vmatpush2.bf16.msra.mxu0 0
        %680 = vmatprep.subr.bf16.mxu0 0
        %681 = vmatpush2.bf16.msra.mxu0 0
        %682 = vmatprep.subr.bf16.mxu0 0
        %683 = vmatpush2.bf16.msra.mxu0 0
        %684 = vmatprep.subr.bf16.mxu0 0
        %685 = vmatpush2.bf16.msra.mxu0 0
        %686 = vmatprep.subr.bf16.mxu0 0
        %687 = vmatpush2.bf16.msra.mxu0 0
        %688 = vmatprep.subr.bf16.mxu0 0
        %689 = vmatpush2.bf16.msra.mxu0 0
        %690 = vmatprep.mubr.bf16.mxu0 0
        %691 = vmatmul.mubr.bf16.gmra.mxu0 %v389
        %v692 = vpop.f32.mrf.mxu0
        %v693 = vadd.f32 %v436, %v692
        %v694 = vpop.f32.mrf.mxu0
        %v695 = vadd.f32 %v440, %v694
        %v696 = vpop.f32.mrf.mxu0
        %v697 = vadd.f32 %v436, %v696
        %v698 = vpop.f32.mrf.mxu0
        %v699 = vadd.f32 %v440, %v698
        %700 = vmatprep.mubr.bf16.mxu0 0
        %701 = vmatmul.mubr.bf16.gmra.mxu0 %v390
        %v702 = vpop.f32.mrf.mxu0
        %v703 = vadd.f32 %v436, %v702
        %v704 = vpop.f32.mrf.mxu0
        %v705 = vadd.f32 %v440, %v704
        %v706 = vpop.f32.mrf.mxu0
        %v707 = vadd.f32 %v436, %v706
        %v708 = vpop.f32.mrf.mxu0
        %v709 = vadd.f32 %v440, %v708
        %710 = vdwg.mxu0
        %v711 = vmul.f32 %v640, 0.5
        %v712 = vmul.f32 %v642, 0.5
        %v713 = vmul.f32 %v693, 0.5
        %v714 = vmul.f32 %v695, 0.5
        %v715 = vmul.f32 %v644, 0.5
        %v716 = vmul.f32 %v646, 0.5
        %v717 = vmul.f32 %v697, 0.5
        %v718 = vmul.f32 %v699, 0.5
        %v719 = vmul.f32 %v650, 0.5
        %v720 = vmul.f32 %v652, 0.5
        %v721 = vmul.f32 %v703, 0.5
        %v722 = vmul.f32 %v705, 0.5
        %v723 = vmul.f32 %v654, 0.5
        %v724 = vmul.f32 %v656, 0.5
        %v725 = vmul.f32 %v707, 0.5
        %v726 = vmul.f32 %v709, 0.5
        %v727 = vmul.f32 %v640, 0.044715
        %v728 = vmul.f32 %v642, 0.044715
        %v729 = vmul.f32 %v693, 0.044715
        %v730 = vmul.f32 %v695, 0.044715
        %v731 = vmul.f32 %v644, 0.044715
        %v732 = vmul.f32 %v646, 0.044715
        %v733 = vmul.f32 %v697, 0.044715
        %v734 = vmul.f32 %v699, 0.044715
        %v735 = vmul.f32 %v650, 0.044715
        %v736 = vmul.f32 %v652, 0.044715
        %v737 = vmul.f32 %v703, 0.044715
        %v738 = vmul.f32 %v705, 0.044715
        %v739 = vmul.f32 %v654, 0.044715
        %v740 = vmul.f32 %v656, 0.044715
        %v741 = vmul.f32 %v707, 0.044715
        %v742 = vmul.f32 %v709, 0.044715
        %v743 = vmul.f32 %v727, %v640
        %v744 = vmul.f32 %v728, %v642
        %v745 = vmul.f32 %v729, %v693
        %v746 = vmul.f32 %v730, %v695
        %v747 = vmul.f32 %v731, %v644
        %v748 = vmul.f32 %v732, %v646
        %v749 = vmul.f32 %v733, %v697
        %v750 = vmul.f32 %v734, %v699
        %v751 = vmul.f32 %v735, %v650
        %v752 = vmul.f32 %v736, %v652
        %v753 = vmul.f32 %v737, %v703
        %v754 = vmul.f32 %v738, %v705
        %v755 = vmul.f32 %v739, %v654
        %v756 = vmul.f32 %v740, %v656
        %v757 = vmul.f32 %v741, %v707
        %v758 = vmul.f32 %v742, %v709
        %v759 = vmul.f32 %v743, %v640
        %v760 = vmul.f32 %v744, %v642
        %v761 = vmul.f32 %v745, %v693
        %v762 = vmul.f32 %v746, %v695
        %v763 = vmul.f32 %v747, %v644
        %v764 = vmul.f32 %v748, %v646
        %v765 = vmul.f32 %v749, %v697
        %v766 = vmul.f32 %v750, %v699
        %v767 = vmul.f32 %v751, %v650
        %v768 = vmul.f32 %v752, %v652
        %v769 = vmul.f32 %v753, %v703
        %v770 = vmul.f32 %v754, %v705
        %v771 = vmul.f32 %v755, %v654
        %v772 = vmul.f32 %v756, %v656
        %v773 = vmul.f32 %v757, %v707
        %v774 = vmul.f32 %v758, %v709
        %v775 = vadd.f32 %v640, %v759
        %v776 = vadd.f32 %v642, %v760
        %v777 = vadd.f32 %v693, %v761
        %v778 = vadd.f32 %v695, %v762
        %v779 = vadd.f32 %v644, %v763
        %v780 = vadd.f32 %v646, %v764
        %v781 = vadd.f32 %v697, %v765
        %v782 = vadd.f32 %v699, %v766
        %v783 = vadd.f32 %v650, %v767
        %v784 = vadd.f32 %v652, %v768
        %v785 = vadd.f32 %v703, %v769
        %v786 = vadd.f32 %v705, %v770
        %v787 = vadd.f32 %v654, %v771
        %v788 = vadd.f32 %v656, %v772
        %v789 = vadd.f32 %v707, %v773
        %v790 = vadd.f32 %v709, %v774
        %v791 = vmul.f32 %v775, 0.7978846
        %v792 = vmul.f32 %v776, 0.7978846
        %v793 = vmul.f32 %v777, 0.7978846
        %v794 = vmul.f32 %v778, 0.7978846
        %v795 = vmul.f32 %v779, 0.7978846
        %v796 = vmul.f32 %v780, 0.7978846
        %v797 = vmul.f32 %v781, 0.7978846
        %v798 = vmul.f32 %v782, 0.7978846
        %v799 = vmul.f32 %v783, 0.7978846
        %v800 = vmul.f32 %v784, 0.7978846
        %v801 = vmul.f32 %v785, 0.7978846
        %v802 = vmul.f32 %v786, 0.7978846
        %v803 = vmul.f32 %v787, 0.7978846
        %v804 = vmul.f32 %v788, 0.7978846
        %v805 = vmul.f32 %v789, 0.7978846
        %v806 = vmul.f32 %v790, 0.7978846
        %v807 = vtanh.pop %v791
        %v808 = vtanh.pop %v792
        %v809 = vtanh.pop %v793
        %v810 = vtanh.pop %v794
        %v811 = vtanh.pop %v795
        %v812 = vtanh.pop %v796
        %v813 = vtanh.pop %v797
        %v814 = vtanh.pop %v798
        %v815 = vtanh.pop %v799
        %v816 = vtanh.pop %v800
        %v817 = vtanh.pop %v801
        %v818 = vtanh.pop %v802
        %v819 = vtanh.pop %v803
        %v820 = vtanh.pop %v804
        %v821 = vtanh.pop %v805
        %v822 = vtanh.pop %v806
        %v823 = vadd.f32 %v807, 1.0
        %v824 = vadd.f32 %v808, 1.0
        %v825 = vadd.f32 %v809, 1.0
        %v826 = vadd.f32 %v810, 1.0
        %v827 = vadd.f32 %v811, 1.0
        %v828 = vadd.f32 %v812, 1.0
        %v829 = vadd.f32 %v813, 1.0
        %v830 = vadd.f32 %v814, 1.0
        %v831 = vadd.f32 %v815, 1.0
        %v832 = vadd.f32 %v816, 1.0
        %v833 = vadd.f32 %v817, 1.0
        %v834 = vadd.f32 %v818, 1.0
        %v835 = vadd.f32 %v819, 1.0
        %v836 = vadd.f32 %v820, 1.0
        %v837 = vadd.f32 %v821, 1.0
        %v838 = vadd.f32 %v822, 1.0
        %v839 = vmul.f32 %v711, %v823
        %v840 = vmul.f32 %v712, %v824
        %v841 = vmul.f32 %v713, %v825
        %v842 = vmul.f32 %v714, %v826
        %v843 = vmul.f32 %v715, %v827
        %v844 = vmul.f32 %v716, %v828
        %v845 = vmul.f32 %v717, %v829
        %v846 = vmul.f32 %v718, %v830
        %v847 = vmul.f32 %v719, %v831
        %v848 = vmul.f32 %v720, %v832
        %v849 = vmul.f32 %v721, %v833
        %v850 = vmul.f32 %v722, %v834
        %v851 = vmul.f32 %v723, %v835
        %v852 = vmul.f32 %v724, %v836
        %v853 = vmul.f32 %v725, %v837
        %v854 = vmul.f32 %v726, %v838
        %v855 = vpack.c.bf16 %v843, %v839
        %v856 = vpack.c.bf16 %v844, %v840
        %v857 = vpack.c.bf16 %v845, %v841
        %v858 = vpack.c.bf16 %v846, %v842
        %v859 = vpack.c.bf16 %v851, %v847
        %v860 = vpack.c.bf16 %v852, %v848
        %v861 = vpack.c.bf16 %v853, %v849
        %v862 = vpack.c.bf16 %v854, %v850
        %v863 = vld [vmem:[%s5] sm:$0xf]
        %v864 = vld [vmem:[%s5 + $0x4] sm:$0xf]
        %v865 = vld [vmem:[%s5 + $0x8] sm:$0xf]
        %v866 = vld [vmem:[%s5 + $0xc] sm:$0xf]
        %v867 = vld [vmem:[%s5 + $0x10] sm:$0xf]
        %v868 = vld [vmem:[%s5 + $0x14] sm:$0xf]
        %v869 = vld [vmem:[%s5 + $0x18] sm:$0xf]
        %v870 = vld [vmem:[%s5 + $0x1c] sm:$0xf]
        %v871 = vld [vmem:[%s5 + $0x20] sm:$0xf]
        %v872 = vld [vmem:[%s5 + $0x24] sm:$0xf]
        %v873 = vld [vmem:[%s5 + $0x28] sm:$0xf]
        %v874 = vld [vmem:[%s5 + $0x2c] sm:$0xf]
        %v875 = vld [vmem:[%s5 + $0x30] sm:$0xf]
        %v876 = vld [vmem:[%s5 + $0x34] sm:$0xf]
        %v877 = vld [vmem:[%s5 + $0x38] sm:$0xf]
        %v878 = vld [vmem:[%s5 + $0x3c] sm:$0xf]
        %v879 = vld [vmem:[%s5 + $0x40] sm:$0xf]
        %v880 = vld [vmem:[%s5 + $0x44] sm:$0xf]
        %v881 = vld [vmem:[%s5 + $0x48] sm:$0xf]
        %v882 = vld [vmem:[%s5 + $0x4c] sm:$0xf]
        %v883 = vld [vmem:[%s5 + $0x50] sm:$0xf]
        %v884 = vld [vmem:[%s5 + $0x54] sm:$0xf]
        %v885 = vld [vmem:[%s5 + $0x58] sm:$0xf]
        %v886 = vld [vmem:[%s5 + $0x5c] sm:$0xf]
        %v887 = vld [vmem:[%s5 + $0x60] sm:$0xf]
        %v888 = vld [vmem:[%s5 + $0x64] sm:$0xf]
        %v889 = vld [vmem:[%s5 + $0x68] sm:$0xf]
        %v890 = vld [vmem:[%s5 + $0x6c] sm:$0xf]
        %v891 = vld [vmem:[%s5 + $0x70] sm:$0xf]
        %v892 = vld [vmem:[%s5 + $0x74] sm:$0xf]
        %v893 = vld [vmem:[%s5 + $0x78] sm:$0xf]
        %v894 = vld [vmem:[%s5 + $0x7c] sm:$0xf]
        %v895 = vld [vmem:[%s5 + $0x80] sm:$0xf]
        %v896 = vld [vmem:[%s5 + $0x84] sm:$0xf]
        %v897 = vld [vmem:[%s5 + $0x88] sm:$0xf]
        %v898 = vld [vmem:[%s5 + $0x8c] sm:$0xf]
        %v899 = vld [vmem:[%s5 + $0x90] sm:$0xf]
        %v900 = vld [vmem:[%s5 + $0x94] sm:$0xf]
        %v901 = vld [vmem:[%s5 + $0x98] sm:$0xf]
        %v902 = vld [vmem:[%s5 + $0x9c] sm:$0xf]
        %v903 = vld [vmem:[%s5 + $0xa0] sm:$0xf]
        %v904 = vld [vmem:[%s5 + $0xa4] sm:$0xf]
        %v905 = vld [vmem:[%s5 + $0xa8] sm:$0xf]
        %v906 = vld [vmem:[%s5 + $0xac] sm:$0xf]
        %v907 = vld [vmem:[%s5 + $0xb0] sm:$0xf]
        %v908 = vld [vmem:[%s5 + $0xb4] sm:$0xf]
        %v909 = vld [vmem:[%s5 + $0xb8] sm:$0xf]
        %v910 = vld [vmem:[%s5 + $0xbc] sm:$0xf]
        %v911 = vld [vmem:[%s5 + $0xc0] sm:$0xf]
        %v912 = vld [vmem:[%s5 + $0xc4] sm:$0xf]
        %v913 = vld [vmem:[%s5 + $0xc8] sm:$0xf]
        %v914 = vld [vmem:[%s5 + $0xcc] sm:$0xf]
        %v915 = vld [vmem:[%s5 + $0xd0] sm:$0xf]
        %v916 = vld [vmem:[%s5 + $0xd4] sm:$0xf]
        %v917 = vld [vmem:[%s5 + $0xd8] sm:$0xf]
        %v918 = vld [vmem:[%s5 + $0xdc] sm:$0xf]
        %v919 = vld [vmem:[%s5 + $0xe0] sm:$0xf]
        %v920 = vld [vmem:[%s5 + $0xe4] sm:$0xf]
        %v921 = vld [vmem:[%s5 + $0xe8] sm:$0xf]
        %v922 = vld [vmem:[%s5 + $0xec] sm:$0xf]
        %v923 = vld [vmem:[%s5 + $0xf0] sm:$0xf]
        %v924 = vld [vmem:[%s5 + $0xf4] sm:$0xf]
        %v925 = vld [vmem:[%s5 + $0xf8] sm:$0xf]
        %v926 = vld [vmem:[%s5 + $0xfc] sm:$0xf]
        %v927 = vld [vmem:[%s6] sm:$0x1]
        %v929 = vlaneseq
        %v930 = vshrl.u32 %v929, 7
        %v931 = vsub.s32 0, %v930
        %v932 = vrot.slane %v927, %v931
        %v998 = vunpack.c.l.b16 %v863
        %v999 = vunpack.c.l.b16 %v864
        %v1000 = vunpack.c.l.b16 %v865
        %v1001 = vunpack.c.l.b16 %v866
        %v1002 = vunpack.c.l.b16 %v867
        %v1003 = vunpack.c.l.b16 %v868
        %v1004 = vunpack.c.l.b16 %v869
        %v1005 = vunpack.c.l.b16 %v870
        %v1006 = vunpack.c.l.b16 %v871
        %v1007 = vunpack.c.l.b16 %v872
        %v1008 = vunpack.c.l.b16 %v873
        %v1009 = vunpack.c.l.b16 %v874
        %v1010 = vunpack.c.l.b16 %v875
        %v1011 = vunpack.c.l.b16 %v876
        %v1012 = vunpack.c.l.b16 %v877
        %v1013 = vunpack.c.l.b16 %v878
        %v1014 = vunpack.c.l.b16 %v879
        %v1015 = vunpack.c.l.b16 %v880
        %v1016 = vunpack.c.l.b16 %v881
        %v1017 = vunpack.c.l.b16 %v882
        %v1018 = vunpack.c.l.b16 %v883
        %v1019 = vunpack.c.l.b16 %v884
        %v1020 = vunpack.c.l.b16 %v885
        %v1021 = vunpack.c.l.b16 %v886
        %v1022 = vunpack.c.l.b16 %v887
        %v1023 = vunpack.c.l.b16 %v888
        %v1024 = vunpack.c.l.b16 %v889
        %v1025 = vunpack.c.l.b16 %v890
        %v1026 = vunpack.c.l.b16 %v891
        %v1027 = vunpack.c.l.b16 %v892
        %v1028 = vunpack.c.l.b16 %v893
        %v1029 = vunpack.c.l.b16 %v894
        %v1030 = vunpack.c.l.b16 %v895
        %v1031 = vunpack.c.l.b16 %v896
        %v1032 = vunpack.c.l.b16 %v897
        %v1033 = vunpack.c.l.b16 %v898
        %v1034 = vunpack.c.l.b16 %v899
        %v1035 = vunpack.c.l.b16 %v900
        %v1036 = vunpack.c.l.b16 %v901
        %v1037 = vunpack.c.l.b16 %v902
        %v1038 = vunpack.c.l.b16 %v903
        %v1039 = vunpack.c.l.b16 %v904
        %v1040 = vunpack.c.l.b16 %v905
        %v1041 = vunpack.c.l.b16 %v906
        %v1042 = vunpack.c.l.b16 %v907
        %v1043 = vunpack.c.l.b16 %v908
        %v1044 = vunpack.c.l.b16 %v909
        %v1045 = vunpack.c.l.b16 %v910
        %v1046 = vunpack.c.l.b16 %v911
        %v1047 = vunpack.c.l.b16 %v912
        %v1048 = vunpack.c.l.b16 %v913
        %v1049 = vunpack.c.l.b16 %v914
        %v1050 = vunpack.c.l.b16 %v915
        %v1051 = vunpack.c.l.b16 %v916
        %v1052 = vunpack.c.l.b16 %v917
        %v1053 = vunpack.c.l.b16 %v918
        %v1054 = vunpack.c.l.b16 %v919
        %v1055 = vunpack.c.l.b16 %v920
        %v1056 = vunpack.c.l.b16 %v921
        %v1057 = vunpack.c.l.b16 %v922
        %v1058 = vunpack.c.l.b16 %v923
        %v1059 = vunpack.c.l.b16 %v924
        %v1060 = vunpack.c.l.b16 %v925
        %v1061 = vunpack.c.l.b16 %v926
        %v1062 = vpack.c.b16 %v999, %v998
        %v1063 = vpack.c.b16 %v1001, %v1000
        %v1064 = vpack.c.b16 %v1003, %v1002
        %v1065 = vpack.c.b16 %v1005, %v1004
        %v1066 = vpack.c.b16 %v1007, %v1006
        %v1067 = vpack.c.b16 %v1009, %v1008
        %v1068 = vpack.c.b16 %v1011, %v1010
        %v1069 = vpack.c.b16 %v1013, %v1012
        %v1070 = vpack.c.b16 %v1015, %v1014
        %v1071 = vpack.c.b16 %v1017, %v1016
        %v1072 = vpack.c.b16 %v1019, %v1018
        %v1073 = vpack.c.b16 %v1021, %v1020
        %v1074 = vpack.c.b16 %v1023, %v1022
        %v1075 = vpack.c.b16 %v1025, %v1024
        %v1076 = vpack.c.b16 %v1027, %v1026
        %v1077 = vpack.c.b16 %v1029, %v1028
        %v1078 = vpack.c.b16 %v1031, %v1030
        %v1079 = vpack.c.b16 %v1033, %v1032
        %v1080 = vpack.c.b16 %v1035, %v1034
        %v1081 = vpack.c.b16 %v1037, %v1036
        %v1082 = vpack.c.b16 %v1039, %v1038
        %v1083 = vpack.c.b16 %v1041, %v1040
        %v1084 = vpack.c.b16 %v1043, %v1042
        %v1085 = vpack.c.b16 %v1045, %v1044
        %v1086 = vpack.c.b16 %v1047, %v1046
        %v1087 = vpack.c.b16 %v1049, %v1048
        %v1088 = vpack.c.b16 %v1051, %v1050
        %v1089 = vpack.c.b16 %v1053, %v1052
        %v1090 = vpack.c.b16 %v1055, %v1054
        %v1091 = vpack.c.b16 %v1057, %v1056
        %v1092 = vpack.c.b16 %v1059, %v1058
        %v1093 = vpack.c.b16 %v1061, %v1060
        %1126 = vmatprep.subr.bf16.mxu0 0
        %1127 = vmatpush1.bf16.msra.mxu0 %v1069
        %1128 = vmatprep.subr.bf16.mxu0 0
        %1129 = vmatpush1.bf16.msra.mxu0 %v1068
        %1130 = vmatprep.subr.bf16.mxu0 0
        %1131 = vmatpush1.bf16.msra.mxu0 %v1067
        %1132 = vmatprep.subr.bf16.mxu0 0
        %1133 = vmatpush1.bf16.msra.mxu0 %v1066
        %1134 = vmatprep.subr.bf16.mxu0 0
        %1135 = vmatpush1.bf16.msra.mxu0 %v1065
        %1136 = vmatprep.subr.bf16.mxu0 0
        %1137 = vmatpush1.bf16.msra.mxu0 %v1064
        %1138 = vmatprep.subr.bf16.mxu0 0
        %1139 = vmatpush1.bf16.msra.mxu0 %v1063
        %1140 = vmatprep.subr.bf16.mxu0 0
        %1141 = vmatpush1.bf16.msra.mxu0 %v1062
        %1142 = vmatprep.subr.bf16.mxu0 0
        %1143 = vmatpush2.bf16.msra.mxu0 %v1077
        %1144 = vmatprep.subr.bf16.mxu0 0
        %1145 = vmatpush2.bf16.msra.mxu0 %v1076
        %1146 = vmatprep.subr.bf16.mxu0 0
        %1147 = vmatpush2.bf16.msra.mxu0 %v1075
        %1148 = vmatprep.subr.bf16.mxu0 0
        %1149 = vmatpush2.bf16.msra.mxu0 %v1074
        %1150 = vmatprep.subr.bf16.mxu0 0
        %1151 = vmatpush2.bf16.msra.mxu0 %v1073
        %1152 = vmatprep.subr.bf16.mxu0 0
        %1153 = vmatpush2.bf16.msra.mxu0 %v1072
        %1154 = vmatprep.subr.bf16.mxu0 0
        %1155 = vmatpush2.bf16.msra.mxu0 %v1071
        %1156 = vmatprep.subr.bf16.mxu0 0
        %1157 = vmatpush2.bf16.msra.mxu0 %v1070
        %1158 = vmatprep.mubr.bf16.mxu0 %v856
        %1159 = vmatmul.mubr.bf16.gmra.mxu0 %v855
        %v1160 = vpop.f32.mrf.mxu0
        %v1161 = vadd.f32 %v932, %v1160
        %v1162 = vpop.f32.mrf.mxu0
        %v1163 = vpop.f32.mrf.mxu0
        %v1164 = vadd.f32 %v932, %v1163
        %v1165 = vpop.f32.mrf.mxu0
        %1166 = vmatprep.mubr.bf16.mxu0 %v860
        %1167 = vmatmul.mubr.bf16.gmra.mxu0 %v859
        %v1168 = vpop.f32.mrf.mxu0
        %v1169 = vadd.f32 %v932, %v1168
        %v1170 = vpop.f32.mrf.mxu0
        %v1171 = vpop.f32.mrf.mxu0
        %v1172 = vadd.f32 %v932, %v1171
        %v1173 = vpop.f32.mrf.mxu0
        %1174 = vdwg.mxu0
        %1175 = vmatprep.subr.bf16.mxu0 0
        %1176 = vmatpush1.bf16.msra.mxu0 %v1085
        %1177 = vmatprep.subr.bf16.mxu0 0
        %1178 = vmatpush1.bf16.msra.mxu0 %v1084
        %1179 = vmatprep.subr.bf16.mxu0 0
        %1180 = vmatpush1.bf16.msra.mxu0 %v1083
        %1181 = vmatprep.subr.bf16.mxu0 0
        %1182 = vmatpush1.bf16.msra.mxu0 %v1082
        %1183 = vmatprep.subr.bf16.mxu0 0
        %1184 = vmatpush1.bf16.msra.mxu0 %v1081
        %1185 = vmatprep.subr.bf16.mxu0 0
        %1186 = vmatpush1.bf16.msra.mxu0 %v1080
        %1187 = vmatprep.subr.bf16.mxu0 0
        %1188 = vmatpush1.bf16.msra.mxu0 %v1079
        %1189 = vmatprep.subr.bf16.mxu0 0
        %1190 = vmatpush1.bf16.msra.mxu0 %v1078
        %1191 = vmatprep.subr.bf16.mxu0 0
        %1192 = vmatpush2.bf16.msra.mxu0 %v1093
        %1193 = vmatprep.subr.bf16.mxu0 0
        %1194 = vmatpush2.bf16.msra.mxu0 %v1092
        %1195 = vmatprep.subr.bf16.mxu0 0
        %1196 = vmatpush2.bf16.msra.mxu0 %v1091
        %1197 = vmatprep.subr.bf16.mxu0 0
        %1198 = vmatpush2.bf16.msra.mxu0 %v1090
        %1199 = vmatprep.subr.bf16.mxu0 0
        %1200 = vmatpush2.bf16.msra.mxu0 %v1089
        %1201 = vmatprep.subr.bf16.mxu0 0
        %1202 = vmatpush2.bf16.msra.mxu0 %v1088
        %1203 = vmatprep.subr.bf16.mxu0 0
        %1204 = vmatpush2.bf16.msra.mxu0 %v1087
        %1205 = vmatprep.subr.bf16.mxu0 0
        %1206 = vmatpush2.bf16.msra.mxu0 %v1086
        %1207 = vmatprep.mubr.bf16.mxu0 %v858
        %1208 = vmatmul.mubr.bf16.gmra.mxu0 %v857
        %v1209 = vpop.f32.mrf.mxu0
        %v1210 = vadd.f32 %v1161, %v1209
        %v1211 = vpop.f32.mrf.mxu0
        %v1212 = vpop.f32.mrf.mxu0
        %v1213 = vadd.f32 %v1164, %v1212
        %v1214 = vpop.f32.mrf.mxu0
        %1215 = vmatprep.mubr.bf16.mxu0 %v862
        %1216 = vmatmul.mubr.bf16.gmra.mxu0 %v861
        %v1217 = vpop.f32.mrf.mxu0
        %v1218 = vadd.f32 %v1169, %v1217
        %v1219 = vpop.f32.mrf.mxu0
        %v1220 = vpop.f32.mrf.mxu0
        %v1221 = vadd.f32 %v1172, %v1220
        %v1222 = vpop.f32.mrf.mxu0
        %1223 = vdwg.mxu0
        %v1224 = vadd.f32 %v318, %v1210
        %v1225 = vadd.f32 %v319, %v1213
        %v1226 = vadd.f32 %v320, %v1218
        %v1227 = vadd.f32 %v321, %v1221
        %1228 = vst [vmem:[%s314] sm:$0xff] %v1224
        %1229 = vst [vmem:[%s314 + $0x8] sm:$0xff] %v1225
        %1230 = vst [vmem:[%s314 + $0x10] sm:$0xff] %v1226
        %1231 = vst [vmem:[%s314 + $0x18] sm:$0xff] %v1227
        %s1232 = sand.u32 %s200, 1
        %s1233 = scalar_lea.sflag [#allocation4], %s1232
        %s1234 = sand.u32 %s200, 1
        %s1235 = smul.addr %s1234, 32
        %s1236 = scalar_lea.vmem [#allocation5], %s1235
        // Predicated region
        $region53: #{gpt2_block.5} parent=47 // pred_check
          %p1237 = pneg %p210
        $region54: #{gpt2_block.5} parent=47 // pred_check_branch
          %1239 = sbr.rel (%p1237) target = $region56
        $region55: #{gpt2_block.5} parent=47 // pred_region
          %s1240 = smul.u32 4, %s29
          %s1242 = ssub.s32 512, 512
          %1243 = vsyncadd %s1233, %s1242
          %s1244 = smul.addr %s28, 4
          %s1245 = sadd.s32 %s1240, %s1244
          %s1246 = smul.addr %s1245, 128
          %s1247 = scalar_lea.hbm %s7, %s1246
          %s1248 = sshll.u32 %s1236, 4
          %s1249 = int_to_ptr.vmem [resolvable:$true] %s1248
          %1254 = dma.vmem_to_hbm [thread:$0]  %s1249, 512, %s1247, %s1233, 128, 128, 8
        $region56: #{gpt2_block.5} parent=47 // pred_fallthru
          _
      $region48: #{gpt2_block.5} parent=5 // pred_fallthru
        _
      %p1255 = scmp.le.s32.totalorder 2, %s19
      // Predicated region
      $region57: #{gpt2_block.5} parent=5 // pred_check
        %p1256 = pneg %p1255
      $region58: #{gpt2_block.5} parent=5 // pred_check_branch
        %1258 = sbr.rel (%p1256) target = $region60
      $region59: #{gpt2_block.5} parent=5 // pred_region
        %s1259 = ssub.s32 %s19, 2
        // Predicated region
        $region61: #{gpt2_block.5} parent=59 // pred_check
          %p1260 = pneg %p216
        $region62: #{gpt2_block.5} parent=59 // pred_check_branch
          %1262 = sbr.rel (%p1260) target = $region64
        $region63: #{gpt2_block.5} parent=59 // pred_region
          %s1263 = sand.u32 %s201, 1
          %s1264 = scalar_lea.sflag [#allocation4], %s1263
          %s1265 = sand.u32 %s201, 1
          %s1266 = smul.addr %s1265, 32
          %s1267 = scalar_lea.vmem [#allocation5], %s1266
          %1268 = dma.done %s1264, 512
        $region64: #{gpt2_block.5} parent=59 // pred_fallthru
          _
      $region60: #{gpt2_block.5} parent=5 // pred_fallthru
        _
    $region6: #{gpt2_block.5} parent=1 // loop_footer
      %s23 = sadd.s32 1, %s19
    $region7: #{gpt2_block.5} parent=1 // loop_footer_branch
      %18 = sbr.rel target = $region3
    $region8: #{gpt2_block.5} parent=1 // loop_exit
      _
    %1269 = vsyncpa [#allocation3], 1
    %s1270 = scalar_lea.sflag [#allocation3], 1
    %1271 = vsyncpa %s1270, 1
    %1272 = vsyncpa [#allocation4], 1
    %s1273 = scalar_lea.sflag [#allocation4], 1
    %1274 = vsyncpa %s1273, 1

// kernel: gpt2_block.4
$region0: #{gpt2_block.4}
  #allocation0 [shape = 'u32[]', space=smem, size = 0x4, offset = 0x4, fixed_abs, tag = 'smem constant byte address 0x4 - core index']
  #allocation1 [shape = 'u32[144,128]{1,0:T(1,128)}', space=vmem, size = 0x12000, scoped, tag = 'internal scratch']
  #allocation2 [shape = 'bf16[4,32,32]{2,1,0:T(8,128)(2,1)}', space=vmem, size = 0x8000, scoped, tag = 'scratch operand']
  #allocation3 [shape = 'f32[4,32,1]{2,1,0:T(8,128)}', space=vmem, size = 0x10000, scoped, tag = 'scratch operand']
  #allocation4 [shape = 'f32[4,32,1]{2,1,0:T(8,128)}', space=vmem, size = 0x10000, scoped, tag = 'scratch operand']
  #allocation5 [shape = 'f32[4,32,32]{2,1,0:T(8,128)}', space=vmem, size = 0x10000, scoped, tag = 'scratch operand']
  #allocation6 [shape = 'f32[32,128]{1,0:T(8,128)}', space=vmem, size = 0x4000, scoped, tag = 'scratch operand']
  %s0 = inlined_call_operand.vmem [shape: f32[4,32,128], index: 0, kind: input, shape index: {}]
  %s1 = inlined_call_operand.vmem [shape: f32[1,128], index: 1, kind: input, shape index: {}]
  %s2 = inlined_call_operand.vmem [shape: f32[1,128], index: 2, kind: input, shape index: {}]
  %s3 = inlined_call_operand.vmem [shape: bf16[128,128], index: 3, kind: input, shape index: {}]
  %s4 = inlined_call_operand.vmem [shape: f32[1,128], index: 4, kind: input, shape index: {}]
  %s5 = inlined_call_operand.vmem [shape: bf16[4,4,32,32], index: 5, kind: input, shape index: {}]
  %s6 = inlined_call_operand.vmem [shape: bf16[4,4,32,32], index: 6, kind: input, shape index: {}]
  %s7 = inlined_call_operand.vmem [shape: bf16[128,128], index: 7, kind: input, shape index: {}]
  %s8 = inlined_call_operand.vmem [shape: f32[1,128], index: 8, kind: input, shape index: {}]
  %s9 = inlined_call_operand.hbm [shape: f32[4,32,128], index: 9, kind: output, shape index: {}]
  %s10 = sld [smem:[#allocation0]]
  $region81: #{gpt2_block.4} parent=0
    _
  %s12 = ssub.s32 1, %s10
  %s13 = scalar_select 0, %s12, %s10
  $region1: #{gpt2_block.4} parent=0
    #allocation7 [shape = 'u8[32768]{0}', space=vmem, size = 0x8000, scoped, tag = 'output window, operand 0']
    #allocation8 [shape = 's32[2]{0}', space=sflag, size = 0x8, scoped, tag = 'scoped memory for gpt2_block.4']
    %14 = vsyncpa [#allocation8], 0
    %s15 = scalar_lea.sflag [#allocation8], 1
    %16 = vsyncpa %s15, 0
    loop: start=0, step=1, limit=6
    $region2: #{gpt2_block.4} parent=1 // loop_pre_header
      _
    $region3: #{gpt2_block.4} parent=1 // loop_header
      %s18 = sphi 0, %s22
      %p19 = scmp.ge.s32.totalorder %s18, 6
      %s25 = sphi 0, %s44
      %s26 = sphi 0, %s40
      %s27 = sphi 0, %s36
      %s28 = sphi 0, %s25
      %s29 = sphi 0, %s26
      %s30 = sphi 0, %s27
      %s31 = sphi 0, %s28
      %s32 = sphi 0, %s29
      %s33 = sphi 0, %s30
      %s49 = sphi 0, %s51
      %s52 = sphi 0, %s49
      %s53 = sphi 0, %s52
      %s69 = sphi 0, %s53
      %s73 = sphi 0, %s73
      %s75 = sphi 0, %s73
      %s76 = sphi 0, %s75
      %s90 = sphi 0, %s76
      %s94 = sphi 0, %s94
      %s96 = sphi 0, %s94
      %s97 = sphi 0, %s96
      %s111 = sphi 0, %s97
      %s115 = sphi 0, %s115
      %s117 = sphi 0, %s115
      %s118 = sphi 0, %s117
      %s132 = sphi 0, %s118
      %s136 = sphi 0, %s136
      %s138 = sphi 0, %s136
      %s139 = sphi 0, %s138
      %s153 = sphi 0, %s139
      %s165 = sphi 0, %s167
      %s168 = sphi 0, %s165
      %s169 = sphi 0, %s168
      %s185 = sphi 0, %s169
      %s197 = sphi 0, %s199
      %s200 = sphi 0, %s197
      %s201 = sphi 0, %s200
      %s217 = sphi 0, %s201
      %s221 = sphi 0, %s221
      %s223 = sphi 0, %s221
      %s224 = sphi 0, %s223
      %s238 = sphi 0, %s224
      %s242 = sphi 0, %s242
      %s244 = sphi 0, %s242
      %s245 = sphi 0, %s244
      %s259 = sphi 0, %s245
      %s267 = sphi 0, %s269
      %s270 = sphi 0, %s267
      %s271 = sphi 0, %s270
      %s287 = sphi 0, %s271
    $region4: #{gpt2_block.4} parent=1 // loop_header_branch
      %21 = sbr.rel (%p19) target = $region8
    $region5: #{gpt2_block.4} parent=1 // loop_body
      %s23 = ssub.s32 %s18, 1
      %s24 = ssub.s32 %s18, 2
      %s34 = sadd.s32 1, %s27
      %p35 = scmp.ge.s32.totalorder %s34, 1
      %s36 = scalar_select %p35, 0, %s34
      %s37 = sadd.s32 1, %s26
      %s38 = scalar_select %p35, %s37, %s26
      %p39 = scmp.ge.s32.totalorder %s38, 1
      %s40 = scalar_select %p39, 0, %s38
      %s41 = sadd.s32 1, %s25
      %s42 = scalar_select %p39, %s41, %s25
      %p43 = scmp.ge.s32.totalorder %s42, 4
      %s44 = scalar_select %p43, 0, %s42
      %s45 = ssub.s32 %s25, %s44
      %s46 = ssub.s32 %s26, %s40
      %s47 = sor.u32 %s45, %s46
      %p48 = scmp.eq.s32.totalorder %s47, 0
      %s50 = sadd.s32 %s49, 1
      %s51 = scalar_select %p48, %s49, %s50
      %p54 = pneg %p48
      %p55 = scmp.eq.s32.totalorder %s18, 3
      %p56 = por %p54, %p55
      %p57 = scmp.ne.s32.totalorder %s49, %s52
      %p58 = scmp.eq.s32.totalorder %s18, 0
      %p59 = por %p57, %p58
      %p60 = scmp.ne.s32.totalorder %s49, %s52
      %p61 = scmp.eq.s32.totalorder %s23, 3
      %p62 = por %p60, %p61
      %p63 = scmp.ne.s32.totalorder %s52, %s53
      %p64 = scmp.eq.s32.totalorder %s23, 0
      %p65 = por %p63, %p64
      %p66 = scmp.ne.s32.totalorder %s52, %s53
      %p67 = scmp.eq.s32.totalorder %s24, 3
      %p68 = por %p66, %p67
      %p70 = scmp.ne.s32.totalorder %s53, %s69
      %p71 = scmp.eq.s32.totalorder %s24, 0
      %p72 = por %p70, %p71
      %s74 = sadd.s32 %s73, 1
      %p77 = scmp.eq.s32.totalorder %s18, 3
      %p78 = scmp.ne.s32.totalorder %s73, %s75
      %p79 = scmp.eq.s32.totalorder %s18, 0
      %p80 = por %p78, %p79
      %p81 = scmp.ne.s32.totalorder %s73, %s75
      %p82 = scmp.eq.s32.totalorder %s23, 3
      %p83 = por %p81, %p82
      %p84 = scmp.ne.s32.totalorder %s75, %s76
      %p85 = scmp.eq.s32.totalorder %s23, 0
      %p86 = por %p84, %p85
      %p87 = scmp.ne.s32.totalorder %s75, %s76
      %p88 = scmp.eq.s32.totalorder %s24, 3
      %p89 = por %p87, %p88
      %p91 = scmp.ne.s32.totalorder %s76, %s90
      %p92 = scmp.eq.s32.totalorder %s24, 0
      %p93 = por %p91, %p92
      %s95 = sadd.s32 %s94, 1
      %p98 = scmp.eq.s32.totalorder %s18, 3
      %p99 = scmp.ne.s32.totalorder %s94, %s96
      %p100 = scmp.eq.s32.totalorder %s18, 0
      %p101 = por %p99, %p100
      %p102 = scmp.ne.s32.totalorder %s94, %s96
      %p103 = scmp.eq.s32.totalorder %s23, 3
      %p104 = por %p102, %p103
      %p105 = scmp.ne.s32.totalorder %s96, %s97
      %p106 = scmp.eq.s32.totalorder %s23, 0
      %p107 = por %p105, %p106
      %p108 = scmp.ne.s32.totalorder %s96, %s97
      %p109 = scmp.eq.s32.totalorder %s24, 3
      %p110 = por %p108, %p109
      %p112 = scmp.ne.s32.totalorder %s97, %s111
      %p113 = scmp.eq.s32.totalorder %s24, 0
      %p114 = por %p112, %p113
      %s116 = sadd.s32 %s115, 1
      %p119 = scmp.eq.s32.totalorder %s18, 3
      %p120 = scmp.ne.s32.totalorder %s115, %s117
      %p121 = scmp.eq.s32.totalorder %s18, 0
      %p122 = por %p120, %p121
      %p123 = scmp.ne.s32.totalorder %s115, %s117
      %p124 = scmp.eq.s32.totalorder %s23, 3
      %p125 = por %p123, %p124
      %p126 = scmp.ne.s32.totalorder %s117, %s118
      %p127 = scmp.eq.s32.totalorder %s23, 0
      %p128 = por %p126, %p127
      %p129 = scmp.ne.s32.totalorder %s117, %s118
      %p130 = scmp.eq.s32.totalorder %s24, 3
      %p131 = por %p129, %p130
      %p133 = scmp.ne.s32.totalorder %s118, %s132
      %p134 = scmp.eq.s32.totalorder %s24, 0
      %p135 = por %p133, %p134
      %s137 = sadd.s32 %s136, 1
      %p140 = scmp.eq.s32.totalorder %s18, 3
      %p141 = scmp.ne.s32.totalorder %s136, %s138
      %p142 = scmp.eq.s32.totalorder %s18, 0
      %p143 = por %p141, %p142
      %p144 = scmp.ne.s32.totalorder %s136, %s138
      %p145 = scmp.eq.s32.totalorder %s23, 3
      %p146 = por %p144, %p145
      %p147 = scmp.ne.s32.totalorder %s138, %s139
      %p148 = scmp.eq.s32.totalorder %s23, 0
      %p149 = por %p147, %p148
      %p150 = scmp.ne.s32.totalorder %s138, %s139
      %p151 = scmp.eq.s32.totalorder %s24, 3
      %p152 = por %p150, %p151
      %p154 = scmp.ne.s32.totalorder %s139, %s153
      %p155 = scmp.eq.s32.totalorder %s24, 0
      %p156 = por %p154, %p155
      %p157 = scmp.lt.s32.totalorder %s26, %s27
      %s158 = scalar_select %p157, %s26, %s27
      %p159 = scmp.lt.s32.totalorder %s40, %s36
      %s160 = scalar_select %p159, %s40, %s36
      %s161 = ssub.s32 %s25, %s44
      %s162 = ssub.s32 %s158, %s160
      %s163 = sor.u32 %s161, %s162
      %p164 = scmp.eq.s32.totalorder %s163, 0
      %s166 = sadd.s32 %s165, 1
      %s167 = scalar_select %p164, %s165, %s166
      %p170 = pneg %p164
      %p171 = scmp.eq.s32.totalorder %s18, 3
      %p172 = por %p170, %p171
      %p173 = scmp.ne.s32.totalorder %s165, %s168
      %p174 = scmp.eq.s32.totalorder %s18, 0
      %p175 = por %p173, %p174
      %p176 = scmp.ne.s32.totalorder %s165, %s168
      %p177 = scmp.eq.s32.totalorder %s23, 3
      %p178 = por %p176, %p177
      %p179 = scmp.ne.s32.totalorder %s168, %s169
      %p180 = scmp.eq.s32.totalorder %s23, 0
      %p181 = por %p179, %p180
      %p182 = scmp.ne.s32.totalorder %s168, %s169
      %p183 = scmp.eq.s32.totalorder %s24, 3
      %p184 = por %p182, %p183
      %p186 = scmp.ne.s32.totalorder %s169, %s185
      %p187 = scmp.eq.s32.totalorder %s24, 0
      %p188 = por %p186, %p187
      %p189 = scmp.lt.s32.totalorder %s26, %s27
      %s190 = scalar_select %p189, %s26, %s27
      %p191 = scmp.lt.s32.totalorder %s40, %s36
      %s192 = scalar_select %p191, %s40, %s36
      %s193 = ssub.s32 %s25, %s44
      %s194 = ssub.s32 %s190, %s192
      %s195 = sor.u32 %s193, %s194
      %p196 = scmp.eq.s32.totalorder %s195, 0
      %s198 = sadd.s32 %s197, 1
      %s199 = scalar_select %p196, %s197, %s198
      %p202 = pneg %p196
      %p203 = scmp.eq.s32.totalorder %s18, 3
      %p204 = por %p202, %p203
      %p205 = scmp.ne.s32.totalorder %s197, %s200
      %p206 = scmp.eq.s32.totalorder %s18, 0
      %p207 = por %p205, %p206
      %p208 = scmp.ne.s32.totalorder %s197, %s200
      %p209 = scmp.eq.s32.totalorder %s23, 3
      %p210 = por %p208, %p209
      %p211 = scmp.ne.s32.totalorder %s200, %s201
      %p212 = scmp.eq.s32.totalorder %s23, 0
      %p213 = por %p211, %p212
      %p214 = scmp.ne.s32.totalorder %s200, %s201
      %p215 = scmp.eq.s32.totalorder %s24, 3
      %p216 = por %p214, %p215
      %p218 = scmp.ne.s32.totalorder %s201, %s217
      %p219 = scmp.eq.s32.totalorder %s24, 0
      %p220 = por %p218, %p219
      %s222 = sadd.s32 %s221, 1
      %p225 = scmp.eq.s32.totalorder %s18, 3
      %p226 = scmp.ne.s32.totalorder %s221, %s223
      %p227 = scmp.eq.s32.totalorder %s18, 0
      %p228 = por %p226, %p227
      %p229 = scmp.ne.s32.totalorder %s221, %s223
      %p230 = scmp.eq.s32.totalorder %s23, 3
      %p231 = por %p229, %p230
      %p232 = scmp.ne.s32.totalorder %s223, %s224
      %p233 = scmp.eq.s32.totalorder %s23, 0
      %p234 = por %p232, %p233
      %p235 = scmp.ne.s32.totalorder %s223, %s224
      %p236 = scmp.eq.s32.totalorder %s24, 3
      %p237 = por %p235, %p236
      %p239 = scmp.ne.s32.totalorder %s224, %s238
      %p240 = scmp.eq.s32.totalorder %s24, 0
      %p241 = por %p239, %p240
      %s243 = sadd.s32 %s242, 1
      %p246 = scmp.eq.s32.totalorder %s18, 3
      %p247 = scmp.ne.s32.totalorder %s242, %s244
      %p248 = scmp.eq.s32.totalorder %s18, 0
      %p249 = por %p247, %p248
      %p250 = scmp.ne.s32.totalorder %s242, %s244
      %p251 = scmp.eq.s32.totalorder %s23, 3
      %p252 = por %p250, %p251
      %p253 = scmp.ne.s32.totalorder %s244, %s245
      %p254 = scmp.eq.s32.totalorder %s23, 0
      %p255 = por %p253, %p254
      %p256 = scmp.ne.s32.totalorder %s244, %s245
      %p257 = scmp.eq.s32.totalorder %s24, 3
      %p258 = por %p256, %p257
      %p260 = scmp.ne.s32.totalorder %s245, %s259
      %p261 = scmp.eq.s32.totalorder %s24, 0
      %p262 = por %p260, %p261
      %s263 = ssub.s32 %s25, %s44
      %s264 = ssub.s32 %s26, %s40
      %s265 = sor.u32 %s263, %s264
      %p266 = scmp.eq.s32.totalorder %s265, 0
      %s268 = sadd.s32 %s267, 1
      %s269 = scalar_select %p266, %s267, %s268
      %p272 = pneg %p266
      %p273 = scmp.eq.s32.totalorder %s18, 3
      %p274 = por %p272, %p273
      %p275 = scmp.ne.s32.totalorder %s267, %s270
      %p276 = scmp.eq.s32.totalorder %s18, 0
      %p277 = por %p275, %p276
      %p278 = scmp.ne.s32.totalorder %s267, %s270
      %p279 = scmp.eq.s32.totalorder %s23, 3
      %p280 = por %p278, %p279
      %p281 = scmp.ne.s32.totalorder %s270, %s271
      %p282 = scmp.eq.s32.totalorder %s23, 0
      %p283 = por %p281, %p282
      %p284 = scmp.ne.s32.totalorder %s270, %s271
      %p285 = scmp.eq.s32.totalorder %s24, 3
      %p286 = por %p284, %p285
      %p288 = scmp.ne.s32.totalorder %s271, %s287
      %p289 = scmp.eq.s32.totalorder %s24, 0
      %p290 = por %p288, %p289
      %p291 = scmp.le.s32.totalorder 1, %s18
      %p292 = scmp.lt.s32.totalorder %s18, 5
      %p293 = pnand %p291, %p292
      %p294 = pneg %p293
      // Predicated region
      $region9: #{gpt2_block.4} parent=5 // pred_check
        _
      $region10: #{gpt2_block.4} parent=5 // pred_check_branch
        %296 = sbr.rel (%p293) target = $region12
      $region11: #{gpt2_block.4} parent=5 // pred_region
        %s297 = ssub.s32 %s18, 1
        // Predicated region
        $region13: #{gpt2_block.4} parent=11 // pred_check
          %p298 = pneg %p86
        $region14: #{gpt2_block.4} parent=11 // pred_check_branch
          %300 = sbr.rel (%p298) target = $region16
        $region15: #{gpt2_block.4} parent=11 // pred_region
          _
        $region16: #{gpt2_block.4} parent=11 // pred_fallthru
          _
        // Predicated region
        $region17: #{gpt2_block.4} parent=11 // pred_check
          %p301 = pneg %p107
        $region18: #{gpt2_block.4} parent=11 // pred_check_branch
          %303 = sbr.rel (%p301) target = $region20
        $region19: #{gpt2_block.4} parent=11 // pred_region
          _
        $region20: #{gpt2_block.4} parent=11 // pred_fallthru
          _
        // Predicated region
        $region21: #{gpt2_block.4} parent=11 // pred_check
          %p304 = pneg %p128
        $region22: #{gpt2_block.4} parent=11 // pred_check_branch
          %306 = sbr.rel (%p304) target = $region24
        $region23: #{gpt2_block.4} parent=11 // pred_region
          _
        $region24: #{gpt2_block.4} parent=11 // pred_fallthru
          _
        // Predicated region
        $region25: #{gpt2_block.4} parent=11 // pred_check
          %p307 = pneg %p149
        $region26: #{gpt2_block.4} parent=11 // pred_check_branch
          %309 = sbr.rel (%p307) target = $region28
        $region27: #{gpt2_block.4} parent=11 // pred_region
          _
        $region28: #{gpt2_block.4} parent=11 // pred_fallthru
          _
        // Predicated region
        $region29: #{gpt2_block.4} parent=11 // pred_check
          %p310 = pneg %p234
        $region30: #{gpt2_block.4} parent=11 // pred_check_branch
          %312 = sbr.rel (%p310) target = $region32
        $region31: #{gpt2_block.4} parent=11 // pred_region
          _
        $region32: #{gpt2_block.4} parent=11 // pred_fallthru
          _
        // Predicated region
        $region33: #{gpt2_block.4} parent=11 // pred_check
          %p313 = pneg %p255
        $region34: #{gpt2_block.4} parent=11 // pred_check_branch
          %315 = sbr.rel (%p313) target = $region36
        $region35: #{gpt2_block.4} parent=11 // pred_region
          _
        $region36: #{gpt2_block.4} parent=11 // pred_fallthru
          _
      $region12: #{gpt2_block.4} parent=5 // pred_fallthru
        _
      %p316 = scmp.lt.s32.totalorder %s18, 4
      // Predicated region
      $region37: #{gpt2_block.4} parent=5 // pred_check
        %p317 = pneg %p316
      $region38: #{gpt2_block.4} parent=5 // pred_check_branch
        %319 = sbr.rel (%p317) target = $region40
      $region39: #{gpt2_block.4} parent=5 // pred_region
        // Predicated region
        $region41: #{gpt2_block.4} parent=39 // pred_check
          %p320 = pneg %p59
        $region42: #{gpt2_block.4} parent=39 // pred_check_branch
          %322 = sbr.rel (%p320) target = $region44
        $region43: #{gpt2_block.4} parent=39 // pred_region
          %s323 = smul.u32 4, %s26
          %p324 = scmp.lt.s32.totalorder %s25, 3
          %s325 = scalar_select %p324, %s25, 3
          %p326 = scmp.lt.s32.totalorder %s323, 3
          %s327 = scalar_select %p326, %s323, 3
          %s328 = smul.addr %s325, 4
          %s329 = sadd.s32 %s327, %s328
          %s330 = smul.addr %s329, 8
          %s331 = scalar_lea.vmem %s0, %s330
          %s332 = smul.u32 4, %s26
        $region44: #{gpt2_block.4} parent=39 // pred_fallthru
          _
        // Predicated region
        $region45: #{gpt2_block.4} parent=39 // pred_check
          %p333 = pneg %p175
        $region46: #{gpt2_block.4} parent=39 // pred_check_branch
          %335 = sbr.rel (%p333) target = $region48
        $region47: #{gpt2_block.4} parent=39 // pred_region
          %p336 = scmp.lt.s32.totalorder %s26, %s27
          %s337 = scalar_select %p336, %s26, %s27
          %s338 = smul.u32 4, %s337
          %p339 = scmp.lt.s32.totalorder %s25, 3
          %s340 = scalar_select %p339, %s25, 3
          %p341 = scmp.lt.s32.totalorder %s338, 3
          %s342 = scalar_select %p341, %s338, 3
          %s343 = smul.addr %s340, 16
          %s344 = sadd.s32 %s342, %s343
          %s345 = smul.addr %s344, 4
          %s346 = scalar_lea.vmem %s5, %s345
          %p347 = scmp.lt.s32.totalorder %s26, %s27
          %s348 = scalar_select %p347, %s26, %s27
          %s349 = smul.u32 4, %s348
        $region48: #{gpt2_block.4} parent=39 // pred_fallthru
          _
        // Predicated region
        $region49: #{gpt2_block.4} parent=39 // pred_check
          %p350 = pneg %p207
        $region50: #{gpt2_block.4} parent=39 // pred_check_branch
          %352 = sbr.rel (%p350) target = $region52
        $region51: #{gpt2_block.4} parent=39 // pred_region
          %p353 = scmp.lt.s32.totalorder %s26, %s27
          %s354 = scalar_select %p353, %s26, %s27
          %s355 = smul.u32 4, %s354
          %p356 = scmp.lt.s32.totalorder %s25, 3
          %s357 = scalar_select %p356, %s25, 3
          %p358 = scmp.lt.s32.totalorder %s355, 3
          %s359 = scalar_select %p358, %s355, 3
          %s360 = smul.addr %s357, 16
          %s361 = sadd.s32 %s359, %s360
          %s362 = smul.addr %s361, 4
          %s363 = scalar_lea.vmem %s6, %s362
          %p364 = scmp.lt.s32.totalorder %s26, %s27
          %s365 = scalar_select %p364, %s26, %s27
          %s366 = smul.u32 4, %s365
        $region52: #{gpt2_block.4} parent=39 // pred_fallthru
          _
      $region40: #{gpt2_block.4} parent=5 // pred_fallthru
        _
      %p367 = scmp.le.s32.totalorder 1, %s18
      %p368 = scmp.lt.s32.totalorder %s18, 5
      %p369 = pnand %p367, %p368
      %p370 = pneg %p369
      // Predicated region
      $region53: #{gpt2_block.4} parent=5 // pred_check
        _
      $region54: #{gpt2_block.4} parent=5 // pred_check_branch
        %372 = sbr.rel (%p369) target = $region56
      $region55: #{gpt2_block.4} parent=5 // pred_region
        %s373 = ssub.s32 %s18, 1
        %s374 = smul.u32 4, %s29
        %p375 = scmp.lt.s32.totalorder %s28, 3
        %s376 = scalar_select %p375, %s28, 3
        %p377 = scmp.lt.s32.totalorder %s374, 3
        %s378 = scalar_select %p377, %s374, 3
        %s379 = smul.addr %s376, 4
        %s380 = sadd.s32 %s378, %s379
        %s381 = smul.addr %s380, 8
        %s382 = scalar_lea.vmem %s0, %s381
        %p383 = pneg %p65
        %p384 = pneg %p62
        %p385 = pneg %p86
        %p386 = pneg %p83
        %p387 = pneg %p107
        %p388 = pneg %p104
        %p389 = pneg %p128
        %p390 = pneg %p125
        %p391 = pneg %p149
        %p392 = pneg %p146
        %p393 = scmp.lt.s32.totalorder %s29, %s30
        %s394 = scalar_select %p393, %s29, %s30
        %s395 = smul.u32 4, %s394
        %p396 = scmp.lt.s32.totalorder %s28, 3
        %s397 = scalar_select %p396, %s28, 3
        %p398 = scmp.lt.s32.totalorder %s395, 3
        %s399 = scalar_select %p398, %s395, 3
        %s400 = smul.addr %s397, 16
        %s401 = sadd.s32 %s399, %s400
        %s402 = smul.addr %s401, 4
        %s403 = scalar_lea.vmem %s5, %s402
        %p404 = pneg %p181
        %p405 = pneg %p178
        %p406 = scmp.lt.s32.totalorder %s29, %s30
        %s407 = scalar_select %p406, %s29, %s30
        %s408 = smul.u32 4, %s407
        %p409 = scmp.lt.s32.totalorder %s28, 3
        %s410 = scalar_select %p409, %s28, 3
        %p411 = scmp.lt.s32.totalorder %s408, 3
        %s412 = scalar_select %p411, %s408, 3
        %s413 = smul.addr %s410, 16
        %s414 = sadd.s32 %s412, %s413
        %s415 = smul.addr %s414, 4
        %s416 = scalar_lea.vmem %s6, %s415
        %p417 = pneg %p213
        %p418 = pneg %p210
        %p419 = pneg %p234
        %p420 = pneg %p231
        %p421 = pneg %p255
        %p422 = pneg %p252
        %p423 = pneg %p283
        %p424 = pneg %p280
        %s425 = sand.u32 %s270, 1
        %s426 = scalar_lea.sflag [#allocation8], %s425
        %s427 = sand.u32 %s270, 1
        %s428 = smul.addr %s427, 32
        %s429 = scalar_lea.vmem [#allocation7], %s428
        %s430 = smul.u32 4, %s29
        %p431 = scmp.lt.s32.totalorder %s28, 3
        %s432 = scalar_select %p431, %s28, 3
        %p433 = scmp.lt.s32.totalorder %s430, 3
        %s434 = scalar_select %p433, %s430, 3
        %s435 = smul.addr %s432, 4
        %s436 = sadd.s32 %s434, %s435
        %s437 = smul.addr %s436, 8
        %s438 = scalar_lea.vmem %s0, %s437
        %s439 = smul.u32 4, %s29
        %p440 = scmp.lt.s32.totalorder %s29, %s30
        %s441 = scalar_select %p440, %s29, %s30
        %s442 = smul.u32 4, %s441
        %p443 = scmp.lt.s32.totalorder %s28, 3
        %s444 = scalar_select %p443, %s28, 3
        %p445 = scmp.lt.s32.totalorder %s442, 3
        %s446 = scalar_select %p445, %s442, 3
        %s447 = smul.addr %s444, 16
        %s448 = sadd.s32 %s446, %s447
        %s449 = smul.addr %s448, 4
        %s450 = scalar_lea.vmem %s5, %s449
        %p451 = scmp.lt.s32.totalorder %s29, %s30
        %s452 = scalar_select %p451, %s29, %s30
        %s453 = smul.u32 4, %s452
        %p454 = scmp.lt.s32.totalorder %s29, %s30
        %s455 = scalar_select %p454, %s29, %s30
        %s456 = smul.u32 4, %s455
        %p457 = scmp.lt.s32.totalorder %s28, 3
        %s458 = scalar_select %p457, %s28, 3
        %p459 = scmp.lt.s32.totalorder %s456, 3
        %s460 = scalar_select %p459, %s456, 3
        %s461 = smul.addr %s458, 16
        %s462 = sadd.s32 %s460, %s461
        %s463 = smul.addr %s462, 4
        %s464 = scalar_lea.vmem %s6, %s463
        %p465 = scmp.lt.s32.totalorder %s29, %s30
        %s466 = scalar_select %p465, %s29, %s30
        %s467 = smul.u32 4, %s466
        %s468 = smul.u32 4, %s29
        %p470 = scmp.eq.s32.totalorder %s30, 0
        // Predicated region
        $region57: #{gpt2_block.4} parent=55 // pred_check
          %p471 = pneg %p470
        $region58: #{gpt2_block.4} parent=55 // pred_check_branch
          %473 = sbr.rel (%p471) target = $region60
        $region59: #{gpt2_block.4} parent=55 // pred_region
          %v474 = vld [vmem:[%s438] sm:$0xff]
          %v475 = vld [vmem:[%s438 + $0x8] sm:$0xff]
          %v476 = vld [vmem:[%s438 + $0x10] sm:$0xff]
          %v477 = vld [vmem:[%s438 + $0x18] sm:$0xff]
          %v478 = vld [vmem:[%s1] sm:$0x1]
          %v479 = vld [vmem:[%s2] sm:$0x1]
          %480 = vadd.xlane.f32.xlu0 %v474
          %v481 = vpop.xlane.xlu0 %480
          %482 = vadd.xlane.f32.xlu0 %v475
          %v483 = vpop.xlane.xlu0 %482
          %484 = vadd.xlane.f32.xlu0 %v476
          %v485 = vpop.xlane.xlu0 %484
          %486 = vadd.xlane.f32.xlu0 %v477
          %v487 = vpop.xlane.xlu0 %486
          %v488 = vrcp.pop 128.0
          %v489 = vmul.f32 %v481, %v488
          %v490 = vmul.f32 %v483, %v488
          %v491 = vmul.f32 %v485, %v488
          %v492 = vmul.f32 %v487, %v488
          %v493 = vsub.f32 %v474, %v489
          %v494 = vsub.f32 %v475, %v490
          %v495 = vsub.f32 %v476, %v491
          %v496 = vsub.f32 %v477, %v492
          %v497 = vmul.f32 %v493, %v493
          %v498 = vmul.f32 %v494, %v494
          %v499 = vmul.f32 %v495, %v495
          %v500 = vmul.f32 %v496, %v496
          %501 = vadd.xlane.f32.xlu0 %v497
          %v502 = vpop.xlane.xlu0 %501
          %503 = vadd.xlane.f32.xlu0 %v498
          %v504 = vpop.xlane.xlu0 %503
          %505 = vadd.xlane.f32.xlu0 %v499
          %v506 = vpop.xlane.xlu0 %505
          %507 = vadd.xlane.f32.xlu0 %v500
          %v508 = vpop.xlane.xlu0 %507
          %v509 = vmul.f32 %v502, %v488
          %v510 = vmul.f32 %v504, %v488
          %v511 = vmul.f32 %v506, %v488
          %v512 = vmul.f32 %v508, %v488
          %v513 = vadd.f32 %v509, 1e-05
          %v514 = vadd.f32 %v510, 1e-05
          %v515 = vadd.f32 %v511, 1e-05
          %v516 = vadd.f32 %v512, 1e-05
          %v517 = vrsqrt.pop %v513
          %v518 = vrsqrt.pop %v514
          %v519 = vrsqrt.pop %v515
          %v520 = vrsqrt.pop %v516
          %v521 = vmul.f32 %v493, %v517
          %v522 = vmul.f32 %v494, %v518
          %v523 = vmul.f32 %v495, %v519
          %v524 = vmul.f32 %v496, %v520
          %v526 = vlaneseq
          %v527 = vshrl.u32 %v526, 7
          %v528 = vsub.s32 0, %v527
          %v529 = vrot.slane %v478, %v528
          %v531 = vmul.f32 %v521, %v529
          %v532 = vmul.f32 %v522, %v529
          %v533 = vmul.f32 %v523, %v529
          %v534 = vmul.f32 %v524, %v529
          %v536 = vlaneseq
          %v537 = vshrl.u32 %v536, 7
          %v538 = vsub.s32 0, %v537
          %v539 = vrot.slane %v479, %v538
          %v541 = vadd.f32 %v531, %v539
          %v542 = vadd.f32 %v532, %v539
          %v543 = vadd.f32 %v533, %v539
          %v544 = vadd.f32 %v534, %v539
          %v545 = vpack.c.bf16 %v542, %v541
          %v546 = vpack.c.bf16 %v544, %v543
          %v547 = vld [vmem:[%s3] sm:$0xf]
          %v548 = vld [vmem:[%s3 + $0x4] sm:$0xf]
          %v549 = vld [vmem:[%s3 + $0x8] sm:$0xf]
          %v550 = vld [vmem:[%s3 + $0xc] sm:$0xf]
          %v551 = vld [vmem:[%s3 + $0x10] sm:$0xf]
          %v552 = vld [vmem:[%s3 + $0x14] sm:$0xf]
          %v553 = vld [vmem:[%s3 + $0x18] sm:$0xf]
          %v554 = vld [vmem:[%s3 + $0x1c] sm:$0xf]
          %v555 = vld [vmem:[%s3 + $0x20] sm:$0xf]
          %v556 = vld [vmem:[%s3 + $0x24] sm:$0xf]
          %v557 = vld [vmem:[%s3 + $0x28] sm:$0xf]
          %v558 = vld [vmem:[%s3 + $0x2c] sm:$0xf]
          %v559 = vld [vmem:[%s3 + $0x30] sm:$0xf]
          %v560 = vld [vmem:[%s3 + $0x34] sm:$0xf]
          %v561 = vld [vmem:[%s3 + $0x38] sm:$0xf]
          %v562 = vld [vmem:[%s3 + $0x3c] sm:$0xf]
          %v563 = vld [vmem:[%s4] sm:$0x1]
          %v565 = vlaneseq
          %v566 = vshrl.u32 %v565, 7
          %v567 = vsub.s32 0, %v566
          %v568 = vrot.slane %v563, %v567
          %v586 = vunpack.c.l.b16 %v547
          %v587 = vunpack.c.l.b16 %v548
          %v588 = vunpack.c.l.b16 %v549
          %v589 = vunpack.c.l.b16 %v550
          %v590 = vunpack.c.l.b16 %v551
          %v591 = vunpack.c.l.b16 %v552
          %v592 = vunpack.c.l.b16 %v553
          %v593 = vunpack.c.l.b16 %v554
          %v594 = vunpack.c.l.b16 %v555
          %v595 = vunpack.c.l.b16 %v556
          %v596 = vunpack.c.l.b16 %v557
          %v597 = vunpack.c.l.b16 %v558
          %v598 = vunpack.c.l.b16 %v559
          %v599 = vunpack.c.l.b16 %v560
          %v600 = vunpack.c.l.b16 %v561
          %v601 = vunpack.c.l.b16 %v562
          %v602 = vpack.c.b16 %v587, %v586
          %v603 = vpack.c.b16 %v589, %v588
          %v604 = vpack.c.b16 %v591, %v590
          %v605 = vpack.c.b16 %v593, %v592
          %v606 = vpack.c.b16 %v595, %v594
          %v607 = vpack.c.b16 %v597, %v596
          %v608 = vpack.c.b16 %v599, %v598
          %v609 = vpack.c.b16 %v601, %v600
          %618 = vmatprep.subr.bf16.mxu0 0
          %619 = vmatpush1.bf16.msra.mxu0 %v609
          %620 = vmatprep.subr.bf16.mxu0 0
          %621 = vmatpush1.bf16.msra.mxu0 %v608
          %622 = vmatprep.subr.bf16.mxu0 0
          %623 = vmatpush1.bf16.msra.mxu0 %v607
          %624 = vmatprep.subr.bf16.mxu0 0
          %625 = vmatpush1.bf16.msra.mxu0 %v606
          %626 = vmatprep.subr.bf16.mxu0 0
          %627 = vmatpush1.bf16.msra.mxu0 %v605
          %628 = vmatprep.subr.bf16.mxu0 0
          %629 = vmatpush1.bf16.msra.mxu0 %v604
          %630 = vmatprep.subr.bf16.mxu0 0
          %631 = vmatpush1.bf16.msra.mxu0 %v603
          %632 = vmatprep.subr.bf16.mxu0 0
          %633 = vmatpush1.bf16.msra.mxu0 %v602
          %634 = vmatprep.subr.bf16.mxu0 0
          %635 = vmatpush2.bf16.msra.mxu0 0
          %636 = vmatprep.subr.bf16.mxu0 0
          %637 = vmatpush2.bf16.msra.mxu0 0
          %638 = vmatprep.subr.bf16.mxu0 0
          %639 = vmatpush2.bf16.msra.mxu0 0
          %640 = vmatprep.subr.bf16.mxu0 0
          %641 = vmatpush2.bf16.msra.mxu0 0
          %642 = vmatprep.subr.bf16.mxu0 0
          %643 = vmatpush2.bf16.msra.mxu0 0
          %644 = vmatprep.subr.bf16.mxu0 0
          %645 = vmatpush2.bf16.msra.mxu0 0
          %646 = vmatprep.subr.bf16.mxu0 0
          %647 = vmatpush2.bf16.msra.mxu0 0
          %648 = vmatprep.subr.bf16.mxu0 0
          %649 = vmatpush2.bf16.msra.mxu0 0
          %650 = vmatprep.mubr.bf16.mxu0 0
          %651 = vmatmul.mubr.bf16.gmra.mxu0 %v545
          %v652 = vpop.f32.mrf.mxu0
          %v653 = vadd.f32 %v568, %v652
          %v654 = vpop.f32.mrf.mxu0
          %v655 = vpop.f32.mrf.mxu0
          %v656 = vadd.f32 %v568, %v655
          %v657 = vpop.f32.mrf.mxu0
          %658 = vmatprep.mubr.bf16.mxu0 0
          %659 = vmatmul.mubr.bf16.gmra.mxu0 %v546
          %v660 = vpop.f32.mrf.mxu0
          %v661 = vadd.f32 %v568, %v660
          %v662 = vpop.f32.mrf.mxu0
          %v663 = vpop.f32.mrf.mxu0
          %v664 = vadd.f32 %v568, %v663
          %v665 = vpop.f32.mrf.mxu0
          %666 = vdwg.mxu0
          %v667 = vpack.c.bf16 %v656, %v653
          %v668 = vpack.c.bf16 %v664, %v661
          %v671 = vunpack.c.l.b16 %v667
          %v672 = vunpack.c.h.b16 %v667
          %v673 = vunpack.c.l.b16 %v668
          %v674 = vunpack.c.h.b16 %v668
          %v675 = vpack.c.b16 %v671, %v671
          %v676 = vpack.c.b16 %v672, %v672
          %v677 = vpack.c.b16 %v673, %v673
          %v678 = vpack.c.b16 %v674, %v674
          %vm683 = vcmask 257024
          %684 = vst.msk [vmem:[#allocation2] sm:$0xf] %vm683, %v675
          %685 = vst.msk [vmem:[#allocation2 + $0x4] sm:$0xf] %vm683, %v676
          %686 = vst.msk [vmem:[#allocation2 + $0x8] sm:$0xf] %vm683, %v677
          %687 = vst.msk [vmem:[#allocation2 + $0xc] sm:$0xf] %vm683, %v678
          %688 = vrot.lane.b32.xlu0 %v675, 96
          %v689 = vpop.permute.xlu0 %688
          %690 = vrot.lane.b32.xlu0 %v676, 96
          %v691 = vpop.permute.xlu0 %690
          %692 = vrot.lane.b32.xlu0 %v677, 96
          %v693 = vpop.permute.xlu0 %692
          %694 = vrot.lane.b32.xlu0 %v678, 96
          %v695 = vpop.permute.xlu0 %694
          %s700 = scalar_lea.vmem [#allocation2], 16
          %701 = vst.msk [vmem:[%s700] sm:$0xf] %vm683, %v689
          %702 = vst.msk [vmem:[%s700 + $0x4] sm:$0xf] %vm683, %v691
          %703 = vst.msk [vmem:[%s700 + $0x8] sm:$0xf] %vm683, %v693
          %704 = vst.msk [vmem:[%s700 + $0xc] sm:$0xf] %vm683, %v695
          %705 = vrot.lane.b32.xlu0 %v675, 64
          %v706 = vpop.permute.xlu0 %705
          %707 = vrot.lane.b32.xlu0 %v676, 64
          %v708 = vpop.permute.xlu0 %707
          %709 = vrot.lane.b32.xlu0 %v677, 64
          %v710 = vpop.permute.xlu0 %709
          %711 = vrot.lane.b32.xlu0 %v678, 64
          %v712 = vpop.permute.xlu0 %711
          %s717 = scalar_lea.vmem [#allocation2], 32
          %718 = vst.msk [vmem:[%s717] sm:$0xf] %vm683, %v706
          %719 = vst.msk [vmem:[%s717 + $0x4] sm:$0xf] %vm683, %v708
          %720 = vst.msk [vmem:[%s717 + $0x8] sm:$0xf] %vm683, %v710
          %721 = vst.msk [vmem:[%s717 + $0xc] sm:$0xf] %vm683, %v712
          %722 = vrot.lane.b32.xlu0 %v675, 32
          %v723 = vpop.permute.xlu0 %722
          %724 = vrot.lane.b32.xlu0 %v676, 32
          %v725 = vpop.permute.xlu0 %724
          %726 = vrot.lane.b32.xlu0 %v677, 32
          %v727 = vpop.permute.xlu0 %726
          %728 = vrot.lane.b32.xlu0 %v678, 32
          %v729 = vpop.permute.xlu0 %728
          %s734 = scalar_lea.vmem [#allocation2], 48
          %735 = vst.msk [vmem:[%s734] sm:$0xf] %vm683, %v723
          %736 = vst.msk [vmem:[%s734 + $0x4] sm:$0xf] %vm683, %v725
          %737 = vst.msk [vmem:[%s734 + $0x8] sm:$0xf] %vm683, %v727
          %738 = vst.msk [vmem:[%s734 + $0xc] sm:$0xf] %vm683, %v729
          %vm739 = vcmask 7168
          %740 = vst.msk [vmem:[#allocation3] sm:$0xff] %vm739, -1e+30
          %741 = vst.msk [vmem:[#allocation3 + $0x8] sm:$0xff] %vm739, -1e+30
          %742 = vst.msk [vmem:[#allocation3 + $0x10] sm:$0xff] %vm739, -1e+30
          %743 = vst.msk [vmem:[#allocation3 + $0x18] sm:$0xff] %vm739, -1e+30
          %744 = vst.msk [vmem:[#allocation3 + $0x20] sm:$0xff] %vm739, -1e+30
          %745 = vst.msk [vmem:[#allocation3 + $0x28] sm:$0xff] %vm739, -1e+30
          %746 = vst.msk [vmem:[#allocation3 + $0x30] sm:$0xff] %vm739, -1e+30
          %747 = vst.msk [vmem:[#allocation3 + $0x38] sm:$0xff] %vm739, -1e+30
          %748 = vst.msk [vmem:[#allocation3 + $0x40] sm:$0xff] %vm739, -1e+30
          %749 = vst.msk [vmem:[#allocation3 + $0x48] sm:$0xff] %vm739, -1e+30
          %750 = vst.msk [vmem:[#allocation3 + $0x50] sm:$0xff] %vm739, -1e+30
          %751 = vst.msk [vmem:[#allocation3 + $0x58] sm:$0xff] %vm739, -1e+30
          %752 = vst.msk [vmem:[#allocation3 + $0x60] sm:$0xff] %vm739, -1e+30
          %753 = vst.msk [vmem:[#allocation3 + $0x68] sm:$0xff] %vm739, -1e+30
          %754 = vst.msk [vmem:[#allocation3 + $0x70] sm:$0xff] %vm739, -1e+30
          %755 = vst.msk [vmem:[#allocation3 + $0x78] sm:$0xff] %vm739, -1e+30
          %756 = vst.msk [vmem:[#allocation4] sm:$0xff] %vm739, 0.0
          %757 = vst.msk [vmem:[#allocation4 + $0x8] sm:$0xff] %vm739, 0.0
          %758 = vst.msk [vmem:[#allocation4 + $0x10] sm:$0xff] %vm739, 0.0
          %759 = vst.msk [vmem:[#allocation4 + $0x18] sm:$0xff] %vm739, 0.0
          %760 = vst.msk [vmem:[#allocation4 + $0x20] sm:$0xff] %vm739, 0.0
          %761 = vst.msk [vmem:[#allocation4 + $0x28] sm:$0xff] %vm739, 0.0
          %762 = vst.msk [vmem:[#allocation4 + $0x30] sm:$0xff] %vm739, 0.0
          %763 = vst.msk [vmem:[#allocation4 + $0x38] sm:$0xff] %vm739, 0.0
          %764 = vst.msk [vmem:[#allocation4 + $0x40] sm:$0xff] %vm739, 0.0
          %765 = vst.msk [vmem:[#allocation4 + $0x48] sm:$0xff] %vm739, 0.0
          %766 = vst.msk [vmem:[#allocation4 + $0x50] sm:$0xff] %vm739, 0.0
          %767 = vst.msk [vmem:[#allocation4 + $0x58] sm:$0xff] %vm739, 0.0
          %768 = vst.msk [vmem:[#allocation4 + $0x60] sm:$0xff] %vm739, 0.0
          %769 = vst.msk [vmem:[#allocation4 + $0x68] sm:$0xff] %vm739, 0.0
          %770 = vst.msk [vmem:[#allocation4 + $0x70] sm:$0xff] %vm739, 0.0
          %771 = vst.msk [vmem:[#allocation4 + $0x78] sm:$0xff] %vm739, 0.0
          %vm772 = vcmask 261120
          %773 = vst.msk [vmem:[#allocation5] sm:$0xff] %vm772, 0.0
          %774 = vst.msk [vmem:[#allocation5 + $0x8] sm:$0xff] %vm772, 0.0
          %775 = vst.msk [vmem:[#allocation5 + $0x10] sm:$0xff] %vm772, 0.0
          %776 = vst.msk [vmem:[#allocation5 + $0x18] sm:$0xff] %vm772, 0.0
          %777 = vst.msk [vmem:[#allocation5 + $0x20] sm:$0xff] %vm772, 0.0
          %778 = vst.msk [vmem:[#allocation5 + $0x28] sm:$0xff] %vm772, 0.0
          %779 = vst.msk [vmem:[#allocation5 + $0x30] sm:$0xff] %vm772, 0.0
          %780 = vst.msk [vmem:[#allocation5 + $0x38] sm:$0xff] %vm772, 0.0
          %781 = vst.msk [vmem:[#allocation5 + $0x40] sm:$0xff] %vm772, 0.0
          %782 = vst.msk [vmem:[#allocation5 + $0x48] sm:$0xff] %vm772, 0.0
          %783 = vst.msk [vmem:[#allocation5 + $0x50] sm:$0xff] %vm772, 0.0
          %784 = vst.msk [vmem:[#allocation5 + $0x58] sm:$0xff] %vm772, 0.0
          %785 = vst.msk [vmem:[#allocation5 + $0x60] sm:$0xff] %vm772, 0.0
          %786 = vst.msk [vmem:[#allocation5 + $0x68] sm:$0xff] %vm772, 0.0
          %787 = vst.msk [vmem:[#allocation5 + $0x70] sm:$0xff] %vm772, 0.0
          %788 = vst.msk [vmem:[#allocation5 + $0x78] sm:$0xff] %vm772, 0.0
        $region60: #{gpt2_block.4} parent=55 // pred_fallthru
          _
        %p789 = scmp.lt.s32.totalorder %s30, %s29
        // Predicated region
        $region61: #{gpt2_block.4} parent=55 // pred_check
          %p790 = pneg %p789
        $region62: #{gpt2_block.4} parent=55 // pred_check_branch
          %792 = sbr.rel (%p790) target = $region64
        $region63: #{gpt2_block.4} parent=55 // pred_region
          %v793 = vld [vmem:[#allocation2] sm:$0xf]
          %v794 = vld [vmem:[#allocation2 + $0x4] sm:$0xf]
          %v795 = vld [vmem:[#allocation2 + $0x8] sm:$0xf]
          %v796 = vld [vmem:[#allocation2 + $0xc] sm:$0xf]
          %v797 = vld [vmem:[%s450] sm:$0xf]
          %v798 = vld [vmem:[%s450 + $0x4] sm:$0xf]
          %v799 = vld [vmem:[%s450 + $0x8] sm:$0xf]
          %v800 = vld [vmem:[%s450 + $0xc] sm:$0xf]
          %v805 = vunpack.c.l.b16 %v793
          %v806 = vunpack.c.l.b16 %v794
          %v807 = vunpack.c.l.b16 %v795
          %v808 = vunpack.c.l.b16 %v796
          %v809 = vpack.c.b16 %v806, %v805
          %v810 = vpack.c.b16 %v808, %v807
          %v815 = vunpack.c.l.b16 %v797
          %v816 = vunpack.c.l.b16 %v798
          %v817 = vunpack.c.l.b16 %v799
          %v818 = vunpack.c.l.b16 %v800
          %v819 = vpack.c.b16 %v816, %v815
          %v820 = vpack.c.b16 %v818, %v817
          %vm821 = vcmask 261120
          %v823 = vsel %vm821, %v809, 0
          %v826 = vsel %vm821, %v810, 0
          %v829 = vsel %vm821, %v819, 0
          %v832 = vsel %vm821, %v820, 0
          %834 = vmatprep.subr.bf16.mxu0 0
          %835 = vmatpush1.bf16.xpose.msra.mxu0 0
          %836 = vmatprep.subr.bf16.mxu0 0
          %837 = vmatpush1.bf16.xpose.msra.mxu0 0
          %838 = vmatprep.subr.bf16.mxu0 0
          %839 = vmatpush1.bf16.xpose.msra.mxu0 0
          %840 = vmatprep.subr.bf16.mxu0 0
          %841 = vmatpush1.bf16.xpose.msra.mxu0 0
          %842 = vmatprep.subr.bf16.mxu0 0
          %843 = vmatpush1.bf16.xpose.msra.mxu0 0
          %844 = vmatprep.subr.bf16.mxu0 0
          %845 = vmatpush1.bf16.xpose.msra.mxu0 0
          %846 = vmatprep.subr.bf16.mxu0 0
          %847 = vmatpush1.bf16.xpose.msra.mxu0 %v832
          %848 = vmatprep.subr.bf16.mxu0 0
          %849 = vmatpush1.bf16.xpose.msra.mxu0 %v829
          %850 = vmatprep.subr.bf16.mxu0 0
          %851 = vmatpush2.bf16.xpose.msra.mxu0 0
          %852 = vmatprep.subr.bf16.mxu0 0
          %853 = vmatpush2.bf16.xpose.msra.mxu0 0
          %854 = vmatprep.subr.bf16.mxu0 0
          %855 = vmatpush2.bf16.xpose.msra.mxu0 0
          %856 = vmatprep.subr.bf16.mxu0 0
          %857 = vmatpush2.bf16.xpose.msra.mxu0 0
          %858 = vmatprep.subr.bf16.mxu0 0
          %859 = vmatpush2.bf16.xpose.msra.mxu0 0
          %860 = vmatprep.subr.bf16.mxu0 0
          %861 = vmatpush2.bf16.xpose.msra.mxu0 0
          %862 = vmatprep.subr.bf16.mxu0 0
          %863 = vmatpush2.bf16.xpose.msra.mxu0 0
          %864 = vmatprep.subr.bf16.mxu0 0
          %865 = vmatpush2.bf16.xpose.msra.mxu0 0
          %866 = vmatprep.mubr.bf16.mxu0 0
          %867 = vmatmul.mubr.bf16.gmra.mxu0 %v823
          %v868 = vpop.f32.mrf.mxu0
          %v869 = vadd.f32 0.0, %v868
          %v870 = vpop.f32.mrf.mxu0
          %v871 = vpop.f32.mrf.mxu0
          %v872 = vadd.f32 0.0, %v871
          %v873 = vpop.f32.mrf.mxu0
          %874 = vmatprep.mubr.bf16.mxu0 0
          %875 = vmatmul.mubr.bf16.gmra.mxu0 %v826
          %v876 = vpop.f32.mrf.mxu0
          %v877 = vadd.f32 0.0, %v876
          %v878 = vpop.f32.mrf.mxu0
          %v879 = vpop.f32.mrf.mxu0
          %v880 = vadd.f32 0.0, %v879
          %v881 = vpop.f32.mrf.mxu0
          %882 = vdwg.mxu0
          %v883 = vld [vmem:[#allocation3] sm:$0xff]
          %v884 = vld [vmem:[#allocation3 + $0x8] sm:$0xff]
          %v885 = vld [vmem:[#allocation3 + $0x10] sm:$0xff]
          %v886 = vld [vmem:[#allocation3 + $0x18] sm:$0xff]
          %v887 = vsel %vm821, %v869, -inf
          %888 = vmax.xlane.f32.xlu0 %v887
          %v889 = vpop.xlane.xlu0 %888
          %v890 = vsel %vm821, %v872, -inf
          %891 = vmax.xlane.f32.xlu0 %v890
          %v892 = vpop.xlane.xlu0 %891
          %v893 = vsel %vm821, %v877, -inf
          %894 = vmax.xlane.f32.xlu0 %v893
          %v895 = vpop.xlane.xlu0 %894
          %v896 = vsel %vm821, %v880, -inf
          %897 = vmax.xlane.f32.xlu0 %v896
          %v898 = vpop.xlane.xlu0 %897
          %v899 = vmax.f32 %v883, %v889
          %v900 = vmax.f32 %v884, %v892
          %v901 = vmax.f32 %v885, %v895
          %v902 = vmax.f32 %v886, %v898
          %v903 = vsub.f32 %v883, %v899
          %v904 = vsub.f32 %v884, %v900
          %v905 = vsub.f32 %v885, %v901
          %v906 = vsub.f32 %v886, %v902
          %v907 = vmul.f32 %v903, 1.442695
          %v908 = vpow.pop %v907
          %v909 = vmul.f32 %v904, 1.442695
          %v910 = vpow.pop %v909
          %v911 = vmul.f32 %v905, 1.442695
          %v912 = vpow.pop %v911
          %v913 = vmul.f32 %v906, 1.442695
          %v914 = vpow.pop %v913
          %916 = vset.pattern.permute.xlu0 0
          %917 = vperm.xlu0 %916, %v899
          %v918 = vpop.permute.xlu0 %917
          %921 = vset.pattern.permute.xlu0 0
          %922 = vperm.xlu0 %921, %v900
          %v923 = vpop.permute.xlu0 %922
          %926 = vset.pattern.permute.xlu0 0
          %927 = vperm.xlu0 %926, %v901
          %v928 = vpop.permute.xlu0 %927
          %931 = vset.pattern.permute.xlu0 0
          %932 = vperm.xlu0 %931, %v902
          %v933 = vpop.permute.xlu0 %932
          %v935 = vsub.f32 %v869, %v918
          %v936 = vsub.f32 %v872, %v923
          %v937 = vsub.f32 %v877, %v928
          %v938 = vsub.f32 %v880, %v933
          %v939 = vmul.f32 %v935, 1.442695
          %v940 = vpow.pop %v939
          %v941 = vmul.f32 %v936, 1.442695
          %v942 = vpow.pop %v941
          %v943 = vmul.f32 %v937, 1.442695
          %v944 = vpow.pop %v943
          %v945 = vmul.f32 %v938, 1.442695
          %v946 = vpow.pop %v945
          %v947 = vld [vmem:[#allocation4] sm:$0xff]
          %v948 = vld [vmem:[#allocation4 + $0x8] sm:$0xff]
          %v949 = vld [vmem:[#allocation4 + $0x10] sm:$0xff]
          %v950 = vld [vmem:[#allocation4 + $0x18] sm:$0xff]
          %v951 = vmul.f32 %v908, %v947
          %v952 = vmul.f32 %v910, %v948
          %v953 = vmul.f32 %v912, %v949
          %v954 = vmul.f32 %v914, %v950
          %v955 = vsel %vm821, %v940, 0.0
          %956 = vadd.xlane.f32.xlu0 %v955
          %v957 = vpop.xlane.xlu0 %956
          %v958 = vsel %vm821, %v942, 0.0
          %959 = vadd.xlane.f32.xlu0 %v958
          %v960 = vpop.xlane.xlu0 %959
          %v961 = vsel %vm821, %v944, 0.0
          %962 = vadd.xlane.f32.xlu0 %v961
          %v963 = vpop.xlane.xlu0 %962
          %v964 = vsel %vm821, %v946, 0.0
          %965 = vadd.xlane.f32.xlu0 %v964
          %v966 = vpop.xlane.xlu0 %965
          %v967 = vadd.f32 %v951, %v957
          %v968 = vadd.f32 %v952, %v960
          %v969 = vadd.f32 %v953, %v963
          %v970 = vadd.f32 %v954, %v966
          %vm971 = vcmask 7168
          %972 = vst.msk [vmem:[#allocation4] sm:$0xff] %vm971, %v967
          %973 = vst.msk [vmem:[#allocation4 + $0x8] sm:$0xff] %vm971, %v968
          %974 = vst.msk [vmem:[#allocation4 + $0x10] sm:$0xff] %vm971, %v969
          %975 = vst.msk [vmem:[#allocation4 + $0x18] sm:$0xff] %vm971, %v970
          %v976 = vld [vmem:[#allocation5] sm:$0xff]
          %v977 = vld [vmem:[#allocation5 + $0x8] sm:$0xff]
          %v978 = vld [vmem:[#allocation5 + $0x10] sm:$0xff]
          %v979 = vld [vmem:[#allocation5 + $0x18] sm:$0xff]
          %981 = vset.pattern.permute.xlu0 0
          %982 = vperm.xlu0 %981, %v908
          %v983 = vpop.permute.xlu0 %982
          %986 = vset.pattern.permute.xlu0 0
          %987 = vperm.xlu0 %986, %v910
          %v988 = vpop.permute.xlu0 %987
          %991 = vset.pattern.permute.xlu0 0
          %992 = vperm.xlu0 %991, %v912
          %v993 = vpop.permute.xlu0 %992
          %996 = vset.pattern.permute.xlu0 0
          %997 = vperm.xlu0 %996, %v914
          %v998 = vpop.permute.xlu0 %997
          %v1000 = vmul.f32 %v983, %v976
          %v1001 = vmul.f32 %v988, %v977
          %v1002 = vmul.f32 %v993, %v978
          %v1003 = vmul.f32 %v998, %v979
          %v1004 = vpack.c.bf16 %v942, %v940
          %v1005 = vpack.c.bf16 %v946, %v944
          %v1006 = vld [vmem:[%s464] sm:$0xf]
          %v1007 = vld [vmem:[%s464 + $0x4] sm:$0xf]
          %v1008 = vld [vmem:[%s464 + $0x8] sm:$0xf]
          %v1009 = vld [vmem:[%s464 + $0xc] sm:$0xf]
          %v1014 = vunpack.c.l.b16 %v1006
          %v1015 = vunpack.c.l.b16 %v1007
          %v1016 = vunpack.c.l.b16 %v1008
          %v1017 = vunpack.c.l.b16 %v1009
          %v1018 = vpack.c.b16 %v1015, %v1014
          %v1019 = vpack.c.b16 %v1017, %v1016
          %v1023 = vsel %vm821, %v1004, 0
          %v1026 = vsel %vm821, %v1005, 0
          %1028 = vmatprep.subr.bf16.mxu0 0
          %1029 = vmatpush1.bf16.msra.mxu0 0
          %1030 = vmatprep.subr.bf16.mxu0 0
          %1031 = vmatpush1.bf16.msra.mxu0 0
          %1032 = vmatprep.subr.bf16.mxu0 0
          %1033 = vmatpush1.bf16.msra.mxu0 0
          %1034 = vmatprep.subr.bf16.mxu0 0
          %1035 = vmatpush1.bf16.msra.mxu0 0
          %1036 = vmatprep.subr.bf16.mxu0 0
          %1037 = vmatpush1.bf16.msra.mxu0 0
          %1038 = vmatprep.subr.bf16.mxu0 0
          %1039 = vmatpush1.bf16.msra.mxu0 0
          %1040 = vmatprep.subr.bf16.mxu0 0
          %1041 = vmatpush1.bf16.msra.mxu0 %v1019
          %1042 = vmatprep.subr.bf16.mxu0 0
          %1043 = vmatpush1.bf16.msra.mxu0 %v1018
          %1044 = vmatprep.subr.bf16.mxu0 0
          %1045 = vmatpush2.bf16.msra.mxu0 0
          %1046 = vmatprep.subr.bf16.mxu0 0
          %1047 = vmatpush2.bf16.msra.mxu0 0
          %1048 = vmatprep.subr.bf16.mxu0 0
          %1049 = vmatpush2.bf16.msra.mxu0 0
          %1050 = vmatprep.subr.bf16.mxu0 0
          %1051 = vmatpush2.bf16.msra.mxu0 0
          %1052 = vmatprep.subr.bf16.mxu0 0
          %1053 = vmatpush2.bf16.msra.mxu0 0
          %1054 = vmatprep.subr.bf16.mxu0 0
          %1055 = vmatpush2.bf16.msra.mxu0 0
          %1056 = vmatprep.subr.bf16.mxu0 0
          %1057 = vmatpush2.bf16.msra.mxu0 0
          %1058 = vmatprep.subr.bf16.mxu0 0
          %1059 = vmatpush2.bf16.msra.mxu0 0
          %1060 = vmatprep.mubr.bf16.mxu0 0
          %1061 = vmatmul.mubr.bf16.gmra.mxu0 %v1023
          %v1062 = vpop.f32.mrf.mxu0
          %v1063 = vadd.f32 0.0, %v1062
          %v1064 = vpop.f32.mrf.mxu0
          %v1065 = vpop.f32.mrf.mxu0
          %v1066 = vadd.f32 0.0, %v1065
          %v1067 = vpop.f32.mrf.mxu0
          %1068 = vmatprep.mubr.bf16.mxu0 0
          %1069 = vmatmul.mubr.bf16.gmra.mxu0 %v1026
          %v1070 = vpop.f32.mrf.mxu0
          %v1071 = vadd.f32 0.0, %v1070
          %v1072 = vpop.f32.mrf.mxu0
          %v1073 = vpop.f32.mrf.mxu0
          %v1074 = vadd.f32 0.0, %v1073
          %v1075 = vpop.f32.mrf.mxu0
          %1076 = vdwg.mxu0
          %v1077 = vadd.f32 %v1000, %v1063
          %v1078 = vadd.f32 %v1001, %v1066
          %v1079 = vadd.f32 %v1002, %v1071
          %v1080 = vadd.f32 %v1003, %v1074
          %1081 = vst.msk [vmem:[#allocation5] sm:$0xff] %vm821, %v1077
          %1082 = vst.msk [vmem:[#allocation5 + $0x8] sm:$0xff] %vm821, %v1078
          %1083 = vst.msk [vmem:[#allocation5 + $0x10] sm:$0xff] %vm821, %v1079
          %1084 = vst.msk [vmem:[#allocation5 + $0x18] sm:$0xff] %vm821, %v1080
          %1085 = vst.msk [vmem:[#allocation3] sm:$0xff] %vm971, %v899
          %1086 = vst.msk [vmem:[#allocation3 + $0x8] sm:$0xff] %vm971, %v900
          %1087 = vst.msk [vmem:[#allocation3 + $0x10] sm:$0xff] %vm971, %v901
          %1088 = vst.msk [vmem:[#allocation3 + $0x18] sm:$0xff] %vm971, %v902
          %s1089 = scalar_lea.vmem [#allocation2], 16
          %v1090 = vld [vmem:[%s1089] sm:$0xf]
          %v1091 = vld [vmem:[%s1089 + $0x4] sm:$0xf]
          %v1092 = vld [vmem:[%s1089 + $0x8] sm:$0xf]
          %v1093 = vld [vmem:[%s1089 + $0xc] sm:$0xf]
          %s1094 = scalar_lea.vmem %s450, 16
          %v1095 = vld [vmem:[%s1094] sm:$0xf]
          %v1096 = vld [vmem:[%s1094 + $0x4] sm:$0xf]
          %v1097 = vld [vmem:[%s1094 + $0x8] sm:$0xf]
          %v1098 = vld [vmem:[%s1094 + $0xc] sm:$0xf]
          %v1103 = vunpack.c.l.b16 %v1090
          %v1104 = vunpack.c.l.b16 %v1091
          %v1105 = vunpack.c.l.b16 %v1092
          %v1106 = vunpack.c.l.b16 %v1093
          %v1107 = vpack.c.b16 %v1104, %v1103
          %v1108 = vpack.c.b16 %v1106, %v1105
          %v1113 = vunpack.c.l.b16 %v1095
          %v1114 = vunpack.c.l.b16 %v1096
          %v1115 = vunpack.c.l.b16 %v1097
          %v1116 = vunpack.c.l.b16 %v1098
          %v1117 = vpack.c.b16 %v1114, %v1113
          %v1118 = vpack.c.b16 %v1116, %v1115
          %v1120 = vsel %vm821, %v1107, 0
          %v1123 = vsel %vm821, %v1108, 0
          %v1126 = vsel %vm821, %v1117, 0
          %v1129 = vsel %vm821, %v1118, 0
          %1131 = vmatprep.subr.bf16.mxu0 0
          %1132 = vmatpush1.bf16.xpose.msra.mxu0 0
          %1133 = vmatprep.subr.bf16.mxu0 0
          %1134 = vmatpush1.bf16.xpose.msra.mxu0 0
          %1135 = vmatprep.subr.bf16.mxu0 0
          %1136 = vmatpush1.bf16.xpose.msra.mxu0 0
          %1137 = vmatprep.subr.bf16.mxu0 0
          %1138 = vmatpush1.bf16.xpose.msra.mxu0 0
          %1139 = vmatprep.subr.bf16.mxu0 0
          %1140 = vmatpush1.bf16.xpose.msra.mxu0 0
          %1141 = vmatprep.subr.bf16.mxu0 0
          %1142 = vmatpush1.bf16.xpose.msra.mxu0 0
          %1143 = vmatprep.subr.bf16.mxu0 0
          %1144 = vmatpush1.bf16.xpose.msra.mxu0 %v1129
          %1145 = vmatprep.subr.bf16.mxu0 0
          %1146 = vmatpush1.bf16.xpose.msra.mxu0 %v1126
          %1147 = vmatprep.subr.bf16.mxu0 0
          %1148 = vmatpush2.bf16.xpose.msra.mxu0 0
          %1149 = vmatprep.subr.bf16.mxu0 0
          %1150 = vmatpush2.bf16.xpose.msra.mxu0 0
          %1151 = vmatprep.subr.bf16.mxu0 0
          %1152 = vmatpush2.bf16.xpose.msra.mxu0 0
          %1153 = vmatprep.subr.bf16.mxu0 0
          %1154 = vmatpush2.bf16.xpose.msra.mxu0 0
          %1155 = vmatprep.subr.bf16.mxu0 0
          %1156 = vmatpush2.bf16.xpose.msra.mxu0 0
          %1157 = vmatprep.subr.bf16.mxu0 0
          %1158 = vmatpush2.bf16.xpose.msra.mxu0 0
          %1159 = vmatprep.subr.bf16.mxu0 0
          %1160 = vmatpush2.bf16.xpose.msra.mxu0 0
          %1161 = vmatprep.subr.bf16.mxu0 0
          %1162 = vmatpush2.bf16.xpose.msra.mxu0 0
          %1163 = vmatprep.mubr.bf16.mxu0 0
          %1164 = vmatmul.mubr.bf16.gmra.mxu0 %v1120
          %v1165 = vpop.f32.mrf.mxu0
          %v1166 = vadd.f32 0.0, %v1165
          %v1167 = vpop.f32.mrf.mxu0
          %v1168 = vpop.f32.mrf.mxu0
          %v1169 = vadd.f32 0.0, %v1168
          %v1170 = vpop.f32.mrf.mxu0
          %1171 = vmatprep.mubr.bf16.mxu0 0
          %1172 = vmatmul.mubr.bf16.gmra.mxu0 %v1123
          %v1173 = vpop.f32.mrf.mxu0
          %v1174 = vadd.f32 0.0, %v1173
          %v1175 = vpop.f32.mrf.mxu0
          %v1176 = vpop.f32.mrf.mxu0
          %v1177 = vadd.f32 0.0, %v1176
          %v1178 = vpop.f32.mrf.mxu0
          %1179 = vdwg.mxu0
          %s1180 = scalar_lea.vmem [#allocation3], 32
          %v1181 = vld [vmem:[%s1180] sm:$0xff]
          %v1182 = vld [vmem:[%s1180 + $0x8] sm:$0xff]
          %v1183 = vld [vmem:[%s1180 + $0x10] sm:$0xff]
          %v1184 = vld [vmem:[%s1180 + $0x18] sm:$0xff]
          %v1185 = vsel %vm821, %v1166, -inf
          %1186 = vmax.xlane.f32.xlu0 %v1185
          %v1187 = vpop.xlane.xlu0 %1186
          %v1188 = vsel %vm821, %v1169, -inf
          %1189 = vmax.xlane.f32.xlu0 %v1188
          %v1190 = vpop.xlane.xlu0 %1189
          %v1191 = vsel %vm821, %v1174, -inf
          %1192 = vmax.xlane.f32.xlu0 %v1191
          %v1193 = vpop.xlane.xlu0 %1192
          %v1194 = vsel %vm821, %v1177, -inf
          %1195 = vmax.xlane.f32.xlu0 %v1194
          %v1196 = vpop.xlane.xlu0 %1195
          %v1197 = vmax.f32 %v1181, %v1187
          %v1198 = vmax.f32 %v1182, %v1190
          %v1199 = vmax.f32 %v1183, %v1193
          %v1200 = vmax.f32 %v1184, %v1196
          %v1201 = vsub.f32 %v1181, %v1197
          %v1202 = vsub.f32 %v1182, %v1198
          %v1203 = vsub.f32 %v1183, %v1199
          %v1204 = vsub.f32 %v1184, %v1200
          %v1205 = vmul.f32 %v1201, 1.442695
          %v1206 = vpow.pop %v1205
          %v1207 = vmul.f32 %v1202, 1.442695
          %v1208 = vpow.pop %v1207
          %v1209 = vmul.f32 %v1203, 1.442695
          %v1210 = vpow.pop %v1209
          %v1211 = vmul.f32 %v1204, 1.442695
          %v1212 = vpow.pop %v1211
          %1214 = vset.pattern.permute.xlu0 0
          %1215 = vperm.xlu0 %1214, %v1197
          %v1216 = vpop.permute.xlu0 %1215
          %1219 = vset.pattern.permute.xlu0 0
          %1220 = vperm.xlu0 %1219, %v1198
          %v1221 = vpop.permute.xlu0 %1220
          %1224 = vset.pattern.permute.xlu0 0
          %1225 = vperm.xlu0 %1224, %v1199
          %v1226 = vpop.permute.xlu0 %1225
          %1229 = vset.pattern.permute.xlu0 0
          %1230 = vperm.xlu0 %1229, %v1200
          %v1231 = vpop.permute.xlu0 %1230
          %v1233 = vsub.f32 %v1166, %v1216
          %v1234 = vsub.f32 %v1169, %v1221
          %v1235 = vsub.f32 %v1174, %v1226
          %v1236 = vsub.f32 %v1177, %v1231
          %v1237 = vmul.f32 %v1233, 1.442695
          %v1238 = vpow.pop %v1237
          %v1239 = vmul.f32 %v1234, 1.442695
          %v1240 = vpow.pop %v1239
          %v1241 = vmul.f32 %v1235, 1.442695
          %v1242 = vpow.pop %v1241
          %v1243 = vmul.f32 %v1236, 1.442695
          %v1244 = vpow.pop %v1243
          %s1245 = scalar_lea.vmem [#allocation4], 32
          %v1246 = vld [vmem:[%s1245] sm:$0xff]
          %v1247 = vld [vmem:[%s1245 + $0x8] sm:$0xff]
          %v1248 = vld [vmem:[%s1245 + $0x10] sm:$0xff]
          %v1249 = vld [vmem:[%s1245 + $0x18] sm:$0xff]
          %v1250 = vmul.f32 %v1206, %v1246
          %v1251 = vmul.f32 %v1208, %v1247
          %v1252 = vmul.f32 %v1210, %v1248
          %v1253 = vmul.f32 %v1212, %v1249
          %v1254 = vsel %vm821, %v1238, 0.0
          %1255 = vadd.xlane.f32.xlu0 %v1254
          %v1256 = vpop.xlane.xlu0 %1255
          %v1257 = vsel %vm821, %v1240, 0.0
          %1258 = vadd.xlane.f32.xlu0 %v1257
          %v1259 = vpop.xlane.xlu0 %1258
          %v1260 = vsel %vm821, %v1242, 0.0
          %1261 = vadd.xlane.f32.xlu0 %v1260
          %v1262 = vpop.xlane.xlu0 %1261
          %v1263 = vsel %vm821, %v1244, 0.0
          %1264 = vadd.xlane.f32.xlu0 %v1263
          %v1265 = vpop.xlane.xlu0 %1264
          %v1266 = vadd.f32 %v1250, %v1256
          %v1267 = vadd.f32 %v1251, %v1259
          %v1268 = vadd.f32 %v1252, %v1262
          %v1269 = vadd.f32 %v1253, %v1265
          %1270 = vst.msk [vmem:[%s1245] sm:$0xff] %vm971, %v1266
          %1271 = vst.msk [vmem:[%s1245 + $0x8] sm:$0xff] %vm971, %v1267
          %1272 = vst.msk [vmem:[%s1245 + $0x10] sm:$0xff] %vm971, %v1268
          %1273 = vst.msk [vmem:[%s1245 + $0x18] sm:$0xff] %vm971, %v1269
          %s1274 = scalar_lea.vmem [#allocation5], 32
          %v1275 = vld [vmem:[%s1274] sm:$0xff]
          %v1276 = vld [vmem:[%s1274 + $0x8] sm:$0xff]
          %v1277 = vld [vmem:[%s1274 + $0x10] sm:$0xff]
          %v1278 = vld [vmem:[%s1274 + $0x18] sm:$0xff]
          %1280 = vset.pattern.permute.xlu0 0
          %1281 = vperm.xlu0 %1280, %v1206
          %v1282 = vpop.permute.xlu0 %1281
          %1285 = vset.pattern.permute.xlu0 0
          %1286 = vperm.xlu0 %1285, %v1208
          %v1287 = vpop.permute.xlu0 %1286
          %1290 = vset.pattern.permute.xlu0 0
          %1291 = vperm.xlu0 %1290, %v1210
          %v1292 = vpop.permute.xlu0 %1291
          %1295 = vset.pattern.permute.xlu0 0
          %1296 = vperm.xlu0 %1295, %v1212
          %v1297 = vpop.permute.xlu0 %1296
          %v1299 = vmul.f32 %v1282, %v1275
          %v1300 = vmul.f32 %v1287, %v1276
          %v1301 = vmul.f32 %v1292, %v1277
          %v1302 = vmul.f32 %v1297, %v1278
          %v1303 = vpack.c.bf16 %v1240, %v1238
          %v1304 = vpack.c.bf16 %v1244, %v1242
          %s1305 = scalar_lea.vmem %s464, 16
          %v1306 = vld [vmem:[%s1305] sm:$0xf]
          %v1307 = vld [vmem:[%s1305 + $0x4] sm:$0xf]
          %v1308 = vld [vmem:[%s1305 + $0x8] sm:$0xf]
          %v1309 = vld [vmem:[%s1305 + $0xc] sm:$0xf]
          %v1314 = vunpack.c.l.b16 %v1306
          %v1315 = vunpack.c.l.b16 %v1307
          %v1316 = vunpack.c.l.b16 %v1308
          %v1317 = vunpack.c.l.b16 %v1309
          %v1318 = vpack.c.b16 %v1315, %v1314
          %v1319 = vpack.c.b16 %v1317, %v1316
          %v1323 = vsel %vm821, %v1303, 0
          %v1326 = vsel %vm821, %v1304, 0
          %1328 = vmatprep.subr.bf16.mxu0 0
          %1329 = vmatpush1.bf16.msra.mxu0 0
          %1330 = vmatprep.subr.bf16.mxu0 0
          %1331 = vmatpush1.bf16.msra.mxu0 0
          %1332 = vmatprep.subr.bf16.mxu0 0
          %1333 = vmatpush1.bf16.msra.mxu0 0
          %1334 = vmatprep.subr.bf16.mxu0 0
          %1335 = vmatpush1.bf16.msra.mxu0 0
          %1336 = vmatprep.subr.bf16.mxu0 0
          %1337 = vmatpush1.bf16.msra.mxu0 0
          %1338 = vmatprep.subr.bf16.mxu0 0
          %1339 = vmatpush1.bf16.msra.mxu0 0
          %1340 = vmatprep.subr.bf16.mxu0 0
          %1341 = vmatpush1.bf16.msra.mxu0 %v1319
          %1342 = vmatprep.subr.bf16.mxu0 0
          %1343 = vmatpush1.bf16.msra.mxu0 %v1318
          %1344 = vmatprep.subr.bf16.mxu0 0
          %1345 = vmatpush2.bf16.msra.mxu0 0
          %1346 = vmatprep.subr.bf16.mxu0 0
          %1347 = vmatpush2.bf16.msra.mxu0 0
          %1348 = vmatprep.subr.bf16.mxu0 0
          %1349 = vmatpush2.bf16.msra.mxu0 0
          %1350 = vmatprep.subr.bf16.mxu0 0
          %1351 = vmatpush2.bf16.msra.mxu0 0
          %1352 = vmatprep.subr.bf16.mxu0 0
          %1353 = vmatpush2.bf16.msra.mxu0 0
          %1354 = vmatprep.subr.bf16.mxu0 0
          %1355 = vmatpush2.bf16.msra.mxu0 0
          %1356 = vmatprep.subr.bf16.mxu0 0
          %1357 = vmatpush2.bf16.msra.mxu0 0
          %1358 = vmatprep.subr.bf16.mxu0 0
          %1359 = vmatpush2.bf16.msra.mxu0 0
          %1360 = vmatprep.mubr.bf16.mxu0 0
          %1361 = vmatmul.mubr.bf16.gmra.mxu0 %v1323
          %v1362 = vpop.f32.mrf.mxu0
          %v1363 = vadd.f32 0.0, %v1362
          %v1364 = vpop.f32.mrf.mxu0
          %v1365 = vpop.f32.mrf.mxu0
          %v1366 = vadd.f32 0.0, %v1365
          %v1367 = vpop.f32.mrf.mxu0
          %1368 = vmatprep.mubr.bf16.mxu0 0
          %1369 = vmatmul.mubr.bf16.gmra.mxu0 %v1326
          %v1370 = vpop.f32.mrf.mxu0
          %v1371 = vadd.f32 0.0, %v1370
          %v1372 = vpop.f32.mrf.mxu0
          %v1373 = vpop.f32.mrf.mxu0
          %v1374 = vadd.f32 0.0, %v1373
          %v1375 = vpop.f32.mrf.mxu0
          %1376 = vdwg.mxu0
          %v1377 = vadd.f32 %v1299, %v1363
          %v1378 = vadd.f32 %v1300, %v1366
          %v1379 = vadd.f32 %v1301, %v1371
          %v1380 = vadd.f32 %v1302, %v1374
          %1381 = vst.msk [vmem:[%s1274] sm:$0xff] %vm821, %v1377
          %1382 = vst.msk [vmem:[%s1274 + $0x8] sm:$0xff] %vm821, %v1378
          %1383 = vst.msk [vmem:[%s1274 + $0x10] sm:$0xff] %vm821, %v1379
          %1384 = vst.msk [vmem:[%s1274 + $0x18] sm:$0xff] %vm821, %v1380
          %1385 = vst.msk [vmem:[%s1180] sm:$0xff] %vm971, %v1197
          %1386 = vst.msk [vmem:[%s1180 + $0x8] sm:$0xff] %vm971, %v1198
          %1387 = vst.msk [vmem:[%s1180 + $0x10] sm:$0xff] %vm971, %v1199
          %1388 = vst.msk [vmem:[%s1180 + $0x18] sm:$0xff] %vm971, %v1200
          %s1389 = scalar_lea.vmem [#allocation2], 32
          %v1390 = vld [vmem:[%s1389] sm:$0xf]
          %v1391 = vld [vmem:[%s1389 + $0x4] sm:$0xf]
          %v1392 = vld [vmem:[%s1389 + $0x8] sm:$0xf]
          %v1393 = vld [vmem:[%s1389 + $0xc] sm:$0xf]
          %s1394 = scalar_lea.vmem %s450, 32
          %v1395 = vld [vmem:[%s1394] sm:$0xf]
          %v1396 = vld [vmem:[%s1394 + $0x4] sm:$0xf]
          %v1397 = vld [vmem:[%s1394 + $0x8] sm:$0xf]
          %v1398 = vld [vmem:[%s1394 + $0xc] sm:$0xf]
          %v1403 = vunpack.c.l.b16 %v1390
          %v1404 = vunpack.c.l.b16 %v1391
          %v1405 = vunpack.c.l.b16 %v1392
          %v1406 = vunpack.c.l.b16 %v1393
          %v1407 = vpack.c.b16 %v1404, %v1403
          %v1408 = vpack.c.b16 %v1406, %v1405
          %v1413 = vunpack.c.l.b16 %v1395
          %v1414 = vunpack.c.l.b16 %v1396
          %v1415 = vunpack.c.l.b16 %v1397
          %v1416 = vunpack.c.l.b16 %v1398
          %v1417 = vpack.c.b16 %v1414, %v1413
          %v1418 = vpack.c.b16 %v1416, %v1415
          %v1420 = vsel %vm821, %v1407, 0
          %v1423 = vsel %vm821, %v1408, 0
          %v1426 = vsel %vm821, %v1417, 0
          %v1429 = vsel %vm821, %v1418, 0
          %1431 = vmatprep.subr.bf16.mxu0 0
          %1432 = vmatpush1.bf16.xpose.msra.mxu0 0
          %1433 = vmatprep.subr.bf16.mxu0 0
          %1434 = vmatpush1.bf16.xpose.msra.mxu0 0
          %1435 = vmatprep.subr.bf16.mxu0 0
          %1436 = vmatpush1.bf16.xpose.msra.mxu0 0
          %1437 = vmatprep.subr.bf16.mxu0 0
          %1438 = vmatpush1.bf16.xpose.msra.mxu0 0
          %1439 = vmatprep.subr.bf16.mxu0 0
          %1440 = vmatpush1.bf16.xpose.msra.mxu0 0
          %1441 = vmatprep.subr.bf16.mxu0 0
          %1442 = vmatpush1.bf16.xpose.msra.mxu0 0
          %1443 = vmatprep.subr.bf16.mxu0 0
          %1444 = vmatpush1.bf16.xpose.msra.mxu0 %v1429
          %1445 = vmatprep.subr.bf16.mxu0 0
          %1446 = vmatpush1.bf16.xpose.msra.mxu0 %v1426
          %1447 = vmatprep.subr.bf16.mxu0 0
          %1448 = vmatpush2.bf16.xpose.msra.mxu0 0
          %1449 = vmatprep.subr.bf16.mxu0 0
          %1450 = vmatpush2.bf16.xpose.msra.mxu0 0
          %1451 = vmatprep.subr.bf16.mxu0 0
          %1452 = vmatpush2.bf16.xpose.msra.mxu0 0
          %1453 = vmatprep.subr.bf16.mxu0 0
          %1454 = vmatpush2.bf16.xpose.msra.mxu0 0
          %1455 = vmatprep.subr.bf16.mxu0 0
          %1456 = vmatpush2.bf16.xpose.msra.mxu0 0
          %1457 = vmatprep.subr.bf16.mxu0 0
          %1458 = vmatpush2.bf16.xpose.msra.mxu0 0
          %1459 = vmatprep.subr.bf16.mxu0 0
          %1460 = vmatpush2.bf16.xpose.msra.mxu0 0
          %1461 = vmatprep.subr.bf16.mxu0 0
          %1462 = vmatpush2.bf16.xpose.msra.mxu0 0
          %1463 = vmatprep.mubr.bf16.mxu0 0
          %1464 = vmatmul.mubr.bf16.gmra.mxu0 %v1420
          %v1465 = vpop.f32.mrf.mxu0
          %v1466 = vadd.f32 0.0, %v1465
          %v1467 = vpop.f32.mrf.mxu0
          %v1468 = vpop.f32.mrf.mxu0
          %v1469 = vadd.f32 0.0, %v1468
          %v1470 = vpop.f32.mrf.mxu0
          %1471 = vmatprep.mubr.bf16.mxu0 0
          %1472 = vmatmul.mubr.bf16.gmra.mxu0 %v1423
          %v1473 = vpop.f32.mrf.mxu0
          %v1474 = vadd.f32 0.0, %v1473
          %v1475 = vpop.f32.mrf.mxu0
          %v1476 = vpop.f32.mrf.mxu0
          %v1477 = vadd.f32 0.0, %v1476
          %v1478 = vpop.f32.mrf.mxu0
          %1479 = vdwg.mxu0
          %s1480 = scalar_lea.vmem [#allocation3], 64
          %v1481 = vld [vmem:[%s1480] sm:$0xff]
          %v1482 = vld [vmem:[%s1480 + $0x8] sm:$0xff]
          %v1483 = vld [vmem:[%s1480 + $0x10] sm:$0xff]
          %v1484 = vld [vmem:[%s1480 + $0x18] sm:$0xff]
          %v1485 = vsel %vm821, %v1466, -inf
          %1486 = vmax.xlane.f32.xlu0 %v1485
          %v1487 = vpop.xlane.xlu0 %1486
          %v1488 = vsel %vm821, %v1469, -inf
          %1489 = vmax.xlane.f32.xlu0 %v1488
          %v1490 = vpop.xlane.xlu0 %1489
          %v1491 = vsel %vm821, %v1474, -inf
          %1492 = vmax.xlane.f32.xlu0 %v1491
          %v1493 = vpop.xlane.xlu0 %1492
          %v1494 = vsel %vm821, %v1477, -inf
          %1495 = vmax.xlane.f32.xlu0 %v1494
          %v1496 = vpop.xlane.xlu0 %1495
          %v1497 = vmax.f32 %v1481, %v1487
          %v1498 = vmax.f32 %v1482, %v1490
          %v1499 = vmax.f32 %v1483, %v1493
          %v1500 = vmax.f32 %v1484, %v1496
          %v1501 = vsub.f32 %v1481, %v1497
          %v1502 = vsub.f32 %v1482, %v1498
          %v1503 = vsub.f32 %v1483, %v1499
          %v1504 = vsub.f32 %v1484, %v1500
          %v1505 = vmul.f32 %v1501, 1.442695
          %v1506 = vpow.pop %v1505
          %v1507 = vmul.f32 %v1502, 1.442695
          %v1508 = vpow.pop %v1507
          %v1509 = vmul.f32 %v1503, 1.442695
          %v1510 = vpow.pop %v1509
          %v1511 = vmul.f32 %v1504, 1.442695
          %v1512 = vpow.pop %v1511
          %1514 = vset.pattern.permute.xlu0 0
          %1515 = vperm.xlu0 %1514, %v1497
          %v1516 = vpop.permute.xlu0 %1515
          %1519 = vset.pattern.permute.xlu0 0
          %1520 = vperm.xlu0 %1519, %v1498
          %v1521 = vpop.permute.xlu0 %1520
          %1524 = vset.pattern.permute.xlu0 0
          %1525 = vperm.xlu0 %1524, %v1499
          %v1526 = vpop.permute.xlu0 %1525
          %1529 = vset.pattern.permute.xlu0 0
          %1530 = vperm.xlu0 %1529, %v1500
          %v1531 = vpop.permute.xlu0 %1530
          %v1533 = vsub.f32 %v1466, %v1516
          %v1534 = vsub.f32 %v1469, %v1521
          %v1535 = vsub.f32 %v1474, %v1526
          %v1536 = vsub.f32 %v1477, %v1531
          %v1537 = vmul.f32 %v1533, 1.442695
          %v1538 = vpow.pop %v1537
          %v1539 = vmul.f32 %v1534, 1.442695
          %v1540 = vpow.pop %v1539
          %v1541 = vmul.f32 %v1535, 1.442695
          %v1542 = vpow.pop %v1541
          %v1543 = vmul.f32 %v1536, 1.442695
          %v1544 = vpow.pop %v1543
          %s1545 = scalar_lea.vmem [#allocation4], 64
          %v1546 = vld [vmem:[%s1545] sm:$0xff]
          %v1547 = vld [vmem:[%s1545 + $0x8] sm:$0xff]
          %v1548 = vld [vmem:[%s1545 + $0x10] sm:$0xff]
          %v1549 = vld [vmem:[%s1545 + $0x18] sm:$0xff]
          %v1550 = vmul.f32 %v1506, %v1546
          %v1551 = vmul.f32 %v1508, %v1547
          %v1552 = vmul.f32 %v1510, %v1548
          %v1553 = vmul.f32 %v1512, %v1549
          %v1554 = vsel %vm821, %v1538, 0.0
          %1555 = vadd.xlane.f32.xlu0 %v1554
          %v1556 = vpop.xlane.xlu0 %1555
          %v1557 = vsel %vm821, %v1540, 0.0
          %1558 = vadd.xlane.f32.xlu0 %v1557
          %v1559 = vpop.xlane.xlu0 %1558
          %v1560 = vsel %vm821, %v1542, 0.0
          %1561 = vadd.xlane.f32.xlu0 %v1560
          %v1562 = vpop.xlane.xlu0 %1561
          %v1563 = vsel %vm821, %v1544, 0.0
          %1564 = vadd.xlane.f32.xlu0 %v1563
          %v1565 = vpop.xlane.xlu0 %1564
          %v1566 = vadd.f32 %v1550, %v1556
          %v1567 = vadd.f32 %v1551, %v1559
          %v1568 = vadd.f32 %v1552, %v1562
          %v1569 = vadd.f32 %v1553, %v1565
          %1570 = vst.msk [vmem:[%s1545] sm:$0xff] %vm971, %v1566
          %1571 = vst.msk [vmem:[%s1545 + $0x8] sm:$0xff] %vm971, %v1567
          %1572 = vst.msk [vmem:[%s1545 + $0x10] sm:$0xff] %vm971, %v1568
          %1573 = vst.msk [vmem:[%s1545 + $0x18] sm:$0xff] %vm971, %v1569
          %s1574 = scalar_lea.vmem [#allocation5], 64
          %v1575 = vld [vmem:[%s1574] sm:$0xff]
          %v1576 = vld [vmem:[%s1574 + $0x8] sm:$0xff]
          %v1577 = vld [vmem:[%s1574 + $0x10] sm:$0xff]
          %v1578 = vld [vmem:[%s1574 + $0x18] sm:$0xff]
          %1580 = vset.pattern.permute.xlu0 0
          %1581 = vperm.xlu0 %1580, %v1506
          %v1582 = vpop.permute.xlu0 %1581
          %1585 = vset.pattern.permute.xlu0 0
          %1586 = vperm.xlu0 %1585, %v1508
          %v1587 = vpop.permute.xlu0 %1586
          %1590 = vset.pattern.permute.xlu0 0
          %1591 = vperm.xlu0 %1590, %v1510
          %v1592 = vpop.permute.xlu0 %1591
          %1595 = vset.pattern.permute.xlu0 0
          %1596 = vperm.xlu0 %1595, %v1512
          %v1597 = vpop.permute.xlu0 %1596
          %v1599 = vmul.f32 %v1582, %v1575
          %v1600 = vmul.f32 %v1587, %v1576
          %v1601 = vmul.f32 %v1592, %v1577
          %v1602 = vmul.f32 %v1597, %v1578
          %v1603 = vpack.c.bf16 %v1540, %v1538
          %v1604 = vpack.c.bf16 %v1544, %v1542
          %s1605 = scalar_lea.vmem %s464, 32
          %v1606 = vld [vmem:[%s1605] sm:$0xf]
          %v1607 = vld [vmem:[%s1605 + $0x4] sm:$0xf]
          %v1608 = vld [vmem:[%s1605 + $0x8] sm:$0xf]
          %v1609 = vld [vmem:[%s1605 + $0xc] sm:$0xf]
          %v1614 = vunpack.c.l.b16 %v1606
          %v1615 = vunpack.c.l.b16 %v1607
          %v1616 = vunpack.c.l.b16 %v1608
          %v1617 = vunpack.c.l.b16 %v1609
          %v1618 = vpack.c.b16 %v1615, %v1614
          %v1619 = vpack.c.b16 %v1617, %v1616
          %v1623 = vsel %vm821, %v1603, 0
          %v1626 = vsel %vm821, %v1604, 0
          %1628 = vmatprep.subr.bf16.mxu0 0
          %1629 = vmatpush1.bf16.msra.mxu0 0
          %1630 = vmatprep.subr.bf16.mxu0 0
          %1631 = vmatpush1.bf16.msra.mxu0 0
          %1632 = vmatprep.subr.bf16.mxu0 0
          %1633 = vmatpush1.bf16.msra.mxu0 0
          %1634 = vmatprep.subr.bf16.mxu0 0
          %1635 = vmatpush1.bf16.msra.mxu0 0
          %1636 = vmatprep.subr.bf16.mxu0 0
          %1637 = vmatpush1.bf16.msra.mxu0 0
          %1638 = vmatprep.subr.bf16.mxu0 0
          %1639 = vmatpush1.bf16.msra.mxu0 0
          %1640 = vmatprep.subr.bf16.mxu0 0
          %1641 = vmatpush1.bf16.msra.mxu0 %v1619
          %1642 = vmatprep.subr.bf16.mxu0 0
          %1643 = vmatpush1.bf16.msra.mxu0 %v1618
          %1644 = vmatprep.subr.bf16.mxu0 0
          %1645 = vmatpush2.bf16.msra.mxu0 0
          %1646 = vmatprep.subr.bf16.mxu0 0
          %1647 = vmatpush2.bf16.msra.mxu0 0
          %1648 = vmatprep.subr.bf16.mxu0 0
          %1649 = vmatpush2.bf16.msra.mxu0 0
          %1650 = vmatprep.subr.bf16.mxu0 0
          %1651 = vmatpush2.bf16.msra.mxu0 0
          %1652 = vmatprep.subr.bf16.mxu0 0
          %1653 = vmatpush2.bf16.msra.mxu0 0
          %1654 = vmatprep.subr.bf16.mxu0 0
          %1655 = vmatpush2.bf16.msra.mxu0 0
          %1656 = vmatprep.subr.bf16.mxu0 0
          %1657 = vmatpush2.bf16.msra.mxu0 0
          %1658 = vmatprep.subr.bf16.mxu0 0
          %1659 = vmatpush2.bf16.msra.mxu0 0
          %1660 = vmatprep.mubr.bf16.mxu0 0
          %1661 = vmatmul.mubr.bf16.gmra.mxu0 %v1623
          %v1662 = vpop.f32.mrf.mxu0
          %v1663 = vadd.f32 0.0, %v1662
          %v1664 = vpop.f32.mrf.mxu0
          %v1665 = vpop.f32.mrf.mxu0
          %v1666 = vadd.f32 0.0, %v1665
          %v1667 = vpop.f32.mrf.mxu0
          %1668 = vmatprep.mubr.bf16.mxu0 0
          %1669 = vmatmul.mubr.bf16.gmra.mxu0 %v1626
          %v1670 = vpop.f32.mrf.mxu0
          %v1671 = vadd.f32 0.0, %v1670
          %v1672 = vpop.f32.mrf.mxu0
          %v1673 = vpop.f32.mrf.mxu0
          %v1674 = vadd.f32 0.0, %v1673
          %v1675 = vpop.f32.mrf.mxu0
          %1676 = vdwg.mxu0
          %v1677 = vadd.f32 %v1599, %v1663
          %v1678 = vadd.f32 %v1600, %v1666
          %v1679 = vadd.f32 %v1601, %v1671
          %v1680 = vadd.f32 %v1602, %v1674
          %1681 = vst.msk [vmem:[%s1574] sm:$0xff] %vm821, %v1677
          %1682 = vst.msk [vmem:[%s1574 + $0x8] sm:$0xff] %vm821, %v1678
          %1683 = vst.msk [vmem:[%s1574 + $0x10] sm:$0xff] %vm821, %v1679
          %1684 = vst.msk [vmem:[%s1574 + $0x18] sm:$0xff] %vm821, %v1680
          %1685 = vst.msk [vmem:[%s1480] sm:$0xff] %vm971, %v1497
          %1686 = vst.msk [vmem:[%s1480 + $0x8] sm:$0xff] %vm971, %v1498
          %1687 = vst.msk [vmem:[%s1480 + $0x10] sm:$0xff] %vm971, %v1499
          %1688 = vst.msk [vmem:[%s1480 + $0x18] sm:$0xff] %vm971, %v1500
          %s1689 = scalar_lea.vmem [#allocation2], 48
          %v1690 = vld [vmem:[%s1689] sm:$0xf]
          %v1691 = vld [vmem:[%s1689 + $0x4] sm:$0xf]
          %v1692 = vld [vmem:[%s1689 + $0x8] sm:$0xf]
          %v1693 = vld [vmem:[%s1689 + $0xc] sm:$0xf]
          %s1694 = scalar_lea.vmem %s450, 48
          %v1695 = vld [vmem:[%s1694] sm:$0xf]
          %v1696 = vld [vmem:[%s1694 + $0x4] sm:$0xf]
          %v1697 = vld [vmem:[%s1694 + $0x8] sm:$0xf]
          %v1698 = vld [vmem:[%s1694 + $0xc] sm:$0xf]
          %v1703 = vunpack.c.l.b16 %v1690
          %v1704 = vunpack.c.l.b16 %v1691
          %v1705 = vunpack.c.l.b16 %v1692
          %v1706 = vunpack.c.l.b16 %v1693
          %v1707 = vpack.c.b16 %v1704, %v1703
          %v1708 = vpack.c.b16 %v1706, %v1705
          %v1713 = vunpack.c.l.b16 %v1695
          %v1714 = vunpack.c.l.b16 %v1696
          %v1715 = vunpack.c.l.b16 %v1697
          %v1716 = vunpack.c.l.b16 %v1698
          %v1717 = vpack.c.b16 %v1714, %v1713
          %v1718 = vpack.c.b16 %v1716, %v1715
          %v1720 = vsel %vm821, %v1707, 0
          %v1723 = vsel %vm821, %v1708, 0
          %v1726 = vsel %vm821, %v1717, 0
          %v1729 = vsel %vm821, %v1718, 0
          %1731 = vmatprep.subr.bf16.mxu0 0
          %1732 = vmatpush1.bf16.xpose.msra.mxu0 0
          %1733 = vmatprep.subr.bf16.mxu0 0
          %1734 = vmatpush1.bf16.xpose.msra.mxu0 0
          %1735 = vmatprep.subr.bf16.mxu0 0
          %1736 = vmatpush1.bf16.xpose.msra.mxu0 0
          %1737 = vmatprep.subr.bf16.mxu0 0
          %1738 = vmatpush1.bf16.xpose.msra.mxu0 0
          %1739 = vmatprep.subr.bf16.mxu0 0
          %1740 = vmatpush1.bf16.xpose.msra.mxu0 0
          %1741 = vmatprep.subr.bf16.mxu0 0
          %1742 = vmatpush1.bf16.xpose.msra.mxu0 0
          %1743 = vmatprep.subr.bf16.mxu0 0
          %1744 = vmatpush1.bf16.xpose.msra.mxu0 %v1729
          %1745 = vmatprep.subr.bf16.mxu0 0
          %1746 = vmatpush1.bf16.xpose.msra.mxu0 %v1726
          %1747 = vmatprep.subr.bf16.mxu0 0
          %1748 = vmatpush2.bf16.xpose.msra.mxu0 0
          %1749 = vmatprep.subr.bf16.mxu0 0
          %1750 = vmatpush2.bf16.xpose.msra.mxu0 0
          %1751 = vmatprep.subr.bf16.mxu0 0
          %1752 = vmatpush2.bf16.xpose.msra.mxu0 0
          %1753 = vmatprep.subr.bf16.mxu0 0
          %1754 = vmatpush2.bf16.xpose.msra.mxu0 0
          %1755 = vmatprep.subr.bf16.mxu0 0
          %1756 = vmatpush2.bf16.xpose.msra.mxu0 0
          %1757 = vmatprep.subr.bf16.mxu0 0
          %1758 = vmatpush2.bf16.xpose.msra.mxu0 0
          %1759 = vmatprep.subr.bf16.mxu0 0
          %1760 = vmatpush2.bf16.xpose.msra.mxu0 0
          %1761 = vmatprep.subr.bf16.mxu0 0
          %1762 = vmatpush2.bf16.xpose.msra.mxu0 0
          %1763 = vmatprep.mubr.bf16.mxu0 0
          %1764 = vmatmul.mubr.bf16.gmra.mxu0 %v1720
          %v1765 = vpop.f32.mrf.mxu0
          %v1766 = vadd.f32 0.0, %v1765
          %v1767 = vpop.f32.mrf.mxu0
          %v1768 = vpop.f32.mrf.mxu0
          %v1769 = vadd.f32 0.0, %v1768
          %v1770 = vpop.f32.mrf.mxu0
          %1771 = vmatprep.mubr.bf16.mxu0 0
          %1772 = vmatmul.mubr.bf16.gmra.mxu0 %v1723
          %v1773 = vpop.f32.mrf.mxu0
          %v1774 = vadd.f32 0.0, %v1773
          %v1775 = vpop.f32.mrf.mxu0
          %v1776 = vpop.f32.mrf.mxu0
          %v1777 = vadd.f32 0.0, %v1776
          %v1778 = vpop.f32.mrf.mxu0
          %1779 = vdwg.mxu0
          %s1780 = scalar_lea.vmem [#allocation3], 96
          %v1781 = vld [vmem:[%s1780] sm:$0xff]
          %v1782 = vld [vmem:[%s1780 + $0x8] sm:$0xff]
          %v1783 = vld [vmem:[%s1780 + $0x10] sm:$0xff]
          %v1784 = vld [vmem:[%s1780 + $0x18] sm:$0xff]
          %v1785 = vsel %vm821, %v1766, -inf
          %1786 = vmax.xlane.f32.xlu0 %v1785
          %v1787 = vpop.xlane.xlu0 %1786
          %v1788 = vsel %vm821, %v1769, -inf
          %1789 = vmax.xlane.f32.xlu0 %v1788
          %v1790 = vpop.xlane.xlu0 %1789
          %v1791 = vsel %vm821, %v1774, -inf
          %1792 = vmax.xlane.f32.xlu0 %v1791
          %v1793 = vpop.xlane.xlu0 %1792
          %v1794 = vsel %vm821, %v1777, -inf
          %1795 = vmax.xlane.f32.xlu0 %v1794
          %v1796 = vpop.xlane.xlu0 %1795
          %v1797 = vmax.f32 %v1781, %v1787
          %v1798 = vmax.f32 %v1782, %v1790
          %v1799 = vmax.f32 %v1783, %v1793
          %v1800 = vmax.f32 %v1784, %v1796
          %v1801 = vsub.f32 %v1781, %v1797
          %v1802 = vsub.f32 %v1782, %v1798
          %v1803 = vsub.f32 %v1783, %v1799
          %v1804 = vsub.f32 %v1784, %v1800
          %v1805 = vmul.f32 %v1801, 1.442695
          %v1806 = vpow.pop %v1805
          %v1807 = vmul.f32 %v1802, 1.442695
          %v1808 = vpow.pop %v1807
          %v1809 = vmul.f32 %v1803, 1.442695
          %v1810 = vpow.pop %v1809
          %v1811 = vmul.f32 %v1804, 1.442695
          %v1812 = vpow.pop %v1811
          %1814 = vset.pattern.permute.xlu0 0
          %1815 = vperm.xlu0 %1814, %v1797
          %v1816 = vpop.permute.xlu0 %1815
          %1819 = vset.pattern.permute.xlu0 0
          %1820 = vperm.xlu0 %1819, %v1798
          %v1821 = vpop.permute.xlu0 %1820
          %1824 = vset.pattern.permute.xlu0 0
          %1825 = vperm.xlu0 %1824, %v1799
          %v1826 = vpop.permute.xlu0 %1825
          %1829 = vset.pattern.permute.xlu0 0
          %1830 = vperm.xlu0 %1829, %v1800
          %v1831 = vpop.permute.xlu0 %1830
          %v1833 = vsub.f32 %v1766, %v1816
          %v1834 = vsub.f32 %v1769, %v1821
          %v1835 = vsub.f32 %v1774, %v1826
          %v1836 = vsub.f32 %v1777, %v1831
          %v1837 = vmul.f32 %v1833, 1.442695
          %v1838 = vpow.pop %v1837
          %v1839 = vmul.f32 %v1834, 1.442695
          %v1840 = vpow.pop %v1839
          %v1841 = vmul.f32 %v1835, 1.442695
          %v1842 = vpow.pop %v1841
          %v1843 = vmul.f32 %v1836, 1.442695
          %v1844 = vpow.pop %v1843
          %s1845 = scalar_lea.vmem [#allocation4], 96
          %v1846 = vld [vmem:[%s1845] sm:$0xff]
          %v1847 = vld [vmem:[%s1845 + $0x8] sm:$0xff]
          %v1848 = vld [vmem:[%s1845 + $0x10] sm:$0xff]
          %v1849 = vld [vmem:[%s1845 + $0x18] sm:$0xff]
          %v1850 = vmul.f32 %v1806, %v1846
          %v1851 = vmul.f32 %v1808, %v1847
          %v1852 = vmul.f32 %v1810, %v1848
          %v1853 = vmul.f32 %v1812, %v1849
          %v1854 = vsel %vm821, %v1838, 0.0
          %1855 = vadd.xlane.f32.xlu0 %v1854
          %v1856 = vpop.xlane.xlu0 %1855
          %v1857 = vsel %vm821, %v1840, 0.0
          %1858 = vadd.xlane.f32.xlu0 %v1857
          %v1859 = vpop.xlane.xlu0 %1858
          %v1860 = vsel %vm821, %v1842, 0.0
          %1861 = vadd.xlane.f32.xlu0 %v1860
          %v1862 = vpop.xlane.xlu0 %1861
          %v1863 = vsel %vm821, %v1844, 0.0
          %1864 = vadd.xlane.f32.xlu0 %v1863
          %v1865 = vpop.xlane.xlu0 %1864
          %v1866 = vadd.f32 %v1850, %v1856
          %v1867 = vadd.f32 %v1851, %v1859
          %v1868 = vadd.f32 %v1852, %v1862
          %v1869 = vadd.f32 %v1853, %v1865
          %1870 = vst.msk [vmem:[%s1845] sm:$0xff] %vm971, %v1866
          %1871 = vst.msk [vmem:[%s1845 + $0x8] sm:$0xff] %vm971, %v1867
          %1872 = vst.msk [vmem:[%s1845 + $0x10] sm:$0xff] %vm971, %v1868
          %1873 = vst.msk [vmem:[%s1845 + $0x18] sm:$0xff] %vm971, %v1869
          %s1874 = scalar_lea.vmem [#allocation5], 96
          %v1875 = vld [vmem:[%s1874] sm:$0xff]
          %v1876 = vld [vmem:[%s1874 + $0x8] sm:$0xff]
          %v1877 = vld [vmem:[%s1874 + $0x10] sm:$0xff]
          %v1878 = vld [vmem:[%s1874 + $0x18] sm:$0xff]
          %1880 = vset.pattern.permute.xlu0 0
          %1881 = vperm.xlu0 %1880, %v1806
          %v1882 = vpop.permute.xlu0 %1881
          %1885 = vset.pattern.permute.xlu0 0
          %1886 = vperm.xlu0 %1885, %v1808
          %v1887 = vpop.permute.xlu0 %1886
          %1890 = vset.pattern.permute.xlu0 0
          %1891 = vperm.xlu0 %1890, %v1810
          %v1892 = vpop.permute.xlu0 %1891
          %1895 = vset.pattern.permute.xlu0 0
          %1896 = vperm.xlu0 %1895, %v1812
          %v1897 = vpop.permute.xlu0 %1896
          %v1899 = vmul.f32 %v1882, %v1875
          %v1900 = vmul.f32 %v1887, %v1876
          %v1901 = vmul.f32 %v1892, %v1877
          %v1902 = vmul.f32 %v1897, %v1878
          %v1903 = vpack.c.bf16 %v1840, %v1838
          %v1904 = vpack.c.bf16 %v1844, %v1842
          %s1905 = scalar_lea.vmem %s464, 48
          %v1906 = vld [vmem:[%s1905] sm:$0xf]
          %v1907 = vld [vmem:[%s1905 + $0x4] sm:$0xf]
          %v1908 = vld [vmem:[%s1905 + $0x8] sm:$0xf]
          %v1909 = vld [vmem:[%s1905 + $0xc] sm:$0xf]
          %v1914 = vunpack.c.l.b16 %v1906
          %v1915 = vunpack.c.l.b16 %v1907
          %v1916 = vunpack.c.l.b16 %v1908
          %v1917 = vunpack.c.l.b16 %v1909
          %v1918 = vpack.c.b16 %v1915, %v1914
          %v1919 = vpack.c.b16 %v1917, %v1916
          %v1923 = vsel %vm821, %v1903, 0
          %v1926 = vsel %vm821, %v1904, 0
          %1928 = vmatprep.subr.bf16.mxu0 0
          %1929 = vmatpush1.bf16.msra.mxu0 0
          %1930 = vmatprep.subr.bf16.mxu0 0
          %1931 = vmatpush1.bf16.msra.mxu0 0
          %1932 = vmatprep.subr.bf16.mxu0 0
          %1933 = vmatpush1.bf16.msra.mxu0 0
          %1934 = vmatprep.subr.bf16.mxu0 0
          %1935 = vmatpush1.bf16.msra.mxu0 0
          %1936 = vmatprep.subr.bf16.mxu0 0
          %1937 = vmatpush1.bf16.msra.mxu0 0
          %1938 = vmatprep.subr.bf16.mxu0 0
          %1939 = vmatpush1.bf16.msra.mxu0 0
          %1940 = vmatprep.subr.bf16.mxu0 0
          %1941 = vmatpush1.bf16.msra.mxu0 %v1919
          %1942 = vmatprep.subr.bf16.mxu0 0
          %1943 = vmatpush1.bf16.msra.mxu0 %v1918
          %1944 = vmatprep.subr.bf16.mxu0 0
          %1945 = vmatpush2.bf16.msra.mxu0 0
          %1946 = vmatprep.subr.bf16.mxu0 0
          %1947 = vmatpush2.bf16.msra.mxu0 0
          %1948 = vmatprep.subr.bf16.mxu0 0
          %1949 = vmatpush2.bf16.msra.mxu0 0
          %1950 = vmatprep.subr.bf16.mxu0 0
          %1951 = vmatpush2.bf16.msra.mxu0 0
          %1952 = vmatprep.subr.bf16.mxu0 0
          %1953 = vmatpush2.bf16.msra.mxu0 0
          %1954 = vmatprep.subr.bf16.mxu0 0
          %1955 = vmatpush2.bf16.msra.mxu0 0
          %1956 = vmatprep.subr.bf16.mxu0 0
          %1957 = vmatpush2.bf16.msra.mxu0 0
          %1958 = vmatprep.subr.bf16.mxu0 0
          %1959 = vmatpush2.bf16.msra.mxu0 0
          %1960 = vmatprep.mubr.bf16.mxu0 0
          %1961 = vmatmul.mubr.bf16.gmra.mxu0 %v1923
          %v1962 = vpop.f32.mrf.mxu0
          %v1963 = vadd.f32 0.0, %v1962
          %v1964 = vpop.f32.mrf.mxu0
          %v1965 = vpop.f32.mrf.mxu0
          %v1966 = vadd.f32 0.0, %v1965
          %v1967 = vpop.f32.mrf.mxu0
          %1968 = vmatprep.mubr.bf16.mxu0 0
          %1969 = vmatmul.mubr.bf16.gmra.mxu0 %v1926
          %v1970 = vpop.f32.mrf.mxu0
          %v1971 = vadd.f32 0.0, %v1970
          %v1972 = vpop.f32.mrf.mxu0
          %v1973 = vpop.f32.mrf.mxu0
          %v1974 = vadd.f32 0.0, %v1973
          %v1975 = vpop.f32.mrf.mxu0
          %1976 = vdwg.mxu0
          %v1977 = vadd.f32 %v1899, %v1963
          %v1978 = vadd.f32 %v1900, %v1966
          %v1979 = vadd.f32 %v1901, %v1971
          %v1980 = vadd.f32 %v1902, %v1974
          %1981 = vst.msk [vmem:[%s1874] sm:$0xff] %vm821, %v1977
          %1982 = vst.msk [vmem:[%s1874 + $0x8] sm:$0xff] %vm821, %v1978
          %1983 = vst.msk [vmem:[%s1874 + $0x10] sm:$0xff] %vm821, %v1979
          %1984 = vst.msk [vmem:[%s1874 + $0x18] sm:$0xff] %vm821, %v1980
          %1985 = vst.msk [vmem:[%s1780] sm:$0xff] %vm971, %v1797
          %1986 = vst.msk [vmem:[%s1780 + $0x8] sm:$0xff] %vm971, %v1798
          %1987 = vst.msk [vmem:[%s1780 + $0x10] sm:$0xff] %vm971, %v1799
          %1988 = vst.msk [vmem:[%s1780 + $0x18] sm:$0xff] %vm971, %v1800
        $region64: #{gpt2_block.4} parent=55 // pred_fallthru
          _
        %p1989 = scmp.eq.s32.totalorder %s30, %s29
        // Predicated region
        $region65: #{gpt2_block.4} parent=55 // pred_check
          %p1990 = pneg %p1989
        $region66: #{gpt2_block.4} parent=55 // pred_check_branch
          %1992 = sbr.rel (%p1990) target = $region68
        $region67: #{gpt2_block.4} parent=55 // pred_region
          %v1993 = vlaneseq
          %v1994 = vshrl.u32 %v1993, 7
          %v1995 = vadd.s32 %v1994, 8
          %v1996 = vadd.s32 %v1994, 16
          %v1997 = vadd.s32 %v1994, 24
          %v1998 = vlaneseq
          %v1999 = vand.u32 %v1998, 127
          %vm2000 = vcmp.le.s32.totalorder %v1999, %v1994
          %vm2001 = vcmp.le.s32.totalorder %v1999, %v1995
          %vm2002 = vcmp.le.s32.totalorder %v1999, %v1996
          %vm2003 = vcmp.le.s32.totalorder %v1999, %v1997
          %v2004 = vld [vmem:[#allocation2] sm:$0xf]
          %v2005 = vld [vmem:[#allocation2 + $0x4] sm:$0xf]
          %v2006 = vld [vmem:[#allocation2 + $0x8] sm:$0xf]
          %v2007 = vld [vmem:[#allocation2 + $0xc] sm:$0xf]
          %v2008 = vld [vmem:[%s450] sm:$0xf]
          %v2009 = vld [vmem:[%s450 + $0x4] sm:$0xf]
          %v2010 = vld [vmem:[%s450 + $0x8] sm:$0xf]
          %v2011 = vld [vmem:[%s450 + $0xc] sm:$0xf]
          %v2016 = vunpack.c.l.b16 %v2004
          %v2017 = vunpack.c.l.b16 %v2005
          %v2018 = vunpack.c.l.b16 %v2006
          %v2019 = vunpack.c.l.b16 %v2007
          %v2020 = vpack.c.b16 %v2017, %v2016
          %v2021 = vpack.c.b16 %v2019, %v2018
          %v2026 = vunpack.c.l.b16 %v2008
          %v2027 = vunpack.c.l.b16 %v2009
          %v2028 = vunpack.c.l.b16 %v2010
          %v2029 = vunpack.c.l.b16 %v2011
          %v2030 = vpack.c.b16 %v2027, %v2026
          %v2031 = vpack.c.b16 %v2029, %v2028
          %vm2032 = vcmask 261120
          %v2034 = vsel %vm2032, %v2020, 0
          %v2037 = vsel %vm2032, %v2021, 0
          %v2040 = vsel %vm2032, %v2030, 0
          %v2043 = vsel %vm2032, %v2031, 0
          %2045 = vmatprep.subr.bf16.mxu0 0
          %2046 = vmatpush1.bf16.xpose.msra.mxu0 0
          %2047 = vmatprep.subr.bf16.mxu0 0
          %2048 = vmatpush1.bf16.xpose.msra.mxu0 0
          %2049 = vmatprep.subr.bf16.mxu0 0
          %2050 = vmatpush1.bf16.xpose.msra.mxu0 0
          %2051 = vmatprep.subr.bf16.mxu0 0
          %2052 = vmatpush1.bf16.xpose.msra.mxu0 0
          %2053 = vmatprep.subr.bf16.mxu0 0
          %2054 = vmatpush1.bf16.xpose.msra.mxu0 0
          %2055 = vmatprep.subr.bf16.mxu0 0
          %2056 = vmatpush1.bf16.xpose.msra.mxu0 0
          %2057 = vmatprep.subr.bf16.mxu0 0
          %2058 = vmatpush1.bf16.xpose.msra.mxu0 %v2043
          %2059 = vmatprep.subr.bf16.mxu0 0
          %2060 = vmatpush1.bf16.xpose.msra.mxu0 %v2040
          %2061 = vmatprep.subr.bf16.mxu0 0
          %2062 = vmatpush2.bf16.xpose.msra.mxu0 0
          %2063 = vmatprep.subr.bf16.mxu0 0
          %2064 = vmatpush2.bf16.xpose.msra.mxu0 0
          %2065 = vmatprep.subr.bf16.mxu0 0
          %2066 = vmatpush2.bf16.xpose.msra.mxu0 0
          %2067 = vmatprep.subr.bf16.mxu0 0
          %2068 = vmatpush2.bf16.xpose.msra.mxu0 0
          %2069 = vmatprep.subr.bf16.mxu0 0
          %2070 = vmatpush2.bf16.xpose.msra.mxu0 0
          %2071 = vmatprep.subr.bf16.mxu0 0
          %2072 = vmatpush2.bf16.xpose.msra.mxu0 0
          %2073 = vmatprep.subr.bf16.mxu0 0
          %2074 = vmatpush2.bf16.xpose.msra.mxu0 0
          %2075 = vmatprep.subr.bf16.mxu0 0
          %2076 = vmatpush2.bf16.xpose.msra.mxu0 0
          %2077 = vmatprep.mubr.bf16.mxu0 0
          %2078 = vmatmul.mubr.bf16.gmra.mxu0 %v2034
          %v2079 = vpop.f32.mrf.mxu0
          %v2080 = vadd.f32 0.0, %v2079
          %v2081 = vpop.f32.mrf.mxu0
          %v2082 = vpop.f32.mrf.mxu0
          %v2083 = vadd.f32 0.0, %v2082
          %v2084 = vpop.f32.mrf.mxu0
          %2085 = vmatprep.mubr.bf16.mxu0 0
          %2086 = vmatmul.mubr.bf16.gmra.mxu0 %v2037
          %v2087 = vpop.f32.mrf.mxu0
          %v2088 = vadd.f32 0.0, %v2087
          %v2089 = vpop.f32.mrf.mxu0
          %v2090 = vpop.f32.mrf.mxu0
          %v2091 = vadd.f32 0.0, %v2090
          %v2092 = vpop.f32.mrf.mxu0
          %2093 = vdwg.mxu0
          %v2094 = vsel %vm2000, %v2080, -1e+30
          %v2095 = vsel %vm2001, %v2083, -1e+30
          %v2096 = vsel %vm2002, %v2088, -1e+30
          %v2097 = vsel %vm2003, %v2091, -1e+30
          %v2098 = vld [vmem:[#allocation3] sm:$0xff]
          %v2099 = vld [vmem:[#allocation3 + $0x8] sm:$0xff]
          %v2100 = vld [vmem:[#allocation3 + $0x10] sm:$0xff]
          %v2101 = vld [vmem:[#allocation3 + $0x18] sm:$0xff]
          %v2102 = vsel %vm2032, %v2094, -inf
          %2103 = vmax.xlane.f32.xlu0 %v2102
          %v2104 = vpop.xlane.xlu0 %2103
          %v2105 = vsel %vm2032, %v2095, -inf
          %2106 = vmax.xlane.f32.xlu0 %v2105
          %v2107 = vpop.xlane.xlu0 %2106
          %v2108 = vsel %vm2032, %v2096, -inf
          %2109 = vmax.xlane.f32.xlu0 %v2108
          %v2110 = vpop.xlane.xlu0 %2109
          %v2111 = vsel %vm2032, %v2097, -inf
          %2112 = vmax.xlane.f32.xlu0 %v2111
          %v2113 = vpop.xlane.xlu0 %2112
          %v2114 = vmax.f32 %v2098, %v2104
          %v2115 = vmax.f32 %v2099, %v2107
          %v2116 = vmax.f32 %v2100, %v2110
          %v2117 = vmax.f32 %v2101, %v2113
          %v2118 = vsub.f32 %v2098, %v2114
          %v2119 = vsub.f32 %v2099, %v2115
          %v2120 = vsub.f32 %v2100, %v2116
          %v2121 = vsub.f32 %v2101, %v2117
          %v2122 = vmul.f32 %v2118, 1.442695
          %v2123 = vpow.pop %v2122
          %v2124 = vmul.f32 %v2119, 1.442695
          %v2125 = vpow.pop %v2124
          %v2126 = vmul.f32 %v2120, 1.442695
          %v2127 = vpow.pop %v2126
          %v2128 = vmul.f32 %v2121, 1.442695
          %v2129 = vpow.pop %v2128
          %2131 = vset.pattern.permute.xlu0 0
          %2132 = vperm.xlu0 %2131, %v2114
          %v2133 = vpop.permute.xlu0 %2132
          %2136 = vset.pattern.permute.xlu0 0
          %2137 = vperm.xlu0 %2136, %v2115
          %v2138 = vpop.permute.xlu0 %2137
          %2141 = vset.pattern.permute.xlu0 0
          %2142 = vperm.xlu0 %2141, %v2116
          %v2143 = vpop.permute.xlu0 %2142
          %2146 = vset.pattern.permute.xlu0 0
          %2147 = vperm.xlu0 %2146, %v2117
          %v2148 = vpop.permute.xlu0 %2147
          %v2150 = vsub.f32 %v2094, %v2133
          %v2151 = vsub.f32 %v2095, %v2138
          %v2152 = vsub.f32 %v2096, %v2143
          %v2153 = vsub.f32 %v2097, %v2148
          %v2154 = vmul.f32 %v2150, 1.442695
          %v2155 = vpow.pop %v2154
          %v2156 = vmul.f32 %v2151, 1.442695
          %v2157 = vpow.pop %v2156
          %v2158 = vmul.f32 %v2152, 1.442695
          %v2159 = vpow.pop %v2158
          %v2160 = vmul.f32 %v2153, 1.442695
          %v2161 = vpow.pop %v2160
          %v2162 = vld [vmem:[#allocation4] sm:$0xff]
          %v2163 = vld [vmem:[#allocation4 + $0x8] sm:$0xff]
          %v2164 = vld [vmem:[#allocation4 + $0x10] sm:$0xff]
          %v2165 = vld [vmem:[#allocation4 + $0x18] sm:$0xff]
          %v2166 = vmul.f32 %v2123, %v2162
          %v2167 = vmul.f32 %v2125, %v2163
          %v2168 = vmul.f32 %v2127, %v2164
          %v2169 = vmul.f32 %v2129, %v2165
          %v2170 = vsel %vm2032, %v2155, 0.0
          %2171 = vadd.xlane.f32.xlu0 %v2170
          %v2172 = vpop.xlane.xlu0 %2171
          %v2173 = vsel %vm2032, %v2157, 0.0
          %2174 = vadd.xlane.f32.xlu0 %v2173
          %v2175 = vpop.xlane.xlu0 %2174
          %v2176 = vsel %vm2032, %v2159, 0.0
          %2177 = vadd.xlane.f32.xlu0 %v2176
          %v2178 = vpop.xlane.xlu0 %2177
          %v2179 = vsel %vm2032, %v2161, 0.0
          %2180 = vadd.xlane.f32.xlu0 %v2179
          %v2181 = vpop.xlane.xlu0 %2180
          %v2182 = vadd.f32 %v2166, %v2172
          %v2183 = vadd.f32 %v2167, %v2175
          %v2184 = vadd.f32 %v2168, %v2178
          %v2185 = vadd.f32 %v2169, %v2181
          %vm2186 = vcmask 7168
          %2187 = vst.msk [vmem:[#allocation4] sm:$0xff] %vm2186, %v2182
          %2188 = vst.msk [vmem:[#allocation4 + $0x8] sm:$0xff] %vm2186, %v2183
          %2189 = vst.msk [vmem:[#allocation4 + $0x10] sm:$0xff] %vm2186, %v2184
          %2190 = vst.msk [vmem:[#allocation4 + $0x18] sm:$0xff] %vm2186, %v2185
          %v2191 = vld [vmem:[#allocation5] sm:$0xff]
          %v2192 = vld [vmem:[#allocation5 + $0x8] sm:$0xff]
          %v2193 = vld [vmem:[#allocation5 + $0x10] sm:$0xff]
          %v2194 = vld [vmem:[#allocation5 + $0x18] sm:$0xff]
          %2196 = vset.pattern.permute.xlu0 0
          %2197 = vperm.xlu0 %2196, %v2123
          %v2198 = vpop.permute.xlu0 %2197
          %2201 = vset.pattern.permute.xlu0 0
          %2202 = vperm.xlu0 %2201, %v2125
          %v2203 = vpop.permute.xlu0 %2202
          %2206 = vset.pattern.permute.xlu0 0
          %2207 = vperm.xlu0 %2206, %v2127
          %v2208 = vpop.permute.xlu0 %2207
          %2211 = vset.pattern.permute.xlu0 0
          %2212 = vperm.xlu0 %2211, %v2129
          %v2213 = vpop.permute.xlu0 %2212
          %v2215 = vmul.f32 %v2198, %v2191
          %v2216 = vmul.f32 %v2203, %v2192
          %v2217 = vmul.f32 %v2208, %v2193
          %v2218 = vmul.f32 %v2213, %v2194
          %v2219 = vpack.c.bf16 %v2157, %v2155
          %v2220 = vpack.c.bf16 %v2161, %v2159
          %v2221 = vld [vmem:[%s464] sm:$0xf]
          %v2222 = vld [vmem:[%s464 + $0x4] sm:$0xf]
          %v2223 = vld [vmem:[%s464 + $0x8] sm:$0xf]
          %v2224 = vld [vmem:[%s464 + $0xc] sm:$0xf]
          %v2229 = vunpack.c.l.b16 %v2221
          %v2230 = vunpack.c.l.b16 %v2222
          %v2231 = vunpack.c.l.b16 %v2223
          %v2232 = vunpack.c.l.b16 %v2224
          %v2233 = vpack.c.b16 %v2230, %v2229
          %v2234 = vpack.c.b16 %v2232, %v2231
          %v2238 = vsel %vm2032, %v2219, 0
          %v2241 = vsel %vm2032, %v2220, 0
          %2243 = vmatprep.subr.bf16.mxu0 0
          %2244 = vmatpush1.bf16.msra.mxu0 0
          %2245 = vmatprep.subr.bf16.mxu0 0
          %2246 = vmatpush1.bf16.msra.mxu0 0
          %2247 = vmatprep.subr.bf16.mxu0 0
          %2248 = vmatpush1.bf16.msra.mxu0 0
          %2249 = vmatprep.subr.bf16.mxu0 0
          %2250 = vmatpush1.bf16.msra.mxu0 0
          %2251 = vmatprep.subr.bf16.mxu0 0
          %2252 = vmatpush1.bf16.msra.mxu0 0
          %2253 = vmatprep.subr.bf16.mxu0 0
          %2254 = vmatpush1.bf16.msra.mxu0 0
          %2255 = vmatprep.subr.bf16.mxu0 0
          %2256 = vmatpush1.bf16.msra.mxu0 %v2234
          %2257 = vmatprep.subr.bf16.mxu0 0
          %2258 = vmatpush1.bf16.msra.mxu0 %v2233
          %2259 = vmatprep.subr.bf16.mxu0 0
          %2260 = vmatpush2.bf16.msra.mxu0 0
          %2261 = vmatprep.subr.bf16.mxu0 0
          %2262 = vmatpush2.bf16.msra.mxu0 0
          %2263 = vmatprep.subr.bf16.mxu0 0
          %2264 = vmatpush2.bf16.msra.mxu0 0
          %2265 = vmatprep.subr.bf16.mxu0 0
          %2266 = vmatpush2.bf16.msra.mxu0 0
          %2267 = vmatprep.subr.bf16.mxu0 0
          %2268 = vmatpush2.bf16.msra.mxu0 0
          %2269 = vmatprep.subr.bf16.mxu0 0
          %2270 = vmatpush2.bf16.msra.mxu0 0
          %2271 = vmatprep.subr.bf16.mxu0 0
          %2272 = vmatpush2.bf16.msra.mxu0 0
          %2273 = vmatprep.subr.bf16.mxu0 0
          %2274 = vmatpush2.bf16.msra.mxu0 0
          %2275 = vmatprep.mubr.bf16.mxu0 0
          %2276 = vmatmul.mubr.bf16.gmra.mxu0 %v2238
          %v2277 = vpop.f32.mrf.mxu0
          %v2278 = vadd.f32 0.0, %v2277
          %v2279 = vpop.f32.mrf.mxu0
          %v2280 = vpop.f32.mrf.mxu0
          %v2281 = vadd.f32 0.0, %v2280
          %v2282 = vpop.f32.mrf.mxu0
          %2283 = vmatprep.mubr.bf16.mxu0 0
          %2284 = vmatmul.mubr.bf16.gmra.mxu0 %v2241
          %v2285 = vpop.f32.mrf.mxu0
          %v2286 = vadd.f32 0.0, %v2285
          %v2287 = vpop.f32.mrf.mxu0
          %v2288 = vpop.f32.mrf.mxu0
          %v2289 = vadd.f32 0.0, %v2288
          %v2290 = vpop.f32.mrf.mxu0
          %2291 = vdwg.mxu0
          %v2292 = vadd.f32 %v2215, %v2278
          %v2293 = vadd.f32 %v2216, %v2281
          %v2294 = vadd.f32 %v2217, %v2286
          %v2295 = vadd.f32 %v2218, %v2289
          %2296 = vst.msk [vmem:[#allocation5] sm:$0xff] %vm2032, %v2292
          %2297 = vst.msk [vmem:[#allocation5 + $0x8] sm:$0xff] %vm2032, %v2293
          %2298 = vst.msk [vmem:[#allocation5 + $0x10] sm:$0xff] %vm2032, %v2294
          %2299 = vst.msk [vmem:[#allocation5 + $0x18] sm:$0xff] %vm2032, %v2295
          %2300 = vst.msk [vmem:[#allocation3] sm:$0xff] %vm2186, %v2114
          %2301 = vst.msk [vmem:[#allocation3 + $0x8] sm:$0xff] %vm2186, %v2115
          %2302 = vst.msk [vmem:[#allocation3 + $0x10] sm:$0xff] %vm2186, %v2116
          %2303 = vst.msk [vmem:[#allocation3 + $0x18] sm:$0xff] %vm2186, %v2117
          %s2304 = scalar_lea.vmem [#allocation2], 16
          %v2305 = vld [vmem:[%s2304] sm:$0xf]
          %v2306 = vld [vmem:[%s2304 + $0x4] sm:$0xf]
          %v2307 = vld [vmem:[%s2304 + $0x8] sm:$0xf]
          %v2308 = vld [vmem:[%s2304 + $0xc] sm:$0xf]
          %s2309 = scalar_lea.vmem %s450, 16
          %v2310 = vld [vmem:[%s2309] sm:$0xf]
          %v2311 = vld [vmem:[%s2309 + $0x4] sm:$0xf]
          %v2312 = vld [vmem:[%s2309 + $0x8] sm:$0xf]
          %v2313 = vld [vmem:[%s2309 + $0xc] sm:$0xf]
          %v2318 = vunpack.c.l.b16 %v2305
          %v2319 = vunpack.c.l.b16 %v2306
          %v2320 = vunpack.c.l.b16 %v2307
          %v2321 = vunpack.c.l.b16 %v2308
          %v2322 = vpack.c.b16 %v2319, %v2318
          %v2323 = vpack.c.b16 %v2321, %v2320
          %v2328 = vunpack.c.l.b16 %v2310
          %v2329 = vunpack.c.l.b16 %v2311
          %v2330 = vunpack.c.l.b16 %v2312
          %v2331 = vunpack.c.l.b16 %v2313
          %v2332 = vpack.c.b16 %v2329, %v2328
          %v2333 = vpack.c.b16 %v2331, %v2330
          %v2335 = vsel %vm2032, %v2322, 0
          %v2338 = vsel %vm2032, %v2323, 0
          %v2341 = vsel %vm2032, %v2332, 0
          %v2344 = vsel %vm2032, %v2333, 0
          %2346 = vmatprep.subr.bf16.mxu0 0
          %2347 = vmatpush1.bf16.xpose.msra.mxu0 0
          %2348 = vmatprep.subr.bf16.mxu0 0
          %2349 = vmatpush1.bf16.xpose.msra.mxu0 0
          %2350 = vmatprep.subr.bf16.mxu0 0
          %2351 = vmatpush1.bf16.xpose.msra.mxu0 0
          %2352 = vmatprep.subr.bf16.mxu0 0
          %2353 = vmatpush1.bf16.xpose.msra.mxu0 0
          %2354 = vmatprep.subr.bf16.mxu0 0
          %2355 = vmatpush1.bf16.xpose.msra.mxu0 0
          %2356 = vmatprep.subr.bf16.mxu0 0
          %2357 = vmatpush1.bf16.xpose.msra.mxu0 0
          %2358 = vmatprep.subr.bf16.mxu0 0
          %2359 = vmatpush1.bf16.xpose.msra.mxu0 %v2344
          %2360 = vmatprep.subr.bf16.mxu0 0
          %2361 = vmatpush1.bf16.xpose.msra.mxu0 %v2341
          %2362 = vmatprep.subr.bf16.mxu0 0
          %2363 = vmatpush2.bf16.xpose.msra.mxu0 0
          %2364 = vmatprep.subr.bf16.mxu0 0
          %2365 = vmatpush2.bf16.xpose.msra.mxu0 0
          %2366 = vmatprep.subr.bf16.mxu0 0
          %2367 = vmatpush2.bf16.xpose.msra.mxu0 0
          %2368 = vmatprep.subr.bf16.mxu0 0
          %2369 = vmatpush2.bf16.xpose.msra.mxu0 0
          %2370 = vmatprep.subr.bf16.mxu0 0
          %2371 = vmatpush2.bf16.xpose.msra.mxu0 0
          %2372 = vmatprep.subr.bf16.mxu0 0
          %2373 = vmatpush2.bf16.xpose.msra.mxu0 0
          %2374 = vmatprep.subr.bf16.mxu0 0
          %2375 = vmatpush2.bf16.xpose.msra.mxu0 0
          %2376 = vmatprep.subr.bf16.mxu0 0
          %2377 = vmatpush2.bf16.xpose.msra.mxu0 0
          %2378 = vmatprep.mubr.bf16.mxu0 0
          %2379 = vmatmul.mubr.bf16.gmra.mxu0 %v2335
          %v2380 = vpop.f32.mrf.mxu0
          %v2381 = vadd.f32 0.0, %v2380
          %v2382 = vpop.f32.mrf.mxu0
          %v2383 = vpop.f32.mrf.mxu0
          %v2384 = vadd.f32 0.0, %v2383
          %v2385 = vpop.f32.mrf.mxu0
          %2386 = vmatprep.mubr.bf16.mxu0 0
          %2387 = vmatmul.mubr.bf16.gmra.mxu0 %v2338
          %v2388 = vpop.f32.mrf.mxu0
          %v2389 = vadd.f32 0.0, %v2388
          %v2390 = vpop.f32.mrf.mxu0
          %v2391 = vpop.f32.mrf.mxu0
          %v2392 = vadd.f32 0.0, %v2391
          %v2393 = vpop.f32.mrf.mxu0
          %2394 = vdwg.mxu0
          %v2395 = vsel %vm2000, %v2381, -1e+30
          %v2396 = vsel %vm2001, %v2384, -1e+30
          %v2397 = vsel %vm2002, %v2389, -1e+30
          %v2398 = vsel %vm2003, %v2392, -1e+30
          %s2399 = scalar_lea.vmem [#allocation3], 32
          %v2400 = vld [vmem:[%s2399] sm:$0xff]
          %v2401 = vld [vmem:[%s2399 + $0x8] sm:$0xff]
          %v2402 = vld [vmem:[%s2399 + $0x10] sm:$0xff]
          %v2403 = vld [vmem:[%s2399 + $0x18] sm:$0xff]
          %v2404 = vsel %vm2032, %v2395, -inf
          %2405 = vmax.xlane.f32.xlu0 %v2404
          %v2406 = vpop.xlane.xlu0 %2405
          %v2407 = vsel %vm2032, %v2396, -inf
          %2408 = vmax.xlane.f32.xlu0 %v2407
          %v2409 = vpop.xlane.xlu0 %2408
          %v2410 = vsel %vm2032, %v2397, -inf
          %2411 = vmax.xlane.f32.xlu0 %v2410
          %v2412 = vpop.xlane.xlu0 %2411
          %v2413 = vsel %vm2032, %v2398, -inf
          %2414 = vmax.xlane.f32.xlu0 %v2413
          %v2415 = vpop.xlane.xlu0 %2414
          %v2416 = vmax.f32 %v2400, %v2406
          %v2417 = vmax.f32 %v2401, %v2409
          %v2418 = vmax.f32 %v2402, %v2412
          %v2419 = vmax.f32 %v2403, %v2415
          %v2420 = vsub.f32 %v2400, %v2416
          %v2421 = vsub.f32 %v2401, %v2417
          %v2422 = vsub.f32 %v2402, %v2418
          %v2423 = vsub.f32 %v2403, %v2419
          %v2424 = vmul.f32 %v2420, 1.442695
          %v2425 = vpow.pop %v2424
          %v2426 = vmul.f32 %v2421, 1.442695
          %v2427 = vpow.pop %v2426
          %v2428 = vmul.f32 %v2422, 1.442695
          %v2429 = vpow.pop %v2428
          %v2430 = vmul.f32 %v2423, 1.442695
          %v2431 = vpow.pop %v2430
          %2433 = vset.pattern.permute.xlu0 0
          %2434 = vperm.xlu0 %2433, %v2416
          %v2435 = vpop.permute.xlu0 %2434
          %2438 = vset.pattern.permute.xlu0 0
          %2439 = vperm.xlu0 %2438, %v2417
          %v2440 = vpop.permute.xlu0 %2439
          %2443 = vset.pattern.permute.xlu0 0
          %2444 = vperm.xlu0 %2443, %v2418
          %v2445 = vpop.permute.xlu0 %2444
          %2448 = vset.pattern.permute.xlu0 0
          %2449 = vperm.xlu0 %2448, %v2419
          %v2450 = vpop.permute.xlu0 %2449
          %v2452 = vsub.f32 %v2395, %v2435
          %v2453 = vsub.f32 %v2396, %v2440
          %v2454 = vsub.f32 %v2397, %v2445
          %v2455 = vsub.f32 %v2398, %v2450
          %v2456 = vmul.f32 %v2452, 1.442695
          %v2457 = vpow.pop %v2456
          %v2458 = vmul.f32 %v2453, 1.442695
          %v2459 = vpow.pop %v2458
          %v2460 = vmul.f32 %v2454, 1.442695
          %v2461 = vpow.pop %v2460
          %v2462 = vmul.f32 %v2455, 1.442695
          %v2463 = vpow.pop %v2462
          %s2464 = scalar_lea.vmem [#allocation4], 32
          %v2465 = vld [vmem:[%s2464] sm:$0xff]
          %v2466 = vld [vmem:[%s2464 + $0x8] sm:$0xff]
          %v2467 = vld [vmem:[%s2464 + $0x10] sm:$0xff]
          %v2468 = vld [vmem:[%s2464 + $0x18] sm:$0xff]
          %v2469 = vmul.f32 %v2425, %v2465
          %v2470 = vmul.f32 %v2427, %v2466
          %v2471 = vmul.f32 %v2429, %v2467
          %v2472 = vmul.f32 %v2431, %v2468
          %v2473 = vsel %vm2032, %v2457, 0.0
          %2474 = vadd.xlane.f32.xlu0 %v2473
          %v2475 = vpop.xlane.xlu0 %2474
          %v2476 = vsel %vm2032, %v2459, 0.0
          %2477 = vadd.xlane.f32.xlu0 %v2476
          %v2478 = vpop.xlane.xlu0 %2477
          %v2479 = vsel %vm2032, %v2461, 0.0
          %2480 = vadd.xlane.f32.xlu0 %v2479
          %v2481 = vpop.xlane.xlu0 %2480
          %v2482 = vsel %vm2032, %v2463, 0.0
          %2483 = vadd.xlane.f32.xlu0 %v2482
          %v2484 = vpop.xlane.xlu0 %2483
          %v2485 = vadd.f32 %v2469, %v2475
          %v2486 = vadd.f32 %v2470, %v2478
          %v2487 = vadd.f32 %v2471, %v2481
          %v2488 = vadd.f32 %v2472, %v2484
          %2489 = vst.msk [vmem:[%s2464] sm:$0xff] %vm2186, %v2485
          %2490 = vst.msk [vmem:[%s2464 + $0x8] sm:$0xff] %vm2186, %v2486
          %2491 = vst.msk [vmem:[%s2464 + $0x10] sm:$0xff] %vm2186, %v2487
          %2492 = vst.msk [vmem:[%s2464 + $0x18] sm:$0xff] %vm2186, %v2488
          %s2493 = scalar_lea.vmem [#allocation5], 32
          %v2494 = vld [vmem:[%s2493] sm:$0xff]
          %v2495 = vld [vmem:[%s2493 + $0x8] sm:$0xff]
          %v2496 = vld [vmem:[%s2493 + $0x10] sm:$0xff]
          %v2497 = vld [vmem:[%s2493 + $0x18] sm:$0xff]
          %2499 = vset.pattern.permute.xlu0 0
          %2500 = vperm.xlu0 %2499, %v2425
          %v2501 = vpop.permute.xlu0 %2500
          %2504 = vset.pattern.permute.xlu0 0
          %2505 = vperm.xlu0 %2504, %v2427
          %v2506 = vpop.permute.xlu0 %2505
          %2509 = vset.pattern.permute.xlu0 0
          %2510 = vperm.xlu0 %2509, %v2429
          %v2511 = vpop.permute.xlu0 %2510
          %2514 = vset.pattern.permute.xlu0 0
          %2515 = vperm.xlu0 %2514, %v2431
          %v2516 = vpop.permute.xlu0 %2515
          %v2518 = vmul.f32 %v2501, %v2494
          %v2519 = vmul.f32 %v2506, %v2495
          %v2520 = vmul.f32 %v2511, %v2496
          %v2521 = vmul.f32 %v2516, %v2497
          %v2522 = vpack.c.bf16 %v2459, %v2457
          %v2523 = vpack.c.bf16 %v2463, %v2461
          %s2524 = scalar_lea.vmem %s464, 16
          %v2525 = vld [vmem:[%s2524] sm:$0xf]
          %v2526 = vld [vmem:[%s2524 + $0x4] sm:$0xf]
          %v2527 = vld [vmem:[%s2524 + $0x8] sm:$0xf]
          %v2528 = vld [vmem:[%s2524 + $0xc] sm:$0xf]
          %v2533 = vunpack.c.l.b16 %v2525
          %v2534 = vunpack.c.l.b16 %v2526
          %v2535 = vunpack.c.l.b16 %v2527
          %v2536 = vunpack.c.l.b16 %v2528
          %v2537 = vpack.c.b16 %v2534, %v2533
          %v2538 = vpack.c.b16 %v2536, %v2535
          %v2542 = vsel %vm2032, %v2522, 0
          %v2545 = vsel %vm2032, %v2523, 0
          %2547 = vmatprep.subr.bf16.mxu0 0
          %2548 = vmatpush1.bf16.msra.mxu0 0
          %2549 = vmatprep.subr.bf16.mxu0 0
          %2550 = vmatpush1.bf16.msra.mxu0 0
          %2551 = vmatprep.subr.bf16.mxu0 0
          %2552 = vmatpush1.bf16.msra.mxu0 0
          %2553 = vmatprep.subr.bf16.mxu0 0
          %2554 = vmatpush1.bf16.msra.mxu0 0
          %2555 = vmatprep.subr.bf16.mxu0 0
          %2556 = vmatpush1.bf16.msra.mxu0 0
          %2557 = vmatprep.subr.bf16.mxu0 0
          %2558 = vmatpush1.bf16.msra.mxu0 0
          %2559 = vmatprep.subr.bf16.mxu0 0
          %2560 = vmatpush1.bf16.msra.mxu0 %v2538
          %2561 = vmatprep.subr.bf16.mxu0 0
          %2562 = vmatpush1.bf16.msra.mxu0 %v2537
          %2563 = vmatprep.subr.bf16.mxu0 0
          %2564 = vmatpush2.bf16.msra.mxu0 0
          %2565 = vmatprep.subr.bf16.mxu0 0
          %2566 = vmatpush2.bf16.msra.mxu0 0
          %2567 = vmatprep.subr.bf16.mxu0 0
          %2568 = vmatpush2.bf16.msra.mxu0 0
          %2569 = vmatprep.subr.bf16.mxu0 0
          %2570 = vmatpush2.bf16.msra.mxu0 0
          %2571 = vmatprep.subr.bf16.mxu0 0
          %2572 = vmatpush2.bf16.msra.mxu0 0
          %2573 = vmatprep.subr.bf16.mxu0 0
          %2574 = vmatpush2.bf16.msra.mxu0 0
          %2575 = vmatprep.subr.bf16.mxu0 0
          %2576 = vmatpush2.bf16.msra.mxu0 0
          %2577 = vmatprep.subr.bf16.mxu0 0
          %2578 = vmatpush2.bf16.msra.mxu0 0
          %2579 = vmatprep.mubr.bf16.mxu0 0
          %2580 = vmatmul.mubr.bf16.gmra.mxu0 %v2542
          %v2581 = vpop.f32.mrf.mxu0
          %v2582 = vadd.f32 0.0, %v2581
          %v2583 = vpop.f32.mrf.mxu0
          %v2584 = vpop.f32.mrf.mxu0
          %v2585 = vadd.f32 0.0, %v2584
          %v2586 = vpop.f32.mrf.mxu0
          %2587 = vmatprep.mubr.bf16.mxu0 0
          %2588 = vmatmul.mubr.bf16.gmra.mxu0 %v2545
          %v2589 = vpop.f32.mrf.mxu0
          %v2590 = vadd.f32 0.0, %v2589
          %v2591 = vpop.f32.mrf.mxu0
          %v2592 = vpop.f32.mrf.mxu0
          %v2593 = vadd.f32 0.0, %v2592
          %v2594 = vpop.f32.mrf.mxu0
          %2595 = vdwg.mxu0
          %v2596 = vadd.f32 %v2518, %v2582
          %v2597 = vadd.f32 %v2519, %v2585
          %v2598 = vadd.f32 %v2520, %v2590
          %v2599 = vadd.f32 %v2521, %v2593
          %2600 = vst.msk [vmem:[%s2493] sm:$0xff] %vm2032, %v2596
          %2601 = vst.msk [vmem:[%s2493 + $0x8] sm:$0xff] %vm2032, %v2597
          %2602 = vst.msk [vmem:[%s2493 + $0x10] sm:$0xff] %vm2032, %v2598
          %2603 = vst.msk [vmem:[%s2493 + $0x18] sm:$0xff] %vm2032, %v2599
          %2604 = vst.msk [vmem:[%s2399] sm:$0xff] %vm2186, %v2416
          %2605 = vst.msk [vmem:[%s2399 + $0x8] sm:$0xff] %vm2186, %v2417
          %2606 = vst.msk [vmem:[%s2399 + $0x10] sm:$0xff] %vm2186, %v2418
          %2607 = vst.msk [vmem:[%s2399 + $0x18] sm:$0xff] %vm2186, %v2419
          %s2608 = scalar_lea.vmem [#allocation2], 32
          %v2609 = vld [vmem:[%s2608] sm:$0xf]
          %v2610 = vld [vmem:[%s2608 + $0x4] sm:$0xf]
          %v2611 = vld [vmem:[%s2608 + $0x8] sm:$0xf]
          %v2612 = vld [vmem:[%s2608 + $0xc] sm:$0xf]
          %s2613 = scalar_lea.vmem %s450, 32
          %v2614 = vld [vmem:[%s2613] sm:$0xf]
          %v2615 = vld [vmem:[%s2613 + $0x4] sm:$0xf]
          %v2616 = vld [vmem:[%s2613 + $0x8] sm:$0xf]
          %v2617 = vld [vmem:[%s2613 + $0xc] sm:$0xf]
          %v2622 = vunpack.c.l.b16 %v2609
          %v2623 = vunpack.c.l.b16 %v2610
          %v2624 = vunpack.c.l.b16 %v2611
          %v2625 = vunpack.c.l.b16 %v2612
          %v2626 = vpack.c.b16 %v2623, %v2622
          %v2627 = vpack.c.b16 %v2625, %v2624
          %v2632 = vunpack.c.l.b16 %v2614
          %v2633 = vunpack.c.l.b16 %v2615
          %v2634 = vunpack.c.l.b16 %v2616
          %v2635 = vunpack.c.l.b16 %v2617
          %v2636 = vpack.c.b16 %v2633, %v2632
          %v2637 = vpack.c.b16 %v2635, %v2634
          %v2639 = vsel %vm2032, %v2626, 0
          %v2642 = vsel %vm2032, %v2627, 0
          %v2645 = vsel %vm2032, %v2636, 0
          %v2648 = vsel %vm2032, %v2637, 0
          %2650 = vmatprep.subr.bf16.mxu0 0
          %2651 = vmatpush1.bf16.xpose.msra.mxu0 0
          %2652 = vmatprep.subr.bf16.mxu0 0
          %2653 = vmatpush1.bf16.xpose.msra.mxu0 0
          %2654 = vmatprep.subr.bf16.mxu0 0
          %2655 = vmatpush1.bf16.xpose.msra.mxu0 0
          %2656 = vmatprep.subr.bf16.mxu0 0
          %2657 = vmatpush1.bf16.xpose.msra.mxu0 0
          %2658 = vmatprep.subr.bf16.mxu0 0
          %2659 = vmatpush1.bf16.xpose.msra.mxu0 0
          %2660 = vmatprep.subr.bf16.mxu0 0
          %2661 = vmatpush1.bf16.xpose.msra.mxu0 0
          %2662 = vmatprep.subr.bf16.mxu0 0
          %2663 = vmatpush1.bf16.xpose.msra.mxu0 %v2648
          %2664 = vmatprep.subr.bf16.mxu0 0
          %2665 = vmatpush1.bf16.xpose.msra.mxu0 %v2645
          %2666 = vmatprep.subr.bf16.mxu0 0
          %2667 = vmatpush2.bf16.xpose.msra.mxu0 0
          %2668 = vmatprep.subr.bf16.mxu0 0
          %2669 = vmatpush2.bf16.xpose.msra.mxu0 0
          %2670 = vmatprep.subr.bf16.mxu0 0
          %2671 = vmatpush2.bf16.xpose.msra.mxu0 0
          %2672 = vmatprep.subr.bf16.mxu0 0
          %2673 = vmatpush2.bf16.xpose.msra.mxu0 0
          %2674 = vmatprep.subr.bf16.mxu0 0
          %2675 = vmatpush2.bf16.xpose.msra.mxu0 0
          %2676 = vmatprep.subr.bf16.mxu0 0
          %2677 = vmatpush2.bf16.xpose.msra.mxu0 0
          %2678 = vmatprep.subr.bf16.mxu0 0
          %2679 = vmatpush2.bf16.xpose.msra.mxu0 0
          %2680 = vmatprep.subr.bf16.mxu0 0
          %2681 = vmatpush2.bf16.xpose.msra.mxu0 0
          %2682 = vmatprep.mubr.bf16.mxu0 0
          %2683 = vmatmul.mubr.bf16.gmra.mxu0 %v2639
          %v2684 = vpop.f32.mrf.mxu0
          %v2685 = vadd.f32 0.0, %v2684
          %v2686 = vpop.f32.mrf.mxu0
          %v2687 = vpop.f32.mrf.mxu0
          %v2688 = vadd.f32 0.0, %v2687
          %v2689 = vpop.f32.mrf.mxu0
          %2690 = vmatprep.mubr.bf16.mxu0 0
          %2691 = vmatmul.mubr.bf16.gmra.mxu0 %v2642
          %v2692 = vpop.f32.mrf.mxu0
          %v2693 = vadd.f32 0.0, %v2692
          %v2694 = vpop.f32.mrf.mxu0
          %v2695 = vpop.f32.mrf.mxu0
          %v2696 = vadd.f32 0.0, %v2695
          %v2697 = vpop.f32.mrf.mxu0
          %2698 = vdwg.mxu0
          %v2699 = vsel %vm2000, %v2685, -1e+30
          %v2700 = vsel %vm2001, %v2688, -1e+30
          %v2701 = vsel %vm2002, %v2693, -1e+30
          %v2702 = vsel %vm2003, %v2696, -1e+30
          %s2703 = scalar_lea.vmem [#allocation3], 64
          %v2704 = vld [vmem:[%s2703] sm:$0xff]
          %v2705 = vld [vmem:[%s2703 + $0x8] sm:$0xff]
          %v2706 = vld [vmem:[%s2703 + $0x10] sm:$0xff]
          %v2707 = vld [vmem:[%s2703 + $0x18] sm:$0xff]
          %v2708 = vsel %vm2032, %v2699, -inf
          %2709 = vmax.xlane.f32.xlu0 %v2708
          %v2710 = vpop.xlane.xlu0 %2709
          %v2711 = vsel %vm2032, %v2700, -inf
          %2712 = vmax.xlane.f32.xlu0 %v2711
          %v2713 = vpop.xlane.xlu0 %2712
          %v2714 = vsel %vm2032, %v2701, -inf
          %2715 = vmax.xlane.f32.xlu0 %v2714
          %v2716 = vpop.xlane.xlu0 %2715
          %v2717 = vsel %vm2032, %v2702, -inf
          %2718 = vmax.xlane.f32.xlu0 %v2717
          %v2719 = vpop.xlane.xlu0 %2718
          %v2720 = vmax.f32 %v2704, %v2710
          %v2721 = vmax.f32 %v2705, %v2713
          %v2722 = vmax.f32 %v2706, %v2716
          %v2723 = vmax.f32 %v2707, %v2719
          %v2724 = vsub.f32 %v2704, %v2720
          %v2725 = vsub.f32 %v2705, %v2721
          %v2726 = vsub.f32 %v2706, %v2722
          %v2727 = vsub.f32 %v2707, %v2723
          %v2728 = vmul.f32 %v2724, 1.442695
          %v2729 = vpow.pop %v2728
          %v2730 = vmul.f32 %v2725, 1.442695
          %v2731 = vpow.pop %v2730
          %v2732 = vmul.f32 %v2726, 1.442695
          %v2733 = vpow.pop %v2732
          %v2734 = vmul.f32 %v2727, 1.442695
          %v2735 = vpow.pop %v2734
          %2737 = vset.pattern.permute.xlu0 0
          %2738 = vperm.xlu0 %2737, %v2720
          %v2739 = vpop.permute.xlu0 %2738
          %2742 = vset.pattern.permute.xlu0 0
          %2743 = vperm.xlu0 %2742, %v2721
          %v2744 = vpop.permute.xlu0 %2743
          %2747 = vset.pattern.permute.xlu0 0
          %2748 = vperm.xlu0 %2747, %v2722
          %v2749 = vpop.permute.xlu0 %2748
          %2752 = vset.pattern.permute.xlu0 0
          %2753 = vperm.xlu0 %2752, %v2723
          %v2754 = vpop.permute.xlu0 %2753
          %v2756 = vsub.f32 %v2699, %v2739
          %v2757 = vsub.f32 %v2700, %v2744
          %v2758 = vsub.f32 %v2701, %v2749
          %v2759 = vsub.f32 %v2702, %v2754
          %v2760 = vmul.f32 %v2756, 1.442695
          %v2761 = vpow.pop %v2760
          %v2762 = vmul.f32 %v2757, 1.442695
          %v2763 = vpow.pop %v2762
          %v2764 = vmul.f32 %v2758, 1.442695
          %v2765 = vpow.pop %v2764
          %v2766 = vmul.f32 %v2759, 1.442695
          %v2767 = vpow.pop %v2766
          %s2768 = scalar_lea.vmem [#allocation4], 64
          %v2769 = vld [vmem:[%s2768] sm:$0xff]
          %v2770 = vld [vmem:[%s2768 + $0x8] sm:$0xff]
          %v2771 = vld [vmem:[%s2768 + $0x10] sm:$0xff]
          %v2772 = vld [vmem:[%s2768 + $0x18] sm:$0xff]
          %v2773 = vmul.f32 %v2729, %v2769
          %v2774 = vmul.f32 %v2731, %v2770
          %v2775 = vmul.f32 %v2733, %v2771
          %v2776 = vmul.f32 %v2735, %v2772
          %v2777 = vsel %vm2032, %v2761, 0.0
          %2778 = vadd.xlane.f32.xlu0 %v2777
          %v2779 = vpop.xlane.xlu0 %2778
          %v2780 = vsel %vm2032, %v2763, 0.0
          %2781 = vadd.xlane.f32.xlu0 %v2780
          %v2782 = vpop.xlane.xlu0 %2781
          %v2783 = vsel %vm2032, %v2765, 0.0
          %2784 = vadd.xlane.f32.xlu0 %v2783
          %v2785 = vpop.xlane.xlu0 %2784
          %v2786 = vsel %vm2032, %v2767, 0.0
          %2787 = vadd.xlane.f32.xlu0 %v2786
          %v2788 = vpop.xlane.xlu0 %2787
          %v2789 = vadd.f32 %v2773, %v2779
          %v2790 = vadd.f32 %v2774, %v2782
          %v2791 = vadd.f32 %v2775, %v2785
          %v2792 = vadd.f32 %v2776, %v2788
          %2793 = vst.msk [vmem:[%s2768] sm:$0xff] %vm2186, %v2789
          %2794 = vst.msk [vmem:[%s2768 + $0x8] sm:$0xff] %vm2186, %v2790
          %2795 = vst.msk [vmem:[%s2768 + $0x10] sm:$0xff] %vm2186, %v2791
          %2796 = vst.msk [vmem:[%s2768 + $0x18] sm:$0xff] %vm2186, %v2792
          %s2797 = scalar_lea.vmem [#allocation5], 64
          %v2798 = vld [vmem:[%s2797] sm:$0xff]
          %v2799 = vld [vmem:[%s2797 + $0x8] sm:$0xff]
          %v2800 = vld [vmem:[%s2797 + $0x10] sm:$0xff]
          %v2801 = vld [vmem:[%s2797 + $0x18] sm:$0xff]
          %2803 = vset.pattern.permute.xlu0 0
          %2804 = vperm.xlu0 %2803, %v2729
          %v2805 = vpop.permute.xlu0 %2804
          %2808 = vset.pattern.permute.xlu0 0
          %2809 = vperm.xlu0 %2808, %v2731
          %v2810 = vpop.permute.xlu0 %2809
          %2813 = vset.pattern.permute.xlu0 0
          %2814 = vperm.xlu0 %2813, %v2733
          %v2815 = vpop.permute.xlu0 %2814
          %2818 = vset.pattern.permute.xlu0 0
          %2819 = vperm.xlu0 %2818, %v2735
          %v2820 = vpop.permute.xlu0 %2819
          %v2822 = vmul.f32 %v2805, %v2798
          %v2823 = vmul.f32 %v2810, %v2799
          %v2824 = vmul.f32 %v2815, %v2800
          %v2825 = vmul.f32 %v2820, %v2801
          %v2826 = vpack.c.bf16 %v2763, %v2761
          %v2827 = vpack.c.bf16 %v2767, %v2765
          %s2828 = scalar_lea.vmem %s464, 32
          %v2829 = vld [vmem:[%s2828] sm:$0xf]
          %v2830 = vld [vmem:[%s2828 + $0x4] sm:$0xf]
          %v2831 = vld [vmem:[%s2828 + $0x8] sm:$0xf]
          %v2832 = vld [vmem:[%s2828 + $0xc] sm:$0xf]
          %v2837 = vunpack.c.l.b16 %v2829
          %v2838 = vunpack.c.l.b16 %v2830
          %v2839 = vunpack.c.l.b16 %v2831
          %v2840 = vunpack.c.l.b16 %v2832
          %v2841 = vpack.c.b16 %v2838, %v2837
          %v2842 = vpack.c.b16 %v2840, %v2839
          %v2846 = vsel %vm2032, %v2826, 0
          %v2849 = vsel %vm2032, %v2827, 0
          %2851 = vmatprep.subr.bf16.mxu0 0
          %2852 = vmatpush1.bf16.msra.mxu0 0
          %2853 = vmatprep.subr.bf16.mxu0 0
          %2854 = vmatpush1.bf16.msra.mxu0 0
          %2855 = vmatprep.subr.bf16.mxu0 0
          %2856 = vmatpush1.bf16.msra.mxu0 0
          %2857 = vmatprep.subr.bf16.mxu0 0
          %2858 = vmatpush1.bf16.msra.mxu0 0
          %2859 = vmatprep.subr.bf16.mxu0 0
          %2860 = vmatpush1.bf16.msra.mxu0 0
          %2861 = vmatprep.subr.bf16.mxu0 0
          %2862 = vmatpush1.bf16.msra.mxu0 0
          %2863 = vmatprep.subr.bf16.mxu0 0
          %2864 = vmatpush1.bf16.msra.mxu0 %v2842
          %2865 = vmatprep.subr.bf16.mxu0 0
          %2866 = vmatpush1.bf16.msra.mxu0 %v2841
          %2867 = vmatprep.subr.bf16.mxu0 0
          %2868 = vmatpush2.bf16.msra.mxu0 0
          %2869 = vmatprep.subr.bf16.mxu0 0
          %2870 = vmatpush2.bf16.msra.mxu0 0
          %2871 = vmatprep.subr.bf16.mxu0 0
          %2872 = vmatpush2.bf16.msra.mxu0 0
          %2873 = vmatprep.subr.bf16.mxu0 0
          %2874 = vmatpush2.bf16.msra.mxu0 0
          %2875 = vmatprep.subr.bf16.mxu0 0
          %2876 = vmatpush2.bf16.msra.mxu0 0
          %2877 = vmatprep.subr.bf16.mxu0 0
          %2878 = vmatpush2.bf16.msra.mxu0 0
          %2879 = vmatprep.subr.bf16.mxu0 0
          %2880 = vmatpush2.bf16.msra.mxu0 0
          %2881 = vmatprep.subr.bf16.mxu0 0
          %2882 = vmatpush2.bf16.msra.mxu0 0
          %2883 = vmatprep.mubr.bf16.mxu0 0
          %2884 = vmatmul.mubr.bf16.gmra.mxu0 %v2846
          %v2885 = vpop.f32.mrf.mxu0
          %v2886 = vadd.f32 0.0, %v2885
          %v2887 = vpop.f32.mrf.mxu0
          %v2888 = vpop.f32.mrf.mxu0
          %v2889 = vadd.f32 0.0, %v2888
          %v2890 = vpop.f32.mrf.mxu0
          %2891 = vmatprep.mubr.bf16.mxu0 0
          %2892 = vmatmul.mubr.bf16.gmra.mxu0 %v2849
          %v2893 = vpop.f32.mrf.mxu0
          %v2894 = vadd.f32 0.0, %v2893
          %v2895 = vpop.f32.mrf.mxu0
          %v2896 = vpop.f32.mrf.mxu0
          %v2897 = vadd.f32 0.0, %v2896
          %v2898 = vpop.f32.mrf.mxu0
          %2899 = vdwg.mxu0
          %v2900 = vadd.f32 %v2822, %v2886
          %v2901 = vadd.f32 %v2823, %v2889
          %v2902 = vadd.f32 %v2824, %v2894
          %v2903 = vadd.f32 %v2825, %v2897
          %2904 = vst.msk [vmem:[%s2797] sm:$0xff] %vm2032, %v2900
          %2905 = vst.msk [vmem:[%s2797 + $0x8] sm:$0xff] %vm2032, %v2901
          %2906 = vst.msk [vmem:[%s2797 + $0x10] sm:$0xff] %vm2032, %v2902
          %2907 = vst.msk [vmem:[%s2797 + $0x18] sm:$0xff] %vm2032, %v2903
          %2908 = vst.msk [vmem:[%s2703] sm:$0xff] %vm2186, %v2720
          %2909 = vst.msk [vmem:[%s2703 + $0x8] sm:$0xff] %vm2186, %v2721
          %2910 = vst.msk [vmem:[%s2703 + $0x10] sm:$0xff] %vm2186, %v2722
          %2911 = vst.msk [vmem:[%s2703 + $0x18] sm:$0xff] %vm2186, %v2723
          %s2912 = scalar_lea.vmem [#allocation2], 48
          %v2913 = vld [vmem:[%s2912] sm:$0xf]
          %v2914 = vld [vmem:[%s2912 + $0x4] sm:$0xf]
          %v2915 = vld [vmem:[%s2912 + $0x8] sm:$0xf]
          %v2916 = vld [vmem:[%s2912 + $0xc] sm:$0xf]
          %s2917 = scalar_lea.vmem %s450, 48
          %v2918 = vld [vmem:[%s2917] sm:$0xf]
          %v2919 = vld [vmem:[%s2917 + $0x4] sm:$0xf]
          %v2920 = vld [vmem:[%s2917 + $0x8] sm:$0xf]
          %v2921 = vld [vmem:[%s2917 + $0xc] sm:$0xf]
          %v2926 = vunpack.c.l.b16 %v2913
          %v2927 = vunpack.c.l.b16 %v2914
          %v2928 = vunpack.c.l.b16 %v2915
          %v2929 = vunpack.c.l.b16 %v2916
          %v2930 = vpack.c.b16 %v2927, %v2926
          %v2931 = vpack.c.b16 %v2929, %v2928
          %v2936 = vunpack.c.l.b16 %v2918
          %v2937 = vunpack.c.l.b16 %v2919
          %v2938 = vunpack.c.l.b16 %v2920
          %v2939 = vunpack.c.l.b16 %v2921
          %v2940 = vpack.c.b16 %v2937, %v2936
          %v2941 = vpack.c.b16 %v2939, %v2938
          %v2943 = vsel %vm2032, %v2930, 0
          %v2946 = vsel %vm2032, %v2931, 0
          %v2949 = vsel %vm2032, %v2940, 0
          %v2952 = vsel %vm2032, %v2941, 0
          %2954 = vmatprep.subr.bf16.mxu0 0
          %2955 = vmatpush1.bf16.xpose.msra.mxu0 0
          %2956 = vmatprep.subr.bf16.mxu0 0
          %2957 = vmatpush1.bf16.xpose.msra.mxu0 0
          %2958 = vmatprep.subr.bf16.mxu0 0
          %2959 = vmatpush1.bf16.xpose.msra.mxu0 0
          %2960 = vmatprep.subr.bf16.mxu0 0
          %2961 = vmatpush1.bf16.xpose.msra.mxu0 0
          %2962 = vmatprep.subr.bf16.mxu0 0
          %2963 = vmatpush1.bf16.xpose.msra.mxu0 0
          %2964 = vmatprep.subr.bf16.mxu0 0
          %2965 = vmatpush1.bf16.xpose.msra.mxu0 0
          %2966 = vmatprep.subr.bf16.mxu0 0
          %2967 = vmatpush1.bf16.xpose.msra.mxu0 %v2952
          %2968 = vmatprep.subr.bf16.mxu0 0
          %2969 = vmatpush1.bf16.xpose.msra.mxu0 %v2949
          %2970 = vmatprep.subr.bf16.mxu0 0
          %2971 = vmatpush2.bf16.xpose.msra.mxu0 0
          %2972 = vmatprep.subr.bf16.mxu0 0
          %2973 = vmatpush2.bf16.xpose.msra.mxu0 0
          %2974 = vmatprep.subr.bf16.mxu0 0
          %2975 = vmatpush2.bf16.xpose.msra.mxu0 0
          %2976 = vmatprep.subr.bf16.mxu0 0
          %2977 = vmatpush2.bf16.xpose.msra.mxu0 0
          %2978 = vmatprep.subr.bf16.mxu0 0
          %2979 = vmatpush2.bf16.xpose.msra.mxu0 0
          %2980 = vmatprep.subr.bf16.mxu0 0
          %2981 = vmatpush2.bf16.xpose.msra.mxu0 0
          %2982 = vmatprep.subr.bf16.mxu0 0
          %2983 = vmatpush2.bf16.xpose.msra.mxu0 0
          %2984 = vmatprep.subr.bf16.mxu0 0
          %2985 = vmatpush2.bf16.xpose.msra.mxu0 0
          %2986 = vmatprep.mubr.bf16.mxu0 0
          %2987 = vmatmul.mubr.bf16.gmra.mxu0 %v2943
          %v2988 = vpop.f32.mrf.mxu0
          %v2989 = vadd.f32 0.0, %v2988
          %v2990 = vpop.f32.mrf.mxu0
          %v2991 = vpop.f32.mrf.mxu0
          %v2992 = vadd.f32 0.0, %v2991
          %v2993 = vpop.f32.mrf.mxu0
          %2994 = vmatprep.mubr.bf16.mxu0 0
          %2995 = vmatmul.mubr.bf16.gmra.mxu0 %v2946
          %v2996 = vpop.f32.mrf.mxu0
          %v2997 = vadd.f32 0.0, %v2996
          %v2998 = vpop.f32.mrf.mxu0
          %v2999 = vpop.f32.mrf.mxu0
          %v3000 = vadd.f32 0.0, %v2999
          %v3001 = vpop.f32.mrf.mxu0
          %3002 = vdwg.mxu0
          %v3003 = vsel %vm2000, %v2989, -1e+30
          %v3004 = vsel %vm2001, %v2992, -1e+30
          %v3005 = vsel %vm2002, %v2997, -1e+30
          %v3006 = vsel %vm2003, %v3000, -1e+30
          %s3007 = scalar_lea.vmem [#allocation3], 96
          %v3008 = vld [vmem:[%s3007] sm:$0xff]
          %v3009 = vld [vmem:[%s3007 + $0x8] sm:$0xff]
          %v3010 = vld [vmem:[%s3007 + $0x10] sm:$0xff]
          %v3011 = vld [vmem:[%s3007 + $0x18] sm:$0xff]
          %v3012 = vsel %vm2032, %v3003, -inf
          %3013 = vmax.xlane.f32.xlu0 %v3012
          %v3014 = vpop.xlane.xlu0 %3013
          %v3015 = vsel %vm2032, %v3004, -inf
          %3016 = vmax.xlane.f32.xlu0 %v3015
          %v3017 = vpop.xlane.xlu0 %3016
          %v3018 = vsel %vm2032, %v3005, -inf
          %3019 = vmax.xlane.f32.xlu0 %v3018
          %v3020 = vpop.xlane.xlu0 %3019
          %v3021 = vsel %vm2032, %v3006, -inf
          %3022 = vmax.xlane.f32.xlu0 %v3021
          %v3023 = vpop.xlane.xlu0 %3022
          %v3024 = vmax.f32 %v3008, %v3014
          %v3025 = vmax.f32 %v3009, %v3017
          %v3026 = vmax.f32 %v3010, %v3020
          %v3027 = vmax.f32 %v3011, %v3023
          %v3028 = vsub.f32 %v3008, %v3024
          %v3029 = vsub.f32 %v3009, %v3025
          %v3030 = vsub.f32 %v3010, %v3026
          %v3031 = vsub.f32 %v3011, %v3027
          %v3032 = vmul.f32 %v3028, 1.442695
          %v3033 = vpow.pop %v3032
          %v3034 = vmul.f32 %v3029, 1.442695
          %v3035 = vpow.pop %v3034
          %v3036 = vmul.f32 %v3030, 1.442695
          %v3037 = vpow.pop %v3036
          %v3038 = vmul.f32 %v3031, 1.442695
          %v3039 = vpow.pop %v3038
          %3041 = vset.pattern.permute.xlu0 0
          %3042 = vperm.xlu0 %3041, %v3024
          %v3043 = vpop.permute.xlu0 %3042
          %3046 = vset.pattern.permute.xlu0 0
          %3047 = vperm.xlu0 %3046, %v3025
          %v3048 = vpop.permute.xlu0 %3047
          %3051 = vset.pattern.permute.xlu0 0
          %3052 = vperm.xlu0 %3051, %v3026
          %v3053 = vpop.permute.xlu0 %3052
          %3056 = vset.pattern.permute.xlu0 0
          %3057 = vperm.xlu0 %3056, %v3027
          %v3058 = vpop.permute.xlu0 %3057
          %v3060 = vsub.f32 %v3003, %v3043
          %v3061 = vsub.f32 %v3004, %v3048
          %v3062 = vsub.f32 %v3005, %v3053
          %v3063 = vsub.f32 %v3006, %v3058
          %v3064 = vmul.f32 %v3060, 1.442695
          %v3065 = vpow.pop %v3064
          %v3066 = vmul.f32 %v3061, 1.442695
          %v3067 = vpow.pop %v3066
          %v3068 = vmul.f32 %v3062, 1.442695
          %v3069 = vpow.pop %v3068
          %v3070 = vmul.f32 %v3063, 1.442695
          %v3071 = vpow.pop %v3070
          %s3072 = scalar_lea.vmem [#allocation4], 96
          %v3073 = vld [vmem:[%s3072] sm:$0xff]
          %v3074 = vld [vmem:[%s3072 + $0x8] sm:$0xff]
          %v3075 = vld [vmem:[%s3072 + $0x10] sm:$0xff]
          %v3076 = vld [vmem:[%s3072 + $0x18] sm:$0xff]
          %v3077 = vmul.f32 %v3033, %v3073
          %v3078 = vmul.f32 %v3035, %v3074
          %v3079 = vmul.f32 %v3037, %v3075
          %v3080 = vmul.f32 %v3039, %v3076
          %v3081 = vsel %vm2032, %v3065, 0.0
          %3082 = vadd.xlane.f32.xlu0 %v3081
          %v3083 = vpop.xlane.xlu0 %3082
          %v3084 = vsel %vm2032, %v3067, 0.0
          %3085 = vadd.xlane.f32.xlu0 %v3084
          %v3086 = vpop.xlane.xlu0 %3085
          %v3087 = vsel %vm2032, %v3069, 0.0
          %3088 = vadd.xlane.f32.xlu0 %v3087
          %v3089 = vpop.xlane.xlu0 %3088
          %v3090 = vsel %vm2032, %v3071, 0.0
          %3091 = vadd.xlane.f32.xlu0 %v3090
          %v3092 = vpop.xlane.xlu0 %3091
          %v3093 = vadd.f32 %v3077, %v3083
          %v3094 = vadd.f32 %v3078, %v3086
          %v3095 = vadd.f32 %v3079, %v3089
          %v3096 = vadd.f32 %v3080, %v3092
          %3097 = vst.msk [vmem:[%s3072] sm:$0xff] %vm2186, %v3093
          %3098 = vst.msk [vmem:[%s3072 + $0x8] sm:$0xff] %vm2186, %v3094
          %3099 = vst.msk [vmem:[%s3072 + $0x10] sm:$0xff] %vm2186, %v3095
          %3100 = vst.msk [vmem:[%s3072 + $0x18] sm:$0xff] %vm2186, %v3096
          %s3101 = scalar_lea.vmem [#allocation5], 96
          %v3102 = vld [vmem:[%s3101] sm:$0xff]
          %v3103 = vld [vmem:[%s3101 + $0x8] sm:$0xff]
          %v3104 = vld [vmem:[%s3101 + $0x10] sm:$0xff]
          %v3105 = vld [vmem:[%s3101 + $0x18] sm:$0xff]
          %3107 = vset.pattern.permute.xlu0 0
          %3108 = vperm.xlu0 %3107, %v3033
          %v3109 = vpop.permute.xlu0 %3108
          %3112 = vset.pattern.permute.xlu0 0
          %3113 = vperm.xlu0 %3112, %v3035
          %v3114 = vpop.permute.xlu0 %3113
          %3117 = vset.pattern.permute.xlu0 0
          %3118 = vperm.xlu0 %3117, %v3037
          %v3119 = vpop.permute.xlu0 %3118
          %3122 = vset.pattern.permute.xlu0 0
          %3123 = vperm.xlu0 %3122, %v3039
          %v3124 = vpop.permute.xlu0 %3123
          %v3126 = vmul.f32 %v3109, %v3102
          %v3127 = vmul.f32 %v3114, %v3103
          %v3128 = vmul.f32 %v3119, %v3104
          %v3129 = vmul.f32 %v3124, %v3105
          %v3130 = vpack.c.bf16 %v3067, %v3065
          %v3131 = vpack.c.bf16 %v3071, %v3069
          %s3132 = scalar_lea.vmem %s464, 48
          %v3133 = vld [vmem:[%s3132] sm:$0xf]
          %v3134 = vld [vmem:[%s3132 + $0x4] sm:$0xf]
          %v3135 = vld [vmem:[%s3132 + $0x8] sm:$0xf]
          %v3136 = vld [vmem:[%s3132 + $0xc] sm:$0xf]
          %v3141 = vunpack.c.l.b16 %v3133
          %v3142 = vunpack.c.l.b16 %v3134
          %v3143 = vunpack.c.l.b16 %v3135
          %v3144 = vunpack.c.l.b16 %v3136
          %v3145 = vpack.c.b16 %v3142, %v3141
          %v3146 = vpack.c.b16 %v3144, %v3143
          %v3150 = vsel %vm2032, %v3130, 0
          %v3153 = vsel %vm2032, %v3131, 0
          %3155 = vmatprep.subr.bf16.mxu0 0
          %3156 = vmatpush1.bf16.msra.mxu0 0
          %3157 = vmatprep.subr.bf16.mxu0 0
          %3158 = vmatpush1.bf16.msra.mxu0 0
          %3159 = vmatprep.subr.bf16.mxu0 0
          %3160 = vmatpush1.bf16.msra.mxu0 0
          %3161 = vmatprep.subr.bf16.mxu0 0
          %3162 = vmatpush1.bf16.msra.mxu0 0
          %3163 = vmatprep.subr.bf16.mxu0 0
          %3164 = vmatpush1.bf16.msra.mxu0 0
          %3165 = vmatprep.subr.bf16.mxu0 0
          %3166 = vmatpush1.bf16.msra.mxu0 0
          %3167 = vmatprep.subr.bf16.mxu0 0
          %3168 = vmatpush1.bf16.msra.mxu0 %v3146
          %3169 = vmatprep.subr.bf16.mxu0 0
          %3170 = vmatpush1.bf16.msra.mxu0 %v3145
          %3171 = vmatprep.subr.bf16.mxu0 0
          %3172 = vmatpush2.bf16.msra.mxu0 0
          %3173 = vmatprep.subr.bf16.mxu0 0
          %3174 = vmatpush2.bf16.msra.mxu0 0
          %3175 = vmatprep.subr.bf16.mxu0 0
          %3176 = vmatpush2.bf16.msra.mxu0 0
          %3177 = vmatprep.subr.bf16.mxu0 0
          %3178 = vmatpush2.bf16.msra.mxu0 0
          %3179 = vmatprep.subr.bf16.mxu0 0
          %3180 = vmatpush2.bf16.msra.mxu0 0
          %3181 = vmatprep.subr.bf16.mxu0 0
          %3182 = vmatpush2.bf16.msra.mxu0 0
          %3183 = vmatprep.subr.bf16.mxu0 0
          %3184 = vmatpush2.bf16.msra.mxu0 0
          %3185 = vmatprep.subr.bf16.mxu0 0
          %3186 = vmatpush2.bf16.msra.mxu0 0
          %3187 = vmatprep.mubr.bf16.mxu0 0
          %3188 = vmatmul.mubr.bf16.gmra.mxu0 %v3150
          %v3189 = vpop.f32.mrf.mxu0
          %v3190 = vadd.f32 0.0, %v3189
          %v3191 = vpop.f32.mrf.mxu0
          %v3192 = vpop.f32.mrf.mxu0
          %v3193 = vadd.f32 0.0, %v3192
          %v3194 = vpop.f32.mrf.mxu0
          %3195 = vmatprep.mubr.bf16.mxu0 0
          %3196 = vmatmul.mubr.bf16.gmra.mxu0 %v3153
          %v3197 = vpop.f32.mrf.mxu0
          %v3198 = vadd.f32 0.0, %v3197
          %v3199 = vpop.f32.mrf.mxu0
          %v3200 = vpop.f32.mrf.mxu0
          %v3201 = vadd.f32 0.0, %v3200
          %v3202 = vpop.f32.mrf.mxu0
          %3203 = vdwg.mxu0
          %v3204 = vadd.f32 %v3126, %v3190
          %v3205 = vadd.f32 %v3127, %v3193
          %v3206 = vadd.f32 %v3128, %v3198
          %v3207 = vadd.f32 %v3129, %v3201
          %3208 = vst.msk [vmem:[%s3101] sm:$0xff] %vm2032, %v3204
          %3209 = vst.msk [vmem:[%s3101 + $0x8] sm:$0xff] %vm2032, %v3205
          %3210 = vst.msk [vmem:[%s3101 + $0x10] sm:$0xff] %vm2032, %v3206
          %3211 = vst.msk [vmem:[%s3101 + $0x18] sm:$0xff] %vm2032, %v3207
          %3212 = vst.msk [vmem:[%s3007] sm:$0xff] %vm2186, %v3024
          %3213 = vst.msk [vmem:[%s3007 + $0x8] sm:$0xff] %vm2186, %v3025
          %3214 = vst.msk [vmem:[%s3007 + $0x10] sm:$0xff] %vm2186, %v3026
          %3215 = vst.msk [vmem:[%s3007 + $0x18] sm:$0xff] %vm2186, %v3027
          %v3216 = vld [vmem:[#allocation4] sm:$0xff]
          %v3217 = vld [vmem:[#allocation4 + $0x8] sm:$0xff]
          %v3218 = vld [vmem:[#allocation4 + $0x10] sm:$0xff]
          %v3219 = vld [vmem:[#allocation4 + $0x18] sm:$0xff]
          %v3220 = vrcp.pop %v3216
          %v3221 = vrcp.pop %v3217
          %v3222 = vrcp.pop %v3218
          %v3223 = vrcp.pop %v3219
          %v3224 = vld [vmem:[#allocation5] sm:$0xff]
          %v3225 = vld [vmem:[#allocation5 + $0x8] sm:$0xff]
          %v3226 = vld [vmem:[#allocation5 + $0x10] sm:$0xff]
          %v3227 = vld [vmem:[#allocation5 + $0x18] sm:$0xff]
          %3229 = vset.pattern.permute.xlu0 0
          %3230 = vperm.xlu0 %3229, %v3220
          %v3231 = vpop.permute.xlu0 %3230
          %3234 = vset.pattern.permute.xlu0 0
          %3235 = vperm.xlu0 %3234, %v3221
          %v3236 = vpop.permute.xlu0 %3235
          %3239 = vset.pattern.permute.xlu0 0
          %3240 = vperm.xlu0 %3239, %v3222
          %v3241 = vpop.permute.xlu0 %3240
          %3244 = vset.pattern.permute.xlu0 0
          %3245 = vperm.xlu0 %3244, %v3223
          %v3246 = vpop.permute.xlu0 %3245
          %v3248 = vmul.f32 %v3224, %v3231
          %v3249 = vmul.f32 %v3225, %v3236
          %v3250 = vmul.f32 %v3226, %v3241
          %v3251 = vmul.f32 %v3227, %v3246
          %3252 = vst.msk [vmem:[#allocation6] sm:$0xff] %vm2032, %v3248
          %3253 = vst.msk [vmem:[#allocation6 + $0x8] sm:$0xff] %vm2032, %v3249
          %3254 = vst.msk [vmem:[#allocation6 + $0x10] sm:$0xff] %vm2032, %v3250
          %3255 = vst.msk [vmem:[#allocation6 + $0x18] sm:$0xff] %vm2032, %v3251
          %v3256 = vld [vmem:[%s2464] sm:$0xff]
          %v3257 = vld [vmem:[%s2464 + $0x8] sm:$0xff]
          %v3258 = vld [vmem:[%s2464 + $0x10] sm:$0xff]
          %v3259 = vld [vmem:[%s2464 + $0x18] sm:$0xff]
          %v3260 = vrcp.pop %v3256
          %v3261 = vrcp.pop %v3257
          %v3262 = vrcp.pop %v3258
          %v3263 = vrcp.pop %v3259
          %v3264 = vld [vmem:[%s2493] sm:$0xff]
          %v3265 = vld [vmem:[%s2493 + $0x8] sm:$0xff]
          %v3266 = vld [vmem:[%s2493 + $0x10] sm:$0xff]
          %v3267 = vld [vmem:[%s2493 + $0x18] sm:$0xff]
          %3269 = vset.pattern.permute.xlu0 0
          %3270 = vperm.xlu0 %3269, %v3260
          %v3271 = vpop.permute.xlu0 %3270
          %3274 = vset.pattern.permute.xlu0 0
          %3275 = vperm.xlu0 %3274, %v3261
          %v3276 = vpop.permute.xlu0 %3275
          %3279 = vset.pattern.permute.xlu0 0
          %3280 = vperm.xlu0 %3279, %v3262
          %v3281 = vpop.permute.xlu0 %3280
          %3284 = vset.pattern.permute.xlu0 0
          %3285 = vperm.xlu0 %3284, %v3263
          %v3286 = vpop.permute.xlu0 %3285
          %v3288 = vmul.f32 %v3264, %v3271
          %v3289 = vmul.f32 %v3265, %v3276
          %v3290 = vmul.f32 %v3266, %v3281
          %v3291 = vmul.f32 %v3267, %v3286
          %3296 = vrot.lane.b32.xlu0 %v3288, 32
          %v3297 = vpop.permute.xlu0 %3296
          %3298 = vrot.lane.b32.xlu0 %v3289, 32
          %v3299 = vpop.permute.xlu0 %3298
          %3300 = vrot.lane.b32.xlu0 %v3290, 32
          %v3301 = vpop.permute.xlu0 %3300
          %3302 = vrot.lane.b32.xlu0 %v3291, 32
          %v3303 = vpop.permute.xlu0 %3302
          %vm3308 = vcmask 523520
          %3309 = vst.msk [vmem:[#allocation6] sm:$0xff] %vm3308, %v3297
          %3310 = vst.msk [vmem:[#allocation6 + $0x8] sm:$0xff] %vm3308, %v3299
          %3311 = vst.msk [vmem:[#allocation6 + $0x10] sm:$0xff] %vm3308, %v3301
          %3312 = vst.msk [vmem:[#allocation6 + $0x18] sm:$0xff] %vm3308, %v3303
          %v3313 = vld [vmem:[%s2768] sm:$0xff]
          %v3314 = vld [vmem:[%s2768 + $0x8] sm:$0xff]
          %v3315 = vld [vmem:[%s2768 + $0x10] sm:$0xff]
          %v3316 = vld [vmem:[%s2768 + $0x18] sm:$0xff]
          %v3317 = vrcp.pop %v3313
          %v3318 = vrcp.pop %v3314
          %v3319 = vrcp.pop %v3315
          %v3320 = vrcp.pop %v3316
          %v3321 = vld [vmem:[%s2797] sm:$0xff]
          %v3322 = vld [vmem:[%s2797 + $0x8] sm:$0xff]
          %v3323 = vld [vmem:[%s2797 + $0x10] sm:$0xff]
          %v3324 = vld [vmem:[%s2797 + $0x18] sm:$0xff]
          %3326 = vset.pattern.permute.xlu0 0
          %3327 = vperm.xlu0 %3326, %v3317
          %v3328 = vpop.permute.xlu0 %3327
          %3331 = vset.pattern.permute.xlu0 0
          %3332 = vperm.xlu0 %3331, %v3318
          %v3333 = vpop.permute.xlu0 %3332
          %3336 = vset.pattern.permute.xlu0 0
          %3337 = vperm.xlu0 %3336, %v3319
          %v3338 = vpop.permute.xlu0 %3337
          %3341 = vset.pattern.permute.xlu0 0
          %3342 = vperm.xlu0 %3341, %v3320
          %v3343 = vpop.permute.xlu0 %3342
          %v3345 = vmul.f32 %v3321, %v3328
          %v3346 = vmul.f32 %v3322, %v3333
          %v3347 = vmul.f32 %v3323, %v3338
          %v3348 = vmul.f32 %v3324, %v3343
          %3353 = vrot.lane.b32.xlu0 %v3345, 64
          %v3354 = vpop.permute.xlu0 %3353
          %3355 = vrot.lane.b32.xlu0 %v3346, 64
          %v3356 = vpop.permute.xlu0 %3355
          %3357 = vrot.lane.b32.xlu0 %v3347, 64
          %v3358 = vpop.permute.xlu0 %3357
          %3359 = vrot.lane.b32.xlu0 %v3348, 64
          %v3360 = vpop.permute.xlu0 %3359
          %vm3365 = vcmask 785920
          %3366 = vst.msk [vmem:[#allocation6] sm:$0xff] %vm3365, %v3354
          %3367 = vst.msk [vmem:[#allocation6 + $0x8] sm:$0xff] %vm3365, %v3356
          %3368 = vst.msk [vmem:[#allocation6 + $0x10] sm:$0xff] %vm3365, %v3358
          %3369 = vst.msk [vmem:[#allocation6 + $0x18] sm:$0xff] %vm3365, %v3360
          %v3370 = vld [vmem:[%s3072] sm:$0xff]
          %v3371 = vld [vmem:[%s3072 + $0x8] sm:$0xff]
          %v3372 = vld [vmem:[%s3072 + $0x10] sm:$0xff]
          %v3373 = vld [vmem:[%s3072 + $0x18] sm:$0xff]
          %v3374 = vrcp.pop %v3370
          %v3375 = vrcp.pop %v3371
          %v3376 = vrcp.pop %v3372
          %v3377 = vrcp.pop %v3373
          %v3378 = vld [vmem:[%s3101] sm:$0xff]
          %v3379 = vld [vmem:[%s3101 + $0x8] sm:$0xff]
          %v3380 = vld [vmem:[%s3101 + $0x10] sm:$0xff]
          %v3381 = vld [vmem:[%s3101 + $0x18] sm:$0xff]
          %3383 = vset.pattern.permute.xlu0 0
          %3384 = vperm.xlu0 %3383, %v3374
          %v3385 = vpop.permute.xlu0 %3384
          %3388 = vset.pattern.permute.xlu0 0
          %3389 = vperm.xlu0 %3388, %v3375
          %v3390 = vpop.permute.xlu0 %3389
          %3393 = vset.pattern.permute.xlu0 0
          %3394 = vperm.xlu0 %3393, %v3376
          %v3395 = vpop.permute.xlu0 %3394
          %3398 = vset.pattern.permute.xlu0 0
          %3399 = vperm.xlu0 %3398, %v3377
          %v3400 = vpop.permute.xlu0 %3399
          %v3402 = vmul.f32 %v3378, %v3385
          %v3403 = vmul.f32 %v3379, %v3390
          %v3404 = vmul.f32 %v3380, %v3395
          %v3405 = vmul.f32 %v3381, %v3400
          %3410 = vrot.lane.b32.xlu0 %v3402, 96
          %v3411 = vpop.permute.xlu0 %3410
          %3412 = vrot.lane.b32.xlu0 %v3403, 96
          %v3413 = vpop.permute.xlu0 %3412
          %3414 = vrot.lane.b32.xlu0 %v3404, 96
          %v3415 = vpop.permute.xlu0 %3414
          %3416 = vrot.lane.b32.xlu0 %v3405, 96
          %v3417 = vpop.permute.xlu0 %3416
          %vm3422 = vcmask 1048320
          %3423 = vst.msk [vmem:[#allocation6] sm:$0xff] %vm3422, %v3411
          %3424 = vst.msk [vmem:[#allocation6 + $0x8] sm:$0xff] %vm3422, %v3413
          %3425 = vst.msk [vmem:[#allocation6 + $0x10] sm:$0xff] %vm3422, %v3415
          %3426 = vst.msk [vmem:[#allocation6 + $0x18] sm:$0xff] %vm3422, %v3417
          %v3427 = vld [vmem:[#allocation6] sm:$0xff]
          %v3428 = vld [vmem:[#allocation6 + $0x8] sm:$0xff]
          %v3429 = vld [vmem:[#allocation6 + $0x10] sm:$0xff]
          %v3430 = vld [vmem:[#allocation6 + $0x18] sm:$0xff]
          %v3431 = vpack.c.bf16 %v3428, %v3427
          %v3432 = vpack.c.bf16 %v3430, %v3429
          %v3433 = vld [vmem:[%s7] sm:$0xf]
          %v3434 = vld [vmem:[%s7 + $0x4] sm:$0xf]
          %v3435 = vld [vmem:[%s7 + $0x8] sm:$0xf]
          %v3436 = vld [vmem:[%s7 + $0xc] sm:$0xf]
          %v3437 = vld [vmem:[%s7 + $0x10] sm:$0xf]
          %v3438 = vld [vmem:[%s7 + $0x14] sm:$0xf]
          %v3439 = vld [vmem:[%s7 + $0x18] sm:$0xf]
          %v3440 = vld [vmem:[%s7 + $0x1c] sm:$0xf]
          %v3441 = vld [vmem:[%s7 + $0x20] sm:$0xf]
          %v3442 = vld [vmem:[%s7 + $0x24] sm:$0xf]
          %v3443 = vld [vmem:[%s7 + $0x28] sm:$0xf]
          %v3444 = vld [vmem:[%s7 + $0x2c] sm:$0xf]
          %v3445 = vld [vmem:[%s7 + $0x30] sm:$0xf]
          %v3446 = vld [vmem:[%s7 + $0x34] sm:$0xf]
          %v3447 = vld [vmem:[%s7 + $0x38] sm:$0xf]
          %v3448 = vld [vmem:[%s7 + $0x3c] sm:$0xf]
          %v3449 = vld [vmem:[%s8] sm:$0x1]
          %v3451 = vlaneseq
          %v3452 = vshrl.u32 %v3451, 7
          %v3453 = vsub.s32 0, %v3452
          %v3454 = vrot.slane %v3449, %v3453
          %v3472 = vunpack.c.l.b16 %v3433
          %v3473 = vunpack.c.l.b16 %v3434
          %v3474 = vunpack.c.l.b16 %v3435
          %v3475 = vunpack.c.l.b16 %v3436
          %v3476 = vunpack.c.l.b16 %v3437
          %v3477 = vunpack.c.l.b16 %v3438
          %v3478 = vunpack.c.l.b16 %v3439
          %v3479 = vunpack.c.l.b16 %v3440
          %v3480 = vunpack.c.l.b16 %v3441
          %v3481 = vunpack.c.l.b16 %v3442
          %v3482 = vunpack.c.l.b16 %v3443
          %v3483 = vunpack.c.l.b16 %v3444
          %v3484 = vunpack.c.l.b16 %v3445
          %v3485 = vunpack.c.l.b16 %v3446
          %v3486 = vunpack.c.l.b16 %v3447
          %v3487 = vunpack.c.l.b16 %v3448
          %v3488 = vpack.c.b16 %v3473, %v3472
          %v3489 = vpack.c.b16 %v3475, %v3474
          %v3490 = vpack.c.b16 %v3477, %v3476
          %v3491 = vpack.c.b16 %v3479, %v3478
          %v3492 = vpack.c.b16 %v3481, %v3480
          %v3493 = vpack.c.b16 %v3483, %v3482
          %v3494 = vpack.c.b16 %v3485, %v3484
          %v3495 = vpack.c.b16 %v3487, %v3486
          %3504 = vmatprep.subr.bf16.mxu0 0
          %3505 = vmatpush1.bf16.msra.mxu0 %v3495
          %3506 = vmatprep.subr.bf16.mxu0 0
          %3507 = vmatpush1.bf16.msra.mxu0 %v3494
          %3508 = vmatprep.subr.bf16.mxu0 0
          %3509 = vmatpush1.bf16.msra.mxu0 %v3493
          %3510 = vmatprep.subr.bf16.mxu0 0
          %3511 = vmatpush1.bf16.msra.mxu0 %v3492
          %3512 = vmatprep.subr.bf16.mxu0 0
          %3513 = vmatpush1.bf16.msra.mxu0 %v3491
          %3514 = vmatprep.subr.bf16.mxu0 0
          %3515 = vmatpush1.bf16.msra.mxu0 %v3490
          %3516 = vmatprep.subr.bf16.mxu0 0
          %3517 = vmatpush1.bf16.msra.mxu0 %v3489
          %3518 = vmatprep.subr.bf16.mxu0 0
          %3519 = vmatpush1.bf16.msra.mxu0 %v3488
          %3520 = vmatprep.subr.bf16.mxu0 0
          %3521 = vmatpush2.bf16.msra.mxu0 0
          %3522 = vmatprep.subr.bf16.mxu0 0
          %3523 = vmatpush2.bf16.msra.mxu0 0
          %3524 = vmatprep.subr.bf16.mxu0 0
          %3525 = vmatpush2.bf16.msra.mxu0 0
          %3526 = vmatprep.subr.bf16.mxu0 0
          %3527 = vmatpush2.bf16.msra.mxu0 0
          %3528 = vmatprep.subr.bf16.mxu0 0
          %3529 = vmatpush2.bf16.msra.mxu0 0
          %3530 = vmatprep.subr.bf16.mxu0 0
          %3531 = vmatpush2.bf16.msra.mxu0 0
          %3532 = vmatprep.subr.bf16.mxu0 0
          %3533 = vmatpush2.bf16.msra.mxu0 0
          %3534 = vmatprep.subr.bf16.mxu0 0
          %3535 = vmatpush2.bf16.msra.mxu0 0
          %3536 = vmatprep.mubr.bf16.mxu0 0
          %3537 = vmatmul.mubr.bf16.gmra.mxu0 %v3431
          %v3538 = vpop.f32.mrf.mxu0
          %v3539 = vadd.f32 %v3454, %v3538
          %v3540 = vpop.f32.mrf.mxu0
          %v3541 = vpop.f32.mrf.mxu0
          %v3542 = vadd.f32 %v3454, %v3541
          %v3543 = vpop.f32.mrf.mxu0
          %3544 = vmatprep.mubr.bf16.mxu0 0
          %3545 = vmatmul.mubr.bf16.gmra.mxu0 %v3432
          %v3546 = vpop.f32.mrf.mxu0
          %v3547 = vadd.f32 %v3454, %v3546
          %v3548 = vpop.f32.mrf.mxu0
          %v3549 = vpop.f32.mrf.mxu0
          %v3550 = vadd.f32 %v3454, %v3549
          %v3551 = vpop.f32.mrf.mxu0
          %3552 = vdwg.mxu0
          %v3553 = vld [vmem:[%s438] sm:$0xff]
          %v3554 = vld [vmem:[%s438 + $0x8] sm:$0xff]
          %v3555 = vld [vmem:[%s438 + $0x10] sm:$0xff]
          %v3556 = vld [vmem:[%s438 + $0x18] sm:$0xff]
          %v3557 = vadd.f32 %v3553, %v3539
          %v3558 = vadd.f32 %v3554, %v3542
          %v3559 = vadd.f32 %v3555, %v3547
          %v3560 = vadd.f32 %v3556, %v3550
          %3561 = vst [vmem:[%s429] sm:$0xff] %v3557
          %3562 = vst [vmem:[%s429 + $0x8] sm:$0xff] %v3558
          %3563 = vst [vmem:[%s429 + $0x10] sm:$0xff] %v3559
          %3564 = vst [vmem:[%s429 + $0x18] sm:$0xff] %v3560
        $region68: #{gpt2_block.4} parent=55 // pred_fallthru
          _
        %s3565 = sand.u32 %s270, 1
        %s3566 = scalar_lea.sflag [#allocation8], %s3565
        %s3567 = sand.u32 %s270, 1
        %s3568 = smul.addr %s3567, 32
        %s3569 = scalar_lea.vmem [#allocation7], %s3568
        // Predicated region
        $region69: #{gpt2_block.4} parent=55 // pred_check
          %p3570 = pneg %p280
        $region70: #{gpt2_block.4} parent=55 // pred_check_branch
          %3572 = sbr.rel (%p3570) target = $region72
        $region71: #{gpt2_block.4} parent=55 // pred_region
          %s3573 = smul.u32 4, %s29
          %s3575 = ssub.s32 512, 512
          %3576 = vsyncadd %s3566, %s3575
          %s3577 = smul.addr %s28, 4
          %s3578 = sadd.s32 %s3573, %s3577
          %s3579 = smul.addr %s3578, 128
          %s3580 = scalar_lea.hbm %s9, %s3579
          %s3581 = sshll.u32 %s3569, 4
          %s3582 = int_to_ptr.vmem [resolvable:$true] %s3581
          %3587 = dma.vmem_to_hbm [thread:$0]  %s3582, 512, %s3580, %s3566, 128, 128, 8
        $region72: #{gpt2_block.4} parent=55 // pred_fallthru
          _
      $region56: #{gpt2_block.4} parent=5 // pred_fallthru
        _
      %p3588 = scmp.le.s32.totalorder 2, %s18
      // Predicated region
      $region73: #{gpt2_block.4} parent=5 // pred_check
        %p3589 = pneg %p3588
      $region74: #{gpt2_block.4} parent=5 // pred_check_branch
        %3591 = sbr.rel (%p3589) target = $region76
      $region75: #{gpt2_block.4} parent=5 // pred_region
        %s3592 = ssub.s32 %s18, 2
        // Predicated region
        $region77: #{gpt2_block.4} parent=75 // pred_check
          %p3593 = pneg %p286
        $region78: #{gpt2_block.4} parent=75 // pred_check_branch
          %3595 = sbr.rel (%p3593) target = $region80
        $region79: #{gpt2_block.4} parent=75 // pred_region
          %s3596 = sand.u32 %s271, 1
          %s3597 = scalar_lea.sflag [#allocation8], %s3596
          %s3598 = sand.u32 %s271, 1
          %s3599 = smul.addr %s3598, 32
          %s3600 = scalar_lea.vmem [#allocation7], %s3599
          %3601 = dma.done %s3597, 512
        $region80: #{gpt2_block.4} parent=75 // pred_fallthru
          _
      $region76: #{gpt2_block.4} parent=5 // pred_fallthru
        _
    $region6: #{gpt2_block.4} parent=1 // loop_footer
      %s22 = sadd.s32 1, %s18
    $region7: #{gpt2_block.4} parent=1 // loop_footer_branch
      %17 = sbr.rel target = $region3
    $region8: #{gpt2_block.4} parent=1 // loop_exit
      _
    %3602 = vsyncpa [#allocation8], 1
    %s3603 = scalar_lea.sflag [#allocation8], 1
    %3604 = vsyncpa %s3603, 1

</llo_original>
